<compile_context>
chip_gen: v7x
topology: tpu7x:2x2x1
jax: 0.10.0
libtpu: 0.0.40
codegen_flags: <defaults>
</compile_context>

<pallas_src>
import jax
import jax.numpy as jnp
from jax.experimental import pallas as pl
from jax.experimental.pallas import tpu as pltpu

IMG = 16                     # size_of_image -> LSTM input_size = 256
SEQ = 8                      # sequence length
BATCH = 2                    # logical batch
BP = 8                       # padded batch (full vreg sublane group)
INPUT = IMG * IMG            # 256 (lane-aligned)

HIDDEN = 400                 # logical LSTM hidden size (as in the module)
HP = 512                     # padded hidden size (lane-dense, 128-aligned gate slices)
GATES = 4 * HP               # 2048

ENC1, ENC2, DEC1, DEC2 = 250, 100, 500, 600            # logical MLP widths
ENC1P, ENC2P, DEC1P, DEC2P = 256, 128, 512, 640         # padded MLP widths


# ----------------------------------------------------------------------------
# Fused kernel: batched input projection -> unrolled LSTM recurrence -> MLP head.
# W_hh and MLP weights arrive via manual async DMA overlapped with compute.
# ----------------------------------------------------------------------------
def fused_kernel(x_ref, wih_ref, b_ref,                 # auto-VMEM inputs
                 whh_hbm, w1_hbm, w2_hbm, w3_hbm, w4_hbm, w5_hbm,   # HBM (pl.ANY)
                 b1, b2, b3, b4, b5,                    # auto-VMEM biases
                 out_ref,                               # output
                 whh_s, w1_s, w2_s, w3_s, w4_s, w5_s, sems):        # scratch
    BPk = out_ref.shape[0]
    TB = x_ref.shape[0]
    T = TB // BPk                                        # static

    # Kick off the W_hh DMA immediately; it overlaps the input projection below.
    whh_cp = pltpu.make_async_copy(whh_hbm, whh_s, sems.at[0])
    whh_cp.start()

    # Hoisted input projection for all timesteps at once: (T*BP, I) @ (I, 4*HP).
    x_all = x_ref[...].astype(jnp.bfloat16)
    pre = (jnp.dot(x_all, wih_ref[...], preferred_element_type=jnp.float32)
           + b_ref[...])                                 # (T*BP, GATES), f32

    # Start the MLP-weight DMAs; they complete while the recurrence runs.
    mlp_copies = [
        pltpu.make_async_copy(w1_hbm, w1_s, sems.at[1]),
        pltpu.make_async_copy(w2_hbm, w2_s, sems.at[2]),
        pltpu.make_async_copy(w3_hbm, w3_s, sems.at[3]),
        pltpu.make_async_copy(w4_hbm, w4_s, sems.at[4]),
        pltpu.make_async_copy(w5_hbm, w5_s, sems.at[5]),
    ]
    for cp in mlp_copies:
        cp.start()

    # W_hh must be resident before the first recurrence step.
    whh_cp.wait()

    h = jnp.zeros((BPk, HP), jnp.float32)
    c = jnp.zeros((BPk, HP), jnp.float32)

    # Recurrent loop, fully unrolled (T is a compile-time constant).  Every row
    # slice of `pre` starts on a multiple of 8 sublanes (BP = 8).
    for t in range(T):
        g = pre[t * BPk:(t + 1) * BPk, :] + jnp.dot(
            h.astype(jnp.bfloat16), whh_s[...], preferred_element_type=jnp.float32)
        # PyTorch gate order: i, f, g, o — slices are 128-aligned thanks to HP=512.
        i_g = jax.nn.sigmoid(g[:, 0 * HP:1 * HP])
        f_g = jax.nn.sigmoid(g[:, 1 * HP:2 * HP])
        g_g = jnp.tanh(g[:, 2 * HP:3 * HP])
        o_g = jax.nn.sigmoid(g[:, 3 * HP:4 * HP])
        c = f_g * c + i_g * g_g
        h = o_g * jnp.tanh(c)

    # MLP weights must be resident before the head.
    for cp in mlp_copies:
        cp.wait()

    # MLP head: fc_enc -> tanh -> fc_enc2 -> tanh -> fc_dec1 -> tanh ->
    # fc_dec2 -> tanh -> fc_dec3 (no final activation).
    a = jnp.tanh(jnp.dot(h.astype(jnp.bfloat16), w1_s[...],
                         preferred_element_type=jnp.float32) + b1[...])
    a = jnp.tanh(jnp.dot(a.astype(jnp.bfloat16), w2_s[...],
                         preferred_element_type=jnp.float32) + b2[...])
    a = jnp.tanh(jnp.dot(a.astype(jnp.bfloat16), w3_s[...],
                         preferred_element_type=jnp.float32) + b3[...])
    a = jnp.tanh(jnp.dot(a.astype(jnp.bfloat16), w4_s[...],
                         preferred_element_type=jnp.float32) + b4[...])
    out_ref[...] = (jnp.dot(a.astype(jnp.bfloat16), w5_s[...],
                            preferred_element_type=jnp.float32) + b5[...])


def run_fused(x2d, p):
    # x2d: (T*BP, INPUT) f32, time-major rows, batch padded to BP with zero rows.
    vmem = pl.BlockSpec(memory_space=pltpu.MemorySpace.VMEM)
    hbm = pl.BlockSpec(memory_space=pl.ANY)
    return pl.pallas_call(
        fused_kernel,
        out_shape=jax.ShapeDtypeStruct((BP, INPUT), jnp.float32),
        in_specs=[vmem, vmem, vmem,                 # x, wih, b_lstm
                  hbm, hbm, hbm, hbm, hbm, hbm,     # whh, w_enc..w_dec3 (manual DMA)
                  vmem, vmem, vmem, vmem, vmem],    # MLP biases
        out_specs=vmem,
        scratch_shapes=[
            pltpu.VMEM((HP, GATES), jnp.bfloat16),      # whh
            pltpu.VMEM((HP, ENC1P), jnp.bfloat16),      # w_enc
            pltpu.VMEM((ENC1P, ENC2P), jnp.bfloat16),   # w_enc2
            pltpu.VMEM((ENC2P, DEC1P), jnp.bfloat16),   # w_dec1
            pltpu.VMEM((DEC1P, DEC2P), jnp.bfloat16),   # w_dec2
            pltpu.VMEM((DEC2P, INPUT), jnp.bfloat16),   # w_dec3
            pltpu.SemaphoreType.DMA((6,)),
        ],
    )(x2d,
      p["wih"], p["b_lstm"],
      p["whh"], p["w_enc"], p["w_enc2"], p["w_dec1"], p["w_dec2"], p["w_dec3"],
      p["b_enc"], p["b_enc2"], p["b_dec1"], p["b_dec2"], p["b_dec3"])


# ----------------------------------------------------------------------------
# Parameter init (deterministic, PyTorch-style U(-1/sqrt(fan), 1/sqrt(fan))),
# then zero-padded to lane-aligned shapes and weights cast to bf16.
# LSTM weights stored as (in, 4*HP) with gate blocks [g*HP : g*HP+400] real,
# rest zero; combined bias b_ih + b_hh kept f32 as (1, 4*HP).
# ----------------------------------------------------------------------------
def init_params(key):
    ks = jax.random.split(key, 16)

    def uni(k, shape, fan_in):
        bound = 1.0 / jnp.sqrt(float(fan_in))
        return jax.random.uniform(k, shape, jnp.float32, -bound, bound)

    # LSTM (gate order i, f, g, o), unpadded then padded.
    wih = uni(ks[0], (4, INPUT, HIDDEN), HIDDEN)       # per-gate (in, H)
    whh = uni(ks[1], (4, HIDDEN, HIDDEN), HIDDEN)
    b_comb = uni(ks[2], (4, HIDDEN), HIDDEN) + uni(ks[3], (4, HIDDEN), HIDDEN)

    wih_p = jnp.concatenate(
        [jnp.pad(wih[g], ((0, 0), (0, HP - HIDDEN))) for g in range(4)], axis=1)
    whh_p = jnp.concatenate(
        [jnp.pad(whh[g], ((0, HP - HIDDEN), (0, HP - HIDDEN))) for g in range(4)], axis=1)
    b_p = jnp.concatenate(
        [jnp.pad(b_comb[g], (0, HP - HIDDEN)) for g in range(4)], axis=0)

    p = {
        "wih": wih_p.astype(jnp.bfloat16),             # (INPUT, 4*HP)
        "whh": whh_p.astype(jnp.bfloat16),             # (HP, 4*HP)
        "b_lstm": b_p.reshape(1, GATES),               # (1, 4*HP) f32
    }

    # Fully connected layers: (fan_in, padded_in, fan_out, padded_out, name).
    dims = [(HIDDEN, HP, ENC1, ENC1P, "enc"),
            (ENC1, ENC1P, ENC2, ENC2P, "enc2"),
            (ENC2, ENC2P, DEC1, DEC1P, "dec1"),
            (DEC1, DEC1P, DEC2, DEC2P, "dec2"),
            (DEC2, DEC2P, INPUT, INPUT, "dec3")]
    ki = 4
    for fi, fip, fo, fop, name in dims:
        w = uni(ks[ki], (fi, fo), fi); ki += 1
        bL = uni(ks[ki], (fo,), fi); ki += 1
        p[f"w_{name}"] = jnp.pad(w, ((0, fip - fi), (0, fop - fo))).astype(jnp.bfloat16)
        p[f"b_{name}"] = jnp.pad(bL, (0, fop - fo)).reshape(1, fop)   # f32
    return p


def pure_lstm_forward(x_3d, params):
    # x_3d: (B, T, 1, H, W) -> output (B, 1, 1, H, W), matching the torch module.
    B, T, _, H, W = x_3d.shape
    x = x_3d.reshape(B, T, H * W).astype(jnp.float32)
    x = jnp.transpose(x, (1, 0, 2))                          # (T, B, I) time-major
    x = jnp.pad(x, ((0, 0), (0, BP - B), (0, 0)))            # pad batch to BP with zeros
    x = x.reshape(T * BP, H * W)
    out = run_fused(x, params)                               # (BP, H*W)
    return out[:B].reshape(B, 1, 1, H, W)


pure_lstm_forward_jit = jax.jit(pure_lstm_forward)


# Pure-JAX reference using the same padded bf16 weights (for a sanity check).
# Runs at the logical batch size (B=2), so it also verifies that the kernel's
# internal batch padding is semantically transparent.
def reference_forward(x_3d, p):
    B, T, _, H, W = x_3d.shape
    x = x_3d.reshape(B, T, H * W).astype(jnp.float32)
    h = jnp.zeros((B, HP), jnp.float32)
    c = jnp.zeros((B, HP), jnp.float32)
    for t in range(T):
        g = (jnp.dot(x[:, t, :].astype(jnp.bfloat16), p["wih"],
                     preferred_element_type=jnp.float32)
             + jnp.dot(h.astype(jnp.bfloat16), p["whh"],
                       preferred_element_type=jnp.float32)
             + p["b_lstm"])
        i_g = jax.nn.sigmoid(g[:, 0 * HP:1 * HP])
        f_g = jax.nn.sigmoid(g[:, 1 * HP:2 * HP])
        g_g = jnp.tanh(g[:, 2 * HP:3 * HP])
        o_g = jax.nn.sigmoid(g[:, 3 * HP:4 * HP])
        c = f_g * c + i_g * g_g
        h = o_g * jnp.tanh(c)
    a = h
    for name in ("enc", "enc2", "dec1", "dec2"):
        a = jnp.tanh(jnp.dot(a.astype(jnp.bfloat16), p[f"w_{name}"],
                             preferred_element_type=jnp.float32) + p[f"b_{name}"])
    out = jnp.dot(a.astype(jnp.bfloat16), p["w_dec3"],
                  preferred_element_type=jnp.float32) + p["b_dec3"]
    return out.reshape(B, 1, 1, H, W)


if __name__ == "__main__":
    key = jax.random.PRNGKey(0)
    pkey, xkey = jax.random.split(key)
    params = init_params(pkey)
    x_3d = jax.random.normal(xkey, (BATCH, SEQ, 1, IMG, IMG), jnp.float32)

    out = pure_lstm_forward_jit(x_3d, params)
    jax.block_until_ready(out)
    assert out.shape == (BATCH, 1, 1, IMG, IMG)

    ref = reference_forward(x_3d, params)
    jax.block_until_ready(ref)
    assert jnp.max(jnp.abs(out - ref)) < 1e-2, "kernel output mismatch vs reference"

    print("KERNEL_OK")
</pallas_src>

<mosaic_0001>
module attributes {stable_mosaic.version = 11 : i64} {
  func.func @fused_kernel(%arg0: memref<64x256xf32, #tpu.memory_space<vmem>>, %arg1: memref<256x2048xbf16, #tpu.memory_space<vmem>>, %arg2: memref<1x2048xf32, #tpu.memory_space<vmem>>, %arg3: memref<512x2048xbf16, #tpu.memory_space<any>>, %arg4: memref<512x256xbf16, #tpu.memory_space<any>>, %arg5: memref<256x128xbf16, #tpu.memory_space<any>>, %arg6: memref<128x512xbf16, #tpu.memory_space<any>>, %arg7: memref<512x640xbf16, #tpu.memory_space<any>>, %arg8: memref<640x256xbf16, #tpu.memory_space<any>>, %arg9: memref<1x256xf32, #tpu.memory_space<vmem>>, %arg10: memref<1x128xf32, #tpu.memory_space<vmem>>, %arg11: memref<1x512xf32, #tpu.memory_space<vmem>>, %arg12: memref<1x640xf32, #tpu.memory_space<vmem>>, %arg13: memref<1x256xf32, #tpu.memory_space<vmem>>, %arg14: memref<8x256xf32, #tpu.memory_space<vmem>>, %arg15: memref<512x2048xbf16, #tpu.memory_space<vmem>>, %arg16: memref<512x256xbf16, #tpu.memory_space<vmem>>, %arg17: memref<256x128xbf16, #tpu.memory_space<vmem>>, %arg18: memref<128x512xbf16, #tpu.memory_space<vmem>>, %arg19: memref<512x640xbf16, #tpu.memory_space<vmem>>, %arg20: memref<640x256xbf16, #tpu.memory_space<vmem>>, %arg21: memref<6x!tpu.dma_semaphore, #tpu.memory_space<semaphore_mem>>) attributes {dimension_semantics = [], scalar_prefetch = 0 : i64, scratch_operands = 7 : i64, tpu.core_type = #tpu.core_type<tc>} {
    %c0_i32 = arith.constant 0 : i32
    %0 = tpu.memref_slice %arg21[%c0_i32] : memref<6x!tpu.dma_semaphore, #tpu.memory_space<semaphore_mem>> -> memref<1x!tpu.dma_semaphore, #tpu.memory_space<semaphore_mem>>
    %1 = tpu.memref_squeeze %0 : memref<1x!tpu.dma_semaphore, #tpu.memory_space<semaphore_mem>> -> memref<!tpu.dma_semaphore, #tpu.memory_space<semaphore_mem>>
    tpu.enqueue_dma source(%arg3 : memref<512x2048xbf16, #tpu.memory_space<any>>) target(%arg15 : memref<512x2048xbf16, #tpu.memory_space<vmem>>) target_semaphore(%1 : memref<!tpu.dma_semaphore, #tpu.memory_space<semaphore_mem>>)
    %c0 = arith.constant 0 : index
    %c0_0 = arith.constant 0 : index
    %2 = vector.load %arg0[%c0, %c0_0] : memref<64x256xf32, #tpu.memory_space<vmem>>, vector<64x256xf32>
    %3 = arith.truncf %2 : vector<64x256xf32> to vector<64x256xbf16>
    %c0_1 = arith.constant 0 : index
    %c0_2 = arith.constant 0 : index
    %4 = vector.load %arg1[%c0_1, %c0_2] : memref<256x2048xbf16, #tpu.memory_space<vmem>>, vector<256x2048xbf16>
    %cst = arith.constant dense<0.000000e+00> : vector<64x2048xf32>
    %5 = tpu.matmul %3, %4, %cst {dimension_numbers = #tpu.dot_dimension_numbers<[1], [0], [0], [1], [0, 0, 1, 1], [], []>} : vector<64x256xbf16>, vector<256x2048xbf16>, vector<64x2048xf32> -> vector<64x2048xf32>
    %c0_3 = arith.constant 0 : index
    %c0_4 = arith.constant 0 : index
    %6 = vector.load %arg2[%c0_3, %c0_4] : memref<1x2048xf32, #tpu.memory_space<vmem>>, vector<1x2048xf32>
    %7 = vector.broadcast %6 : vector<1x2048xf32> to vector<64x2048xf32>
    %8 = arith.addf %5, %7 : vector<64x2048xf32>
    %c1_i32 = arith.constant 1 : i32
    %9 = tpu.memref_slice %arg21[%c1_i32] : memref<6x!tpu.dma_semaphore, #tpu.memory_space<semaphore_mem>> -> memref<1x!tpu.dma_semaphore, #tpu.memory_space<semaphore_mem>>
    %10 = tpu.memref_squeeze %9 : memref<1x!tpu.dma_semaphore, #tpu.memory_space<semaphore_mem>> -> memref<!tpu.dma_semaphore, #tpu.memory_space<semaphore_mem>>
    tpu.enqueue_dma source(%arg4 : memref<512x256xbf16, #tpu.memory_space<any>>) target(%arg16 : memref<512x256xbf16, #tpu.memory_space<vmem>>) target_semaphore(%10 : memref<!tpu.dma_semaphore, #tpu.memory_space<semaphore_mem>>)
    %c2_i32 = arith.constant 2 : i32
    %11 = tpu.memref_slice %arg21[%c2_i32] : memref<6x!tpu.dma_semaphore, #tpu.memory_space<semaphore_mem>> -> memref<1x!tpu.dma_semaphore, #tpu.memory_space<semaphore_mem>>
    %12 = tpu.memref_squeeze %11 : memref<1x!tpu.dma_semaphore, #tpu.memory_space<semaphore_mem>> -> memref<!tpu.dma_semaphore, #tpu.memory_space<semaphore_mem>>
    tpu.enqueue_dma source(%arg5 : memref<256x128xbf16, #tpu.memory_space<any>>) target(%arg17 : memref<256x128xbf16, #tpu.memory_space<vmem>>) target_semaphore(%12 : memref<!tpu.dma_semaphore, #tpu.memory_space<semaphore_mem>>)
    %c3_i32 = arith.constant 3 : i32
    %13 = tpu.memref_slice %arg21[%c3_i32] : memref<6x!tpu.dma_semaphore, #tpu.memory_space<semaphore_mem>> -> memref<1x!tpu.dma_semaphore, #tpu.memory_space<semaphore_mem>>
    %14 = tpu.memref_squeeze %13 : memref<1x!tpu.dma_semaphore, #tpu.memory_space<semaphore_mem>> -> memref<!tpu.dma_semaphore, #tpu.memory_space<semaphore_mem>>
    tpu.enqueue_dma source(%arg6 : memref<128x512xbf16, #tpu.memory_space<any>>) target(%arg18 : memref<128x512xbf16, #tpu.memory_space<vmem>>) target_semaphore(%14 : memref<!tpu.dma_semaphore, #tpu.memory_space<semaphore_mem>>)
    %c4_i32 = arith.constant 4 : i32
    %15 = tpu.memref_slice %arg21[%c4_i32] : memref<6x!tpu.dma_semaphore, #tpu.memory_space<semaphore_mem>> -> memref<1x!tpu.dma_semaphore, #tpu.memory_space<semaphore_mem>>
    %16 = tpu.memref_squeeze %15 : memref<1x!tpu.dma_semaphore, #tpu.memory_space<semaphore_mem>> -> memref<!tpu.dma_semaphore, #tpu.memory_space<semaphore_mem>>
    tpu.enqueue_dma source(%arg7 : memref<512x640xbf16, #tpu.memory_space<any>>) target(%arg19 : memref<512x640xbf16, #tpu.memory_space<vmem>>) target_semaphore(%16 : memref<!tpu.dma_semaphore, #tpu.memory_space<semaphore_mem>>)
    %c5_i32 = arith.constant 5 : i32
    %17 = tpu.memref_slice %arg21[%c5_i32] : memref<6x!tpu.dma_semaphore, #tpu.memory_space<semaphore_mem>> -> memref<1x!tpu.dma_semaphore, #tpu.memory_space<semaphore_mem>>
    %18 = tpu.memref_squeeze %17 : memref<1x!tpu.dma_semaphore, #tpu.memory_space<semaphore_mem>> -> memref<!tpu.dma_semaphore, #tpu.memory_space<semaphore_mem>>
    tpu.enqueue_dma source(%arg8 : memref<640x256xbf16, #tpu.memory_space<any>>) target(%arg20 : memref<640x256xbf16, #tpu.memory_space<vmem>>) target_semaphore(%18 : memref<!tpu.dma_semaphore, #tpu.memory_space<semaphore_mem>>)
    %c0_i32_5 = arith.constant 0 : i32
    %19 = tpu.memref_slice %arg21[%c0_i32_5] : memref<6x!tpu.dma_semaphore, #tpu.memory_space<semaphore_mem>> -> memref<1x!tpu.dma_semaphore, #tpu.memory_space<semaphore_mem>>
    %20 = tpu.memref_squeeze %19 : memref<1x!tpu.dma_semaphore, #tpu.memory_space<semaphore_mem>> -> memref<!tpu.dma_semaphore, #tpu.memory_space<semaphore_mem>>
    tpu.wait_dma2 semaphore(%20 : memref<!tpu.dma_semaphore, #tpu.memory_space<semaphore_mem>>) src(%arg3 : memref<512x2048xbf16, #tpu.memory_space<any>>) dst(%arg15 : memref<512x2048xbf16, #tpu.memory_space<vmem>>)
    %cst_6 = arith.constant 0.000000e+00 : f32
    %21 = vector.broadcast %cst_6 : f32 to vector<8x512xf32>
    %cst_7 = arith.constant 0.000000e+00 : f32
    %22 = vector.broadcast %cst_7 : f32 to vector<8x512xf32>
    %23 = vector.extract_strided_slice %8 {offsets = [0, 0], sizes = [8, 2048], strides = [1, 1]} : vector<64x2048xf32> to vector<8x2048xf32>
    %24 = arith.truncf %21 : vector<8x512xf32> to vector<8x512xbf16>
    %c0_8 = arith.constant 0 : index
    %c0_9 = arith.constant 0 : index
    %25 = vector.load %arg15[%c0_8, %c0_9] : memref<512x2048xbf16, #tpu.memory_space<vmem>>, vector<512x2048xbf16>
    %cst_10 = arith.constant dense<0.000000e+00> : vector<8x2048xf32>
    %26 = tpu.matmul %24, %25, %cst_10 {dimension_numbers = #tpu.dot_dimension_numbers<[1], [0], [0], [1], [0, 0, 1, 1], [], []>} : vector<8x512xbf16>, vector<512x2048xbf16>, vector<8x2048xf32> -> vector<8x2048xf32>
    %27 = arith.addf %23, %26 : vector<8x2048xf32>
    %28 = vector.extract_strided_slice %27 {offsets = [0, 0], sizes = [8, 512], strides = [1, 1]} : vector<8x2048xf32> to vector<8x512xf32>
    %29 = arith.negf %28 : vector<8x512xf32>
    %30 = math.exp %29 : vector<8x512xf32>
    %cst_11 = arith.constant 1.000000e+00 : f32
    %31 = vector.broadcast %cst_11 : f32 to vector<8x512xf32>
    %32 = arith.addf %31, %30 : vector<8x512xf32>
    %33 = arith.divf %31, %32 : vector<8x512xf32>
    %34 = vector.extract_strided_slice %27 {offsets = [0, 512], sizes = [8, 512], strides = [1, 1]} : vector<8x2048xf32> to vector<8x512xf32>
    %35 = arith.negf %34 : vector<8x512xf32>
    %36 = math.exp %35 : vector<8x512xf32>
    %cst_12 = arith.constant 1.000000e+00 : f32
    %37 = vector.broadcast %cst_12 : f32 to vector<8x512xf32>
    %38 = arith.addf %37, %36 : vector<8x512xf32>
    %39 = arith.divf %37, %38 : vector<8x512xf32>
    %40 = vector.extract_strided_slice %27 {offsets = [0, 1024], sizes = [8, 512], strides = [1, 1]} : vector<8x2048xf32> to vector<8x512xf32>
    %41 = math.tanh %40 : vector<8x512xf32>
    %42 = vector.extract_strided_slice %27 {offsets = [0, 1536], sizes = [8, 512], strides = [1, 1]} : vector<8x2048xf32> to vector<8x512xf32>
    %43 = arith.negf %42 : vector<8x512xf32>
    %44 = math.exp %43 : vector<8x512xf32>
    %cst_13 = arith.constant 1.000000e+00 : f32
    %45 = vector.broadcast %cst_13 : f32 to vector<8x512xf32>
    %46 = arith.addf %45, %44 : vector<8x512xf32>
    %47 = arith.divf %45, %46 : vector<8x512xf32>
    %48 = arith.mulf %39, %22 : vector<8x512xf32>
    %49 = arith.mulf %33, %41 : vector<8x512xf32>
    %50 = arith.addf %48, %49 : vector<8x512xf32>
    %51 = math.tanh %50 : vector<8x512xf32>
    %52 = arith.mulf %47, %51 : vector<8x512xf32>
    %53 = vector.extract_strided_slice %8 {offsets = [8, 0], sizes = [8, 2048], strides = [1, 1]} : vector<64x2048xf32> to vector<8x2048xf32>
    %54 = arith.truncf %52 : vector<8x512xf32> to vector<8x512xbf16>
    %c0_14 = arith.constant 0 : index
    %c0_15 = arith.constant 0 : index
    %55 = vector.load %arg15[%c0_14, %c0_15] : memref<512x2048xbf16, #tpu.memory_space<vmem>>, vector<512x2048xbf16>
    %cst_16 = arith.constant dense<0.000000e+00> : vector<8x2048xf32>
    %56 = tpu.matmul %54, %55, %cst_16 {dimension_numbers = #tpu.dot_dimension_numbers<[1], [0], [0], [1], [0, 0, 1, 1], [], []>} : vector<8x512xbf16>, vector<512x2048xbf16>, vector<8x2048xf32> -> vector<8x2048xf32>
    %57 = arith.addf %53, %56 : vector<8x2048xf32>
    %58 = vector.extract_strided_slice %57 {offsets = [0, 0], sizes = [8, 512], strides = [1, 1]} : vector<8x2048xf32> to vector<8x512xf32>
    %59 = arith.negf %58 : vector<8x512xf32>
    %60 = math.exp %59 : vector<8x512xf32>
    %cst_17 = arith.constant 1.000000e+00 : f32
    %61 = vector.broadcast %cst_17 : f32 to vector<8x512xf32>
    %62 = arith.addf %61, %60 : vector<8x512xf32>
    %63 = arith.divf %61, %62 : vector<8x512xf32>
    %64 = vector.extract_strided_slice %57 {offsets = [0, 512], sizes = [8, 512], strides = [1, 1]} : vector<8x2048xf32> to vector<8x512xf32>
    %65 = arith.negf %64 : vector<8x512xf32>
    %66 = math.exp %65 : vector<8x512xf32>
    %cst_18 = arith.constant 1.000000e+00 : f32
    %67 = vector.broadcast %cst_18 : f32 to vector<8x512xf32>
    %68 = arith.addf %67, %66 : vector<8x512xf32>
    %69 = arith.divf %67, %68 : vector<8x512xf32>
    %70 = vector.extract_strided_slice %57 {offsets = [0, 1024], sizes = [8, 512], strides = [1, 1]} : vector<8x2048xf32> to vector<8x512xf32>
    %71 = math.tanh %70 : vector<8x512xf32>
    %72 = vector.extract_strided_slice %57 {offsets = [0, 1536], sizes = [8, 512], strides = [1, 1]} : vector<8x2048xf32> to vector<8x512xf32>
    %73 = arith.negf %72 : vector<8x512xf32>
    %74 = math.exp %73 : vector<8x512xf32>
    %cst_19 = arith.constant 1.000000e+00 : f32
    %75 = vector.broadcast %cst_19 : f32 to vector<8x512xf32>
    %76 = arith.addf %75, %74 : vector<8x512xf32>
    %77 = arith.divf %75, %76 : vector<8x512xf32>
    %78 = arith.mulf %69, %50 : vector<8x512xf32>
    %79 = arith.mulf %63, %71 : vector<8x512xf32>
    %80 = arith.addf %78, %79 : vector<8x512xf32>
    %81 = math.tanh %80 : vector<8x512xf32>
    %82 = arith.mulf %77, %81 : vector<8x512xf32>
    %83 = vector.extract_strided_slice %8 {offsets = [16, 0], sizes = [8, 2048], strides = [1, 1]} : vector<64x2048xf32> to vector<8x2048xf32>
    %84 = arith.truncf %82 : vector<8x512xf32> to vector<8x512xbf16>
    %c0_20 = arith.constant 0 : index
    %c0_21 = arith.constant 0 : index
    %85 = vector.load %arg15[%c0_20, %c0_21] : memref<512x2048xbf16, #tpu.memory_space<vmem>>, vector<512x2048xbf16>
    %cst_22 = arith.constant dense<0.000000e+00> : vector<8x2048xf32>
    %86 = tpu.matmul %84, %85, %cst_22 {dimension_numbers = #tpu.dot_dimension_numbers<[1], [0], [0], [1], [0, 0, 1, 1], [], []>} : vector<8x512xbf16>, vector<512x2048xbf16>, vector<8x2048xf32> -> vector<8x2048xf32>
    %87 = arith.addf %83, %86 : vector<8x2048xf32>
    %88 = vector.extract_strided_slice %87 {offsets = [0, 0], sizes = [8, 512], strides = [1, 1]} : vector<8x2048xf32> to vector<8x512xf32>
    %89 = arith.negf %88 : vector<8x512xf32>
    %90 = math.exp %89 : vector<8x512xf32>
    %cst_23 = arith.constant 1.000000e+00 : f32
    %91 = vector.broadcast %cst_23 : f32 to vector<8x512xf32>
    %92 = arith.addf %91, %90 : vector<8x512xf32>
    %93 = arith.divf %91, %92 : vector<8x512xf32>
    %94 = vector.extract_strided_slice %87 {offsets = [0, 512], sizes = [8, 512], strides = [1, 1]} : vector<8x2048xf32> to vector<8x512xf32>
    %95 = arith.negf %94 : vector<8x512xf32>
    %96 = math.exp %95 : vector<8x512xf32>
    %cst_24 = arith.constant 1.000000e+00 : f32
    %97 = vector.broadcast %cst_24 : f32 to vector<8x512xf32>
    %98 = arith.addf %97, %96 : vector<8x512xf32>
    %99 = arith.divf %97, %98 : vector<8x512xf32>
    %100 = vector.extract_strided_slice %87 {offsets = [0, 1024], sizes = [8, 512], strides = [1, 1]} : vector<8x2048xf32> to vector<8x512xf32>
    %101 = math.tanh %100 : vector<8x512xf32>
    %102 = vector.extract_strided_slice %87 {offsets = [0, 1536], sizes = [8, 512], strides = [1, 1]} : vector<8x2048xf32> to vector<8x512xf32>
    %103 = arith.negf %102 : vector<8x512xf32>
    %104 = math.exp %103 : vector<8x512xf32>
    %cst_25 = arith.constant 1.000000e+00 : f32
    %105 = vector.broadcast %cst_25 : f32 to vector<8x512xf32>
    %106 = arith.addf %105, %104 : vector<8x512xf32>
    %107 = arith.divf %105, %106 : vector<8x512xf32>
    %108 = arith.mulf %99, %80 : vector<8x512xf32>
    %109 = arith.mulf %93, %101 : vector<8x512xf32>
    %110 = arith.addf %108, %109 : vector<8x512xf32>
    %111 = math.tanh %110 : vector<8x512xf32>
    %112 = arith.mulf %107, %111 : vector<8x512xf32>
    %113 = vector.extract_strided_slice %8 {offsets = [24, 0], sizes = [8, 2048], strides = [1, 1]} : vector<64x2048xf32> to vector<8x2048xf32>
    %114 = arith.truncf %112 : vector<8x512xf32> to vector<8x512xbf16>
    %c0_26 = arith.constant 0 : index
    %c0_27 = arith.constant 0 : index
    %115 = vector.load %arg15[%c0_26, %c0_27] : memref<512x2048xbf16, #tpu.memory_space<vmem>>, vector<512x2048xbf16>
    %cst_28 = arith.constant dense<0.000000e+00> : vector<8x2048xf32>
    %116 = tpu.matmul %114, %115, %cst_28 {dimension_numbers = #tpu.dot_dimension_numbers<[1], [0], [0], [1], [0, 0, 1, 1], [], []>} : vector<8x512xbf16>, vector<512x2048xbf16>, vector<8x2048xf32> -> vector<8x2048xf32>
    %117 = arith.addf %113, %116 : vector<8x2048xf32>
    %118 = vector.extract_strided_slice %117 {offsets = [0, 0], sizes = [8, 512], strides = [1, 1]} : vector<8x2048xf32> to vector<8x512xf32>
    %119 = arith.negf %118 : vector<8x512xf32>
    %120 = math.exp %119 : vector<8x512xf32>
    %cst_29 = arith.constant 1.000000e+00 : f32
    %121 = vector.broadcast %cst_29 : f32 to vector<8x512xf32>
    %122 = arith.addf %121, %120 : vector<8x512xf32>
    %123 = arith.divf %121, %122 : vector<8x512xf32>
    %124 = vector.extract_strided_slice %117 {offsets = [0, 512], sizes = [8, 512], strides = [1, 1]} : vector<8x2048xf32> to vector<8x512xf32>
    %125 = arith.negf %124 : vector<8x512xf32>
    %126 = math.exp %125 : vector<8x512xf32>
    %cst_30 = arith.constant 1.000000e+00 : f32
    %127 = vector.broadcast %cst_30 : f32 to vector<8x512xf32>
    %128 = arith.addf %127, %126 : vector<8x512xf32>
    %129 = arith.divf %127, %128 : vector<8x512xf32>
    %130 = vector.extract_strided_slice %117 {offsets = [0, 1024], sizes = [8, 512], strides = [1, 1]} : vector<8x2048xf32> to vector<8x512xf32>
    %131 = math.tanh %130 : vector<8x512xf32>
    %132 = vector.extract_strided_slice %117 {offsets = [0, 1536], sizes = [8, 512], strides = [1, 1]} : vector<8x2048xf32> to vector<8x512xf32>
    %133 = arith.negf %132 : vector<8x512xf32>
    %134 = math.exp %133 : vector<8x512xf32>
    %cst_31 = arith.constant 1.000000e+00 : f32
    %135 = vector.broadcast %cst_31 : f32 to vector<8x512xf32>
    %136 = arith.addf %135, %134 : vector<8x512xf32>
    %137 = arith.divf %135, %136 : vector<8x512xf32>
    %138 = arith.mulf %129, %110 : vector<8x512xf32>
    %139 = arith.mulf %123, %131 : vector<8x512xf32>
    %140 = arith.addf %138, %139 : vector<8x512xf32>
    %141 = math.tanh %140 : vector<8x512xf32>
    %142 = arith.mulf %137, %141 : vector<8x512xf32>
    %143 = vector.extract_strided_slice %8 {offsets = [32, 0], sizes = [8, 2048], strides = [1, 1]} : vector<64x2048xf32> to vector<8x2048xf32>
    %144 = arith.truncf %142 : vector<8x512xf32> to vector<8x512xbf16>
    %c0_32 = arith.constant 0 : index
    %c0_33 = arith.constant 0 : index
    %145 = vector.load %arg15[%c0_32, %c0_33] : memref<512x2048xbf16, #tpu.memory_space<vmem>>, vector<512x2048xbf16>
    %cst_34 = arith.constant dense<0.000000e+00> : vector<8x2048xf32>
    %146 = tpu.matmul %144, %145, %cst_34 {dimension_numbers = #tpu.dot_dimension_numbers<[1], [0], [0], [1], [0, 0, 1, 1], [], []>} : vector<8x512xbf16>, vector<512x2048xbf16>, vector<8x2048xf32> -> vector<8x2048xf32>
    %147 = arith.addf %143, %146 : vector<8x2048xf32>
    %148 = vector.extract_strided_slice %147 {offsets = [0, 0], sizes = [8, 512], strides = [1, 1]} : vector<8x2048xf32> to vector<8x512xf32>
    %149 = arith.negf %148 : vector<8x512xf32>
    %150 = math.exp %149 : vector<8x512xf32>
    %cst_35 = arith.constant 1.000000e+00 : f32
    %151 = vector.broadcast %cst_35 : f32 to vector<8x512xf32>
    %152 = arith.addf %151, %150 : vector<8x512xf32>
    %153 = arith.divf %151, %152 : vector<8x512xf32>
    %154 = vector.extract_strided_slice %147 {offsets = [0, 512], sizes = [8, 512], strides = [1, 1]} : vector<8x2048xf32> to vector<8x512xf32>
    %155 = arith.negf %154 : vector<8x512xf32>
    %156 = math.exp %155 : vector<8x512xf32>
    %cst_36 = arith.constant 1.000000e+00 : f32
    %157 = vector.broadcast %cst_36 : f32 to vector<8x512xf32>
    %158 = arith.addf %157, %156 : vector<8x512xf32>
    %159 = arith.divf %157, %158 : vector<8x512xf32>
    %160 = vector.extract_strided_slice %147 {offsets = [0, 1024], sizes = [8, 512], strides = [1, 1]} : vector<8x2048xf32> to vector<8x512xf32>
    %161 = math.tanh %160 : vector<8x512xf32>
    %162 = vector.extract_strided_slice %147 {offsets = [0, 1536], sizes = [8, 512], strides = [1, 1]} : vector<8x2048xf32> to vector<8x512xf32>
    %163 = arith.negf %162 : vector<8x512xf32>
    %164 = math.exp %163 : vector<8x512xf32>
    %cst_37 = arith.constant 1.000000e+00 : f32
    %165 = vector.broadcast %cst_37 : f32 to vector<8x512xf32>
    %166 = arith.addf %165, %164 : vector<8x512xf32>
    %167 = arith.divf %165, %166 : vector<8x512xf32>
    %168 = arith.mulf %159, %140 : vector<8x512xf32>
    %169 = arith.mulf %153, %161 : vector<8x512xf32>
    %170 = arith.addf %168, %169 : vector<8x512xf32>
    %171 = math.tanh %170 : vector<8x512xf32>
    %172 = arith.mulf %167, %171 : vector<8x512xf32>
    %173 = vector.extract_strided_slice %8 {offsets = [40, 0], sizes = [8, 2048], strides = [1, 1]} : vector<64x2048xf32> to vector<8x2048xf32>
    %174 = arith.truncf %172 : vector<8x512xf32> to vector<8x512xbf16>
    %c0_38 = arith.constant 0 : index
    %c0_39 = arith.constant 0 : index
    %175 = vector.load %arg15[%c0_38, %c0_39] : memref<512x2048xbf16, #tpu.memory_space<vmem>>, vector<512x2048xbf16>
    %cst_40 = arith.constant dense<0.000000e+00> : vector<8x2048xf32>
    %176 = tpu.matmul %174, %175, %cst_40 {dimension_numbers = #tpu.dot_dimension_numbers<[1], [0], [0], [1], [0, 0, 1, 1], [], []>} : vector<8x512xbf16>, vector<512x2048xbf16>, vector<8x2048xf32> -> vector<8x2048xf32>
    %177 = arith.addf %173, %176 : vector<8x2048xf32>
    %178 = vector.extract_strided_slice %177 {offsets = [0, 0], sizes = [8, 512], strides = [1, 1]} : vector<8x2048xf32> to vector<8x512xf32>
    %179 = arith.negf %178 : vector<8x512xf32>
    %180 = math.exp %179 : vector<8x512xf32>
    %cst_41 = arith.constant 1.000000e+00 : f32
    %181 = vector.broadcast %cst_41 : f32 to vector<8x512xf32>
    %182 = arith.addf %181, %180 : vector<8x512xf32>
    %183 = arith.divf %181, %182 : vector<8x512xf32>
    %184 = vector.extract_strided_slice %177 {offsets = [0, 512], sizes = [8, 512], strides = [1, 1]} : vector<8x2048xf32> to vector<8x512xf32>
    %185 = arith.negf %184 : vector<8x512xf32>
    %186 = math.exp %185 : vector<8x512xf32>
    %cst_42 = arith.constant 1.000000e+00 : f32
    %187 = vector.broadcast %cst_42 : f32 to vector<8x512xf32>
    %188 = arith.addf %187, %186 : vector<8x512xf32>
    %189 = arith.divf %187, %188 : vector<8x512xf32>
    %190 = vector.extract_strided_slice %177 {offsets = [0, 1024], sizes = [8, 512], strides = [1, 1]} : vector<8x2048xf32> to vector<8x512xf32>
    %191 = math.tanh %190 : vector<8x512xf32>
    %192 = vector.extract_strided_slice %177 {offsets = [0, 1536], sizes = [8, 512], strides = [1, 1]} : vector<8x2048xf32> to vector<8x512xf32>
    %193 = arith.negf %192 : vector<8x512xf32>
    %194 = math.exp %193 : vector<8x512xf32>
    %cst_43 = arith.constant 1.000000e+00 : f32
    %195 = vector.broadcast %cst_43 : f32 to vector<8x512xf32>
    %196 = arith.addf %195, %194 : vector<8x512xf32>
    %197 = arith.divf %195, %196 : vector<8x512xf32>
    %198 = arith.mulf %189, %170 : vector<8x512xf32>
    %199 = arith.mulf %183, %191 : vector<8x512xf32>
    %200 = arith.addf %198, %199 : vector<8x512xf32>
    %201 = math.tanh %200 : vector<8x512xf32>
    %202 = arith.mulf %197, %201 : vector<8x512xf32>
    %203 = vector.extract_strided_slice %8 {offsets = [48, 0], sizes = [8, 2048], strides = [1, 1]} : vector<64x2048xf32> to vector<8x2048xf32>
    %204 = arith.truncf %202 : vector<8x512xf32> to vector<8x512xbf16>
    %c0_44 = arith.constant 0 : index
    %c0_45 = arith.constant 0 : index
    %205 = vector.load %arg15[%c0_44, %c0_45] : memref<512x2048xbf16, #tpu.memory_space<vmem>>, vector<512x2048xbf16>
    %cst_46 = arith.constant dense<0.000000e+00> : vector<8x2048xf32>
    %206 = tpu.matmul %204, %205, %cst_46 {dimension_numbers = #tpu.dot_dimension_numbers<[1], [0], [0], [1], [0, 0, 1, 1], [], []>} : vector<8x512xbf16>, vector<512x2048xbf16>, vector<8x2048xf32> -> vector<8x2048xf32>
    %207 = arith.addf %203, %206 : vector<8x2048xf32>
    %208 = vector.extract_strided_slice %207 {offsets = [0, 0], sizes = [8, 512], strides = [1, 1]} : vector<8x2048xf32> to vector<8x512xf32>
    %209 = arith.negf %208 : vector<8x512xf32>
    %210 = math.exp %209 : vector<8x512xf32>
    %cst_47 = arith.constant 1.000000e+00 : f32
    %211 = vector.broadcast %cst_47 : f32 to vector<8x512xf32>
    %212 = arith.addf %211, %210 : vector<8x512xf32>
    %213 = arith.divf %211, %212 : vector<8x512xf32>
    %214 = vector.extract_strided_slice %207 {offsets = [0, 512], sizes = [8, 512], strides = [1, 1]} : vector<8x2048xf32> to vector<8x512xf32>
    %215 = arith.negf %214 : vector<8x512xf32>
    %216 = math.exp %215 : vector<8x512xf32>
    %cst_48 = arith.constant 1.000000e+00 : f32
    %217 = vector.broadcast %cst_48 : f32 to vector<8x512xf32>
    %218 = arith.addf %217, %216 : vector<8x512xf32>
    %219 = arith.divf %217, %218 : vector<8x512xf32>
    %220 = vector.extract_strided_slice %207 {offsets = [0, 1024], sizes = [8, 512], strides = [1, 1]} : vector<8x2048xf32> to vector<8x512xf32>
    %221 = math.tanh %220 : vector<8x512xf32>
    %222 = vector.extract_strided_slice %207 {offsets = [0, 1536], sizes = [8, 512], strides = [1, 1]} : vector<8x2048xf32> to vector<8x512xf32>
    %223 = arith.negf %222 : vector<8x512xf32>
    %224 = math.exp %223 : vector<8x512xf32>
    %cst_49 = arith.constant 1.000000e+00 : f32
    %225 = vector.broadcast %cst_49 : f32 to vector<8x512xf32>
    %226 = arith.addf %225, %224 : vector<8x512xf32>
    %227 = arith.divf %225, %226 : vector<8x512xf32>
    %228 = arith.mulf %219, %200 : vector<8x512xf32>
    %229 = arith.mulf %213, %221 : vector<8x512xf32>
    %230 = arith.addf %228, %229 : vector<8x512xf32>
    %231 = math.tanh %230 : vector<8x512xf32>
    %232 = arith.mulf %227, %231 : vector<8x512xf32>
    %233 = vector.extract_strided_slice %8 {offsets = [56, 0], sizes = [8, 2048], strides = [1, 1]} : vector<64x2048xf32> to vector<8x2048xf32>
    %234 = arith.truncf %232 : vector<8x512xf32> to vector<8x512xbf16>
    %c0_50 = arith.constant 0 : index
    %c0_51 = arith.constant 0 : index
    %235 = vector.load %arg15[%c0_50, %c0_51] : memref<512x2048xbf16, #tpu.memory_space<vmem>>, vector<512x2048xbf16>
    %cst_52 = arith.constant dense<0.000000e+00> : vector<8x2048xf32>
    %236 = tpu.matmul %234, %235, %cst_52 {dimension_numbers = #tpu.dot_dimension_numbers<[1], [0], [0], [1], [0, 0, 1, 1], [], []>} : vector<8x512xbf16>, vector<512x2048xbf16>, vector<8x2048xf32> -> vector<8x2048xf32>
    %237 = arith.addf %233, %236 : vector<8x2048xf32>
    %238 = vector.extract_strided_slice %237 {offsets = [0, 0], sizes = [8, 512], strides = [1, 1]} : vector<8x2048xf32> to vector<8x512xf32>
    %239 = arith.negf %238 : vector<8x512xf32>
    %240 = math.exp %239 : vector<8x512xf32>
    %cst_53 = arith.constant 1.000000e+00 : f32
    %241 = vector.broadcast %cst_53 : f32 to vector<8x512xf32>
    %242 = arith.addf %241, %240 : vector<8x512xf32>
    %243 = arith.divf %241, %242 : vector<8x512xf32>
    %244 = vector.extract_strided_slice %237 {offsets = [0, 512], sizes = [8, 512], strides = [1, 1]} : vector<8x2048xf32> to vector<8x512xf32>
    %245 = arith.negf %244 : vector<8x512xf32>
    %246 = math.exp %245 : vector<8x512xf32>
    %cst_54 = arith.constant 1.000000e+00 : f32
    %247 = vector.broadcast %cst_54 : f32 to vector<8x512xf32>
    %248 = arith.addf %247, %246 : vector<8x512xf32>
    %249 = arith.divf %247, %248 : vector<8x512xf32>
    %250 = vector.extract_strided_slice %237 {offsets = [0, 1024], sizes = [8, 512], strides = [1, 1]} : vector<8x2048xf32> to vector<8x512xf32>
    %251 = math.tanh %250 : vector<8x512xf32>
    %252 = vector.extract_strided_slice %237 {offsets = [0, 1536], sizes = [8, 512], strides = [1, 1]} : vector<8x2048xf32> to vector<8x512xf32>
    %253 = arith.negf %252 : vector<8x512xf32>
    %254 = math.exp %253 : vector<8x512xf32>
    %cst_55 = arith.constant 1.000000e+00 : f32
    %255 = vector.broadcast %cst_55 : f32 to vector<8x512xf32>
    %256 = arith.addf %255, %254 : vector<8x512xf32>
    %257 = arith.divf %255, %256 : vector<8x512xf32>
    %258 = arith.mulf %249, %230 : vector<8x512xf32>
    %259 = arith.mulf %243, %251 : vector<8x512xf32>
    %260 = arith.addf %258, %259 : vector<8x512xf32>
    %261 = math.tanh %260 : vector<8x512xf32>
    %262 = arith.mulf %257, %261 : vector<8x512xf32>
    %c1_i32_56 = arith.constant 1 : i32
    %263 = tpu.memref_slice %arg21[%c1_i32_56] : memref<6x!tpu.dma_semaphore, #tpu.memory_space<semaphore_mem>> -> memref<1x!tpu.dma_semaphore, #tpu.memory_space<semaphore_mem>>
    %264 = tpu.memref_squeeze %263 : memref<1x!tpu.dma_semaphore, #tpu.memory_space<semaphore_mem>> -> memref<!tpu.dma_semaphore, #tpu.memory_space<semaphore_mem>>
    tpu.wait_dma2 semaphore(%264 : memref<!tpu.dma_semaphore, #tpu.memory_space<semaphore_mem>>) src(%arg4 : memref<512x256xbf16, #tpu.memory_space<any>>) dst(%arg16 : memref<512x256xbf16, #tpu.memory_space<vmem>>)
    %c2_i32_57 = arith.constant 2 : i32
    %265 = tpu.memref_slice %arg21[%c2_i32_57] : memref<6x!tpu.dma_semaphore, #tpu.memory_space<semaphore_mem>> -> memref<1x!tpu.dma_semaphore, #tpu.memory_space<semaphore_mem>>
    %266 = tpu.memref_squeeze %265 : memref<1x!tpu.dma_semaphore, #tpu.memory_space<semaphore_mem>> -> memref<!tpu.dma_semaphore, #tpu.memory_space<semaphore_mem>>
    tpu.wait_dma2 semaphore(%266 : memref<!tpu.dma_semaphore, #tpu.memory_space<semaphore_mem>>) src(%arg5 : memref<256x128xbf16, #tpu.memory_space<any>>) dst(%arg17 : memref<256x128xbf16, #tpu.memory_space<vmem>>)
    %c3_i32_58 = arith.constant 3 : i32
    %267 = tpu.memref_slice %arg21[%c3_i32_58] : memref<6x!tpu.dma_semaphore, #tpu.memory_space<semaphore_mem>> -> memref<1x!tpu.dma_semaphore, #tpu.memory_space<semaphore_mem>>
    %268 = tpu.memref_squeeze %267 : memref<1x!tpu.dma_semaphore, #tpu.memory_space<semaphore_mem>> -> memref<!tpu.dma_semaphore, #tpu.memory_space<semaphore_mem>>
    tpu.wait_dma2 semaphore(%268 : memref<!tpu.dma_semaphore, #tpu.memory_space<semaphore_mem>>) src(%arg6 : memref<128x512xbf16, #tpu.memory_space<any>>) dst(%arg18 : memref<128x512xbf16, #tpu.memory_space<vmem>>)
    %c4_i32_59 = arith.constant 4 : i32
    %269 = tpu.memref_slice %arg21[%c4_i32_59] : memref<6x!tpu.dma_semaphore, #tpu.memory_space<semaphore_mem>> -> memref<1x!tpu.dma_semaphore, #tpu.memory_space<semaphore_mem>>
    %270 = tpu.memref_squeeze %269 : memref<1x!tpu.dma_semaphore, #tpu.memory_space<semaphore_mem>> -> memref<!tpu.dma_semaphore, #tpu.memory_space<semaphore_mem>>
    tpu.wait_dma2 semaphore(%270 : memref<!tpu.dma_semaphore, #tpu.memory_space<semaphore_mem>>) src(%arg7 : memref<512x640xbf16, #tpu.memory_space<any>>) dst(%arg19 : memref<512x640xbf16, #tpu.memory_space<vmem>>)
    %c5_i32_60 = arith.constant 5 : i32
    %271 = tpu.memref_slice %arg21[%c5_i32_60] : memref<6x!tpu.dma_semaphore, #tpu.memory_space<semaphore_mem>> -> memref<1x!tpu.dma_semaphore, #tpu.memory_space<semaphore_mem>>
    %272 = tpu.memref_squeeze %271 : memref<1x!tpu.dma_semaphore, #tpu.memory_space<semaphore_mem>> -> memref<!tpu.dma_semaphore, #tpu.memory_space<semaphore_mem>>
    tpu.wait_dma2 semaphore(%272 : memref<!tpu.dma_semaphore, #tpu.memory_space<semaphore_mem>>) src(%arg8 : memref<640x256xbf16, #tpu.memory_space<any>>) dst(%arg20 : memref<640x256xbf16, #tpu.memory_space<vmem>>)
    %273 = arith.truncf %262 : vector<8x512xf32> to vector<8x512xbf16>
    %c0_61 = arith.constant 0 : index
    %c0_62 = arith.constant 0 : index
    %274 = vector.load %arg16[%c0_61, %c0_62] : memref<512x256xbf16, #tpu.memory_space<vmem>>, vector<512x256xbf16>
    %cst_63 = arith.constant dense<0.000000e+00> : vector<8x256xf32>
    %275 = tpu.matmul %273, %274, %cst_63 {dimension_numbers = #tpu.dot_dimension_numbers<[1], [0], [0], [1], [0, 0, 1, 1], [], []>} : vector<8x512xbf16>, vector<512x256xbf16>, vector<8x256xf32> -> vector<8x256xf32>
    %c0_64 = arith.constant 0 : index
    %c0_65 = arith.constant 0 : index
    %276 = vector.load %arg9[%c0_64, %c0_65] : memref<1x256xf32, #tpu.memory_space<vmem>>, vector<1x256xf32>
    %277 = vector.broadcast %276 : vector<1x256xf32> to vector<8x256xf32>
    %278 = arith.addf %275, %277 : vector<8x256xf32>
    %279 = math.tanh %278 : vector<8x256xf32>
    %280 = arith.truncf %279 : vector<8x256xf32> to vector<8x256xbf16>
    %c0_66 = arith.constant 0 : index
    %c0_67 = arith.constant 0 : index
    %281 = vector.load %arg17[%c0_66, %c0_67] : memref<256x128xbf16, #tpu.memory_space<vmem>>, vector<256x128xbf16>
    %cst_68 = arith.constant dense<0.000000e+00> : vector<8x128xf32>
    %282 = tpu.matmul %280, %281, %cst_68 {dimension_numbers = #tpu.dot_dimension_numbers<[1], [0], [0], [1], [0, 0, 1, 1], [], []>} : vector<8x256xbf16>, vector<256x128xbf16>, vector<8x128xf32> -> vector<8x128xf32>
    %c0_69 = arith.constant 0 : index
    %c0_70 = arith.constant 0 : index
    %283 = vector.load %arg10[%c0_69, %c0_70] : memref<1x128xf32, #tpu.memory_space<vmem>>, vector<1x128xf32>
    %284 = vector.broadcast %283 : vector<1x128xf32> to vector<8x128xf32>
    %285 = arith.addf %282, %284 : vector<8x128xf32>
    %286 = math.tanh %285 : vector<8x128xf32>
    %287 = arith.truncf %286 : vector<8x128xf32> to vector<8x128xbf16>
    %c0_71 = arith.constant 0 : index
    %c0_72 = arith.constant 0 : index
    %288 = vector.load %arg18[%c0_71, %c0_72] : memref<128x512xbf16, #tpu.memory_space<vmem>>, vector<128x512xbf16>
    %cst_73 = arith.constant dense<0.000000e+00> : vector<8x512xf32>
    %289 = tpu.matmul %287, %288, %cst_73 {dimension_numbers = #tpu.dot_dimension_numbers<[1], [0], [0], [1], [0, 0, 1, 1], [], []>} : vector<8x128xbf16>, vector<128x512xbf16>, vector<8x512xf32> -> vector<8x512xf32>
    %c0_74 = arith.constant 0 : index
    %c0_75 = arith.constant 0 : index
    %290 = vector.load %arg11[%c0_74, %c0_75] : memref<1x512xf32, #tpu.memory_space<vmem>>, vector<1x512xf32>
    %291 = vector.broadcast %290 : vector<1x512xf32> to vector<8x512xf32>
    %292 = arith.addf %289, %291 : vector<8x512xf32>
    %293 = math.tanh %292 : vector<8x512xf32>
    %294 = arith.truncf %293 : vector<8x512xf32> to vector<8x512xbf16>
    %c0_76 = arith.constant 0 : index
    %c0_77 = arith.constant 0 : index
    %295 = vector.load %arg19[%c0_76, %c0_77] : memref<512x640xbf16, #tpu.memory_space<vmem>>, vector<512x640xbf16>
    %cst_78 = arith.constant dense<0.000000e+00> : vector<8x640xf32>
    %296 = tpu.matmul %294, %295, %cst_78 {dimension_numbers = #tpu.dot_dimension_numbers<[1], [0], [0], [1], [0, 0, 1, 1], [], []>} : vector<8x512xbf16>, vector<512x640xbf16>, vector<8x640xf32> -> vector<8x640xf32>
    %c0_79 = arith.constant 0 : index
    %c0_80 = arith.constant 0 : index
    %297 = vector.load %arg12[%c0_79, %c0_80] : memref<1x640xf32, #tpu.memory_space<vmem>>, vector<1x640xf32>
    %298 = vector.broadcast %297 : vector<1x640xf32> to vector<8x640xf32>
    %299 = arith.addf %296, %298 : vector<8x640xf32>
    %300 = math.tanh %299 : vector<8x640xf32>
    %301 = arith.truncf %300 : vector<8x640xf32> to vector<8x640xbf16>
    %c0_81 = arith.constant 0 : index
    %c0_82 = arith.constant 0 : index
    %302 = vector.load %arg20[%c0_81, %c0_82] : memref<640x256xbf16, #tpu.memory_space<vmem>>, vector<640x256xbf16>
    %cst_83 = arith.constant dense<0.000000e+00> : vector<8x256xf32>
    %303 = tpu.matmul %301, %302, %cst_83 {dimension_numbers = #tpu.dot_dimension_numbers<[1], [0], [0], [1], [0, 0, 1, 1], [], []>} : vector<8x640xbf16>, vector<640x256xbf16>, vector<8x256xf32> -> vector<8x256xf32>
    %c0_84 = arith.constant 0 : index
    %c0_85 = arith.constant 0 : index
    %304 = vector.load %arg13[%c0_84, %c0_85] : memref<1x256xf32, #tpu.memory_space<vmem>>, vector<1x256xf32>
    %305 = vector.broadcast %304 : vector<1x256xf32> to vector<8x256xf32>
    %306 = arith.addf %303, %305 : vector<8x256xf32>
    %c0_86 = arith.constant 0 : index
    %c0_87 = arith.constant 0 : index
    %307 = vector.load %arg14[%c0_86, %c0_87] : memref<8x256xf32, #tpu.memory_space<vmem>>, vector<8x256xf32>
    tpu.vector_store %arg14[%c0_86, %c0_87], %306 {strides = array<i32>} : memref<8x256xf32, #tpu.memory_space<vmem>>, vector<8x256xf32>,
    return
  }
}

</mosaic_0001>

<llo_original>
// kernel: pure_lstm_forward.1
$region0: #{pure_lstm_forward.1}
  #allocation0 [shape = 'u32[]', space=smem, size = 0x4, offset = 0x4, fixed_abs, tag = 'smem constant byte address 0x4 - core index']
  #allocation1 [shape = 'u32[144,128]{1,0:T(1,128)}', space=vmem, size = 0x12000, scoped, tag = 'internal scratch']
  #allocation2 [shape = 'bf16[512,2048]{1,0:T(16,128)(2,1)}', space=vmem, size = 0x200000, scoped, tag = 'scratch operand']
  #allocation3 [shape = 'bf16[512,256]{1,0:T(16,128)(2,1)}', space=vmem, size = 0x40000, scoped, tag = 'scratch operand']
  #allocation4 [shape = 'bf16[256,128]{1,0:T(16,128)(2,1)}', space=vmem, size = 0x10000, scoped, tag = 'scratch operand']
  #allocation5 [shape = 'bf16[128,512]{1,0:T(16,128)(2,1)}', space=vmem, size = 0x20000, scoped, tag = 'scratch operand']
  #allocation6 [shape = 'bf16[512,640]{1,0:T(16,128)(2,1)}', space=vmem, size = 0xa0000, scoped, tag = 'scratch operand']
  #allocation7 [shape = 'bf16[640,256]{1,0:T(16,128)(2,1)}', space=vmem, size = 0x50000, scoped, tag = 'scratch operand']
  #allocation8 [shape = 's32[6]{0}', space=sflag, size = 0x18, scoped, tag = 'scratch operand']
  #allocation20 [shape = 's32[]', space=sflag, size = 0x4, offset = 0, fixed_abs, tag = 'sflag constant byte address 0x0 - dummy sync flag']
  #allocation22 [shape = 's32[]', space=sflag, size = 0x4, offset = 0, fixed_abs, tag = 'sflag constant byte address 0x0 - dummy sync flag']
  #allocation24 [shape = 's32[]', space=sflag, size = 0x4, offset = 0, fixed_abs, tag = 'sflag constant byte address 0x0 - dummy sync flag']
  #allocation25 [shape = 's32[]', space=sflag, size = 0x4, offset = 0, fixed_abs, tag = 'sflag constant byte address 0x0 - dummy sync flag']
  #allocation26 [shape = 'u32[]', space=smem, size = 0x4, offset = 0x44, fixed_abs, tag = 'smem constant byte address 0x44 - assertion arg 0']
  #allocation27 [shape = 'u32[]', space=smem, size = 0x4, offset = 0x48, fixed_abs, tag = 'smem constant byte address 0x48 - assertion arg 1']
  #allocation28 [shape = 's32[]', space=sflag, size = 0x4, offset = 0, fixed_abs, tag = 'sflag constant byte address 0x0 - dummy sync flag']
  #allocation30 [shape = 's32[]', space=sflag, size = 0x4, offset = 0, fixed_abs, tag = 'sflag constant byte address 0x0 - dummy sync flag']
  #allocation32 [shape = 's32[]', space=sflag, size = 0x4, offset = 0, fixed_abs, tag = 'sflag constant byte address 0x0 - dummy sync flag']
  %s0 = inlined_call_operand.vmem [shape: f32[64,256], index: 0, kind: input, shape index: {}]
  %s1 = inlined_call_operand.hbm [shape: bf16[256,2048], index: 1, kind: input, shape index: {}]
  %s2 = inlined_call_operand.hbm [shape: f32[1,2048], index: 2, kind: input, shape index: {}]
  %s3 = inlined_call_operand.hbm [shape: bf16[512,2048], index: 3, kind: input, shape index: {}]
  %s4 = inlined_call_operand.hbm [shape: bf16[512,256], index: 4, kind: input, shape index: {}]
  %s5 = inlined_call_operand.hbm [shape: bf16[256,128], index: 5, kind: input, shape index: {}]
  %s6 = inlined_call_operand.hbm [shape: bf16[128,512], index: 6, kind: input, shape index: {}]
  %s7 = inlined_call_operand.hbm [shape: bf16[512,640], index: 7, kind: input, shape index: {}]
  %s8 = inlined_call_operand.hbm [shape: bf16[640,256], index: 8, kind: input, shape index: {}]
  %s9 = inlined_call_operand.hbm [shape: f32[1,256], index: 9, kind: input, shape index: {}]
  %s10 = inlined_call_operand.hbm [shape: f32[1,128], index: 10, kind: input, shape index: {}]
  %s11 = inlined_call_operand.hbm [shape: f32[1,512], index: 11, kind: input, shape index: {}]
  %s12 = inlined_call_operand.hbm [shape: f32[1,640], index: 12, kind: input, shape index: {}]
  %s13 = inlined_call_operand.hbm [shape: f32[1,256], index: 13, kind: input, shape index: {}]
  %s14 = inlined_call_operand.vmem [shape: f32[8,256], index: 14, kind: output, shape index: {}]
  %s15 = sld [smem:[#allocation0]]
  $region74: #{pure_lstm_forward.1} parent=0
    _
  %s17 = ssub.s32 1, %s15
  %s18 = scalar_select 0, %s17, %s15
  $region1: #{pure_lstm_forward.1} parent=0
    #allocation9 [shape = 'u8[1048576]{0}', space=vmem, size = 0x100000, scoped, tag = 'input window, operand 1, single buffered']
    #allocation10 [shape = 's32[1]{0}', space=sflag, size = 0x4, scoped, tag = 'scoped memory for pure_lstm_forward.1']
    #allocation11 [shape = 'u8[8192]{0}', space=vmem, size = 0x2000, scoped, tag = 'input window, operand 2, single buffered']
    #allocation12 [shape = 's32[1]{0}', space=sflag, size = 0x4, scoped, tag = 'scoped memory for pure_lstm_forward.1']
    #allocation13 [shape = 'u8[1024]{0}', space=vmem, size = 0x400, scoped, tag = 'input window, operand 9, single buffered']
    #allocation14 [shape = 'u8[512]{0}', space=vmem, size = 0x400, scoped, tag = 'input window, operand 10, single buffered']
    #allocation15 [shape = 's32[1]{0}', space=sflag, size = 0x4, scoped, tag = 'scoped memory for pure_lstm_forward.1']
    #allocation16 [shape = 'u8[2048]{0}', space=vmem, size = 0x800, scoped, tag = 'input window, operand 11, single buffered']
    #allocation17 [shape = 'u8[2560]{0}', space=vmem, size = 0xc00, scoped, tag = 'input window, operand 12, single buffered']
    #allocation18 [shape = 's32[1]{0}', space=sflag, size = 0x4, scoped, tag = 'scoped memory for pure_lstm_forward.1']
    #allocation19 [shape = 'u8[1024]{0}', space=vmem, size = 0x400, scoped, tag = 'input window, operand 13, single buffered']
    #allocation21 [shape = 'u32[9]{0}', space=smem, size = 0x24, scoped, tag = 'DMA stride descriptor']
    #allocation23 [shape = 'u32[9]{0}', space=smem, size = 0x24, scoped, tag = 'DMA stride descriptor']
    #allocation29 [shape = 'u32[9]{0}', space=smem, size = 0x24, scoped, tag = 'DMA stride descriptor']
    #allocation31 [shape = 'u32[9]{0}', space=smem, size = 0x24, scoped, tag = 'DMA stride descriptor']
    #allocation33 [shape = 'u32[9]{0}', space=smem, size = 0x24, scoped, tag = 'DMA stride descriptor']
    %19 = vsyncpa [#allocation10], 0
    %20 = vsyncpa [#allocation12], 0
    %21 = vsyncpa [#allocation15], 0
    %22 = vsyncpa [#allocation18], 0
    // Predicated region
    $region2: #{pure_lstm_forward.1} parent=1 // pred_check
      _
    $region3: #{pure_lstm_forward.1} parent=1 // pred_check_branch
      %24 = sbr.rel (0) target = $region5
    $region4: #{pure_lstm_forward.1} parent=1 // pred_region
      _
    $region5: #{pure_lstm_forward.1} parent=1 // pred_fallthru
      _
    // Predicated region
    $region6: #{pure_lstm_forward.1} parent=1 // pred_check
      _
    $region7: #{pure_lstm_forward.1} parent=1 // pred_check_branch
      %26 = sbr.rel (0) target = $region9
    $region8: #{pure_lstm_forward.1} parent=1 // pred_region
      %s28 = ssub.s32 32768, 32768
      %29 = vsyncadd [#allocation10], %s28
      %s30 = sshll.u32 [#allocation9], 4
      %s31 = int_to_ptr.vmem [resolvable:$true] %s30
      %36 = dma.hbm_to_vmem [thread:$0]  %s1, 32768, %s31, [#allocation10], 1024, 1024, 64
    $region9: #{pure_lstm_forward.1} parent=1 // pred_fallthru
      _
    // Predicated region
    $region10: #{pure_lstm_forward.1} parent=1 // pred_check
      _
    $region11: #{pure_lstm_forward.1} parent=1 // pred_check_branch
      %38 = sbr.rel (0) target = $region13
    $region12: #{pure_lstm_forward.1} parent=1 // pred_region
      %s40 = ssub.s32 256, 256
      %41 = vsyncadd [#allocation12], %s40
      %s43 = sshll.u32 [#allocation11], 4
      %s44 = int_to_ptr.vmem [resolvable:$true] %s43
      %46 = dma.hbm_to_vmem [thread:$0]  %s2, 256, %s44, [#allocation12]
    $region13: #{pure_lstm_forward.1} parent=1 // pred_fallthru
      _
    // Predicated region
    $region14: #{pure_lstm_forward.1} parent=1 // pred_check
      _
    $region15: #{pure_lstm_forward.1} parent=1 // pred_check_branch
      %48 = sbr.rel (0) target = $region17
    $region16: #{pure_lstm_forward.1} parent=1 // pred_region
      %s50 = ssub.s32 32, 32
      %51 = vsyncadd [#allocation12], %s50
      %s53 = sshll.u32 [#allocation13], 4
      %s54 = int_to_ptr.vmem [resolvable:$true] %s53
      %56 = dma.hbm_to_vmem [thread:$0]  %s9, 32, %s54, [#allocation12]
    $region17: #{pure_lstm_forward.1} parent=1 // pred_fallthru
      _
    // Predicated region
    $region18: #{pure_lstm_forward.1} parent=1 // pred_check
      _
    $region19: #{pure_lstm_forward.1} parent=1 // pred_check_branch
      %58 = sbr.rel (0) target = $region21
    $region20: #{pure_lstm_forward.1} parent=1 // pred_region
      %s60 = ssub.s32 16, 16
      %61 = vsyncadd [#allocation15], %s60
      %s63 = sshll.u32 [#allocation14], 4
      %s64 = int_to_ptr.vmem [resolvable:$true] %s63
      %66 = dma.hbm_to_vmem [thread:$0]  %s10, 16, %s64, [#allocation15]
    $region21: #{pure_lstm_forward.1} parent=1 // pred_fallthru
      _
    // Predicated region
    $region22: #{pure_lstm_forward.1} parent=1 // pred_check
      _
    $region23: #{pure_lstm_forward.1} parent=1 // pred_check_branch
      %68 = sbr.rel (0) target = $region25
    $region24: #{pure_lstm_forward.1} parent=1 // pred_region
      %s70 = ssub.s32 64, 64
      %71 = vsyncadd [#allocation15], %s70
      %s73 = sshll.u32 [#allocation16], 4
      %s74 = int_to_ptr.vmem [resolvable:$true] %s73
      %76 = dma.hbm_to_vmem [thread:$0]  %s11, 64, %s74, [#allocation15]
    $region25: #{pure_lstm_forward.1} parent=1 // pred_fallthru
      _
    // Predicated region
    $region26: #{pure_lstm_forward.1} parent=1 // pred_check
      _
    $region27: #{pure_lstm_forward.1} parent=1 // pred_check_branch
      %78 = sbr.rel (0) target = $region29
    $region28: #{pure_lstm_forward.1} parent=1 // pred_region
      %s80 = ssub.s32 80, 80
      %81 = vsyncadd [#allocation18], %s80
      %s83 = sshll.u32 [#allocation17], 4
      %s84 = int_to_ptr.vmem [resolvable:$true] %s83
      %86 = dma.hbm_to_vmem [thread:$0]  %s12, 80, %s84, [#allocation18]
    $region29: #{pure_lstm_forward.1} parent=1 // pred_fallthru
      _
    // Predicated region
    $region30: #{pure_lstm_forward.1} parent=1 // pred_check
      _
    $region31: #{pure_lstm_forward.1} parent=1 // pred_check_branch
      %88 = sbr.rel (0) target = $region33
    $region32: #{pure_lstm_forward.1} parent=1 // pred_region
      %s90 = ssub.s32 32, 32
      %91 = vsyncadd [#allocation18], %s90
      %s93 = sshll.u32 [#allocation19], 4
      %s94 = int_to_ptr.vmem [resolvable:$true] %s93
      %96 = dma.hbm_to_vmem [thread:$0]  %s13, 32, %s94, [#allocation18]
    $region33: #{pure_lstm_forward.1} parent=1 // pred_fallthru
      _
    // Predicated region
    $region34: #{pure_lstm_forward.1} parent=1 // pred_check
      _
    $region35: #{pure_lstm_forward.1} parent=1 // pred_check_branch
      %98 = sbr.rel (0) target = $region37
    $region36: #{pure_lstm_forward.1} parent=1 // pred_region
      %99 = dma.done [#allocation10], 32768
    $region37: #{pure_lstm_forward.1} parent=1 // pred_fallthru
      _
    // Predicated region
    $region38: #{pure_lstm_forward.1} parent=1 // pred_check
      _
    $region39: #{pure_lstm_forward.1} parent=1 // pred_check_branch
      %101 = sbr.rel (0) target = $region41
    $region40: #{pure_lstm_forward.1} parent=1 // pred_region
      %102 = dma.done [#allocation12], 256
    $region41: #{pure_lstm_forward.1} parent=1 // pred_fallthru
      _
    // Predicated region
    $region42: #{pure_lstm_forward.1} parent=1 // pred_check
      _
    $region43: #{pure_lstm_forward.1} parent=1 // pred_check_branch
      %104 = sbr.rel (0) target = $region45
    $region44: #{pure_lstm_forward.1} parent=1 // pred_region
      %105 = dma.done [#allocation12], 32
    $region45: #{pure_lstm_forward.1} parent=1 // pred_fallthru
      _
    // Predicated region
    $region46: #{pure_lstm_forward.1} parent=1 // pred_check
      _
    $region47: #{pure_lstm_forward.1} parent=1 // pred_check_branch
      %107 = sbr.rel (0) target = $region49
    $region48: #{pure_lstm_forward.1} parent=1 // pred_region
      %108 = dma.done [#allocation15], 16
    $region49: #{pure_lstm_forward.1} parent=1 // pred_fallthru
      _
    // Predicated region
    $region50: #{pure_lstm_forward.1} parent=1 // pred_check
      _
    $region51: #{pure_lstm_forward.1} parent=1 // pred_check_branch
      %110 = sbr.rel (0) target = $region53
    $region52: #{pure_lstm_forward.1} parent=1 // pred_region
      %111 = dma.done [#allocation15], 64
    $region53: #{pure_lstm_forward.1} parent=1 // pred_fallthru
      _
    // Predicated region
    $region54: #{pure_lstm_forward.1} parent=1 // pred_check
      _
    $region55: #{pure_lstm_forward.1} parent=1 // pred_check_branch
      %113 = sbr.rel (0) target = $region57
    $region56: #{pure_lstm_forward.1} parent=1 // pred_region
      %114 = dma.done [#allocation18], 80
    $region57: #{pure_lstm_forward.1} parent=1 // pred_fallthru
      _
    // Predicated region
    $region58: #{pure_lstm_forward.1} parent=1 // pred_check
      _
    $region59: #{pure_lstm_forward.1} parent=1 // pred_check_branch
      %116 = sbr.rel (0) target = $region61
    $region60: #{pure_lstm_forward.1} parent=1 // pred_region
      %117 = dma.done [#allocation18], 32
    $region61: #{pure_lstm_forward.1} parent=1 // pred_fallthru
      _
    %s120 = sshll.u32 1, 14
    %s121 = sxor.u32 4294967295, %s120
    %s123 = sld [smem:[#allocation0]]
    %s124 = sadd.s32 2, %s123
    %s126 = sshll.u32 7, 26
    %s127 = sxor.u32 4294967295, %s126
    %s128 = sand.u32 0, %s127
    %s129 = sshll.u32 %s124, 26
    %s130 = sor.u32 %s128, %s129
    %s131 = sshll.u32 [#allocation2], 4
    %s132 = int_to_ptr.vmem [resolvable:$true] %s131
    %135 = sst [smem:[#allocation21]] 2048
    %s136 = scalar_lea.smem [#allocation21], 1
    %137 = sst [smem:[%s136]] 2048
    %s138 = scalar_lea.smem [#allocation21], 2
    %139 = sst [smem:[%s138]] 16
    %s140 = scalar_lea.smem [#allocation21], 3
    %141 = sst [smem:[%s140]] 64
    %s142 = scalar_lea.smem [#allocation21], 4
    %143 = sst [smem:[%s142]] 128
    %s144 = scalar_lea.smem [#allocation21], 5
    %145 = sst [smem:[%s144]] 2
    %s146 = scalar_lea.smem [#allocation21], 6
    %147 = sst [smem:[%s146]] 1024
    %s148 = scalar_lea.smem [#allocation21], 7
    %149 = sst [smem:[%s148]] 64
    %s150 = scalar_lea.smem [#allocation21], 8
    %151 = sst [smem:[%s150]] 4
    %153 = dma.general %s3, 65536, %s132, [#allocation8], [#allocation20], [#allocation21], %s130, 0
    %v154 = vld [vmem:[%s0] sm:$0xff]
    %v155 = vld [vmem:[%s0 + $0x8] sm:$0xff]
    %v156 = vld [vmem:[%s0 + $0x10] sm:$0xff]
    %v157 = vld [vmem:[%s0 + $0x18] sm:$0xff]
    %v158 = vld [vmem:[%s0 + $0x20] sm:$0xff]
    %v159 = vld [vmem:[%s0 + $0x28] sm:$0xff]
    %v160 = vld [vmem:[%s0 + $0x30] sm:$0xff]
    %v161 = vld [vmem:[%s0 + $0x38] sm:$0xff]
    %v162 = vld [vmem:[%s0 + $0x40] sm:$0xff]
    %v163 = vld [vmem:[%s0 + $0x48] sm:$0xff]
    %v164 = vld [vmem:[%s0 + $0x50] sm:$0xff]
    %v165 = vld [vmem:[%s0 + $0x58] sm:$0xff]
    %v166 = vld [vmem:[%s0 + $0x60] sm:$0xff]
    %v167 = vld [vmem:[%s0 + $0x68] sm:$0xff]
    %v168 = vld [vmem:[%s0 + $0x70] sm:$0xff]
    %v169 = vld [vmem:[%s0 + $0x78] sm:$0xff]
    %v170 = vpack.c.bf16 %v156, %v154
    %v171 = vpack.c.bf16 %v157, %v155
    %v172 = vpack.c.bf16 %v160, %v158
    %v173 = vpack.c.bf16 %v161, %v159
    %v174 = vpack.c.bf16 %v164, %v162
    %v175 = vpack.c.bf16 %v165, %v163
    %v176 = vpack.c.bf16 %v168, %v166
    %v177 = vpack.c.bf16 %v169, %v167
    %v178 = vld [vmem:[#allocation9] sm:$0xff]
    %v179 = vld [vmem:[#allocation9 + $0x8] sm:$0xff]
    %v180 = vld [vmem:[#allocation9 + $0x10] sm:$0xff]
    %v181 = vld [vmem:[#allocation9 + $0x18] sm:$0xff]
    %v182 = vld [vmem:[#allocation9 + $0x20] sm:$0xff]
    %v183 = vld [vmem:[#allocation9 + $0x28] sm:$0xff]
    %v184 = vld [vmem:[#allocation9 + $0x30] sm:$0xff]
    %v185 = vld [vmem:[#allocation9 + $0x38] sm:$0xff]
    %v186 = vld [vmem:[#allocation9 + $0x40] sm:$0xff]
    %v187 = vld [vmem:[#allocation9 + $0x48] sm:$0xff]
    %v188 = vld [vmem:[#allocation9 + $0x50] sm:$0xff]
    %v189 = vld [vmem:[#allocation9 + $0x58] sm:$0xff]
    %v190 = vld [vmem:[#allocation9 + $0x60] sm:$0xff]
    %v191 = vld [vmem:[#allocation9 + $0x68] sm:$0xff]
    %v192 = vld [vmem:[#allocation9 + $0x70] sm:$0xff]
    %v193 = vld [vmem:[#allocation9 + $0x78] sm:$0xff]
    %v194 = vld [vmem:[#allocation9 + $0x80] sm:$0xff]
    %v195 = vld [vmem:[#allocation9 + $0x88] sm:$0xff]
    %v196 = vld [vmem:[#allocation9 + $0x90] sm:$0xff]
    %v197 = vld [vmem:[#allocation9 + $0x98] sm:$0xff]
    %v198 = vld [vmem:[#allocation9 + $0xa0] sm:$0xff]
    %v199 = vld [vmem:[#allocation9 + $0xa8] sm:$0xff]
    %v200 = vld [vmem:[#allocation9 + $0xb0] sm:$0xff]
    %v201 = vld [vmem:[#allocation9 + $0xb8] sm:$0xff]
    %v202 = vld [vmem:[#allocation9 + $0xc0] sm:$0xff]
    %v203 = vld [vmem:[#allocation9 + $0xc8] sm:$0xff]
    %v204 = vld [vmem:[#allocation9 + $0xd0] sm:$0xff]
    %v205 = vld [vmem:[#allocation9 + $0xd8] sm:$0xff]
    %v206 = vld [vmem:[#allocation9 + $0xe0] sm:$0xff]
    %v207 = vld [vmem:[#allocation9 + $0xe8] sm:$0xff]
    %v208 = vld [vmem:[#allocation9 + $0xf0] sm:$0xff]
    %v209 = vld [vmem:[#allocation9 + $0xf8] sm:$0xff]
    %v210 = vld [vmem:[#allocation9 + $0x100] sm:$0xff]
    %v211 = vld [vmem:[#allocation9 + $0x108] sm:$0xff]
    %v212 = vld [vmem:[#allocation9 + $0x110] sm:$0xff]
    %v213 = vld [vmem:[#allocation9 + $0x118] sm:$0xff]
    %v214 = vld [vmem:[#allocation9 + $0x120] sm:$0xff]
    %v215 = vld [vmem:[#allocation9 + $0x128] sm:$0xff]
    %v216 = vld [vmem:[#allocation9 + $0x130] sm:$0xff]
    %v217 = vld [vmem:[#allocation9 + $0x138] sm:$0xff]
    %v218 = vld [vmem:[#allocation9 + $0x140] sm:$0xff]
    %v219 = vld [vmem:[#allocation9 + $0x148] sm:$0xff]
    %v220 = vld [vmem:[#allocation9 + $0x150] sm:$0xff]
    %v221 = vld [vmem:[#allocation9 + $0x158] sm:$0xff]
    %v222 = vld [vmem:[#allocation9 + $0x160] sm:$0xff]
    %v223 = vld [vmem:[#allocation9 + $0x168] sm:$0xff]
    %v224 = vld [vmem:[#allocation9 + $0x170] sm:$0xff]
    %v225 = vld [vmem:[#allocation9 + $0x178] sm:$0xff]
    %v226 = vld [vmem:[#allocation9 + $0x180] sm:$0xff]
    %v227 = vld [vmem:[#allocation9 + $0x188] sm:$0xff]
    %v228 = vld [vmem:[#allocation9 + $0x190] sm:$0xff]
    %v229 = vld [vmem:[#allocation9 + $0x198] sm:$0xff]
    %v230 = vld [vmem:[#allocation9 + $0x1a0] sm:$0xff]
    %v231 = vld [vmem:[#allocation9 + $0x1a8] sm:$0xff]
    %v232 = vld [vmem:[#allocation9 + $0x1b0] sm:$0xff]
    %v233 = vld [vmem:[#allocation9 + $0x1b8] sm:$0xff]
    %v234 = vld [vmem:[#allocation9 + $0x1c0] sm:$0xff]
    %v235 = vld [vmem:[#allocation9 + $0x1c8] sm:$0xff]
    %v236 = vld [vmem:[#allocation9 + $0x1d0] sm:$0xff]
    %v237 = vld [vmem:[#allocation9 + $0x1d8] sm:$0xff]
    %v238 = vld [vmem:[#allocation9 + $0x1e0] sm:$0xff]
    %v239 = vld [vmem:[#allocation9 + $0x1e8] sm:$0xff]
    %v240 = vld [vmem:[#allocation9 + $0x1f0] sm:$0xff]
    %v241 = vld [vmem:[#allocation9 + $0x1f8] sm:$0xff]
    %v242 = vld [vmem:[#allocation9 + $0x200] sm:$0xff]
    %v243 = vld [vmem:[#allocation9 + $0x208] sm:$0xff]
    %v244 = vld [vmem:[#allocation9 + $0x210] sm:$0xff]
    %v245 = vld [vmem:[#allocation9 + $0x218] sm:$0xff]
    %v246 = vld [vmem:[#allocation9 + $0x220] sm:$0xff]
    %v247 = vld [vmem:[#allocation9 + $0x228] sm:$0xff]
    %v248 = vld [vmem:[#allocation9 + $0x230] sm:$0xff]
    %v249 = vld [vmem:[#allocation9 + $0x238] sm:$0xff]
    %v250 = vld [vmem:[#allocation9 + $0x240] sm:$0xff]
    %v251 = vld [vmem:[#allocation9 + $0x248] sm:$0xff]
    %v252 = vld [vmem:[#allocation9 + $0x250] sm:$0xff]
    %v253 = vld [vmem:[#allocation9 + $0x258] sm:$0xff]
    %v254 = vld [vmem:[#allocation9 + $0x260] sm:$0xff]
    %v255 = vld [vmem:[#allocation9 + $0x268] sm:$0xff]
    %v256 = vld [vmem:[#allocation9 + $0x270] sm:$0xff]
    %v257 = vld [vmem:[#allocation9 + $0x278] sm:$0xff]
    %v258 = vld [vmem:[#allocation9 + $0x280] sm:$0xff]
    %v259 = vld [vmem:[#allocation9 + $0x288] sm:$0xff]
    %v260 = vld [vmem:[#allocation9 + $0x290] sm:$0xff]
    %v261 = vld [vmem:[#allocation9 + $0x298] sm:$0xff]
    %v262 = vld [vmem:[#allocation9 + $0x2a0] sm:$0xff]
    %v263 = vld [vmem:[#allocation9 + $0x2a8] sm:$0xff]
    %v264 = vld [vmem:[#allocation9 + $0x2b0] sm:$0xff]
    %v265 = vld [vmem:[#allocation9 + $0x2b8] sm:$0xff]
    %v266 = vld [vmem:[#allocation9 + $0x2c0] sm:$0xff]
    %v267 = vld [vmem:[#allocation9 + $0x2c8] sm:$0xff]
    %v268 = vld [vmem:[#allocation9 + $0x2d0] sm:$0xff]
    %v269 = vld [vmem:[#allocation9 + $0x2d8] sm:$0xff]
    %v270 = vld [vmem:[#allocation9 + $0x2e0] sm:$0xff]
    %v271 = vld [vmem:[#allocation9 + $0x2e8] sm:$0xff]
    %v272 = vld [vmem:[#allocation9 + $0x2f0] sm:$0xff]
    %v273 = vld [vmem:[#allocation9 + $0x2f8] sm:$0xff]
    %v274 = vld [vmem:[#allocation9 + $0x300] sm:$0xff]
    %v275 = vld [vmem:[#allocation9 + $0x308] sm:$0xff]
    %v276 = vld [vmem:[#allocation9 + $0x310] sm:$0xff]
    %v277 = vld [vmem:[#allocation9 + $0x318] sm:$0xff]
    %v278 = vld [vmem:[#allocation9 + $0x320] sm:$0xff]
    %v279 = vld [vmem:[#allocation9 + $0x328] sm:$0xff]
    %v280 = vld [vmem:[#allocation9 + $0x330] sm:$0xff]
    %v281 = vld [vmem:[#allocation9 + $0x338] sm:$0xff]
    %v282 = vld [vmem:[#allocation9 + $0x340] sm:$0xff]
    %v283 = vld [vmem:[#allocation9 + $0x348] sm:$0xff]
    %v284 = vld [vmem:[#allocation9 + $0x350] sm:$0xff]
    %v285 = vld [vmem:[#allocation9 + $0x358] sm:$0xff]
    %v286 = vld [vmem:[#allocation9 + $0x360] sm:$0xff]
    %v287 = vld [vmem:[#allocation9 + $0x368] sm:$0xff]
    %v288 = vld [vmem:[#allocation9 + $0x370] sm:$0xff]
    %v289 = vld [vmem:[#allocation9 + $0x378] sm:$0xff]
    %v290 = vld [vmem:[#allocation9 + $0x380] sm:$0xff]
    %v291 = vld [vmem:[#allocation9 + $0x388] sm:$0xff]
    %v292 = vld [vmem:[#allocation9 + $0x390] sm:$0xff]
    %v293 = vld [vmem:[#allocation9 + $0x398] sm:$0xff]
    %v294 = vld [vmem:[#allocation9 + $0x3a0] sm:$0xff]
    %v295 = vld [vmem:[#allocation9 + $0x3a8] sm:$0xff]
    %v296 = vld [vmem:[#allocation9 + $0x3b0] sm:$0xff]
    %v297 = vld [vmem:[#allocation9 + $0x3b8] sm:$0xff]
    %v298 = vld [vmem:[#allocation9 + $0x3c0] sm:$0xff]
    %v299 = vld [vmem:[#allocation9 + $0x3c8] sm:$0xff]
    %v300 = vld [vmem:[#allocation9 + $0x3d0] sm:$0xff]
    %v301 = vld [vmem:[#allocation9 + $0x3d8] sm:$0xff]
    %v302 = vld [vmem:[#allocation9 + $0x3e0] sm:$0xff]
    %v303 = vld [vmem:[#allocation9 + $0x3e8] sm:$0xff]
    %v304 = vld [vmem:[#allocation9 + $0x3f0] sm:$0xff]
    %v305 = vld [vmem:[#allocation9 + $0x3f8] sm:$0xff]
    %v306 = vld [vmem:[#allocation9 + $0x400] sm:$0xff]
    %v307 = vld [vmem:[#allocation9 + $0x408] sm:$0xff]
    %v308 = vld [vmem:[#allocation9 + $0x410] sm:$0xff]
    %v309 = vld [vmem:[#allocation9 + $0x418] sm:$0xff]
    %v310 = vld [vmem:[#allocation9 + $0x420] sm:$0xff]
    %v311 = vld [vmem:[#allocation9 + $0x428] sm:$0xff]
    %v312 = vld [vmem:[#allocation9 + $0x430] sm:$0xff]
    %v313 = vld [vmem:[#allocation9 + $0x438] sm:$0xff]
    %v314 = vld [vmem:[#allocation9 + $0x440] sm:$0xff]
    %v315 = vld [vmem:[#allocation9 + $0x448] sm:$0xff]
    %v316 = vld [vmem:[#allocation9 + $0x450] sm:$0xff]
    %v317 = vld [vmem:[#allocation9 + $0x458] sm:$0xff]
    %v318 = vld [vmem:[#allocation9 + $0x460] sm:$0xff]
    %v319 = vld [vmem:[#allocation9 + $0x468] sm:$0xff]
    %v320 = vld [vmem:[#allocation9 + $0x470] sm:$0xff]
    %v321 = vld [vmem:[#allocation9 + $0x478] sm:$0xff]
    %v322 = vld [vmem:[#allocation9 + $0x480] sm:$0xff]
    %v323 = vld [vmem:[#allocation9 + $0x488] sm:$0xff]
    %v324 = vld [vmem:[#allocation9 + $0x490] sm:$0xff]
    %v325 = vld [vmem:[#allocation9 + $0x498] sm:$0xff]
    %v326 = vld [vmem:[#allocation9 + $0x4a0] sm:$0xff]
    %v327 = vld [vmem:[#allocation9 + $0x4a8] sm:$0xff]
    %v328 = vld [vmem:[#allocation9 + $0x4b0] sm:$0xff]
    %v329 = vld [vmem:[#allocation9 + $0x4b8] sm:$0xff]
    %v330 = vld [vmem:[#allocation9 + $0x4c0] sm:$0xff]
    %v331 = vld [vmem:[#allocation9 + $0x4c8] sm:$0xff]
    %v332 = vld [vmem:[#allocation9 + $0x4d0] sm:$0xff]
    %v333 = vld [vmem:[#allocation9 + $0x4d8] sm:$0xff]
    %v334 = vld [vmem:[#allocation9 + $0x4e0] sm:$0xff]
    %v335 = vld [vmem:[#allocation9 + $0x4e8] sm:$0xff]
    %v336 = vld [vmem:[#allocation9 + $0x4f0] sm:$0xff]
    %v337 = vld [vmem:[#allocation9 + $0x4f8] sm:$0xff]
    %v338 = vld [vmem:[#allocation9 + $0x500] sm:$0xff]
    %v339 = vld [vmem:[#allocation9 + $0x508] sm:$0xff]
    %v340 = vld [vmem:[#allocation9 + $0x510] sm:$0xff]
    %v341 = vld [vmem:[#allocation9 + $0x518] sm:$0xff]
    %v342 = vld [vmem:[#allocation9 + $0x520] sm:$0xff]
    %v343 = vld [vmem:[#allocation9 + $0x528] sm:$0xff]
    %v344 = vld [vmem:[#allocation9 + $0x530] sm:$0xff]
    %v345 = vld [vmem:[#allocation9 + $0x538] sm:$0xff]
    %v346 = vld [vmem:[#allocation9 + $0x540] sm:$0xff]
    %v347 = vld [vmem:[#allocation9 + $0x548] sm:$0xff]
    %v348 = vld [vmem:[#allocation9 + $0x550] sm:$0xff]
    %v349 = vld [vmem:[#allocation9 + $0x558] sm:$0xff]
    %v350 = vld [vmem:[#allocation9 + $0x560] sm:$0xff]
    %v351 = vld [vmem:[#allocation9 + $0x568] sm:$0xff]
    %v352 = vld [vmem:[#allocation9 + $0x570] sm:$0xff]
    %v353 = vld [vmem:[#allocation9 + $0x578] sm:$0xff]
    %v354 = vld [vmem:[#allocation9 + $0x580] sm:$0xff]
    %v355 = vld [vmem:[#allocation9 + $0x588] sm:$0xff]
    %v356 = vld [vmem:[#allocation9 + $0x590] sm:$0xff]
    %v357 = vld [vmem:[#allocation9 + $0x598] sm:$0xff]
    %v358 = vld [vmem:[#allocation9 + $0x5a0] sm:$0xff]
    %v359 = vld [vmem:[#allocation9 + $0x5a8] sm:$0xff]
    %v360 = vld [vmem:[#allocation9 + $0x5b0] sm:$0xff]
    %v361 = vld [vmem:[#allocation9 + $0x5b8] sm:$0xff]
    %v362 = vld [vmem:[#allocation9 + $0x5c0] sm:$0xff]
    %v363 = vld [vmem:[#allocation9 + $0x5c8] sm:$0xff]
    %v364 = vld [vmem:[#allocation9 + $0x5d0] sm:$0xff]
    %v365 = vld [vmem:[#allocation9 + $0x5d8] sm:$0xff]
    %v366 = vld [vmem:[#allocation9 + $0x5e0] sm:$0xff]
    %v367 = vld [vmem:[#allocation9 + $0x5e8] sm:$0xff]
    %v368 = vld [vmem:[#allocation9 + $0x5f0] sm:$0xff]
    %v369 = vld [vmem:[#allocation9 + $0x5f8] sm:$0xff]
    %v370 = vld [vmem:[#allocation9 + $0x600] sm:$0xff]
    %v371 = vld [vmem:[#allocation9 + $0x608] sm:$0xff]
    %v372 = vld [vmem:[#allocation9 + $0x610] sm:$0xff]
    %v373 = vld [vmem:[#allocation9 + $0x618] sm:$0xff]
    %v374 = vld [vmem:[#allocation9 + $0x620] sm:$0xff]
    %v375 = vld [vmem:[#allocation9 + $0x628] sm:$0xff]
    %v376 = vld [vmem:[#allocation9 + $0x630] sm:$0xff]
    %v377 = vld [vmem:[#allocation9 + $0x638] sm:$0xff]
    %v378 = vld [vmem:[#allocation9 + $0x640] sm:$0xff]
    %v379 = vld [vmem:[#allocation9 + $0x648] sm:$0xff]
    %v380 = vld [vmem:[#allocation9 + $0x650] sm:$0xff]
    %v381 = vld [vmem:[#allocation9 + $0x658] sm:$0xff]
    %v382 = vld [vmem:[#allocation9 + $0x660] sm:$0xff]
    %v383 = vld [vmem:[#allocation9 + $0x668] sm:$0xff]
    %v384 = vld [vmem:[#allocation9 + $0x670] sm:$0xff]
    %v385 = vld [vmem:[#allocation9 + $0x678] sm:$0xff]
    %v386 = vld [vmem:[#allocation9 + $0x680] sm:$0xff]
    %v387 = vld [vmem:[#allocation9 + $0x688] sm:$0xff]
    %v388 = vld [vmem:[#allocation9 + $0x690] sm:$0xff]
    %v389 = vld [vmem:[#allocation9 + $0x698] sm:$0xff]
    %v390 = vld [vmem:[#allocation9 + $0x6a0] sm:$0xff]
    %v391 = vld [vmem:[#allocation9 + $0x6a8] sm:$0xff]
    %v392 = vld [vmem:[#allocation9 + $0x6b0] sm:$0xff]
    %v393 = vld [vmem:[#allocation9 + $0x6b8] sm:$0xff]
    %v394 = vld [vmem:[#allocation9 + $0x6c0] sm:$0xff]
    %v395 = vld [vmem:[#allocation9 + $0x6c8] sm:$0xff]
    %v396 = vld [vmem:[#allocation9 + $0x6d0] sm:$0xff]
    %v397 = vld [vmem:[#allocation9 + $0x6d8] sm:$0xff]
    %v398 = vld [vmem:[#allocation9 + $0x6e0] sm:$0xff]
    %v399 = vld [vmem:[#allocation9 + $0x6e8] sm:$0xff]
    %v400 = vld [vmem:[#allocation9 + $0x6f0] sm:$0xff]
    %v401 = vld [vmem:[#allocation9 + $0x6f8] sm:$0xff]
    %v402 = vld [vmem:[#allocation9 + $0x700] sm:$0xff]
    %v403 = vld [vmem:[#allocation9 + $0x708] sm:$0xff]
    %v404 = vld [vmem:[#allocation9 + $0x710] sm:$0xff]
    %v405 = vld [vmem:[#allocation9 + $0x718] sm:$0xff]
    %v406 = vld [vmem:[#allocation9 + $0x720] sm:$0xff]
    %v407 = vld [vmem:[#allocation9 + $0x728] sm:$0xff]
    %v408 = vld [vmem:[#allocation9 + $0x730] sm:$0xff]
    %v409 = vld [vmem:[#allocation9 + $0x738] sm:$0xff]
    %v410 = vld [vmem:[#allocation9 + $0x740] sm:$0xff]
    %v411 = vld [vmem:[#allocation9 + $0x748] sm:$0xff]
    %v412 = vld [vmem:[#allocation9 + $0x750] sm:$0xff]
    %v413 = vld [vmem:[#allocation9 + $0x758] sm:$0xff]
    %v414 = vld [vmem:[#allocation9 + $0x760] sm:$0xff]
    %v415 = vld [vmem:[#allocation9 + $0x768] sm:$0xff]
    %v416 = vld [vmem:[#allocation9 + $0x770] sm:$0xff]
    %v417 = vld [vmem:[#allocation9 + $0x778] sm:$0xff]
    %v418 = vld [vmem:[#allocation9 + $0x780] sm:$0xff]
    %v419 = vld [vmem:[#allocation9 + $0x788] sm:$0xff]
    %v420 = vld [vmem:[#allocation9 + $0x790] sm:$0xff]
    %v421 = vld [vmem:[#allocation9 + $0x798] sm:$0xff]
    %v422 = vld [vmem:[#allocation9 + $0x7a0] sm:$0xff]
    %v423 = vld [vmem:[#allocation9 + $0x7a8] sm:$0xff]
    %v424 = vld [vmem:[#allocation9 + $0x7b0] sm:$0xff]
    %v425 = vld [vmem:[#allocation9 + $0x7b8] sm:$0xff]
    %v426 = vld [vmem:[#allocation9 + $0x7c0] sm:$0xff]
    %v427 = vld [vmem:[#allocation9 + $0x7c8] sm:$0xff]
    %v428 = vld [vmem:[#allocation9 + $0x7d0] sm:$0xff]
    %v429 = vld [vmem:[#allocation9 + $0x7d8] sm:$0xff]
    %v430 = vld [vmem:[#allocation9 + $0x7e0] sm:$0xff]
    %v431 = vld [vmem:[#allocation9 + $0x7e8] sm:$0xff]
    %v432 = vld [vmem:[#allocation9 + $0x7f0] sm:$0xff]
    %v433 = vld [vmem:[#allocation9 + $0x7f8] sm:$0xff]
    %v434 = vld [vmem:[#allocation11] sm:$0xff]
    %v435 = vld [vmem:[#allocation11 + $0x8] sm:$0xff]
    %v438 = vlaneseq
    %v439 = vshrl.u32 %v438, 7
    %v440 = vsub.s32 0, %v439
    %v441 = vrot.slane %v434, %v440
    %v442 = vlaneseq
    %v443 = vshrl.u32 %v442, 7
    %v444 = vsub.s32 1, %v443
    %v445 = vrot.slane %v434, %v444
    %v446 = vlaneseq
    %v447 = vshrl.u32 %v446, 7
    %v448 = vsub.s32 2, %v447
    %v449 = vrot.slane %v434, %v448
    %v450 = vlaneseq
    %v451 = vshrl.u32 %v450, 7
    %v452 = vsub.s32 3, %v451
    %v453 = vrot.slane %v434, %v452
    %v454 = vlaneseq
    %v455 = vshrl.u32 %v454, 7
    %v456 = vsub.s32 4, %v455
    %v457 = vrot.slane %v434, %v456
    %v458 = vlaneseq
    %v459 = vshrl.u32 %v458, 7
    %v460 = vsub.s32 5, %v459
    %v461 = vrot.slane %v434, %v460
    %v462 = vlaneseq
    %v463 = vshrl.u32 %v462, 7
    %v464 = vsub.s32 6, %v463
    %v465 = vrot.slane %v434, %v464
    %v466 = vlaneseq
    %v467 = vshrl.u32 %v466, 7
    %v468 = vsub.s32 7, %v467
    %v469 = vrot.slane %v434, %v468
    %v470 = vlaneseq
    %v471 = vshrl.u32 %v470, 7
    %v472 = vsub.s32 0, %v471
    %v473 = vrot.slane %v435, %v472
    %v474 = vlaneseq
    %v475 = vshrl.u32 %v474, 7
    %v476 = vsub.s32 1, %v475
    %v477 = vrot.slane %v435, %v476
    %v478 = vlaneseq
    %v479 = vshrl.u32 %v478, 7
    %v480 = vsub.s32 2, %v479
    %v481 = vrot.slane %v435, %v480
    %v482 = vlaneseq
    %v483 = vshrl.u32 %v482, 7
    %v484 = vsub.s32 3, %v483
    %v485 = vrot.slane %v435, %v484
    %v486 = vlaneseq
    %v487 = vshrl.u32 %v486, 7
    %v488 = vsub.s32 4, %v487
    %v489 = vrot.slane %v435, %v488
    %v490 = vlaneseq
    %v491 = vshrl.u32 %v490, 7
    %v492 = vsub.s32 5, %v491
    %v493 = vrot.slane %v435, %v492
    %v494 = vlaneseq
    %v495 = vshrl.u32 %v494, 7
    %v496 = vsub.s32 6, %v495
    %v497 = vrot.slane %v435, %v496
    %v498 = vlaneseq
    %v499 = vshrl.u32 %v498, 7
    %v500 = vsub.s32 7, %v499
    %v501 = vrot.slane %v435, %v500
    %v774 = vunpack.c.l.b16 %v178
    %v775 = vunpack.c.h.b16 %v178
    %v776 = vunpack.c.l.b16 %v179
    %v777 = vunpack.c.h.b16 %v179
    %v778 = vunpack.c.l.b16 %v180
    %v779 = vunpack.c.h.b16 %v180
    %v780 = vunpack.c.l.b16 %v181
    %v781 = vunpack.c.h.b16 %v181
    %v782 = vunpack.c.l.b16 %v182
    %v783 = vunpack.c.h.b16 %v182
    %v784 = vunpack.c.l.b16 %v183
    %v785 = vunpack.c.h.b16 %v183
    %v786 = vunpack.c.l.b16 %v184
    %v787 = vunpack.c.h.b16 %v184
    %v788 = vunpack.c.l.b16 %v185
    %v789 = vunpack.c.h.b16 %v185
    %v790 = vunpack.c.l.b16 %v186
    %v791 = vunpack.c.h.b16 %v186
    %v792 = vunpack.c.l.b16 %v187
    %v793 = vunpack.c.h.b16 %v187
    %v794 = vunpack.c.l.b16 %v188
    %v795 = vunpack.c.h.b16 %v188
    %v796 = vunpack.c.l.b16 %v189
    %v797 = vunpack.c.h.b16 %v189
    %v798 = vunpack.c.l.b16 %v190
    %v799 = vunpack.c.h.b16 %v190
    %v800 = vunpack.c.l.b16 %v191
    %v801 = vunpack.c.h.b16 %v191
    %v802 = vunpack.c.l.b16 %v192
    %v803 = vunpack.c.h.b16 %v192
    %v804 = vunpack.c.l.b16 %v193
    %v805 = vunpack.c.h.b16 %v193
    %v806 = vunpack.c.l.b16 %v194
    %v807 = vunpack.c.h.b16 %v194
    %v808 = vunpack.c.l.b16 %v195
    %v809 = vunpack.c.h.b16 %v195
    %v810 = vunpack.c.l.b16 %v196
    %v811 = vunpack.c.h.b16 %v196
    %v812 = vunpack.c.l.b16 %v197
    %v813 = vunpack.c.h.b16 %v197
    %v814 = vunpack.c.l.b16 %v198
    %v815 = vunpack.c.h.b16 %v198
    %v816 = vunpack.c.l.b16 %v199
    %v817 = vunpack.c.h.b16 %v199
    %v818 = vunpack.c.l.b16 %v200
    %v819 = vunpack.c.h.b16 %v200
    %v820 = vunpack.c.l.b16 %v201
    %v821 = vunpack.c.h.b16 %v201
    %v822 = vunpack.c.l.b16 %v202
    %v823 = vunpack.c.h.b16 %v202
    %v824 = vunpack.c.l.b16 %v203
    %v825 = vunpack.c.h.b16 %v203
    %v826 = vunpack.c.l.b16 %v204
    %v827 = vunpack.c.h.b16 %v204
    %v828 = vunpack.c.l.b16 %v205
    %v829 = vunpack.c.h.b16 %v205
    %v830 = vunpack.c.l.b16 %v206
    %v831 = vunpack.c.h.b16 %v206
    %v832 = vunpack.c.l.b16 %v207
    %v833 = vunpack.c.h.b16 %v207
    %v834 = vunpack.c.l.b16 %v208
    %v835 = vunpack.c.h.b16 %v208
    %v836 = vunpack.c.l.b16 %v209
    %v837 = vunpack.c.h.b16 %v209
    %v838 = vunpack.c.l.b16 %v210
    %v839 = vunpack.c.h.b16 %v210
    %v840 = vunpack.c.l.b16 %v211
    %v841 = vunpack.c.h.b16 %v211
    %v842 = vunpack.c.l.b16 %v212
    %v843 = vunpack.c.h.b16 %v212
    %v844 = vunpack.c.l.b16 %v213
    %v845 = vunpack.c.h.b16 %v213
    %v846 = vunpack.c.l.b16 %v214
    %v847 = vunpack.c.h.b16 %v214
    %v848 = vunpack.c.l.b16 %v215
    %v849 = vunpack.c.h.b16 %v215
    %v850 = vunpack.c.l.b16 %v216
    %v851 = vunpack.c.h.b16 %v216
    %v852 = vunpack.c.l.b16 %v217
    %v853 = vunpack.c.h.b16 %v217
    %v854 = vunpack.c.l.b16 %v218
    %v855 = vunpack.c.h.b16 %v218
    %v856 = vunpack.c.l.b16 %v219
    %v857 = vunpack.c.h.b16 %v219
    %v858 = vunpack.c.l.b16 %v220
    %v859 = vunpack.c.h.b16 %v220
    %v860 = vunpack.c.l.b16 %v221
    %v861 = vunpack.c.h.b16 %v221
    %v862 = vunpack.c.l.b16 %v222
    %v863 = vunpack.c.h.b16 %v222
    %v864 = vunpack.c.l.b16 %v223
    %v865 = vunpack.c.h.b16 %v223
    %v866 = vunpack.c.l.b16 %v224
    %v867 = vunpack.c.h.b16 %v224
    %v868 = vunpack.c.l.b16 %v225
    %v869 = vunpack.c.h.b16 %v225
    %v870 = vunpack.c.l.b16 %v226
    %v871 = vunpack.c.h.b16 %v226
    %v872 = vunpack.c.l.b16 %v227
    %v873 = vunpack.c.h.b16 %v227
    %v874 = vunpack.c.l.b16 %v228
    %v875 = vunpack.c.h.b16 %v228
    %v876 = vunpack.c.l.b16 %v229
    %v877 = vunpack.c.h.b16 %v229
    %v878 = vunpack.c.l.b16 %v230
    %v879 = vunpack.c.h.b16 %v230
    %v880 = vunpack.c.l.b16 %v231
    %v881 = vunpack.c.h.b16 %v231
    %v882 = vunpack.c.l.b16 %v232
    %v883 = vunpack.c.h.b16 %v232
    %v884 = vunpack.c.l.b16 %v233
    %v885 = vunpack.c.h.b16 %v233
    %v886 = vunpack.c.l.b16 %v234
    %v887 = vunpack.c.h.b16 %v234
    %v888 = vunpack.c.l.b16 %v235
    %v889 = vunpack.c.h.b16 %v235
    %v890 = vunpack.c.l.b16 %v236
    %v891 = vunpack.c.h.b16 %v236
    %v892 = vunpack.c.l.b16 %v237
    %v893 = vunpack.c.h.b16 %v237
    %v894 = vunpack.c.l.b16 %v238
    %v895 = vunpack.c.h.b16 %v238
    %v896 = vunpack.c.l.b16 %v239
    %v897 = vunpack.c.h.b16 %v239
    %v898 = vunpack.c.l.b16 %v240
    %v899 = vunpack.c.h.b16 %v240
    %v900 = vunpack.c.l.b16 %v241
    %v901 = vunpack.c.h.b16 %v241
    %v902 = vunpack.c.l.b16 %v242
    %v903 = vunpack.c.h.b16 %v242
    %v904 = vunpack.c.l.b16 %v243
    %v905 = vunpack.c.h.b16 %v243
    %v906 = vunpack.c.l.b16 %v244
    %v907 = vunpack.c.h.b16 %v244
    %v908 = vunpack.c.l.b16 %v245
    %v909 = vunpack.c.h.b16 %v245
    %v910 = vunpack.c.l.b16 %v246
    %v911 = vunpack.c.h.b16 %v246
    %v912 = vunpack.c.l.b16 %v247
    %v913 = vunpack.c.h.b16 %v247
    %v914 = vunpack.c.l.b16 %v248
    %v915 = vunpack.c.h.b16 %v248
    %v916 = vunpack.c.l.b16 %v249
    %v917 = vunpack.c.h.b16 %v249
    %v918 = vunpack.c.l.b16 %v250
    %v919 = vunpack.c.h.b16 %v250
    %v920 = vunpack.c.l.b16 %v251
    %v921 = vunpack.c.h.b16 %v251
    %v922 = vunpack.c.l.b16 %v252
    %v923 = vunpack.c.h.b16 %v252
    %v924 = vunpack.c.l.b16 %v253
    %v925 = vunpack.c.h.b16 %v253
    %v926 = vunpack.c.l.b16 %v254
    %v927 = vunpack.c.h.b16 %v254
    %v928 = vunpack.c.l.b16 %v255
    %v929 = vunpack.c.h.b16 %v255
    %v930 = vunpack.c.l.b16 %v256
    %v931 = vunpack.c.h.b16 %v256
    %v932 = vunpack.c.l.b16 %v257
    %v933 = vunpack.c.h.b16 %v257
    %v934 = vunpack.c.l.b16 %v258
    %v935 = vunpack.c.h.b16 %v258
    %v936 = vunpack.c.l.b16 %v259
    %v937 = vunpack.c.h.b16 %v259
    %v938 = vunpack.c.l.b16 %v260
    %v939 = vunpack.c.h.b16 %v260
    %v940 = vunpack.c.l.b16 %v261
    %v941 = vunpack.c.h.b16 %v261
    %v942 = vunpack.c.l.b16 %v262
    %v943 = vunpack.c.h.b16 %v262
    %v944 = vunpack.c.l.b16 %v263
    %v945 = vunpack.c.h.b16 %v263
    %v946 = vunpack.c.l.b16 %v264
    %v947 = vunpack.c.h.b16 %v264
    %v948 = vunpack.c.l.b16 %v265
    %v949 = vunpack.c.h.b16 %v265
    %v950 = vunpack.c.l.b16 %v266
    %v951 = vunpack.c.h.b16 %v266
    %v952 = vunpack.c.l.b16 %v267
    %v953 = vunpack.c.h.b16 %v267
    %v954 = vunpack.c.l.b16 %v268
    %v955 = vunpack.c.h.b16 %v268
    %v956 = vunpack.c.l.b16 %v269
    %v957 = vunpack.c.h.b16 %v269
    %v958 = vunpack.c.l.b16 %v270
    %v959 = vunpack.c.h.b16 %v270
    %v960 = vunpack.c.l.b16 %v271
    %v961 = vunpack.c.h.b16 %v271
    %v962 = vunpack.c.l.b16 %v272
    %v963 = vunpack.c.h.b16 %v272
    %v964 = vunpack.c.l.b16 %v273
    %v965 = vunpack.c.h.b16 %v273
    %v966 = vunpack.c.l.b16 %v274
    %v967 = vunpack.c.h.b16 %v274
    %v968 = vunpack.c.l.b16 %v275
    %v969 = vunpack.c.h.b16 %v275
    %v970 = vunpack.c.l.b16 %v276
    %v971 = vunpack.c.h.b16 %v276
    %v972 = vunpack.c.l.b16 %v277
    %v973 = vunpack.c.h.b16 %v277
    %v974 = vunpack.c.l.b16 %v278
    %v975 = vunpack.c.h.b16 %v278
    %v976 = vunpack.c.l.b16 %v279
    %v977 = vunpack.c.h.b16 %v279
    %v978 = vunpack.c.l.b16 %v280
    %v979 = vunpack.c.h.b16 %v280
    %v980 = vunpack.c.l.b16 %v281
    %v981 = vunpack.c.h.b16 %v281
    %v982 = vunpack.c.l.b16 %v282
    %v983 = vunpack.c.h.b16 %v282
    %v984 = vunpack.c.l.b16 %v283
    %v985 = vunpack.c.h.b16 %v283
    %v986 = vunpack.c.l.b16 %v284
    %v987 = vunpack.c.h.b16 %v284
    %v988 = vunpack.c.l.b16 %v285
    %v989 = vunpack.c.h.b16 %v285
    %v990 = vunpack.c.l.b16 %v286
    %v991 = vunpack.c.h.b16 %v286
    %v992 = vunpack.c.l.b16 %v287
    %v993 = vunpack.c.h.b16 %v287
    %v994 = vunpack.c.l.b16 %v288
    %v995 = vunpack.c.h.b16 %v288
    %v996 = vunpack.c.l.b16 %v289
    %v997 = vunpack.c.h.b16 %v289
    %v998 = vunpack.c.l.b16 %v290
    %v999 = vunpack.c.h.b16 %v290
    %v1000 = vunpack.c.l.b16 %v291
    %v1001 = vunpack.c.h.b16 %v291
    %v1002 = vunpack.c.l.b16 %v292
    %v1003 = vunpack.c.h.b16 %v292
    %v1004 = vunpack.c.l.b16 %v293
    %v1005 = vunpack.c.h.b16 %v293
    %v1006 = vunpack.c.l.b16 %v294
    %v1007 = vunpack.c.h.b16 %v294
    %v1008 = vunpack.c.l.b16 %v295
    %v1009 = vunpack.c.h.b16 %v295
    %v1010 = vunpack.c.l.b16 %v296
    %v1011 = vunpack.c.h.b16 %v296
    %v1012 = vunpack.c.l.b16 %v297
    %v1013 = vunpack.c.h.b16 %v297
    %v1014 = vunpack.c.l.b16 %v298
    %v1015 = vunpack.c.h.b16 %v298
    %v1016 = vunpack.c.l.b16 %v299
    %v1017 = vunpack.c.h.b16 %v299
    %v1018 = vunpack.c.l.b16 %v300
    %v1019 = vunpack.c.h.b16 %v300
    %v1020 = vunpack.c.l.b16 %v301
    %v1021 = vunpack.c.h.b16 %v301
    %v1022 = vunpack.c.l.b16 %v302
    %v1023 = vunpack.c.h.b16 %v302
    %v1024 = vunpack.c.l.b16 %v303
    %v1025 = vunpack.c.h.b16 %v303
    %v1026 = vunpack.c.l.b16 %v304
    %v1027 = vunpack.c.h.b16 %v304
    %v1028 = vunpack.c.l.b16 %v305
    %v1029 = vunpack.c.h.b16 %v305
    %v1030 = vunpack.c.l.b16 %v306
    %v1031 = vunpack.c.h.b16 %v306
    %v1032 = vunpack.c.l.b16 %v307
    %v1033 = vunpack.c.h.b16 %v307
    %v1034 = vunpack.c.l.b16 %v308
    %v1035 = vunpack.c.h.b16 %v308
    %v1036 = vunpack.c.l.b16 %v309
    %v1037 = vunpack.c.h.b16 %v309
    %v1038 = vunpack.c.l.b16 %v310
    %v1039 = vunpack.c.h.b16 %v310
    %v1040 = vunpack.c.l.b16 %v311
    %v1041 = vunpack.c.h.b16 %v311
    %v1042 = vunpack.c.l.b16 %v312
    %v1043 = vunpack.c.h.b16 %v312
    %v1044 = vunpack.c.l.b16 %v313
    %v1045 = vunpack.c.h.b16 %v313
    %v1046 = vunpack.c.l.b16 %v314
    %v1047 = vunpack.c.h.b16 %v314
    %v1048 = vunpack.c.l.b16 %v315
    %v1049 = vunpack.c.h.b16 %v315
    %v1050 = vunpack.c.l.b16 %v316
    %v1051 = vunpack.c.h.b16 %v316
    %v1052 = vunpack.c.l.b16 %v317
    %v1053 = vunpack.c.h.b16 %v317
    %v1054 = vunpack.c.l.b16 %v318
    %v1055 = vunpack.c.h.b16 %v318
    %v1056 = vunpack.c.l.b16 %v319
    %v1057 = vunpack.c.h.b16 %v319
    %v1058 = vunpack.c.l.b16 %v320
    %v1059 = vunpack.c.h.b16 %v320
    %v1060 = vunpack.c.l.b16 %v321
    %v1061 = vunpack.c.h.b16 %v321
    %v1062 = vunpack.c.l.b16 %v322
    %v1063 = vunpack.c.h.b16 %v322
    %v1064 = vunpack.c.l.b16 %v323
    %v1065 = vunpack.c.h.b16 %v323
    %v1066 = vunpack.c.l.b16 %v324
    %v1067 = vunpack.c.h.b16 %v324
    %v1068 = vunpack.c.l.b16 %v325
    %v1069 = vunpack.c.h.b16 %v325
    %v1070 = vunpack.c.l.b16 %v326
    %v1071 = vunpack.c.h.b16 %v326
    %v1072 = vunpack.c.l.b16 %v327
    %v1073 = vunpack.c.h.b16 %v327
    %v1074 = vunpack.c.l.b16 %v328
    %v1075 = vunpack.c.h.b16 %v328
    %v1076 = vunpack.c.l.b16 %v329
    %v1077 = vunpack.c.h.b16 %v329
    %v1078 = vunpack.c.l.b16 %v330
    %v1079 = vunpack.c.h.b16 %v330
    %v1080 = vunpack.c.l.b16 %v331
    %v1081 = vunpack.c.h.b16 %v331
    %v1082 = vunpack.c.l.b16 %v332
    %v1083 = vunpack.c.h.b16 %v332
    %v1084 = vunpack.c.l.b16 %v333
    %v1085 = vunpack.c.h.b16 %v333
    %v1086 = vunpack.c.l.b16 %v334
    %v1087 = vunpack.c.h.b16 %v334
    %v1088 = vunpack.c.l.b16 %v335
    %v1089 = vunpack.c.h.b16 %v335
    %v1090 = vunpack.c.l.b16 %v336
    %v1091 = vunpack.c.h.b16 %v336
    %v1092 = vunpack.c.l.b16 %v337
    %v1093 = vunpack.c.h.b16 %v337
    %v1094 = vunpack.c.l.b16 %v338
    %v1095 = vunpack.c.h.b16 %v338
    %v1096 = vunpack.c.l.b16 %v339
    %v1097 = vunpack.c.h.b16 %v339
    %v1098 = vunpack.c.l.b16 %v340
    %v1099 = vunpack.c.h.b16 %v340
    %v1100 = vunpack.c.l.b16 %v341
    %v1101 = vunpack.c.h.b16 %v341
    %v1102 = vunpack.c.l.b16 %v342
    %v1103 = vunpack.c.h.b16 %v342
    %v1104 = vunpack.c.l.b16 %v343
    %v1105 = vunpack.c.h.b16 %v343
    %v1106 = vunpack.c.l.b16 %v344
    %v1107 = vunpack.c.h.b16 %v344
    %v1108 = vunpack.c.l.b16 %v345
    %v1109 = vunpack.c.h.b16 %v345
    %v1110 = vunpack.c.l.b16 %v346
    %v1111 = vunpack.c.h.b16 %v346
    %v1112 = vunpack.c.l.b16 %v347
    %v1113 = vunpack.c.h.b16 %v347
    %v1114 = vunpack.c.l.b16 %v348
    %v1115 = vunpack.c.h.b16 %v348
    %v1116 = vunpack.c.l.b16 %v349
    %v1117 = vunpack.c.h.b16 %v349
    %v1118 = vunpack.c.l.b16 %v350
    %v1119 = vunpack.c.h.b16 %v350
    %v1120 = vunpack.c.l.b16 %v351
    %v1121 = vunpack.c.h.b16 %v351
    %v1122 = vunpack.c.l.b16 %v352
    %v1123 = vunpack.c.h.b16 %v352
    %v1124 = vunpack.c.l.b16 %v353
    %v1125 = vunpack.c.h.b16 %v353
    %v1126 = vunpack.c.l.b16 %v354
    %v1127 = vunpack.c.h.b16 %v354
    %v1128 = vunpack.c.l.b16 %v355
    %v1129 = vunpack.c.h.b16 %v355
    %v1130 = vunpack.c.l.b16 %v356
    %v1131 = vunpack.c.h.b16 %v356
    %v1132 = vunpack.c.l.b16 %v357
    %v1133 = vunpack.c.h.b16 %v357
    %v1134 = vunpack.c.l.b16 %v358
    %v1135 = vunpack.c.h.b16 %v358
    %v1136 = vunpack.c.l.b16 %v359
    %v1137 = vunpack.c.h.b16 %v359
    %v1138 = vunpack.c.l.b16 %v360
    %v1139 = vunpack.c.h.b16 %v360
    %v1140 = vunpack.c.l.b16 %v361
    %v1141 = vunpack.c.h.b16 %v361
    %v1142 = vunpack.c.l.b16 %v362
    %v1143 = vunpack.c.h.b16 %v362
    %v1144 = vunpack.c.l.b16 %v363
    %v1145 = vunpack.c.h.b16 %v363
    %v1146 = vunpack.c.l.b16 %v364
    %v1147 = vunpack.c.h.b16 %v364
    %v1148 = vunpack.c.l.b16 %v365
    %v1149 = vunpack.c.h.b16 %v365
    %v1150 = vunpack.c.l.b16 %v366
    %v1151 = vunpack.c.h.b16 %v366
    %v1152 = vunpack.c.l.b16 %v367
    %v1153 = vunpack.c.h.b16 %v367
    %v1154 = vunpack.c.l.b16 %v368
    %v1155 = vunpack.c.h.b16 %v368
    %v1156 = vunpack.c.l.b16 %v369
    %v1157 = vunpack.c.h.b16 %v369
    %v1158 = vunpack.c.l.b16 %v370
    %v1159 = vunpack.c.h.b16 %v370
    %v1160 = vunpack.c.l.b16 %v371
    %v1161 = vunpack.c.h.b16 %v371
    %v1162 = vunpack.c.l.b16 %v372
    %v1163 = vunpack.c.h.b16 %v372
    %v1164 = vunpack.c.l.b16 %v373
    %v1165 = vunpack.c.h.b16 %v373
    %v1166 = vunpack.c.l.b16 %v374
    %v1167 = vunpack.c.h.b16 %v374
    %v1168 = vunpack.c.l.b16 %v375
    %v1169 = vunpack.c.h.b16 %v375
    %v1170 = vunpack.c.l.b16 %v376
    %v1171 = vunpack.c.h.b16 %v376
    %v1172 = vunpack.c.l.b16 %v377
    %v1173 = vunpack.c.h.b16 %v377
    %v1174 = vunpack.c.l.b16 %v378
    %v1175 = vunpack.c.h.b16 %v378
    %v1176 = vunpack.c.l.b16 %v379
    %v1177 = vunpack.c.h.b16 %v379
    %v1178 = vunpack.c.l.b16 %v380
    %v1179 = vunpack.c.h.b16 %v380
    %v1180 = vunpack.c.l.b16 %v381
    %v1181 = vunpack.c.h.b16 %v381
    %v1182 = vunpack.c.l.b16 %v382
    %v1183 = vunpack.c.h.b16 %v382
    %v1184 = vunpack.c.l.b16 %v383
    %v1185 = vunpack.c.h.b16 %v383
    %v1186 = vunpack.c.l.b16 %v384
    %v1187 = vunpack.c.h.b16 %v384
    %v1188 = vunpack.c.l.b16 %v385
    %v1189 = vunpack.c.h.b16 %v385
    %v1190 = vunpack.c.l.b16 %v386
    %v1191 = vunpack.c.h.b16 %v386
    %v1192 = vunpack.c.l.b16 %v387
    %v1193 = vunpack.c.h.b16 %v387
    %v1194 = vunpack.c.l.b16 %v388
    %v1195 = vunpack.c.h.b16 %v388
    %v1196 = vunpack.c.l.b16 %v389
    %v1197 = vunpack.c.h.b16 %v389
    %v1198 = vunpack.c.l.b16 %v390
    %v1199 = vunpack.c.h.b16 %v390
    %v1200 = vunpack.c.l.b16 %v391
    %v1201 = vunpack.c.h.b16 %v391
    %v1202 = vunpack.c.l.b16 %v392
    %v1203 = vunpack.c.h.b16 %v392
    %v1204 = vunpack.c.l.b16 %v393
    %v1205 = vunpack.c.h.b16 %v393
    %v1206 = vunpack.c.l.b16 %v394
    %v1207 = vunpack.c.h.b16 %v394
    %v1208 = vunpack.c.l.b16 %v395
    %v1209 = vunpack.c.h.b16 %v395
    %v1210 = vunpack.c.l.b16 %v396
    %v1211 = vunpack.c.h.b16 %v396
    %v1212 = vunpack.c.l.b16 %v397
    %v1213 = vunpack.c.h.b16 %v397
    %v1214 = vunpack.c.l.b16 %v398
    %v1215 = vunpack.c.h.b16 %v398
    %v1216 = vunpack.c.l.b16 %v399
    %v1217 = vunpack.c.h.b16 %v399
    %v1218 = vunpack.c.l.b16 %v400
    %v1219 = vunpack.c.h.b16 %v400
    %v1220 = vunpack.c.l.b16 %v401
    %v1221 = vunpack.c.h.b16 %v401
    %v1222 = vunpack.c.l.b16 %v402
    %v1223 = vunpack.c.h.b16 %v402
    %v1224 = vunpack.c.l.b16 %v403
    %v1225 = vunpack.c.h.b16 %v403
    %v1226 = vunpack.c.l.b16 %v404
    %v1227 = vunpack.c.h.b16 %v404
    %v1228 = vunpack.c.l.b16 %v405
    %v1229 = vunpack.c.h.b16 %v405
    %v1230 = vunpack.c.l.b16 %v406
    %v1231 = vunpack.c.h.b16 %v406
    %v1232 = vunpack.c.l.b16 %v407
    %v1233 = vunpack.c.h.b16 %v407
    %v1234 = vunpack.c.l.b16 %v408
    %v1235 = vunpack.c.h.b16 %v408
    %v1236 = vunpack.c.l.b16 %v409
    %v1237 = vunpack.c.h.b16 %v409
    %v1238 = vunpack.c.l.b16 %v410
    %v1239 = vunpack.c.h.b16 %v410
    %v1240 = vunpack.c.l.b16 %v411
    %v1241 = vunpack.c.h.b16 %v411
    %v1242 = vunpack.c.l.b16 %v412
    %v1243 = vunpack.c.h.b16 %v412
    %v1244 = vunpack.c.l.b16 %v413
    %v1245 = vunpack.c.h.b16 %v413
    %v1246 = vunpack.c.l.b16 %v414
    %v1247 = vunpack.c.h.b16 %v414
    %v1248 = vunpack.c.l.b16 %v415
    %v1249 = vunpack.c.h.b16 %v415
    %v1250 = vunpack.c.l.b16 %v416
    %v1251 = vunpack.c.h.b16 %v416
    %v1252 = vunpack.c.l.b16 %v417
    %v1253 = vunpack.c.h.b16 %v417
    %v1254 = vunpack.c.l.b16 %v418
    %v1255 = vunpack.c.h.b16 %v418
    %v1256 = vunpack.c.l.b16 %v419
    %v1257 = vunpack.c.h.b16 %v419
    %v1258 = vunpack.c.l.b16 %v420
    %v1259 = vunpack.c.h.b16 %v420
    %v1260 = vunpack.c.l.b16 %v421
    %v1261 = vunpack.c.h.b16 %v421
    %v1262 = vunpack.c.l.b16 %v422
    %v1263 = vunpack.c.h.b16 %v422
    %v1264 = vunpack.c.l.b16 %v423
    %v1265 = vunpack.c.h.b16 %v423
    %v1266 = vunpack.c.l.b16 %v424
    %v1267 = vunpack.c.h.b16 %v424
    %v1268 = vunpack.c.l.b16 %v425
    %v1269 = vunpack.c.h.b16 %v425
    %v1270 = vunpack.c.l.b16 %v426
    %v1271 = vunpack.c.h.b16 %v426
    %v1272 = vunpack.c.l.b16 %v427
    %v1273 = vunpack.c.h.b16 %v427
    %v1274 = vunpack.c.l.b16 %v428
    %v1275 = vunpack.c.h.b16 %v428
    %v1276 = vunpack.c.l.b16 %v429
    %v1277 = vunpack.c.h.b16 %v429
    %v1278 = vunpack.c.l.b16 %v430
    %v1279 = vunpack.c.h.b16 %v430
    %v1280 = vunpack.c.l.b16 %v431
    %v1281 = vunpack.c.h.b16 %v431
    %v1282 = vunpack.c.l.b16 %v432
    %v1283 = vunpack.c.h.b16 %v432
    %v1284 = vunpack.c.l.b16 %v433
    %v1285 = vunpack.c.h.b16 %v433
    %v1286 = vpack.c.b16 %v790, %v774
    %v1287 = vpack.c.b16 %v791, %v775
    %v1288 = vpack.c.b16 %v792, %v776
    %v1289 = vpack.c.b16 %v793, %v777
    %v1290 = vpack.c.b16 %v794, %v778
    %v1291 = vpack.c.b16 %v795, %v779
    %v1292 = vpack.c.b16 %v796, %v780
    %v1293 = vpack.c.b16 %v797, %v781
    %v1294 = vpack.c.b16 %v798, %v782
    %v1295 = vpack.c.b16 %v799, %v783
    %v1296 = vpack.c.b16 %v800, %v784
    %v1297 = vpack.c.b16 %v801, %v785
    %v1298 = vpack.c.b16 %v802, %v786
    %v1299 = vpack.c.b16 %v803, %v787
    %v1300 = vpack.c.b16 %v804, %v788
    %v1301 = vpack.c.b16 %v805, %v789
    %v1302 = vpack.c.b16 %v822, %v806
    %v1303 = vpack.c.b16 %v823, %v807
    %v1304 = vpack.c.b16 %v824, %v808
    %v1305 = vpack.c.b16 %v825, %v809
    %v1306 = vpack.c.b16 %v826, %v810
    %v1307 = vpack.c.b16 %v827, %v811
    %v1308 = vpack.c.b16 %v828, %v812
    %v1309 = vpack.c.b16 %v829, %v813
    %v1310 = vpack.c.b16 %v830, %v814
    %v1311 = vpack.c.b16 %v831, %v815
    %v1312 = vpack.c.b16 %v832, %v816
    %v1313 = vpack.c.b16 %v833, %v817
    %v1314 = vpack.c.b16 %v834, %v818
    %v1315 = vpack.c.b16 %v835, %v819
    %v1316 = vpack.c.b16 %v836, %v820
    %v1317 = vpack.c.b16 %v837, %v821
    %v1318 = vpack.c.b16 %v854, %v838
    %v1319 = vpack.c.b16 %v855, %v839
    %v1320 = vpack.c.b16 %v856, %v840
    %v1321 = vpack.c.b16 %v857, %v841
    %v1322 = vpack.c.b16 %v858, %v842
    %v1323 = vpack.c.b16 %v859, %v843
    %v1324 = vpack.c.b16 %v860, %v844
    %v1325 = vpack.c.b16 %v861, %v845
    %v1326 = vpack.c.b16 %v862, %v846
    %v1327 = vpack.c.b16 %v863, %v847
    %v1328 = vpack.c.b16 %v864, %v848
    %v1329 = vpack.c.b16 %v865, %v849
    %v1330 = vpack.c.b16 %v866, %v850
    %v1331 = vpack.c.b16 %v867, %v851
    %v1332 = vpack.c.b16 %v868, %v852
    %v1333 = vpack.c.b16 %v869, %v853
    %v1334 = vpack.c.b16 %v886, %v870
    %v1335 = vpack.c.b16 %v887, %v871
    %v1336 = vpack.c.b16 %v888, %v872
    %v1337 = vpack.c.b16 %v889, %v873
    %v1338 = vpack.c.b16 %v890, %v874
    %v1339 = vpack.c.b16 %v891, %v875
    %v1340 = vpack.c.b16 %v892, %v876
    %v1341 = vpack.c.b16 %v893, %v877
    %v1342 = vpack.c.b16 %v894, %v878
    %v1343 = vpack.c.b16 %v895, %v879
    %v1344 = vpack.c.b16 %v896, %v880
    %v1345 = vpack.c.b16 %v897, %v881
    %v1346 = vpack.c.b16 %v898, %v882
    %v1347 = vpack.c.b16 %v899, %v883
    %v1348 = vpack.c.b16 %v900, %v884
    %v1349 = vpack.c.b16 %v901, %v885
    %v1350 = vpack.c.b16 %v918, %v902
    %v1351 = vpack.c.b16 %v919, %v903
    %v1352 = vpack.c.b16 %v920, %v904
    %v1353 = vpack.c.b16 %v921, %v905
    %v1354 = vpack.c.b16 %v922, %v906
    %v1355 = vpack.c.b16 %v923, %v907
    %v1356 = vpack.c.b16 %v924, %v908
    %v1357 = vpack.c.b16 %v925, %v909
    %v1358 = vpack.c.b16 %v926, %v910
    %v1359 = vpack.c.b16 %v927, %v911
    %v1360 = vpack.c.b16 %v928, %v912
    %v1361 = vpack.c.b16 %v929, %v913
    %v1362 = vpack.c.b16 %v930, %v914
    %v1363 = vpack.c.b16 %v931, %v915
    %v1364 = vpack.c.b16 %v932, %v916
    %v1365 = vpack.c.b16 %v933, %v917
    %v1366 = vpack.c.b16 %v950, %v934
    %v1367 = vpack.c.b16 %v951, %v935
    %v1368 = vpack.c.b16 %v952, %v936
    %v1369 = vpack.c.b16 %v953, %v937
    %v1370 = vpack.c.b16 %v954, %v938
    %v1371 = vpack.c.b16 %v955, %v939
    %v1372 = vpack.c.b16 %v956, %v940
    %v1373 = vpack.c.b16 %v957, %v941
    %v1374 = vpack.c.b16 %v958, %v942
    %v1375 = vpack.c.b16 %v959, %v943
    %v1376 = vpack.c.b16 %v960, %v944
    %v1377 = vpack.c.b16 %v961, %v945
    %v1378 = vpack.c.b16 %v962, %v946
    %v1379 = vpack.c.b16 %v963, %v947
    %v1380 = vpack.c.b16 %v964, %v948
    %v1381 = vpack.c.b16 %v965, %v949
    %v1382 = vpack.c.b16 %v982, %v966
    %v1383 = vpack.c.b16 %v983, %v967
    %v1384 = vpack.c.b16 %v984, %v968
    %v1385 = vpack.c.b16 %v985, %v969
    %v1386 = vpack.c.b16 %v986, %v970
    %v1387 = vpack.c.b16 %v987, %v971
    %v1388 = vpack.c.b16 %v988, %v972
    %v1389 = vpack.c.b16 %v989, %v973
    %v1390 = vpack.c.b16 %v990, %v974
    %v1391 = vpack.c.b16 %v991, %v975
    %v1392 = vpack.c.b16 %v992, %v976
    %v1393 = vpack.c.b16 %v993, %v977
    %v1394 = vpack.c.b16 %v994, %v978
    %v1395 = vpack.c.b16 %v995, %v979
    %v1396 = vpack.c.b16 %v996, %v980
    %v1397 = vpack.c.b16 %v997, %v981
    %v1398 = vpack.c.b16 %v1014, %v998
    %v1399 = vpack.c.b16 %v1015, %v999
    %v1400 = vpack.c.b16 %v1016, %v1000
    %v1401 = vpack.c.b16 %v1017, %v1001
    %v1402 = vpack.c.b16 %v1018, %v1002
    %v1403 = vpack.c.b16 %v1019, %v1003
    %v1404 = vpack.c.b16 %v1020, %v1004
    %v1405 = vpack.c.b16 %v1021, %v1005
    %v1406 = vpack.c.b16 %v1022, %v1006
    %v1407 = vpack.c.b16 %v1023, %v1007
    %v1408 = vpack.c.b16 %v1024, %v1008
    %v1409 = vpack.c.b16 %v1025, %v1009
    %v1410 = vpack.c.b16 %v1026, %v1010
    %v1411 = vpack.c.b16 %v1027, %v1011
    %v1412 = vpack.c.b16 %v1028, %v1012
    %v1413 = vpack.c.b16 %v1029, %v1013
    %v1414 = vpack.c.b16 %v1046, %v1030
    %v1415 = vpack.c.b16 %v1047, %v1031
    %v1416 = vpack.c.b16 %v1048, %v1032
    %v1417 = vpack.c.b16 %v1049, %v1033
    %v1418 = vpack.c.b16 %v1050, %v1034
    %v1419 = vpack.c.b16 %v1051, %v1035
    %v1420 = vpack.c.b16 %v1052, %v1036
    %v1421 = vpack.c.b16 %v1053, %v1037
    %v1422 = vpack.c.b16 %v1054, %v1038
    %v1423 = vpack.c.b16 %v1055, %v1039
    %v1424 = vpack.c.b16 %v1056, %v1040
    %v1425 = vpack.c.b16 %v1057, %v1041
    %v1426 = vpack.c.b16 %v1058, %v1042
    %v1427 = vpack.c.b16 %v1059, %v1043
    %v1428 = vpack.c.b16 %v1060, %v1044
    %v1429 = vpack.c.b16 %v1061, %v1045
    %v1430 = vpack.c.b16 %v1078, %v1062
    %v1431 = vpack.c.b16 %v1079, %v1063
    %v1432 = vpack.c.b16 %v1080, %v1064
    %v1433 = vpack.c.b16 %v1081, %v1065
    %v1434 = vpack.c.b16 %v1082, %v1066
    %v1435 = vpack.c.b16 %v1083, %v1067
    %v1436 = vpack.c.b16 %v1084, %v1068
    %v1437 = vpack.c.b16 %v1085, %v1069
    %v1438 = vpack.c.b16 %v1086, %v1070
    %v1439 = vpack.c.b16 %v1087, %v1071
    %v1440 = vpack.c.b16 %v1088, %v1072
    %v1441 = vpack.c.b16 %v1089, %v1073
    %v1442 = vpack.c.b16 %v1090, %v1074
    %v1443 = vpack.c.b16 %v1091, %v1075
    %v1444 = vpack.c.b16 %v1092, %v1076
    %v1445 = vpack.c.b16 %v1093, %v1077
    %v1446 = vpack.c.b16 %v1110, %v1094
    %v1447 = vpack.c.b16 %v1111, %v1095
    %v1448 = vpack.c.b16 %v1112, %v1096
    %v1449 = vpack.c.b16 %v1113, %v1097
    %v1450 = vpack.c.b16 %v1114, %v1098
    %v1451 = vpack.c.b16 %v1115, %v1099
    %v1452 = vpack.c.b16 %v1116, %v1100
    %v1453 = vpack.c.b16 %v1117, %v1101
    %v1454 = vpack.c.b16 %v1118, %v1102
    %v1455 = vpack.c.b16 %v1119, %v1103
    %v1456 = vpack.c.b16 %v1120, %v1104
    %v1457 = vpack.c.b16 %v1121, %v1105
    %v1458 = vpack.c.b16 %v1122, %v1106
    %v1459 = vpack.c.b16 %v1123, %v1107
    %v1460 = vpack.c.b16 %v1124, %v1108
    %v1461 = vpack.c.b16 %v1125, %v1109
    %v1462 = vpack.c.b16 %v1142, %v1126
    %v1463 = vpack.c.b16 %v1143, %v1127
    %v1464 = vpack.c.b16 %v1144, %v1128
    %v1465 = vpack.c.b16 %v1145, %v1129
    %v1466 = vpack.c.b16 %v1146, %v1130
    %v1467 = vpack.c.b16 %v1147, %v1131
    %v1468 = vpack.c.b16 %v1148, %v1132
    %v1469 = vpack.c.b16 %v1149, %v1133
    %v1470 = vpack.c.b16 %v1150, %v1134
    %v1471 = vpack.c.b16 %v1151, %v1135
    %v1472 = vpack.c.b16 %v1152, %v1136
    %v1473 = vpack.c.b16 %v1153, %v1137
    %v1474 = vpack.c.b16 %v1154, %v1138
    %v1475 = vpack.c.b16 %v1155, %v1139
    %v1476 = vpack.c.b16 %v1156, %v1140
    %v1477 = vpack.c.b16 %v1157, %v1141
    %v1478 = vpack.c.b16 %v1174, %v1158
    %v1479 = vpack.c.b16 %v1175, %v1159
    %v1480 = vpack.c.b16 %v1176, %v1160
    %v1481 = vpack.c.b16 %v1177, %v1161
    %v1482 = vpack.c.b16 %v1178, %v1162
    %v1483 = vpack.c.b16 %v1179, %v1163
    %v1484 = vpack.c.b16 %v1180, %v1164
    %v1485 = vpack.c.b16 %v1181, %v1165
    %v1486 = vpack.c.b16 %v1182, %v1166
    %v1487 = vpack.c.b16 %v1183, %v1167
    %v1488 = vpack.c.b16 %v1184, %v1168
    %v1489 = vpack.c.b16 %v1185, %v1169
    %v1490 = vpack.c.b16 %v1186, %v1170
    %v1491 = vpack.c.b16 %v1187, %v1171
    %v1492 = vpack.c.b16 %v1188, %v1172
    %v1493 = vpack.c.b16 %v1189, %v1173
    %v1494 = vpack.c.b16 %v1206, %v1190
    %v1495 = vpack.c.b16 %v1207, %v1191
    %v1496 = vpack.c.b16 %v1208, %v1192
    %v1497 = vpack.c.b16 %v1209, %v1193
    %v1498 = vpack.c.b16 %v1210, %v1194
    %v1499 = vpack.c.b16 %v1211, %v1195
    %v1500 = vpack.c.b16 %v1212, %v1196
    %v1501 = vpack.c.b16 %v1213, %v1197
    %v1502 = vpack.c.b16 %v1214, %v1198
    %v1503 = vpack.c.b16 %v1215, %v1199
    %v1504 = vpack.c.b16 %v1216, %v1200
    %v1505 = vpack.c.b16 %v1217, %v1201
    %v1506 = vpack.c.b16 %v1218, %v1202
    %v1507 = vpack.c.b16 %v1219, %v1203
    %v1508 = vpack.c.b16 %v1220, %v1204
    %v1509 = vpack.c.b16 %v1221, %v1205
    %v1510 = vpack.c.b16 %v1238, %v1222
    %v1511 = vpack.c.b16 %v1239, %v1223
    %v1512 = vpack.c.b16 %v1240, %v1224
    %v1513 = vpack.c.b16 %v1241, %v1225
    %v1514 = vpack.c.b16 %v1242, %v1226
    %v1515 = vpack.c.b16 %v1243, %v1227
    %v1516 = vpack.c.b16 %v1244, %v1228
    %v1517 = vpack.c.b16 %v1245, %v1229
    %v1518 = vpack.c.b16 %v1246, %v1230
    %v1519 = vpack.c.b16 %v1247, %v1231
    %v1520 = vpack.c.b16 %v1248, %v1232
    %v1521 = vpack.c.b16 %v1249, %v1233
    %v1522 = vpack.c.b16 %v1250, %v1234
    %v1523 = vpack.c.b16 %v1251, %v1235
    %v1524 = vpack.c.b16 %v1252, %v1236
    %v1525 = vpack.c.b16 %v1253, %v1237
    %v1526 = vpack.c.b16 %v1270, %v1254
    %v1527 = vpack.c.b16 %v1271, %v1255
    %v1528 = vpack.c.b16 %v1272, %v1256
    %v1529 = vpack.c.b16 %v1273, %v1257
    %v1530 = vpack.c.b16 %v1274, %v1258
    %v1531 = vpack.c.b16 %v1275, %v1259
    %v1532 = vpack.c.b16 %v1276, %v1260
    %v1533 = vpack.c.b16 %v1277, %v1261
    %v1534 = vpack.c.b16 %v1278, %v1262
    %v1535 = vpack.c.b16 %v1279, %v1263
    %v1536 = vpack.c.b16 %v1280, %v1264
    %v1537 = vpack.c.b16 %v1281, %v1265
    %v1538 = vpack.c.b16 %v1282, %v1266
    %v1539 = vpack.c.b16 %v1283, %v1267
    %v1540 = vpack.c.b16 %v1284, %v1268
    %v1541 = vpack.c.b16 %v1285, %v1269
    %1798 = vmatprep.subr.bf16.mxu0 %v1287
    %1799 = vmatpush1.bf16.msra.mxu0 %v1286
    %1800 = vmatprep.subr.bf16.mxu0 %v1303
    %1801 = vmatpush1.bf16.msra.mxu0 %v1302
    %1802 = vmatprep.subr.bf16.mxu0 %v1319
    %1803 = vmatpush1.bf16.msra.mxu0 %v1318
    %1804 = vmatprep.subr.bf16.mxu0 %v1335
    %1805 = vmatpush1.bf16.msra.mxu0 %v1334
    %1806 = vmatprep.subr.bf16.mxu0 %v1351
    %1807 = vmatpush1.bf16.msra.mxu0 %v1350
    %1808 = vmatprep.subr.bf16.mxu0 %v1367
    %1809 = vmatpush1.bf16.msra.mxu0 %v1366
    %1810 = vmatprep.subr.bf16.mxu0 %v1383
    %1811 = vmatpush1.bf16.msra.mxu0 %v1382
    %1812 = vmatprep.subr.bf16.mxu0 %v1399
    %1813 = vmatpush1.bf16.msra.mxu0 %v1398
    %1814 = vmatprep.subr.bf16.mxu0 %v1415
    %1815 = vmatpush1.bf16.msra.mxu0 %v1414
    %1816 = vmatprep.subr.bf16.mxu0 %v1431
    %1817 = vmatpush1.bf16.msra.mxu0 %v1430
    %1818 = vmatprep.subr.bf16.mxu0 %v1447
    %1819 = vmatpush1.bf16.msra.mxu0 %v1446
    %1820 = vmatprep.subr.bf16.mxu0 %v1463
    %1821 = vmatpush1.bf16.msra.mxu0 %v1462
    %1822 = vmatprep.subr.bf16.mxu0 %v1479
    %1823 = vmatpush1.bf16.msra.mxu0 %v1478
    %1824 = vmatprep.subr.bf16.mxu0 %v1495
    %1825 = vmatpush1.bf16.msra.mxu0 %v1494
    %1826 = vmatprep.subr.bf16.mxu0 %v1511
    %1827 = vmatpush1.bf16.msra.mxu0 %v1510
    %1828 = vmatprep.subr.bf16.mxu0 %v1527
    %1829 = vmatpush1.bf16.msra.mxu0 %v1526
    %1830 = vmatprep.mubr.bf16.mxu0 %v171
    %1831 = vmatmul.mubr.bf16.gmra.mrb[0].mxu0 %v170
    %v1832 = vpop.f32.mrb[0].mxu0
    %v1833 = vadd.f32 %v441, %v1832
    %v1834 = vpop.f32.mrb[0].mxu0
    %v1835 = vadd.f32 %v445, %v1834
    %v1836 = vpop.f32.mrb[0].mxu0
    %v1837 = vadd.f32 %v441, %v1836
    %v1838 = vpop.f32.mrb[0].mxu0
    %v1839 = vadd.f32 %v445, %v1838
    %1840 = vmatprep.mubr.bf16.mxu0 %v173
    %1841 = vmatmul.mubr.bf16.gmra.mrb[0].mxu0 %v172
    %v1842 = vpop.f32.mrb[0].mxu0
    %v1843 = vadd.f32 %v441, %v1842
    %v1844 = vpop.f32.mrb[0].mxu0
    %v1845 = vadd.f32 %v445, %v1844
    %v1846 = vpop.f32.mrb[0].mxu0
    %v1847 = vadd.f32 %v441, %v1846
    %v1848 = vpop.f32.mrb[0].mxu0
    %v1849 = vadd.f32 %v445, %v1848
    %1850 = vmatprep.mubr.bf16.mxu0 %v175
    %1851 = vmatmul.mubr.bf16.gmra.mrb[0].mxu0 %v174
    %v1852 = vpop.f32.mrb[0].mxu0
    %v1853 = vadd.f32 %v441, %v1852
    %v1854 = vpop.f32.mrb[0].mxu0
    %v1855 = vadd.f32 %v445, %v1854
    %v1856 = vpop.f32.mrb[0].mxu0
    %v1857 = vadd.f32 %v441, %v1856
    %v1858 = vpop.f32.mrb[0].mxu0
    %v1859 = vadd.f32 %v445, %v1858
    %1860 = vmatprep.mubr.bf16.mxu0 %v177
    %1861 = vmatmul.mubr.bf16.gmra.mrb[0].mxu0 %v176
    %v1862 = vpop.f32.mrb[0].mxu0
    %v1863 = vadd.f32 %v441, %v1862
    %v1864 = vpop.f32.mrb[0].mxu0
    %v1865 = vadd.f32 %v445, %v1864
    %v1866 = vpop.f32.mrb[0].mxu0
    %v1867 = vadd.f32 %v441, %v1866
    %v1868 = vpop.f32.mrb[0].mxu0
    %v1869 = vadd.f32 %v445, %v1868
    %1870 = vdwg.mxu0
    %1871 = vmatprep.subr.bf16.mxu0 %v1289
    %1872 = vmatpush1.bf16.msra.mxu0 %v1288
    %1873 = vmatprep.subr.bf16.mxu0 %v1305
    %1874 = vmatpush1.bf16.msra.mxu0 %v1304
    %1875 = vmatprep.subr.bf16.mxu0 %v1321
    %1876 = vmatpush1.bf16.msra.mxu0 %v1320
    %1877 = vmatprep.subr.bf16.mxu0 %v1337
    %1878 = vmatpush1.bf16.msra.mxu0 %v1336
    %1879 = vmatprep.subr.bf16.mxu0 %v1353
    %1880 = vmatpush1.bf16.msra.mxu0 %v1352
    %1881 = vmatprep.subr.bf16.mxu0 %v1369
    %1882 = vmatpush1.bf16.msra.mxu0 %v1368
    %1883 = vmatprep.subr.bf16.mxu0 %v1385
    %1884 = vmatpush1.bf16.msra.mxu0 %v1384
    %1885 = vmatprep.subr.bf16.mxu0 %v1401
    %1886 = vmatpush1.bf16.msra.mxu0 %v1400
    %1887 = vmatprep.subr.bf16.mxu0 %v1417
    %1888 = vmatpush1.bf16.msra.mxu0 %v1416
    %1889 = vmatprep.subr.bf16.mxu0 %v1433
    %1890 = vmatpush1.bf16.msra.mxu0 %v1432
    %1891 = vmatprep.subr.bf16.mxu0 %v1449
    %1892 = vmatpush1.bf16.msra.mxu0 %v1448
    %1893 = vmatprep.subr.bf16.mxu0 %v1465
    %1894 = vmatpush1.bf16.msra.mxu0 %v1464
    %1895 = vmatprep.subr.bf16.mxu0 %v1481
    %1896 = vmatpush1.bf16.msra.mxu0 %v1480
    %1897 = vmatprep.subr.bf16.mxu0 %v1497
    %1898 = vmatpush1.bf16.msra.mxu0 %v1496
    %1899 = vmatprep.subr.bf16.mxu0 %v1513
    %1900 = vmatpush1.bf16.msra.mxu0 %v1512
    %1901 = vmatprep.subr.bf16.mxu0 %v1529
    %1902 = vmatpush1.bf16.msra.mxu0 %v1528
    %1903 = vmatprep.mubr.bf16.mxu0 %v171
    %1904 = vmatmul.mubr.bf16.gmra.mrb[0].mxu0 %v170
    %v1905 = vpop.f32.mrb[0].mxu0
    %v1906 = vadd.f32 %v449, %v1905
    %v1907 = vpop.f32.mrb[0].mxu0
    %v1908 = vadd.f32 %v453, %v1907
    %v1909 = vpop.f32.mrb[0].mxu0
    %v1910 = vadd.f32 %v449, %v1909
    %v1911 = vpop.f32.mrb[0].mxu0
    %v1912 = vadd.f32 %v453, %v1911
    %1913 = vmatprep.mubr.bf16.mxu0 %v173
    %1914 = vmatmul.mubr.bf16.gmra.mrb[0].mxu0 %v172
    %v1915 = vpop.f32.mrb[0].mxu0
    %v1916 = vadd.f32 %v449, %v1915
    %v1917 = vpop.f32.mrb[0].mxu0
    %v1918 = vadd.f32 %v453, %v1917
    %v1919 = vpop.f32.mrb[0].mxu0
    %v1920 = vadd.f32 %v449, %v1919
    %v1921 = vpop.f32.mrb[0].mxu0
    %v1922 = vadd.f32 %v453, %v1921
    %1923 = vmatprep.mubr.bf16.mxu0 %v175
    %1924 = vmatmul.mubr.bf16.gmra.mrb[0].mxu0 %v174
    %v1925 = vpop.f32.mrb[0].mxu0
    %v1926 = vadd.f32 %v449, %v1925
    %v1927 = vpop.f32.mrb[0].mxu0
    %v1928 = vadd.f32 %v453, %v1927
    %v1929 = vpop.f32.mrb[0].mxu0
    %v1930 = vadd.f32 %v449, %v1929
    %v1931 = vpop.f32.mrb[0].mxu0
    %v1932 = vadd.f32 %v453, %v1931
    %1933 = vmatprep.mubr.bf16.mxu0 %v177
    %1934 = vmatmul.mubr.bf16.gmra.mrb[0].mxu0 %v176
    %v1935 = vpop.f32.mrb[0].mxu0
    %v1936 = vadd.f32 %v449, %v1935
    %v1937 = vpop.f32.mrb[0].mxu0
    %v1938 = vadd.f32 %v453, %v1937
    %v1939 = vpop.f32.mrb[0].mxu0
    %v1940 = vadd.f32 %v449, %v1939
    %v1941 = vpop.f32.mrb[0].mxu0
    %v1942 = vadd.f32 %v453, %v1941
    %1943 = vdwg.mxu0
    %1944 = vmatprep.subr.bf16.mxu0 %v1291
    %1945 = vmatpush1.bf16.msra.mxu0 %v1290
    %1946 = vmatprep.subr.bf16.mxu0 %v1307
    %1947 = vmatpush1.bf16.msra.mxu0 %v1306
    %1948 = vmatprep.subr.bf16.mxu0 %v1323
    %1949 = vmatpush1.bf16.msra.mxu0 %v1322
    %1950 = vmatprep.subr.bf16.mxu0 %v1339
    %1951 = vmatpush1.bf16.msra.mxu0 %v1338
    %1952 = vmatprep.subr.bf16.mxu0 %v1355
    %1953 = vmatpush1.bf16.msra.mxu0 %v1354
    %1954 = vmatprep.subr.bf16.mxu0 %v1371
    %1955 = vmatpush1.bf16.msra.mxu0 %v1370
    %1956 = vmatprep.subr.bf16.mxu0 %v1387
    %1957 = vmatpush1.bf16.msra.mxu0 %v1386
    %1958 = vmatprep.subr.bf16.mxu0 %v1403
    %1959 = vmatpush1.bf16.msra.mxu0 %v1402
    %1960 = vmatprep.subr.bf16.mxu0 %v1419
    %1961 = vmatpush1.bf16.msra.mxu0 %v1418
    %1962 = vmatprep.subr.bf16.mxu0 %v1435
    %1963 = vmatpush1.bf16.msra.mxu0 %v1434
    %1964 = vmatprep.subr.bf16.mxu0 %v1451
    %1965 = vmatpush1.bf16.msra.mxu0 %v1450
    %1966 = vmatprep.subr.bf16.mxu0 %v1467
    %1967 = vmatpush1.bf16.msra.mxu0 %v1466
    %1968 = vmatprep.subr.bf16.mxu0 %v1483
    %1969 = vmatpush1.bf16.msra.mxu0 %v1482
    %1970 = vmatprep.subr.bf16.mxu0 %v1499
    %1971 = vmatpush1.bf16.msra.mxu0 %v1498
    %1972 = vmatprep.subr.bf16.mxu0 %v1515
    %1973 = vmatpush1.bf16.msra.mxu0 %v1514
    %1974 = vmatprep.subr.bf16.mxu0 %v1531
    %1975 = vmatpush1.bf16.msra.mxu0 %v1530
    %1976 = vmatprep.mubr.bf16.mxu0 %v171
    %1977 = vmatmul.mubr.bf16.gmra.mrb[0].mxu0 %v170
    %v1978 = vpop.f32.mrb[0].mxu0
    %v1979 = vadd.f32 %v457, %v1978
    %v1980 = vpop.f32.mrb[0].mxu0
    %v1981 = vadd.f32 %v461, %v1980
    %v1982 = vpop.f32.mrb[0].mxu0
    %v1983 = vadd.f32 %v457, %v1982
    %v1984 = vpop.f32.mrb[0].mxu0
    %v1985 = vadd.f32 %v461, %v1984
    %1986 = vmatprep.mubr.bf16.mxu0 %v173
    %1987 = vmatmul.mubr.bf16.gmra.mrb[0].mxu0 %v172
    %v1988 = vpop.f32.mrb[0].mxu0
    %v1989 = vadd.f32 %v457, %v1988
    %v1990 = vpop.f32.mrb[0].mxu0
    %v1991 = vadd.f32 %v461, %v1990
    %v1992 = vpop.f32.mrb[0].mxu0
    %v1993 = vadd.f32 %v457, %v1992
    %v1994 = vpop.f32.mrb[0].mxu0
    %v1995 = vadd.f32 %v461, %v1994
    %1996 = vmatprep.mubr.bf16.mxu0 %v175
    %1997 = vmatmul.mubr.bf16.gmra.mrb[0].mxu0 %v174
    %v1998 = vpop.f32.mrb[0].mxu0
    %v1999 = vadd.f32 %v457, %v1998
    %v2000 = vpop.f32.mrb[0].mxu0
    %v2001 = vadd.f32 %v461, %v2000
    %v2002 = vpop.f32.mrb[0].mxu0
    %v2003 = vadd.f32 %v457, %v2002
    %v2004 = vpop.f32.mrb[0].mxu0
    %v2005 = vadd.f32 %v461, %v2004
    %2006 = vmatprep.mubr.bf16.mxu0 %v177
    %2007 = vmatmul.mubr.bf16.gmra.mrb[0].mxu0 %v176
    %v2008 = vpop.f32.mrb[0].mxu0
    %v2009 = vadd.f32 %v457, %v2008
    %v2010 = vpop.f32.mrb[0].mxu0
    %v2011 = vadd.f32 %v461, %v2010
    %v2012 = vpop.f32.mrb[0].mxu0
    %v2013 = vadd.f32 %v457, %v2012
    %v2014 = vpop.f32.mrb[0].mxu0
    %v2015 = vadd.f32 %v461, %v2014
    %2016 = vdwg.mxu0
    %2017 = vmatprep.subr.bf16.mxu0 %v1293
    %2018 = vmatpush1.bf16.msra.mxu0 %v1292
    %2019 = vmatprep.subr.bf16.mxu0 %v1309
    %2020 = vmatpush1.bf16.msra.mxu0 %v1308
    %2021 = vmatprep.subr.bf16.mxu0 %v1325
    %2022 = vmatpush1.bf16.msra.mxu0 %v1324
    %2023 = vmatprep.subr.bf16.mxu0 %v1341
    %2024 = vmatpush1.bf16.msra.mxu0 %v1340
    %2025 = vmatprep.subr.bf16.mxu0 %v1357
    %2026 = vmatpush1.bf16.msra.mxu0 %v1356
    %2027 = vmatprep.subr.bf16.mxu0 %v1373
    %2028 = vmatpush1.bf16.msra.mxu0 %v1372
    %2029 = vmatprep.subr.bf16.mxu0 %v1389
    %2030 = vmatpush1.bf16.msra.mxu0 %v1388
    %2031 = vmatprep.subr.bf16.mxu0 %v1405
    %2032 = vmatpush1.bf16.msra.mxu0 %v1404
    %2033 = vmatprep.subr.bf16.mxu0 %v1421
    %2034 = vmatpush1.bf16.msra.mxu0 %v1420
    %2035 = vmatprep.subr.bf16.mxu0 %v1437
    %2036 = vmatpush1.bf16.msra.mxu0 %v1436
    %2037 = vmatprep.subr.bf16.mxu0 %v1453
    %2038 = vmatpush1.bf16.msra.mxu0 %v1452
    %2039 = vmatprep.subr.bf16.mxu0 %v1469
    %2040 = vmatpush1.bf16.msra.mxu0 %v1468
    %2041 = vmatprep.subr.bf16.mxu0 %v1485
    %2042 = vmatpush1.bf16.msra.mxu0 %v1484
    %2043 = vmatprep.subr.bf16.mxu0 %v1501
    %2044 = vmatpush1.bf16.msra.mxu0 %v1500
    %2045 = vmatprep.subr.bf16.mxu0 %v1517
    %2046 = vmatpush1.bf16.msra.mxu0 %v1516
    %2047 = vmatprep.subr.bf16.mxu0 %v1533
    %2048 = vmatpush1.bf16.msra.mxu0 %v1532
    %2049 = vmatprep.mubr.bf16.mxu0 %v171
    %2050 = vmatmul.mubr.bf16.gmra.mrb[0].mxu0 %v170
    %v2051 = vpop.f32.mrb[0].mxu0
    %v2052 = vadd.f32 %v465, %v2051
    %v2053 = vpop.f32.mrb[0].mxu0
    %v2054 = vadd.f32 %v469, %v2053
    %v2055 = vpop.f32.mrb[0].mxu0
    %v2056 = vadd.f32 %v465, %v2055
    %v2057 = vpop.f32.mrb[0].mxu0
    %v2058 = vadd.f32 %v469, %v2057
    %2059 = vmatprep.mubr.bf16.mxu0 %v173
    %2060 = vmatmul.mubr.bf16.gmra.mrb[0].mxu0 %v172
    %v2061 = vpop.f32.mrb[0].mxu0
    %v2062 = vadd.f32 %v465, %v2061
    %v2063 = vpop.f32.mrb[0].mxu0
    %v2064 = vadd.f32 %v469, %v2063
    %v2065 = vpop.f32.mrb[0].mxu0
    %v2066 = vadd.f32 %v465, %v2065
    %v2067 = vpop.f32.mrb[0].mxu0
    %v2068 = vadd.f32 %v469, %v2067
    %2069 = vmatprep.mubr.bf16.mxu0 %v175
    %2070 = vmatmul.mubr.bf16.gmra.mrb[0].mxu0 %v174
    %v2071 = vpop.f32.mrb[0].mxu0
    %v2072 = vadd.f32 %v465, %v2071
    %v2073 = vpop.f32.mrb[0].mxu0
    %v2074 = vadd.f32 %v469, %v2073
    %v2075 = vpop.f32.mrb[0].mxu0
    %v2076 = vadd.f32 %v465, %v2075
    %v2077 = vpop.f32.mrb[0].mxu0
    %v2078 = vadd.f32 %v469, %v2077
    %2079 = vmatprep.mubr.bf16.mxu0 %v177
    %2080 = vmatmul.mubr.bf16.gmra.mrb[0].mxu0 %v176
    %v2081 = vpop.f32.mrb[0].mxu0
    %v2082 = vadd.f32 %v465, %v2081
    %v2083 = vpop.f32.mrb[0].mxu0
    %v2084 = vadd.f32 %v469, %v2083
    %v2085 = vpop.f32.mrb[0].mxu0
    %v2086 = vadd.f32 %v465, %v2085
    %v2087 = vpop.f32.mrb[0].mxu0
    %v2088 = vadd.f32 %v469, %v2087
    %2089 = vdwg.mxu0
    %2090 = vmatprep.subr.bf16.mxu0 %v1295
    %2091 = vmatpush1.bf16.msra.mxu0 %v1294
    %2092 = vmatprep.subr.bf16.mxu0 %v1311
    %2093 = vmatpush1.bf16.msra.mxu0 %v1310
    %2094 = vmatprep.subr.bf16.mxu0 %v1327
    %2095 = vmatpush1.bf16.msra.mxu0 %v1326
    %2096 = vmatprep.subr.bf16.mxu0 %v1343
    %2097 = vmatpush1.bf16.msra.mxu0 %v1342
    %2098 = vmatprep.subr.bf16.mxu0 %v1359
    %2099 = vmatpush1.bf16.msra.mxu0 %v1358
    %2100 = vmatprep.subr.bf16.mxu0 %v1375
    %2101 = vmatpush1.bf16.msra.mxu0 %v1374
    %2102 = vmatprep.subr.bf16.mxu0 %v1391
    %2103 = vmatpush1.bf16.msra.mxu0 %v1390
    %2104 = vmatprep.subr.bf16.mxu0 %v1407
    %2105 = vmatpush1.bf16.msra.mxu0 %v1406
    %2106 = vmatprep.subr.bf16.mxu0 %v1423
    %2107 = vmatpush1.bf16.msra.mxu0 %v1422
    %2108 = vmatprep.subr.bf16.mxu0 %v1439
    %2109 = vmatpush1.bf16.msra.mxu0 %v1438
    %2110 = vmatprep.subr.bf16.mxu0 %v1455
    %2111 = vmatpush1.bf16.msra.mxu0 %v1454
    %2112 = vmatprep.subr.bf16.mxu0 %v1471
    %2113 = vmatpush1.bf16.msra.mxu0 %v1470
    %2114 = vmatprep.subr.bf16.mxu0 %v1487
    %2115 = vmatpush1.bf16.msra.mxu0 %v1486
    %2116 = vmatprep.subr.bf16.mxu0 %v1503
    %2117 = vmatpush1.bf16.msra.mxu0 %v1502
    %2118 = vmatprep.subr.bf16.mxu0 %v1519
    %2119 = vmatpush1.bf16.msra.mxu0 %v1518
    %2120 = vmatprep.subr.bf16.mxu0 %v1535
    %2121 = vmatpush1.bf16.msra.mxu0 %v1534
    %2122 = vmatprep.mubr.bf16.mxu0 %v171
    %2123 = vmatmul.mubr.bf16.gmra.mrb[0].mxu0 %v170
    %v2124 = vpop.f32.mrb[0].mxu0
    %v2125 = vadd.f32 %v473, %v2124
    %v2126 = vpop.f32.mrb[0].mxu0
    %v2127 = vadd.f32 %v477, %v2126
    %v2128 = vpop.f32.mrb[0].mxu0
    %v2129 = vadd.f32 %v473, %v2128
    %v2130 = vpop.f32.mrb[0].mxu0
    %v2131 = vadd.f32 %v477, %v2130
    %2132 = vmatprep.mubr.bf16.mxu0 %v173
    %2133 = vmatmul.mubr.bf16.gmra.mrb[0].mxu0 %v172
    %v2134 = vpop.f32.mrb[0].mxu0
    %v2135 = vadd.f32 %v473, %v2134
    %v2136 = vpop.f32.mrb[0].mxu0
    %v2137 = vadd.f32 %v477, %v2136
    %v2138 = vpop.f32.mrb[0].mxu0
    %v2139 = vadd.f32 %v473, %v2138
    %v2140 = vpop.f32.mrb[0].mxu0
    %v2141 = vadd.f32 %v477, %v2140
    %2142 = vmatprep.mubr.bf16.mxu0 %v175
    %2143 = vmatmul.mubr.bf16.gmra.mrb[0].mxu0 %v174
    %v2144 = vpop.f32.mrb[0].mxu0
    %v2145 = vadd.f32 %v473, %v2144
    %v2146 = vpop.f32.mrb[0].mxu0
    %v2147 = vadd.f32 %v477, %v2146
    %v2148 = vpop.f32.mrb[0].mxu0
    %v2149 = vadd.f32 %v473, %v2148
    %v2150 = vpop.f32.mrb[0].mxu0
    %v2151 = vadd.f32 %v477, %v2150
    %2152 = vmatprep.mubr.bf16.mxu0 %v177
    %2153 = vmatmul.mubr.bf16.gmra.mrb[0].mxu0 %v176
    %v2154 = vpop.f32.mrb[0].mxu0
    %v2155 = vadd.f32 %v473, %v2154
    %v2156 = vpop.f32.mrb[0].mxu0
    %v2157 = vadd.f32 %v477, %v2156
    %v2158 = vpop.f32.mrb[0].mxu0
    %v2159 = vadd.f32 %v473, %v2158
    %v2160 = vpop.f32.mrb[0].mxu0
    %v2161 = vadd.f32 %v477, %v2160
    %2162 = vdwg.mxu0
    %2163 = vmatprep.subr.bf16.mxu0 %v1297
    %2164 = vmatpush1.bf16.msra.mxu0 %v1296
    %2165 = vmatprep.subr.bf16.mxu0 %v1313
    %2166 = vmatpush1.bf16.msra.mxu0 %v1312
    %2167 = vmatprep.subr.bf16.mxu0 %v1329
    %2168 = vmatpush1.bf16.msra.mxu0 %v1328
    %2169 = vmatprep.subr.bf16.mxu0 %v1345
    %2170 = vmatpush1.bf16.msra.mxu0 %v1344
    %2171 = vmatprep.subr.bf16.mxu0 %v1361
    %2172 = vmatpush1.bf16.msra.mxu0 %v1360
    %2173 = vmatprep.subr.bf16.mxu0 %v1377
    %2174 = vmatpush1.bf16.msra.mxu0 %v1376
    %2175 = vmatprep.subr.bf16.mxu0 %v1393
    %2176 = vmatpush1.bf16.msra.mxu0 %v1392
    %2177 = vmatprep.subr.bf16.mxu0 %v1409
    %2178 = vmatpush1.bf16.msra.mxu0 %v1408
    %2179 = vmatprep.subr.bf16.mxu0 %v1425
    %2180 = vmatpush1.bf16.msra.mxu0 %v1424
    %2181 = vmatprep.subr.bf16.mxu0 %v1441
    %2182 = vmatpush1.bf16.msra.mxu0 %v1440
    %2183 = vmatprep.subr.bf16.mxu0 %v1457
    %2184 = vmatpush1.bf16.msra.mxu0 %v1456
    %2185 = vmatprep.subr.bf16.mxu0 %v1473
    %2186 = vmatpush1.bf16.msra.mxu0 %v1472
    %2187 = vmatprep.subr.bf16.mxu0 %v1489
    %2188 = vmatpush1.bf16.msra.mxu0 %v1488
    %2189 = vmatprep.subr.bf16.mxu0 %v1505
    %2190 = vmatpush1.bf16.msra.mxu0 %v1504
    %2191 = vmatprep.subr.bf16.mxu0 %v1521
    %2192 = vmatpush1.bf16.msra.mxu0 %v1520
    %2193 = vmatprep.subr.bf16.mxu0 %v1537
    %2194 = vmatpush1.bf16.msra.mxu0 %v1536
    %2195 = vmatprep.mubr.bf16.mxu0 %v171
    %2196 = vmatmul.mubr.bf16.gmra.mrb[0].mxu0 %v170
    %v2197 = vpop.f32.mrb[0].mxu0
    %v2198 = vadd.f32 %v481, %v2197
    %v2199 = vpop.f32.mrb[0].mxu0
    %v2200 = vadd.f32 %v485, %v2199
    %v2201 = vpop.f32.mrb[0].mxu0
    %v2202 = vadd.f32 %v481, %v2201
    %v2203 = vpop.f32.mrb[0].mxu0
    %v2204 = vadd.f32 %v485, %v2203
    %2205 = vmatprep.mubr.bf16.mxu0 %v173
    %2206 = vmatmul.mubr.bf16.gmra.mrb[0].mxu0 %v172
    %v2207 = vpop.f32.mrb[0].mxu0
    %v2208 = vadd.f32 %v481, %v2207
    %v2209 = vpop.f32.mrb[0].mxu0
    %v2210 = vadd.f32 %v485, %v2209
    %v2211 = vpop.f32.mrb[0].mxu0
    %v2212 = vadd.f32 %v481, %v2211
    %v2213 = vpop.f32.mrb[0].mxu0
    %v2214 = vadd.f32 %v485, %v2213
    %2215 = vmatprep.mubr.bf16.mxu0 %v175
    %2216 = vmatmul.mubr.bf16.gmra.mrb[0].mxu0 %v174
    %v2217 = vpop.f32.mrb[0].mxu0
    %v2218 = vadd.f32 %v481, %v2217
    %v2219 = vpop.f32.mrb[0].mxu0
    %v2220 = vadd.f32 %v485, %v2219
    %v2221 = vpop.f32.mrb[0].mxu0
    %v2222 = vadd.f32 %v481, %v2221
    %v2223 = vpop.f32.mrb[0].mxu0
    %v2224 = vadd.f32 %v485, %v2223
    %2225 = vmatprep.mubr.bf16.mxu0 %v177
    %2226 = vmatmul.mubr.bf16.gmra.mrb[0].mxu0 %v176
    %v2227 = vpop.f32.mrb[0].mxu0
    %v2228 = vadd.f32 %v481, %v2227
    %v2229 = vpop.f32.mrb[0].mxu0
    %v2230 = vadd.f32 %v485, %v2229
    %v2231 = vpop.f32.mrb[0].mxu0
    %v2232 = vadd.f32 %v481, %v2231
    %v2233 = vpop.f32.mrb[0].mxu0
    %v2234 = vadd.f32 %v485, %v2233
    %2235 = vdwg.mxu0
    %2236 = vmatprep.subr.bf16.mxu0 %v1299
    %2237 = vmatpush1.bf16.msra.mxu0 %v1298
    %2238 = vmatprep.subr.bf16.mxu0 %v1315
    %2239 = vmatpush1.bf16.msra.mxu0 %v1314
    %2240 = vmatprep.subr.bf16.mxu0 %v1331
    %2241 = vmatpush1.bf16.msra.mxu0 %v1330
    %2242 = vmatprep.subr.bf16.mxu0 %v1347
    %2243 = vmatpush1.bf16.msra.mxu0 %v1346
    %2244 = vmatprep.subr.bf16.mxu0 %v1363
    %2245 = vmatpush1.bf16.msra.mxu0 %v1362
    %2246 = vmatprep.subr.bf16.mxu0 %v1379
    %2247 = vmatpush1.bf16.msra.mxu0 %v1378
    %2248 = vmatprep.subr.bf16.mxu0 %v1395
    %2249 = vmatpush1.bf16.msra.mxu0 %v1394
    %2250 = vmatprep.subr.bf16.mxu0 %v1411
    %2251 = vmatpush1.bf16.msra.mxu0 %v1410
    %2252 = vmatprep.subr.bf16.mxu0 %v1427
    %2253 = vmatpush1.bf16.msra.mxu0 %v1426
    %2254 = vmatprep.subr.bf16.mxu0 %v1443
    %2255 = vmatpush1.bf16.msra.mxu0 %v1442
    %2256 = vmatprep.subr.bf16.mxu0 %v1459
    %2257 = vmatpush1.bf16.msra.mxu0 %v1458
    %2258 = vmatprep.subr.bf16.mxu0 %v1475
    %2259 = vmatpush1.bf16.msra.mxu0 %v1474
    %2260 = vmatprep.subr.bf16.mxu0 %v1491
    %2261 = vmatpush1.bf16.msra.mxu0 %v1490
    %2262 = vmatprep.subr.bf16.mxu0 %v1507
    %2263 = vmatpush1.bf16.msra.mxu0 %v1506
    %2264 = vmatprep.subr.bf16.mxu0 %v1523
    %2265 = vmatpush1.bf16.msra.mxu0 %v1522
    %2266 = vmatprep.subr.bf16.mxu0 %v1539
    %2267 = vmatpush1.bf16.msra.mxu0 %v1538
    %2268 = vmatprep.mubr.bf16.mxu0 %v171
    %2269 = vmatmul.mubr.bf16.gmra.mrb[0].mxu0 %v170
    %v2270 = vpop.f32.mrb[0].mxu0
    %v2271 = vadd.f32 %v489, %v2270
    %v2272 = vpop.f32.mrb[0].mxu0
    %v2273 = vadd.f32 %v493, %v2272
    %v2274 = vpop.f32.mrb[0].mxu0
    %v2275 = vadd.f32 %v489, %v2274
    %v2276 = vpop.f32.mrb[0].mxu0
    %v2277 = vadd.f32 %v493, %v2276
    %2278 = vmatprep.mubr.bf16.mxu0 %v173
    %2279 = vmatmul.mubr.bf16.gmra.mrb[0].mxu0 %v172
    %v2280 = vpop.f32.mrb[0].mxu0
    %v2281 = vadd.f32 %v489, %v2280
    %v2282 = vpop.f32.mrb[0].mxu0
    %v2283 = vadd.f32 %v493, %v2282
    %v2284 = vpop.f32.mrb[0].mxu0
    %v2285 = vadd.f32 %v489, %v2284
    %v2286 = vpop.f32.mrb[0].mxu0
    %v2287 = vadd.f32 %v493, %v2286
    %2288 = vmatprep.mubr.bf16.mxu0 %v175
    %2289 = vmatmul.mubr.bf16.gmra.mrb[0].mxu0 %v174
    %v2290 = vpop.f32.mrb[0].mxu0
    %v2291 = vadd.f32 %v489, %v2290
    %v2292 = vpop.f32.mrb[0].mxu0
    %v2293 = vadd.f32 %v493, %v2292
    %v2294 = vpop.f32.mrb[0].mxu0
    %v2295 = vadd.f32 %v489, %v2294
    %v2296 = vpop.f32.mrb[0].mxu0
    %v2297 = vadd.f32 %v493, %v2296
    %2298 = vmatprep.mubr.bf16.mxu0 %v177
    %2299 = vmatmul.mubr.bf16.gmra.mrb[0].mxu0 %v176
    %v2300 = vpop.f32.mrb[0].mxu0
    %v2301 = vadd.f32 %v489, %v2300
    %v2302 = vpop.f32.mrb[0].mxu0
    %v2303 = vadd.f32 %v493, %v2302
    %v2304 = vpop.f32.mrb[0].mxu0
    %v2305 = vadd.f32 %v489, %v2304
    %v2306 = vpop.f32.mrb[0].mxu0
    %v2307 = vadd.f32 %v493, %v2306
    %2308 = vdwg.mxu0
    %2309 = vmatprep.subr.bf16.mxu0 %v1301
    %2310 = vmatpush1.bf16.msra.mxu0 %v1300
    %2311 = vmatprep.subr.bf16.mxu0 %v1317
    %2312 = vmatpush1.bf16.msra.mxu0 %v1316
    %2313 = vmatprep.subr.bf16.mxu0 %v1333
    %2314 = vmatpush1.bf16.msra.mxu0 %v1332
    %2315 = vmatprep.subr.bf16.mxu0 %v1349
    %2316 = vmatpush1.bf16.msra.mxu0 %v1348
    %2317 = vmatprep.subr.bf16.mxu0 %v1365
    %2318 = vmatpush1.bf16.msra.mxu0 %v1364
    %2319 = vmatprep.subr.bf16.mxu0 %v1381
    %2320 = vmatpush1.bf16.msra.mxu0 %v1380
    %2321 = vmatprep.subr.bf16.mxu0 %v1397
    %2322 = vmatpush1.bf16.msra.mxu0 %v1396
    %2323 = vmatprep.subr.bf16.mxu0 %v1413
    %2324 = vmatpush1.bf16.msra.mxu0 %v1412
    %2325 = vmatprep.subr.bf16.mxu0 %v1429
    %2326 = vmatpush1.bf16.msra.mxu0 %v1428
    %2327 = vmatprep.subr.bf16.mxu0 %v1445
    %2328 = vmatpush1.bf16.msra.mxu0 %v1444
    %2329 = vmatprep.subr.bf16.mxu0 %v1461
    %2330 = vmatpush1.bf16.msra.mxu0 %v1460
    %2331 = vmatprep.subr.bf16.mxu0 %v1477
    %2332 = vmatpush1.bf16.msra.mxu0 %v1476
    %2333 = vmatprep.subr.bf16.mxu0 %v1493
    %2334 = vmatpush1.bf16.msra.mxu0 %v1492
    %2335 = vmatprep.subr.bf16.mxu0 %v1509
    %2336 = vmatpush1.bf16.msra.mxu0 %v1508
    %2337 = vmatprep.subr.bf16.mxu0 %v1525
    %2338 = vmatpush1.bf16.msra.mxu0 %v1524
    %2339 = vmatprep.subr.bf16.mxu0 %v1541
    %2340 = vmatpush1.bf16.msra.mxu0 %v1540
    %2341 = vmatprep.mubr.bf16.mxu0 %v171
    %2342 = vmatmul.mubr.bf16.gmra.mrb[0].mxu0 %v170
    %v2343 = vpop.f32.mrb[0].mxu0
    %v2344 = vadd.f32 %v497, %v2343
    %v2345 = vpop.f32.mrb[0].mxu0
    %v2346 = vadd.f32 %v501, %v2345
    %v2347 = vpop.f32.mrb[0].mxu0
    %v2348 = vadd.f32 %v497, %v2347
    %v2349 = vpop.f32.mrb[0].mxu0
    %v2350 = vadd.f32 %v501, %v2349
    %2351 = vmatprep.mubr.bf16.mxu0 %v173
    %2352 = vmatmul.mubr.bf16.gmra.mrb[0].mxu0 %v172
    %v2353 = vpop.f32.mrb[0].mxu0
    %v2354 = vadd.f32 %v497, %v2353
    %v2355 = vpop.f32.mrb[0].mxu0
    %v2356 = vadd.f32 %v501, %v2355
    %v2357 = vpop.f32.mrb[0].mxu0
    %v2358 = vadd.f32 %v497, %v2357
    %v2359 = vpop.f32.mrb[0].mxu0
    %v2360 = vadd.f32 %v501, %v2359
    %2361 = vmatprep.mubr.bf16.mxu0 %v175
    %2362 = vmatmul.mubr.bf16.gmra.mrb[0].mxu0 %v174
    %v2363 = vpop.f32.mrb[0].mxu0
    %v2364 = vadd.f32 %v497, %v2363
    %v2365 = vpop.f32.mrb[0].mxu0
    %v2366 = vadd.f32 %v501, %v2365
    %v2367 = vpop.f32.mrb[0].mxu0
    %v2368 = vadd.f32 %v497, %v2367
    %v2369 = vpop.f32.mrb[0].mxu0
    %v2370 = vadd.f32 %v501, %v2369
    %2371 = vmatprep.mubr.bf16.mxu0 %v177
    %2372 = vmatmul.mubr.bf16.gmra.mrb[0].mxu0 %v176
    %v2373 = vpop.f32.mrb[0].mxu0
    %v2374 = vadd.f32 %v497, %v2373
    %v2375 = vpop.f32.mrb[0].mxu0
    %v2376 = vadd.f32 %v501, %v2375
    %v2377 = vpop.f32.mrb[0].mxu0
    %v2378 = vadd.f32 %v497, %v2377
    %v2379 = vpop.f32.mrb[0].mxu0
    %v2380 = vadd.f32 %v501, %v2379
    %2381 = vdwg.mxu0
    %s2382 = scalar_lea.sflag [#allocation8], 1
    %s2384 = sshll.u32 1, 14
    %s2385 = sxor.u32 4294967295, %s2384
    %s2387 = sadd.s32 2, %s123
    %s2389 = sshll.u32 7, 26
    %s2390 = sxor.u32 4294967295, %s2389
    %s2391 = sand.u32 0, %s2390
    %s2392 = sshll.u32 %s2387, 26
    %s2393 = sor.u32 %s2391, %s2392
    %s2394 = sshll.u32 [#allocation3], 4
    %s2395 = int_to_ptr.vmem [resolvable:$true] %s2394
    %2398 = sst [smem:[#allocation23]] 256
    %s2399 = scalar_lea.smem [#allocation23], 1
    %2400 = sst [smem:[%s2399]] 256
    %s2401 = scalar_lea.smem [#allocation23], 2
    %2402 = sst [smem:[%s2401]] 2
    %s2403 = scalar_lea.smem [#allocation23], 3
    %2404 = sst [smem:[%s2403]] 64
    %s2405 = scalar_lea.smem [#allocation23], 4
    %2406 = sst [smem:[%s2405]] 128
    %s2407 = scalar_lea.smem [#allocation23], 5
    %2408 = sst [smem:[%s2407]] 2
    %s2409 = scalar_lea.smem [#allocation23], 6
    %2410 = sst [smem:[%s2409]] 128
    %s2411 = scalar_lea.smem [#allocation23], 7
    %2412 = sst [smem:[%s2411]] 64
    %s2413 = scalar_lea.smem [#allocation23], 8
    %2414 = sst [smem:[%s2413]] 4
    %2416 = dma.general %s4, 8192, %s2395, %s2382, [#allocation22], [#allocation23], %s2393, 0
    %s2417 = scalar_lea.sflag [#allocation8], 2
    // Predicated region
    $region62: #{pure_lstm_forward.1} parent=1 // pred_check
      _
    $region63: #{pure_lstm_forward.1} parent=1 // pred_check_branch
      %2419 = sbr.rel target = $region65
    $region64: #{pure_lstm_forward.1} parent=1 // pred_region
      %2420 = sst [smem:[#allocation26]] [#allocation25]
      %2421 = sst [smem:[#allocation27]] [#allocation24]
    $region65: #{pure_lstm_forward.1} parent=1 // pred_fallthru
      _
    %2423 = shalt.err (0)
    %s2425 = sshll.u32 [#allocation4], 4
    %s2426 = int_to_ptr.vmem [resolvable:$true] %s2425
    %2428 = dma.hbm_to_vmem [thread:$0]  %s5, 2048, %s2426, %s2417
    %s2429 = scalar_lea.sflag [#allocation8], 3
    %s2431 = sshll.u32 1, 14
    %s2432 = sxor.u32 4294967295, %s2431
    %s2434 = sadd.s32 2, %s123
    %s2436 = sshll.u32 7, 26
    %s2437 = sxor.u32 4294967295, %s2436
    %s2438 = sand.u32 0, %s2437
    %s2439 = sshll.u32 %s2434, 26
    %s2440 = sor.u32 %s2438, %s2439
    %s2441 = sshll.u32 [#allocation5], 4
    %s2442 = int_to_ptr.vmem [resolvable:$true] %s2441
    %2445 = sst [smem:[#allocation29]] 512
    %s2446 = scalar_lea.smem [#allocation29], 1
    %2447 = sst [smem:[%s2446]] 512
    %s2448 = scalar_lea.smem [#allocation29], 2
    %2449 = sst [smem:[%s2448]] 4
    %s2450 = scalar_lea.smem [#allocation29], 3
    %2451 = sst [smem:[%s2450]] 64
    %s2452 = scalar_lea.smem [#allocation29], 4
    %2453 = sst [smem:[%s2452]] 128
    %s2454 = scalar_lea.smem [#allocation29], 5
    %2455 = sst [smem:[%s2454]] 2
    %s2456 = scalar_lea.smem [#allocation29], 6
    %2457 = sst [smem:[%s2456]] 256
    %s2458 = scalar_lea.smem [#allocation29], 7
    %2459 = sst [smem:[%s2458]] 64
    %s2460 = scalar_lea.smem [#allocation29], 8
    %2461 = sst [smem:[%s2460]] 4
    %2463 = dma.general %s6, 4096, %s2442, %s2429, [#allocation28], [#allocation29], %s2440, 0
    %s2464 = scalar_lea.sflag [#allocation8], 4
    %s2466 = sshll.u32 1, 14
    %s2467 = sxor.u32 4294967295, %s2466
    %s2469 = sadd.s32 2, %s123
    %s2471 = sshll.u32 7, 26
    %s2472 = sxor.u32 4294967295, %s2471
    %s2473 = sand.u32 0, %s2472
    %s2474 = sshll.u32 %s2469, 26
    %s2475 = sor.u32 %s2473, %s2474
    %s2476 = sshll.u32 [#allocation6], 4
    %s2477 = int_to_ptr.vmem [resolvable:$true] %s2476
    %2480 = sst [smem:[#allocation31]] 640
    %s2481 = scalar_lea.smem [#allocation31], 1
    %2482 = sst [smem:[%s2481]] 640
    %s2483 = scalar_lea.smem [#allocation31], 2
    %2484 = sst [smem:[%s2483]] 5
    %s2485 = scalar_lea.smem [#allocation31], 3
    %2486 = sst [smem:[%s2485]] 64
    %s2487 = scalar_lea.smem [#allocation31], 4
    %2488 = sst [smem:[%s2487]] 128
    %s2489 = scalar_lea.smem [#allocation31], 5
    %2490 = sst [smem:[%s2489]] 2
    %s2491 = scalar_lea.smem [#allocation31], 6
    %2492 = sst [smem:[%s2491]] 320
    %s2493 = scalar_lea.smem [#allocation31], 7
    %2494 = sst [smem:[%s2493]] 64
    %s2495 = scalar_lea.smem [#allocation31], 8
    %2496 = sst [smem:[%s2495]] 4
    %2498 = dma.general %s7, 20480, %s2477, %s2464, [#allocation30], [#allocation31], %s2475, 0
    %s2499 = scalar_lea.sflag [#allocation8], 5
    %s2501 = sshll.u32 1, 14
    %s2502 = sxor.u32 4294967295, %s2501
    %s2504 = sadd.s32 2, %s123
    %s2506 = sshll.u32 7, 26
    %s2507 = sxor.u32 4294967295, %s2506
    %s2508 = sand.u32 0, %s2507
    %s2509 = sshll.u32 %s2504, 26
    %s2510 = sor.u32 %s2508, %s2509
    %s2511 = sshll.u32 [#allocation7], 4
    %s2512 = int_to_ptr.vmem [resolvable:$true] %s2511
    %2515 = sst [smem:[#allocation33]] 256
    %s2516 = scalar_lea.smem [#allocation33], 1
    %2517 = sst [smem:[%s2516]] 256
    %s2518 = scalar_lea.smem [#allocation33], 2
    %2519 = sst [smem:[%s2518]] 2
    %s2520 = scalar_lea.smem [#allocation33], 3
    %2521 = sst [smem:[%s2520]] 64
    %s2522 = scalar_lea.smem [#allocation33], 4
    %2523 = sst [smem:[%s2522]] 128
    %s2524 = scalar_lea.smem [#allocation33], 5
    %2525 = sst [smem:[%s2524]] 2
    %s2526 = scalar_lea.smem [#allocation33], 6
    %2527 = sst [smem:[%s2526]] 128
    %s2528 = scalar_lea.smem [#allocation33], 7
    %2529 = sst [smem:[%s2528]] 64
    %s2530 = scalar_lea.smem [#allocation33], 8
    %2531 = sst [smem:[%s2530]] 4
    %2533 = dma.general %s8, 10240, %s2512, %s2499, [#allocation32], [#allocation33], %s2510, 0
    %s2534 = smul.u32 4, 64
    %s2535 = smul.u32 %s2534, 16
    %s2536 = sshll.u32 %s2535, 4
    %2537 = dma.done [#allocation8], %s2536
    %v2538 = vld [vmem:[#allocation2] sm:$0xff]
    %v2539 = vld [vmem:[#allocation2 + $0x8] sm:$0xff]
    %v2540 = vld [vmem:[#allocation2 + $0x10] sm:$0xff]
    %v2541 = vld [vmem:[#allocation2 + $0x18] sm:$0xff]
    %v2542 = vld [vmem:[#allocation2 + $0x20] sm:$0xff]
    %v2543 = vld [vmem:[#allocation2 + $0x28] sm:$0xff]
    %v2544 = vld [vmem:[#allocation2 + $0x30] sm:$0xff]
    %v2545 = vld [vmem:[#allocation2 + $0x38] sm:$0xff]
    %v2546 = vld [vmem:[#allocation2 + $0x40] sm:$0xff]
    %v2547 = vld [vmem:[#allocation2 + $0x48] sm:$0xff]
    %v2548 = vld [vmem:[#allocation2 + $0x50] sm:$0xff]
    %v2549 = vld [vmem:[#allocation2 + $0x58] sm:$0xff]
    %v2550 = vld [vmem:[#allocation2 + $0x60] sm:$0xff]
    %v2551 = vld [vmem:[#allocation2 + $0x68] sm:$0xff]
    %v2552 = vld [vmem:[#allocation2 + $0x70] sm:$0xff]
    %v2553 = vld [vmem:[#allocation2 + $0x78] sm:$0xff]
    %v2554 = vld [vmem:[#allocation2 + $0x80] sm:$0xff]
    %v2555 = vld [vmem:[#allocation2 + $0x88] sm:$0xff]
    %v2556 = vld [vmem:[#allocation2 + $0x90] sm:$0xff]
    %v2557 = vld [vmem:[#allocation2 + $0x98] sm:$0xff]
    %v2558 = vld [vmem:[#allocation2 + $0xa0] sm:$0xff]
    %v2559 = vld [vmem:[#allocation2 + $0xa8] sm:$0xff]
    %v2560 = vld [vmem:[#allocation2 + $0xb0] sm:$0xff]
    %v2561 = vld [vmem:[#allocation2 + $0xb8] sm:$0xff]
    %v2562 = vld [vmem:[#allocation2 + $0xc0] sm:$0xff]
    %v2563 = vld [vmem:[#allocation2 + $0xc8] sm:$0xff]
    %v2564 = vld [vmem:[#allocation2 + $0xd0] sm:$0xff]
    %v2565 = vld [vmem:[#allocation2 + $0xd8] sm:$0xff]
    %v2566 = vld [vmem:[#allocation2 + $0xe0] sm:$0xff]
    %v2567 = vld [vmem:[#allocation2 + $0xe8] sm:$0xff]
    %v2568 = vld [vmem:[#allocation2 + $0xf0] sm:$0xff]
    %v2569 = vld [vmem:[#allocation2 + $0xf8] sm:$0xff]
    %v2570 = vld [vmem:[#allocation2 + $0x100] sm:$0xff]
    %v2571 = vld [vmem:[#allocation2 + $0x108] sm:$0xff]
    %v2572 = vld [vmem:[#allocation2 + $0x110] sm:$0xff]
    %v2573 = vld [vmem:[#allocation2 + $0x118] sm:$0xff]
    %v2574 = vld [vmem:[#allocation2 + $0x120] sm:$0xff]
    %v2575 = vld [vmem:[#allocation2 + $0x128] sm:$0xff]
    %v2576 = vld [vmem:[#allocation2 + $0x130] sm:$0xff]
    %v2577 = vld [vmem:[#allocation2 + $0x138] sm:$0xff]
    %v2578 = vld [vmem:[#allocation2 + $0x140] sm:$0xff]
    %v2579 = vld [vmem:[#allocation2 + $0x148] sm:$0xff]
    %v2580 = vld [vmem:[#allocation2 + $0x150] sm:$0xff]
    %v2581 = vld [vmem:[#allocation2 + $0x158] sm:$0xff]
    %v2582 = vld [vmem:[#allocation2 + $0x160] sm:$0xff]
    %v2583 = vld [vmem:[#allocation2 + $0x168] sm:$0xff]
    %v2584 = vld [vmem:[#allocation2 + $0x170] sm:$0xff]
    %v2585 = vld [vmem:[#allocation2 + $0x178] sm:$0xff]
    %v2586 = vld [vmem:[#allocation2 + $0x180] sm:$0xff]
    %v2587 = vld [vmem:[#allocation2 + $0x188] sm:$0xff]
    %v2588 = vld [vmem:[#allocation2 + $0x190] sm:$0xff]
    %v2589 = vld [vmem:[#allocation2 + $0x198] sm:$0xff]
    %v2590 = vld [vmem:[#allocation2 + $0x1a0] sm:$0xff]
    %v2591 = vld [vmem:[#allocation2 + $0x1a8] sm:$0xff]
    %v2592 = vld [vmem:[#allocation2 + $0x1b0] sm:$0xff]
    %v2593 = vld [vmem:[#allocation2 + $0x1b8] sm:$0xff]
    %v2594 = vld [vmem:[#allocation2 + $0x1c0] sm:$0xff]
    %v2595 = vld [vmem:[#allocation2 + $0x1c8] sm:$0xff]
    %v2596 = vld [vmem:[#allocation2 + $0x1d0] sm:$0xff]
    %v2597 = vld [vmem:[#allocation2 + $0x1d8] sm:$0xff]
    %v2598 = vld [vmem:[#allocation2 + $0x1e0] sm:$0xff]
    %v2599 = vld [vmem:[#allocation2 + $0x1e8] sm:$0xff]
    %v2600 = vld [vmem:[#allocation2 + $0x1f0] sm:$0xff]
    %v2601 = vld [vmem:[#allocation2 + $0x1f8] sm:$0xff]
    %v2602 = vld [vmem:[#allocation2 + $0x200] sm:$0xff]
    %v2603 = vld [vmem:[#allocation2 + $0x208] sm:$0xff]
    %v2604 = vld [vmem:[#allocation2 + $0x210] sm:$0xff]
    %v2605 = vld [vmem:[#allocation2 + $0x218] sm:$0xff]
    %v2606 = vld [vmem:[#allocation2 + $0x220] sm:$0xff]
    %v2607 = vld [vmem:[#allocation2 + $0x228] sm:$0xff]
    %v2608 = vld [vmem:[#allocation2 + $0x230] sm:$0xff]
    %v2609 = vld [vmem:[#allocation2 + $0x238] sm:$0xff]
    %v2610 = vld [vmem:[#allocation2 + $0x240] sm:$0xff]
    %v2611 = vld [vmem:[#allocation2 + $0x248] sm:$0xff]
    %v2612 = vld [vmem:[#allocation2 + $0x250] sm:$0xff]
    %v2613 = vld [vmem:[#allocation2 + $0x258] sm:$0xff]
    %v2614 = vld [vmem:[#allocation2 + $0x260] sm:$0xff]
    %v2615 = vld [vmem:[#allocation2 + $0x268] sm:$0xff]
    %v2616 = vld [vmem:[#allocation2 + $0x270] sm:$0xff]
    %v2617 = vld [vmem:[#allocation2 + $0x278] sm:$0xff]
    %v2618 = vld [vmem:[#allocation2 + $0x280] sm:$0xff]
    %v2619 = vld [vmem:[#allocation2 + $0x288] sm:$0xff]
    %v2620 = vld [vmem:[#allocation2 + $0x290] sm:$0xff]
    %v2621 = vld [vmem:[#allocation2 + $0x298] sm:$0xff]
    %v2622 = vld [vmem:[#allocation2 + $0x2a0] sm:$0xff]
    %v2623 = vld [vmem:[#allocation2 + $0x2a8] sm:$0xff]
    %v2624 = vld [vmem:[#allocation2 + $0x2b0] sm:$0xff]
    %v2625 = vld [vmem:[#allocation2 + $0x2b8] sm:$0xff]
    %v2626 = vld [vmem:[#allocation2 + $0x2c0] sm:$0xff]
    %v2627 = vld [vmem:[#allocation2 + $0x2c8] sm:$0xff]
    %v2628 = vld [vmem:[#allocation2 + $0x2d0] sm:$0xff]
    %v2629 = vld [vmem:[#allocation2 + $0x2d8] sm:$0xff]
    %v2630 = vld [vmem:[#allocation2 + $0x2e0] sm:$0xff]
    %v2631 = vld [vmem:[#allocation2 + $0x2e8] sm:$0xff]
    %v2632 = vld [vmem:[#allocation2 + $0x2f0] sm:$0xff]
    %v2633 = vld [vmem:[#allocation2 + $0x2f8] sm:$0xff]
    %v2634 = vld [vmem:[#allocation2 + $0x300] sm:$0xff]
    %v2635 = vld [vmem:[#allocation2 + $0x308] sm:$0xff]
    %v2636 = vld [vmem:[#allocation2 + $0x310] sm:$0xff]
    %v2637 = vld [vmem:[#allocation2 + $0x318] sm:$0xff]
    %v2638 = vld [vmem:[#allocation2 + $0x320] sm:$0xff]
    %v2639 = vld [vmem:[#allocation2 + $0x328] sm:$0xff]
    %v2640 = vld [vmem:[#allocation2 + $0x330] sm:$0xff]
    %v2641 = vld [vmem:[#allocation2 + $0x338] sm:$0xff]
    %v2642 = vld [vmem:[#allocation2 + $0x340] sm:$0xff]
    %v2643 = vld [vmem:[#allocation2 + $0x348] sm:$0xff]
    %v2644 = vld [vmem:[#allocation2 + $0x350] sm:$0xff]
    %v2645 = vld [vmem:[#allocation2 + $0x358] sm:$0xff]
    %v2646 = vld [vmem:[#allocation2 + $0x360] sm:$0xff]
    %v2647 = vld [vmem:[#allocation2 + $0x368] sm:$0xff]
    %v2648 = vld [vmem:[#allocation2 + $0x370] sm:$0xff]
    %v2649 = vld [vmem:[#allocation2 + $0x378] sm:$0xff]
    %v2650 = vld [vmem:[#allocation2 + $0x380] sm:$0xff]
    %v2651 = vld [vmem:[#allocation2 + $0x388] sm:$0xff]
    %v2652 = vld [vmem:[#allocation2 + $0x390] sm:$0xff]
    %v2653 = vld [vmem:[#allocation2 + $0x398] sm:$0xff]
    %v2654 = vld [vmem:[#allocation2 + $0x3a0] sm:$0xff]
    %v2655 = vld [vmem:[#allocation2 + $0x3a8] sm:$0xff]
    %v2656 = vld [vmem:[#allocation2 + $0x3b0] sm:$0xff]
    %v2657 = vld [vmem:[#allocation2 + $0x3b8] sm:$0xff]
    %v2658 = vld [vmem:[#allocation2 + $0x3c0] sm:$0xff]
    %v2659 = vld [vmem:[#allocation2 + $0x3c8] sm:$0xff]
    %v2660 = vld [vmem:[#allocation2 + $0x3d0] sm:$0xff]
    %v2661 = vld [vmem:[#allocation2 + $0x3d8] sm:$0xff]
    %v2662 = vld [vmem:[#allocation2 + $0x3e0] sm:$0xff]
    %v2663 = vld [vmem:[#allocation2 + $0x3e8] sm:$0xff]
    %v2664 = vld [vmem:[#allocation2 + $0x3f0] sm:$0xff]
    %v2665 = vld [vmem:[#allocation2 + $0x3f8] sm:$0xff]
    %v2666 = vld [vmem:[#allocation2 + $0x400] sm:$0xff]
    %v2667 = vld [vmem:[#allocation2 + $0x408] sm:$0xff]
    %v2668 = vld [vmem:[#allocation2 + $0x410] sm:$0xff]
    %v2669 = vld [vmem:[#allocation2 + $0x418] sm:$0xff]
    %v2670 = vld [vmem:[#allocation2 + $0x420] sm:$0xff]
    %v2671 = vld [vmem:[#allocation2 + $0x428] sm:$0xff]
    %v2672 = vld [vmem:[#allocation2 + $0x430] sm:$0xff]
    %v2673 = vld [vmem:[#allocation2 + $0x438] sm:$0xff]
    %v2674 = vld [vmem:[#allocation2 + $0x440] sm:$0xff]
    %v2675 = vld [vmem:[#allocation2 + $0x448] sm:$0xff]
    %v2676 = vld [vmem:[#allocation2 + $0x450] sm:$0xff]
    %v2677 = vld [vmem:[#allocation2 + $0x458] sm:$0xff]
    %v2678 = vld [vmem:[#allocation2 + $0x460] sm:$0xff]
    %v2679 = vld [vmem:[#allocation2 + $0x468] sm:$0xff]
    %v2680 = vld [vmem:[#allocation2 + $0x470] sm:$0xff]
    %v2681 = vld [vmem:[#allocation2 + $0x478] sm:$0xff]
    %v2682 = vld [vmem:[#allocation2 + $0x480] sm:$0xff]
    %v2683 = vld [vmem:[#allocation2 + $0x488] sm:$0xff]
    %v2684 = vld [vmem:[#allocation2 + $0x490] sm:$0xff]
    %v2685 = vld [vmem:[#allocation2 + $0x498] sm:$0xff]
    %v2686 = vld [vmem:[#allocation2 + $0x4a0] sm:$0xff]
    %v2687 = vld [vmem:[#allocation2 + $0x4a8] sm:$0xff]
    %v2688 = vld [vmem:[#allocation2 + $0x4b0] sm:$0xff]
    %v2689 = vld [vmem:[#allocation2 + $0x4b8] sm:$0xff]
    %v2690 = vld [vmem:[#allocation2 + $0x4c0] sm:$0xff]
    %v2691 = vld [vmem:[#allocation2 + $0x4c8] sm:$0xff]
    %v2692 = vld [vmem:[#allocation2 + $0x4d0] sm:$0xff]
    %v2693 = vld [vmem:[#allocation2 + $0x4d8] sm:$0xff]
    %v2694 = vld [vmem:[#allocation2 + $0x4e0] sm:$0xff]
    %v2695 = vld [vmem:[#allocation2 + $0x4e8] sm:$0xff]
    %v2696 = vld [vmem:[#allocation2 + $0x4f0] sm:$0xff]
    %v2697 = vld [vmem:[#allocation2 + $0x4f8] sm:$0xff]
    %v2698 = vld [vmem:[#allocation2 + $0x500] sm:$0xff]
    %v2699 = vld [vmem:[#allocation2 + $0x508] sm:$0xff]
    %v2700 = vld [vmem:[#allocation2 + $0x510] sm:$0xff]
    %v2701 = vld [vmem:[#allocation2 + $0x518] sm:$0xff]
    %v2702 = vld [vmem:[#allocation2 + $0x520] sm:$0xff]
    %v2703 = vld [vmem:[#allocation2 + $0x528] sm:$0xff]
    %v2704 = vld [vmem:[#allocation2 + $0x530] sm:$0xff]
    %v2705 = vld [vmem:[#allocation2 + $0x538] sm:$0xff]
    %v2706 = vld [vmem:[#allocation2 + $0x540] sm:$0xff]
    %v2707 = vld [vmem:[#allocation2 + $0x548] sm:$0xff]
    %v2708 = vld [vmem:[#allocation2 + $0x550] sm:$0xff]
    %v2709 = vld [vmem:[#allocation2 + $0x558] sm:$0xff]
    %v2710 = vld [vmem:[#allocation2 + $0x560] sm:$0xff]
    %v2711 = vld [vmem:[#allocation2 + $0x568] sm:$0xff]
    %v2712 = vld [vmem:[#allocation2 + $0x570] sm:$0xff]
    %v2713 = vld [vmem:[#allocation2 + $0x578] sm:$0xff]
    %v2714 = vld [vmem:[#allocation2 + $0x580] sm:$0xff]
    %v2715 = vld [vmem:[#allocation2 + $0x588] sm:$0xff]
    %v2716 = vld [vmem:[#allocation2 + $0x590] sm:$0xff]
    %v2717 = vld [vmem:[#allocation2 + $0x598] sm:$0xff]
    %v2718 = vld [vmem:[#allocation2 + $0x5a0] sm:$0xff]
    %v2719 = vld [vmem:[#allocation2 + $0x5a8] sm:$0xff]
    %v2720 = vld [vmem:[#allocation2 + $0x5b0] sm:$0xff]
    %v2721 = vld [vmem:[#allocation2 + $0x5b8] sm:$0xff]
    %v2722 = vld [vmem:[#allocation2 + $0x5c0] sm:$0xff]
    %v2723 = vld [vmem:[#allocation2 + $0x5c8] sm:$0xff]
    %v2724 = vld [vmem:[#allocation2 + $0x5d0] sm:$0xff]
    %v2725 = vld [vmem:[#allocation2 + $0x5d8] sm:$0xff]
    %v2726 = vld [vmem:[#allocation2 + $0x5e0] sm:$0xff]
    %v2727 = vld [vmem:[#allocation2 + $0x5e8] sm:$0xff]
    %v2728 = vld [vmem:[#allocation2 + $0x5f0] sm:$0xff]
    %v2729 = vld [vmem:[#allocation2 + $0x5f8] sm:$0xff]
    %v2730 = vld [vmem:[#allocation2 + $0x600] sm:$0xff]
    %v2731 = vld [vmem:[#allocation2 + $0x608] sm:$0xff]
    %v2732 = vld [vmem:[#allocation2 + $0x610] sm:$0xff]
    %v2733 = vld [vmem:[#allocation2 + $0x618] sm:$0xff]
    %v2734 = vld [vmem:[#allocation2 + $0x620] sm:$0xff]
    %v2735 = vld [vmem:[#allocation2 + $0x628] sm:$0xff]
    %v2736 = vld [vmem:[#allocation2 + $0x630] sm:$0xff]
    %v2737 = vld [vmem:[#allocation2 + $0x638] sm:$0xff]
    %v2738 = vld [vmem:[#allocation2 + $0x640] sm:$0xff]
    %v2739 = vld [vmem:[#allocation2 + $0x648] sm:$0xff]
    %v2740 = vld [vmem:[#allocation2 + $0x650] sm:$0xff]
    %v2741 = vld [vmem:[#allocation2 + $0x658] sm:$0xff]
    %v2742 = vld [vmem:[#allocation2 + $0x660] sm:$0xff]
    %v2743 = vld [vmem:[#allocation2 + $0x668] sm:$0xff]
    %v2744 = vld [vmem:[#allocation2 + $0x670] sm:$0xff]
    %v2745 = vld [vmem:[#allocation2 + $0x678] sm:$0xff]
    %v2746 = vld [vmem:[#allocation2 + $0x680] sm:$0xff]
    %v2747 = vld [vmem:[#allocation2 + $0x688] sm:$0xff]
    %v2748 = vld [vmem:[#allocation2 + $0x690] sm:$0xff]
    %v2749 = vld [vmem:[#allocation2 + $0x698] sm:$0xff]
    %v2750 = vld [vmem:[#allocation2 + $0x6a0] sm:$0xff]
    %v2751 = vld [vmem:[#allocation2 + $0x6a8] sm:$0xff]
    %v2752 = vld [vmem:[#allocation2 + $0x6b0] sm:$0xff]
    %v2753 = vld [vmem:[#allocation2 + $0x6b8] sm:$0xff]
    %v2754 = vld [vmem:[#allocation2 + $0x6c0] sm:$0xff]
    %v2755 = vld [vmem:[#allocation2 + $0x6c8] sm:$0xff]
    %v2756 = vld [vmem:[#allocation2 + $0x6d0] sm:$0xff]
    %v2757 = vld [vmem:[#allocation2 + $0x6d8] sm:$0xff]
    %v2758 = vld [vmem:[#allocation2 + $0x6e0] sm:$0xff]
    %v2759 = vld [vmem:[#allocation2 + $0x6e8] sm:$0xff]
    %v2760 = vld [vmem:[#allocation2 + $0x6f0] sm:$0xff]
    %v2761 = vld [vmem:[#allocation2 + $0x6f8] sm:$0xff]
    %v2762 = vld [vmem:[#allocation2 + $0x700] sm:$0xff]
    %v2763 = vld [vmem:[#allocation2 + $0x708] sm:$0xff]
    %v2764 = vld [vmem:[#allocation2 + $0x710] sm:$0xff]
    %v2765 = vld [vmem:[#allocation2 + $0x718] sm:$0xff]
    %v2766 = vld [vmem:[#allocation2 + $0x720] sm:$0xff]
    %v2767 = vld [vmem:[#allocation2 + $0x728] sm:$0xff]
    %v2768 = vld [vmem:[#allocation2 + $0x730] sm:$0xff]
    %v2769 = vld [vmem:[#allocation2 + $0x738] sm:$0xff]
    %v2770 = vld [vmem:[#allocation2 + $0x740] sm:$0xff]
    %v2771 = vld [vmem:[#allocation2 + $0x748] sm:$0xff]
    %v2772 = vld [vmem:[#allocation2 + $0x750] sm:$0xff]
    %v2773 = vld [vmem:[#allocation2 + $0x758] sm:$0xff]
    %v2774 = vld [vmem:[#allocation2 + $0x760] sm:$0xff]
    %v2775 = vld [vmem:[#allocation2 + $0x768] sm:$0xff]
    %v2776 = vld [vmem:[#allocation2 + $0x770] sm:$0xff]
    %v2777 = vld [vmem:[#allocation2 + $0x778] sm:$0xff]
    %v2778 = vld [vmem:[#allocation2 + $0x780] sm:$0xff]
    %v2779 = vld [vmem:[#allocation2 + $0x788] sm:$0xff]
    %v2780 = vld [vmem:[#allocation2 + $0x790] sm:$0xff]
    %v2781 = vld [vmem:[#allocation2 + $0x798] sm:$0xff]
    %v2782 = vld [vmem:[#allocation2 + $0x7a0] sm:$0xff]
    %v2783 = vld [vmem:[#allocation2 + $0x7a8] sm:$0xff]
    %v2784 = vld [vmem:[#allocation2 + $0x7b0] sm:$0xff]
    %v2785 = vld [vmem:[#allocation2 + $0x7b8] sm:$0xff]
    %v2786 = vld [vmem:[#allocation2 + $0x7c0] sm:$0xff]
    %v2787 = vld [vmem:[#allocation2 + $0x7c8] sm:$0xff]
    %v2788 = vld [vmem:[#allocation2 + $0x7d0] sm:$0xff]
    %v2789 = vld [vmem:[#allocation2 + $0x7d8] sm:$0xff]
    %v2790 = vld [vmem:[#allocation2 + $0x7e0] sm:$0xff]
    %v2791 = vld [vmem:[#allocation2 + $0x7e8] sm:$0xff]
    %v2792 = vld [vmem:[#allocation2 + $0x7f0] sm:$0xff]
    %v2793 = vld [vmem:[#allocation2 + $0x7f8] sm:$0xff]
    %v2794 = vld [vmem:[#allocation2 + $0x800] sm:$0xff]
    %v2795 = vld [vmem:[#allocation2 + $0x808] sm:$0xff]
    %v2796 = vld [vmem:[#allocation2 + $0x810] sm:$0xff]
    %v2797 = vld [vmem:[#allocation2 + $0x818] sm:$0xff]
    %v2798 = vld [vmem:[#allocation2 + $0x820] sm:$0xff]
    %v2799 = vld [vmem:[#allocation2 + $0x828] sm:$0xff]
    %v2800 = vld [vmem:[#allocation2 + $0x830] sm:$0xff]
    %v2801 = vld [vmem:[#allocation2 + $0x838] sm:$0xff]
    %v2802 = vld [vmem:[#allocation2 + $0x840] sm:$0xff]
    %v2803 = vld [vmem:[#allocation2 + $0x848] sm:$0xff]
    %v2804 = vld [vmem:[#allocation2 + $0x850] sm:$0xff]
    %v2805 = vld [vmem:[#allocation2 + $0x858] sm:$0xff]
    %v2806 = vld [vmem:[#allocation2 + $0x860] sm:$0xff]
    %v2807 = vld [vmem:[#allocation2 + $0x868] sm:$0xff]
    %v2808 = vld [vmem:[#allocation2 + $0x870] sm:$0xff]
    %v2809 = vld [vmem:[#allocation2 + $0x878] sm:$0xff]
    %v2810 = vld [vmem:[#allocation2 + $0x880] sm:$0xff]
    %v2811 = vld [vmem:[#allocation2 + $0x888] sm:$0xff]
    %v2812 = vld [vmem:[#allocation2 + $0x890] sm:$0xff]
    %v2813 = vld [vmem:[#allocation2 + $0x898] sm:$0xff]
    %v2814 = vld [vmem:[#allocation2 + $0x8a0] sm:$0xff]
    %v2815 = vld [vmem:[#allocation2 + $0x8a8] sm:$0xff]
    %v2816 = vld [vmem:[#allocation2 + $0x8b0] sm:$0xff]
    %v2817 = vld [vmem:[#allocation2 + $0x8b8] sm:$0xff]
    %v2818 = vld [vmem:[#allocation2 + $0x8c0] sm:$0xff]
    %v2819 = vld [vmem:[#allocation2 + $0x8c8] sm:$0xff]
    %v2820 = vld [vmem:[#allocation2 + $0x8d0] sm:$0xff]
    %v2821 = vld [vmem:[#allocation2 + $0x8d8] sm:$0xff]
    %v2822 = vld [vmem:[#allocation2 + $0x8e0] sm:$0xff]
    %v2823 = vld [vmem:[#allocation2 + $0x8e8] sm:$0xff]
    %v2824 = vld [vmem:[#allocation2 + $0x8f0] sm:$0xff]
    %v2825 = vld [vmem:[#allocation2 + $0x8f8] sm:$0xff]
    %v2826 = vld [vmem:[#allocation2 + $0x900] sm:$0xff]
    %v2827 = vld [vmem:[#allocation2 + $0x908] sm:$0xff]
    %v2828 = vld [vmem:[#allocation2 + $0x910] sm:$0xff]
    %v2829 = vld [vmem:[#allocation2 + $0x918] sm:$0xff]
    %v2830 = vld [vmem:[#allocation2 + $0x920] sm:$0xff]
    %v2831 = vld [vmem:[#allocation2 + $0x928] sm:$0xff]
    %v2832 = vld [vmem:[#allocation2 + $0x930] sm:$0xff]
    %v2833 = vld [vmem:[#allocation2 + $0x938] sm:$0xff]
    %v2834 = vld [vmem:[#allocation2 + $0x940] sm:$0xff]
    %v2835 = vld [vmem:[#allocation2 + $0x948] sm:$0xff]
    %v2836 = vld [vmem:[#allocation2 + $0x950] sm:$0xff]
    %v2837 = vld [vmem:[#allocation2 + $0x958] sm:$0xff]
    %v2838 = vld [vmem:[#allocation2 + $0x960] sm:$0xff]
    %v2839 = vld [vmem:[#allocation2 + $0x968] sm:$0xff]
    %v2840 = vld [vmem:[#allocation2 + $0x970] sm:$0xff]
    %v2841 = vld [vmem:[#allocation2 + $0x978] sm:$0xff]
    %v2842 = vld [vmem:[#allocation2 + $0x980] sm:$0xff]
    %v2843 = vld [vmem:[#allocation2 + $0x988] sm:$0xff]
    %v2844 = vld [vmem:[#allocation2 + $0x990] sm:$0xff]
    %v2845 = vld [vmem:[#allocation2 + $0x998] sm:$0xff]
    %v2846 = vld [vmem:[#allocation2 + $0x9a0] sm:$0xff]
    %v2847 = vld [vmem:[#allocation2 + $0x9a8] sm:$0xff]
    %v2848 = vld [vmem:[#allocation2 + $0x9b0] sm:$0xff]
    %v2849 = vld [vmem:[#allocation2 + $0x9b8] sm:$0xff]
    %v2850 = vld [vmem:[#allocation2 + $0x9c0] sm:$0xff]
    %v2851 = vld [vmem:[#allocation2 + $0x9c8] sm:$0xff]
    %v2852 = vld [vmem:[#allocation2 + $0x9d0] sm:$0xff]
    %v2853 = vld [vmem:[#allocation2 + $0x9d8] sm:$0xff]
    %v2854 = vld [vmem:[#allocation2 + $0x9e0] sm:$0xff]
    %v2855 = vld [vmem:[#allocation2 + $0x9e8] sm:$0xff]
    %v2856 = vld [vmem:[#allocation2 + $0x9f0] sm:$0xff]
    %v2857 = vld [vmem:[#allocation2 + $0x9f8] sm:$0xff]
    %v2858 = vld [vmem:[#allocation2 + $0xa00] sm:$0xff]
    %v2859 = vld [vmem:[#allocation2 + $0xa08] sm:$0xff]
    %v2860 = vld [vmem:[#allocation2 + $0xa10] sm:$0xff]
    %v2861 = vld [vmem:[#allocation2 + $0xa18] sm:$0xff]
    %v2862 = vld [vmem:[#allocation2 + $0xa20] sm:$0xff]
    %v2863 = vld [vmem:[#allocation2 + $0xa28] sm:$0xff]
    %v2864 = vld [vmem:[#allocation2 + $0xa30] sm:$0xff]
    %v2865 = vld [vmem:[#allocation2 + $0xa38] sm:$0xff]
    %v2866 = vld [vmem:[#allocation2 + $0xa40] sm:$0xff]
    %v2867 = vld [vmem:[#allocation2 + $0xa48] sm:$0xff]
    %v2868 = vld [vmem:[#allocation2 + $0xa50] sm:$0xff]
    %v2869 = vld [vmem:[#allocation2 + $0xa58] sm:$0xff]
    %v2870 = vld [vmem:[#allocation2 + $0xa60] sm:$0xff]
    %v2871 = vld [vmem:[#allocation2 + $0xa68] sm:$0xff]
    %v2872 = vld [vmem:[#allocation2 + $0xa70] sm:$0xff]
    %v2873 = vld [vmem:[#allocation2 + $0xa78] sm:$0xff]
    %v2874 = vld [vmem:[#allocation2 + $0xa80] sm:$0xff]
    %v2875 = vld [vmem:[#allocation2 + $0xa88] sm:$0xff]
    %v2876 = vld [vmem:[#allocation2 + $0xa90] sm:$0xff]
    %v2877 = vld [vmem:[#allocation2 + $0xa98] sm:$0xff]
    %v2878 = vld [vmem:[#allocation2 + $0xaa0] sm:$0xff]
    %v2879 = vld [vmem:[#allocation2 + $0xaa8] sm:$0xff]
    %v2880 = vld [vmem:[#allocation2 + $0xab0] sm:$0xff]
    %v2881 = vld [vmem:[#allocation2 + $0xab8] sm:$0xff]
    %v2882 = vld [vmem:[#allocation2 + $0xac0] sm:$0xff]
    %v2883 = vld [vmem:[#allocation2 + $0xac8] sm:$0xff]
    %v2884 = vld [vmem:[#allocation2 + $0xad0] sm:$0xff]
    %v2885 = vld [vmem:[#allocation2 + $0xad8] sm:$0xff]
    %v2886 = vld [vmem:[#allocation2 + $0xae0] sm:$0xff]
    %v2887 = vld [vmem:[#allocation2 + $0xae8] sm:$0xff]
    %v2888 = vld [vmem:[#allocation2 + $0xaf0] sm:$0xff]
    %v2889 = vld [vmem:[#allocation2 + $0xaf8] sm:$0xff]
    %v2890 = vld [vmem:[#allocation2 + $0xb00] sm:$0xff]
    %v2891 = vld [vmem:[#allocation2 + $0xb08] sm:$0xff]
    %v2892 = vld [vmem:[#allocation2 + $0xb10] sm:$0xff]
    %v2893 = vld [vmem:[#allocation2 + $0xb18] sm:$0xff]
    %v2894 = vld [vmem:[#allocation2 + $0xb20] sm:$0xff]
    %v2895 = vld [vmem:[#allocation2 + $0xb28] sm:$0xff]
    %v2896 = vld [vmem:[#allocation2 + $0xb30] sm:$0xff]
    %v2897 = vld [vmem:[#allocation2 + $0xb38] sm:$0xff]
    %v2898 = vld [vmem:[#allocation2 + $0xb40] sm:$0xff]
    %v2899 = vld [vmem:[#allocation2 + $0xb48] sm:$0xff]
    %v2900 = vld [vmem:[#allocation2 + $0xb50] sm:$0xff]
    %v2901 = vld [vmem:[#allocation2 + $0xb58] sm:$0xff]
    %v2902 = vld [vmem:[#allocation2 + $0xb60] sm:$0xff]
    %v2903 = vld [vmem:[#allocation2 + $0xb68] sm:$0xff]
    %v2904 = vld [vmem:[#allocation2 + $0xb70] sm:$0xff]
    %v2905 = vld [vmem:[#allocation2 + $0xb78] sm:$0xff]
    %v2906 = vld [vmem:[#allocation2 + $0xb80] sm:$0xff]
    %v2907 = vld [vmem:[#allocation2 + $0xb88] sm:$0xff]
    %v2908 = vld [vmem:[#allocation2 + $0xb90] sm:$0xff]
    %v2909 = vld [vmem:[#allocation2 + $0xb98] sm:$0xff]
    %v2910 = vld [vmem:[#allocation2 + $0xba0] sm:$0xff]
    %v2911 = vld [vmem:[#allocation2 + $0xba8] sm:$0xff]
    %v2912 = vld [vmem:[#allocation2 + $0xbb0] sm:$0xff]
    %v2913 = vld [vmem:[#allocation2 + $0xbb8] sm:$0xff]
    %v2914 = vld [vmem:[#allocation2 + $0xbc0] sm:$0xff]
    %v2915 = vld [vmem:[#allocation2 + $0xbc8] sm:$0xff]
    %v2916 = vld [vmem:[#allocation2 + $0xbd0] sm:$0xff]
    %v2917 = vld [vmem:[#allocation2 + $0xbd8] sm:$0xff]
    %v2918 = vld [vmem:[#allocation2 + $0xbe0] sm:$0xff]
    %v2919 = vld [vmem:[#allocation2 + $0xbe8] sm:$0xff]
    %v2920 = vld [vmem:[#allocation2 + $0xbf0] sm:$0xff]
    %v2921 = vld [vmem:[#allocation2 + $0xbf8] sm:$0xff]
    %v2922 = vld [vmem:[#allocation2 + $0xc00] sm:$0xff]
    %v2923 = vld [vmem:[#allocation2 + $0xc08] sm:$0xff]
    %v2924 = vld [vmem:[#allocation2 + $0xc10] sm:$0xff]
    %v2925 = vld [vmem:[#allocation2 + $0xc18] sm:$0xff]
    %v2926 = vld [vmem:[#allocation2 + $0xc20] sm:$0xff]
    %v2927 = vld [vmem:[#allocation2 + $0xc28] sm:$0xff]
    %v2928 = vld [vmem:[#allocation2 + $0xc30] sm:$0xff]
    %v2929 = vld [vmem:[#allocation2 + $0xc38] sm:$0xff]
    %v2930 = vld [vmem:[#allocation2 + $0xc40] sm:$0xff]
    %v2931 = vld [vmem:[#allocation2 + $0xc48] sm:$0xff]
    %v2932 = vld [vmem:[#allocation2 + $0xc50] sm:$0xff]
    %v2933 = vld [vmem:[#allocation2 + $0xc58] sm:$0xff]
    %v2934 = vld [vmem:[#allocation2 + $0xc60] sm:$0xff]
    %v2935 = vld [vmem:[#allocation2 + $0xc68] sm:$0xff]
    %v2936 = vld [vmem:[#allocation2 + $0xc70] sm:$0xff]
    %v2937 = vld [vmem:[#allocation2 + $0xc78] sm:$0xff]
    %v2938 = vld [vmem:[#allocation2 + $0xc80] sm:$0xff]
    %v2939 = vld [vmem:[#allocation2 + $0xc88] sm:$0xff]
    %v2940 = vld [vmem:[#allocation2 + $0xc90] sm:$0xff]
    %v2941 = vld [vmem:[#allocation2 + $0xc98] sm:$0xff]
    %v2942 = vld [vmem:[#allocation2 + $0xca0] sm:$0xff]
    %v2943 = vld [vmem:[#allocation2 + $0xca8] sm:$0xff]
    %v2944 = vld [vmem:[#allocation2 + $0xcb0] sm:$0xff]
    %v2945 = vld [vmem:[#allocation2 + $0xcb8] sm:$0xff]
    %v2946 = vld [vmem:[#allocation2 + $0xcc0] sm:$0xff]
    %v2947 = vld [vmem:[#allocation2 + $0xcc8] sm:$0xff]
    %v2948 = vld [vmem:[#allocation2 + $0xcd0] sm:$0xff]
    %v2949 = vld [vmem:[#allocation2 + $0xcd8] sm:$0xff]
    %v2950 = vld [vmem:[#allocation2 + $0xce0] sm:$0xff]
    %v2951 = vld [vmem:[#allocation2 + $0xce8] sm:$0xff]
    %v2952 = vld [vmem:[#allocation2 + $0xcf0] sm:$0xff]
    %v2953 = vld [vmem:[#allocation2 + $0xcf8] sm:$0xff]
    %v2954 = vld [vmem:[#allocation2 + $0xd00] sm:$0xff]
    %v2955 = vld [vmem:[#allocation2 + $0xd08] sm:$0xff]
    %v2956 = vld [vmem:[#allocation2 + $0xd10] sm:$0xff]
    %v2957 = vld [vmem:[#allocation2 + $0xd18] sm:$0xff]
    %v2958 = vld [vmem:[#allocation2 + $0xd20] sm:$0xff]
    %v2959 = vld [vmem:[#allocation2 + $0xd28] sm:$0xff]
    %v2960 = vld [vmem:[#allocation2 + $0xd30] sm:$0xff]
    %v2961 = vld [vmem:[#allocation2 + $0xd38] sm:$0xff]
    %v2962 = vld [vmem:[#allocation2 + $0xd40] sm:$0xff]
    %v2963 = vld [vmem:[#allocation2 + $0xd48] sm:$0xff]
    %v2964 = vld [vmem:[#allocation2 + $0xd50] sm:$0xff]
    %v2965 = vld [vmem:[#allocation2 + $0xd58] sm:$0xff]
    %v2966 = vld [vmem:[#allocation2 + $0xd60] sm:$0xff]
    %v2967 = vld [vmem:[#allocation2 + $0xd68] sm:$0xff]
    %v2968 = vld [vmem:[#allocation2 + $0xd70] sm:$0xff]
    %v2969 = vld [vmem:[#allocation2 + $0xd78] sm:$0xff]
    %v2970 = vld [vmem:[#allocation2 + $0xd80] sm:$0xff]
    %v2971 = vld [vmem:[#allocation2 + $0xd88] sm:$0xff]
    %v2972 = vld [vmem:[#allocation2 + $0xd90] sm:$0xff]
    %v2973 = vld [vmem:[#allocation2 + $0xd98] sm:$0xff]
    %v2974 = vld [vmem:[#allocation2 + $0xda0] sm:$0xff]
    %v2975 = vld [vmem:[#allocation2 + $0xda8] sm:$0xff]
    %v2976 = vld [vmem:[#allocation2 + $0xdb0] sm:$0xff]
    %v2977 = vld [vmem:[#allocation2 + $0xdb8] sm:$0xff]
    %v2978 = vld [vmem:[#allocation2 + $0xdc0] sm:$0xff]
    %v2979 = vld [vmem:[#allocation2 + $0xdc8] sm:$0xff]
    %v2980 = vld [vmem:[#allocation2 + $0xdd0] sm:$0xff]
    %v2981 = vld [vmem:[#allocation2 + $0xdd8] sm:$0xff]
    %v2982 = vld [vmem:[#allocation2 + $0xde0] sm:$0xff]
    %v2983 = vld [vmem:[#allocation2 + $0xde8] sm:$0xff]
    %v2984 = vld [vmem:[#allocation2 + $0xdf0] sm:$0xff]
    %v2985 = vld [vmem:[#allocation2 + $0xdf8] sm:$0xff]
    %v2986 = vld [vmem:[#allocation2 + $0xe00] sm:$0xff]
    %v2987 = vld [vmem:[#allocation2 + $0xe08] sm:$0xff]
    %v2988 = vld [vmem:[#allocation2 + $0xe10] sm:$0xff]
    %v2989 = vld [vmem:[#allocation2 + $0xe18] sm:$0xff]
    %v2990 = vld [vmem:[#allocation2 + $0xe20] sm:$0xff]
    %v2991 = vld [vmem:[#allocation2 + $0xe28] sm:$0xff]
    %v2992 = vld [vmem:[#allocation2 + $0xe30] sm:$0xff]
    %v2993 = vld [vmem:[#allocation2 + $0xe38] sm:$0xff]
    %v2994 = vld [vmem:[#allocation2 + $0xe40] sm:$0xff]
    %v2995 = vld [vmem:[#allocation2 + $0xe48] sm:$0xff]
    %v2996 = vld [vmem:[#allocation2 + $0xe50] sm:$0xff]
    %v2997 = vld [vmem:[#allocation2 + $0xe58] sm:$0xff]
    %v2998 = vld [vmem:[#allocation2 + $0xe60] sm:$0xff]
    %v2999 = vld [vmem:[#allocation2 + $0xe68] sm:$0xff]
    %v3000 = vld [vmem:[#allocation2 + $0xe70] sm:$0xff]
    %v3001 = vld [vmem:[#allocation2 + $0xe78] sm:$0xff]
    %v3002 = vld [vmem:[#allocation2 + $0xe80] sm:$0xff]
    %v3003 = vld [vmem:[#allocation2 + $0xe88] sm:$0xff]
    %v3004 = vld [vmem:[#allocation2 + $0xe90] sm:$0xff]
    %v3005 = vld [vmem:[#allocation2 + $0xe98] sm:$0xff]
    %v3006 = vld [vmem:[#allocation2 + $0xea0] sm:$0xff]
    %v3007 = vld [vmem:[#allocation2 + $0xea8] sm:$0xff]
    %v3008 = vld [vmem:[#allocation2 + $0xeb0] sm:$0xff]
    %v3009 = vld [vmem:[#allocation2 + $0xeb8] sm:$0xff]
    %v3010 = vld [vmem:[#allocation2 + $0xec0] sm:$0xff]
    %v3011 = vld [vmem:[#allocation2 + $0xec8] sm:$0xff]
    %v3012 = vld [vmem:[#allocation2 + $0xed0] sm:$0xff]
    %v3013 = vld [vmem:[#allocation2 + $0xed8] sm:$0xff]
    %v3014 = vld [vmem:[#allocation2 + $0xee0] sm:$0xff]
    %v3015 = vld [vmem:[#allocation2 + $0xee8] sm:$0xff]
    %v3016 = vld [vmem:[#allocation2 + $0xef0] sm:$0xff]
    %v3017 = vld [vmem:[#allocation2 + $0xef8] sm:$0xff]
    %v3018 = vld [vmem:[#allocation2 + $0xf00] sm:$0xff]
    %v3019 = vld [vmem:[#allocation2 + $0xf08] sm:$0xff]
    %v3020 = vld [vmem:[#allocation2 + $0xf10] sm:$0xff]
    %v3021 = vld [vmem:[#allocation2 + $0xf18] sm:$0xff]
    %v3022 = vld [vmem:[#allocation2 + $0xf20] sm:$0xff]
    %v3023 = vld [vmem:[#allocation2 + $0xf28] sm:$0xff]
    %v3024 = vld [vmem:[#allocation2 + $0xf30] sm:$0xff]
    %v3025 = vld [vmem:[#allocation2 + $0xf38] sm:$0xff]
    %v3026 = vld [vmem:[#allocation2 + $0xf40] sm:$0xff]
    %v3027 = vld [vmem:[#allocation2 + $0xf48] sm:$0xff]
    %v3028 = vld [vmem:[#allocation2 + $0xf50] sm:$0xff]
    %v3029 = vld [vmem:[#allocation2 + $0xf58] sm:$0xff]
    %v3030 = vld [vmem:[#allocation2 + $0xf60] sm:$0xff]
    %v3031 = vld [vmem:[#allocation2 + $0xf68] sm:$0xff]
    %v3032 = vld [vmem:[#allocation2 + $0xf70] sm:$0xff]
    %v3033 = vld [vmem:[#allocation2 + $0xf78] sm:$0xff]
    %v3034 = vld [vmem:[#allocation2 + $0xf80] sm:$0xff]
    %v3035 = vld [vmem:[#allocation2 + $0xf88] sm:$0xff]
    %v3036 = vld [vmem:[#allocation2 + $0xf90] sm:$0xff]
    %v3037 = vld [vmem:[#allocation2 + $0xf98] sm:$0xff]
    %v3038 = vld [vmem:[#allocation2 + $0xfa0] sm:$0xff]
    %v3039 = vld [vmem:[#allocation2 + $0xfa8] sm:$0xff]
    %v3040 = vld [vmem:[#allocation2 + $0xfb0] sm:$0xff]
    %v3041 = vld [vmem:[#allocation2 + $0xfb8] sm:$0xff]
    %v3042 = vld [vmem:[#allocation2 + $0xfc0] sm:$0xff]
    %v3043 = vld [vmem:[#allocation2 + $0xfc8] sm:$0xff]
    %v3044 = vld [vmem:[#allocation2 + $0xfd0] sm:$0xff]
    %v3045 = vld [vmem:[#allocation2 + $0xfd8] sm:$0xff]
    %v3046 = vld [vmem:[#allocation2 + $0xfe0] sm:$0xff]
    %v3047 = vld [vmem:[#allocation2 + $0xfe8] sm:$0xff]
    %v3048 = vld [vmem:[#allocation2 + $0xff0] sm:$0xff]
    %v3049 = vld [vmem:[#allocation2 + $0xff8] sm:$0xff]
    %3050 = vmatprep.subr.bf16.mxu0 %v2539
    %3051 = vmatpush1.bf16.msra.mxu0 %v2538
    %3052 = vmatprep.subr.bf16.mxu0 %v2555
    %3053 = vmatpush1.bf16.msra.mxu0 %v2554
    %3054 = vmatprep.subr.bf16.mxu0 %v2571
    %3055 = vmatpush1.bf16.msra.mxu0 %v2570
    %3056 = vmatprep.subr.bf16.mxu0 %v2587
    %3057 = vmatpush1.bf16.msra.mxu0 %v2586
    %3058 = vmatprep.subr.bf16.mxu0 %v2603
    %3059 = vmatpush1.bf16.msra.mxu0 %v2602
    %3060 = vmatprep.subr.bf16.mxu0 %v2619
    %3061 = vmatpush1.bf16.msra.mxu0 %v2618
    %3062 = vmatprep.subr.bf16.mxu0 %v2635
    %3063 = vmatpush1.bf16.msra.mxu0 %v2634
    %3064 = vmatprep.subr.bf16.mxu0 %v2651
    %3065 = vmatpush1.bf16.msra.mxu0 %v2650
    %3066 = vmatprep.subr.bf16.mxu0 %v2667
    %3067 = vmatpush1.bf16.msra.mxu0 %v2666
    %3068 = vmatprep.subr.bf16.mxu0 %v2683
    %3069 = vmatpush1.bf16.msra.mxu0 %v2682
    %3070 = vmatprep.subr.bf16.mxu0 %v2699
    %3071 = vmatpush1.bf16.msra.mxu0 %v2698
    %3072 = vmatprep.subr.bf16.mxu0 %v2715
    %3073 = vmatpush1.bf16.msra.mxu0 %v2714
    %3074 = vmatprep.subr.bf16.mxu0 %v2731
    %3075 = vmatpush1.bf16.msra.mxu0 %v2730
    %3076 = vmatprep.subr.bf16.mxu0 %v2747
    %3077 = vmatpush1.bf16.msra.mxu0 %v2746
    %3078 = vmatprep.subr.bf16.mxu0 %v2763
    %3079 = vmatpush1.bf16.msra.mxu0 %v2762
    %3080 = vmatprep.subr.bf16.mxu0 %v2779
    %3081 = vmatpush1.bf16.msra.mxu0 %v2778
    %3082 = vmatprep.mubr.bf16.mxu0 0
    %3083 = vmatmul.mubr.bf16.gmra.mrb[0].mxu0 0
    %v3084 = vpop.f32.mrb[0].mxu0
    %v3085 = vadd.f32 0.0, %v3084
    %v3086 = vpop.f32.mrb[0].mxu0
    %v3087 = vadd.f32 0.0, %v3086
    %v3088 = vpop.f32.mrb[0].mxu0
    %v3089 = vpop.f32.mrb[0].mxu0
    %3090 = vdwg.mxu0
    %3091 = vmatprep.subr.bf16.mxu0 %v2795
    %3092 = vmatpush1.bf16.msra.mxu0 %v2794
    %3093 = vmatprep.subr.bf16.mxu0 %v2811
    %3094 = vmatpush1.bf16.msra.mxu0 %v2810
    %3095 = vmatprep.subr.bf16.mxu0 %v2827
    %3096 = vmatpush1.bf16.msra.mxu0 %v2826
    %3097 = vmatprep.subr.bf16.mxu0 %v2843
    %3098 = vmatpush1.bf16.msra.mxu0 %v2842
    %3099 = vmatprep.subr.bf16.mxu0 %v2859
    %3100 = vmatpush1.bf16.msra.mxu0 %v2858
    %3101 = vmatprep.subr.bf16.mxu0 %v2875
    %3102 = vmatpush1.bf16.msra.mxu0 %v2874
    %3103 = vmatprep.subr.bf16.mxu0 %v2891
    %3104 = vmatpush1.bf16.msra.mxu0 %v2890
    %3105 = vmatprep.subr.bf16.mxu0 %v2907
    %3106 = vmatpush1.bf16.msra.mxu0 %v2906
    %3107 = vmatprep.subr.bf16.mxu0 %v2923
    %3108 = vmatpush1.bf16.msra.mxu0 %v2922
    %3109 = vmatprep.subr.bf16.mxu0 %v2939
    %3110 = vmatpush1.bf16.msra.mxu0 %v2938
    %3111 = vmatprep.subr.bf16.mxu0 %v2955
    %3112 = vmatpush1.bf16.msra.mxu0 %v2954
    %3113 = vmatprep.subr.bf16.mxu0 %v2971
    %3114 = vmatpush1.bf16.msra.mxu0 %v2970
    %3115 = vmatprep.subr.bf16.mxu0 %v2987
    %3116 = vmatpush1.bf16.msra.mxu0 %v2986
    %3117 = vmatprep.subr.bf16.mxu0 %v3003
    %3118 = vmatpush1.bf16.msra.mxu0 %v3002
    %3119 = vmatprep.subr.bf16.mxu0 %v3019
    %3120 = vmatpush1.bf16.msra.mxu0 %v3018
    %3121 = vmatprep.subr.bf16.mxu0 %v3035
    %3122 = vmatpush1.bf16.msra.mxu0 %v3034
    %3123 = vmatprep.mubr.bf16.mxu0 0
    %3124 = vmatmul.mubr.bf16.gmra.mrb[0].mxu0 0
    %v3125 = vpop.f32.mrb[0].mxu0
    %v3126 = vadd.f32 %v3085, %v3125
    %v3127 = vpop.f32.mrb[0].mxu0
    %v3128 = vadd.f32 %v3087, %v3127
    %v3129 = vpop.f32.mrb[0].mxu0
    %v3130 = vpop.f32.mrb[0].mxu0
    %3131 = vdwg.mxu0
    %3132 = vmatprep.subr.bf16.mxu0 %v2541
    %3133 = vmatpush1.bf16.msra.mxu0 %v2540
    %3134 = vmatprep.subr.bf16.mxu0 %v2557
    %3135 = vmatpush1.bf16.msra.mxu0 %v2556
    %3136 = vmatprep.subr.bf16.mxu0 %v2573
    %3137 = vmatpush1.bf16.msra.mxu0 %v2572
    %3138 = vmatprep.subr.bf16.mxu0 %v2589
    %3139 = vmatpush1.bf16.msra.mxu0 %v2588
    %3140 = vmatprep.subr.bf16.mxu0 %v2605
    %3141 = vmatpush1.bf16.msra.mxu0 %v2604
    %3142 = vmatprep.subr.bf16.mxu0 %v2621
    %3143 = vmatpush1.bf16.msra.mxu0 %v2620
    %3144 = vmatprep.subr.bf16.mxu0 %v2637
    %3145 = vmatpush1.bf16.msra.mxu0 %v2636
    %3146 = vmatprep.subr.bf16.mxu0 %v2653
    %3147 = vmatpush1.bf16.msra.mxu0 %v2652
    %3148 = vmatprep.subr.bf16.mxu0 %v2669
    %3149 = vmatpush1.bf16.msra.mxu0 %v2668
    %3150 = vmatprep.subr.bf16.mxu0 %v2685
    %3151 = vmatpush1.bf16.msra.mxu0 %v2684
    %3152 = vmatprep.subr.bf16.mxu0 %v2701
    %3153 = vmatpush1.bf16.msra.mxu0 %v2700
    %3154 = vmatprep.subr.bf16.mxu0 %v2717
    %3155 = vmatpush1.bf16.msra.mxu0 %v2716
    %3156 = vmatprep.subr.bf16.mxu0 %v2733
    %3157 = vmatpush1.bf16.msra.mxu0 %v2732
    %3158 = vmatprep.subr.bf16.mxu0 %v2749
    %3159 = vmatpush1.bf16.msra.mxu0 %v2748
    %3160 = vmatprep.subr.bf16.mxu0 %v2765
    %3161 = vmatpush1.bf16.msra.mxu0 %v2764
    %3162 = vmatprep.subr.bf16.mxu0 %v2781
    %3163 = vmatpush1.bf16.msra.mxu0 %v2780
    %3164 = vmatprep.mubr.bf16.mxu0 0
    %3165 = vmatmul.mubr.bf16.gmra.mrb[0].mxu0 0
    %v3166 = vpop.f32.mrb[0].mxu0
    %v3167 = vadd.f32 0.0, %v3166
    %v3168 = vpop.f32.mrb[0].mxu0
    %v3169 = vadd.f32 0.0, %v3168
    %v3170 = vpop.f32.mrb[0].mxu0
    %v3171 = vpop.f32.mrb[0].mxu0
    %3172 = vdwg.mxu0
    %3173 = vmatprep.subr.bf16.mxu0 %v2797
    %3174 = vmatpush1.bf16.msra.mxu0 %v2796
    %3175 = vmatprep.subr.bf16.mxu0 %v2813
    %3176 = vmatpush1.bf16.msra.mxu0 %v2812
    %3177 = vmatprep.subr.bf16.mxu0 %v2829
    %3178 = vmatpush1.bf16.msra.mxu0 %v2828
    %3179 = vmatprep.subr.bf16.mxu0 %v2845
    %3180 = vmatpush1.bf16.msra.mxu0 %v2844
    %3181 = vmatprep.subr.bf16.mxu0 %v2861
    %3182 = vmatpush1.bf16.msra.mxu0 %v2860
    %3183 = vmatprep.subr.bf16.mxu0 %v2877
    %3184 = vmatpush1.bf16.msra.mxu0 %v2876
    %3185 = vmatprep.subr.bf16.mxu0 %v2893
    %3186 = vmatpush1.bf16.msra.mxu0 %v2892
    %3187 = vmatprep.subr.bf16.mxu0 %v2909
    %3188 = vmatpush1.bf16.msra.mxu0 %v2908
    %3189 = vmatprep.subr.bf16.mxu0 %v2925
    %3190 = vmatpush1.bf16.msra.mxu0 %v2924
    %3191 = vmatprep.subr.bf16.mxu0 %v2941
    %3192 = vmatpush1.bf16.msra.mxu0 %v2940
    %3193 = vmatprep.subr.bf16.mxu0 %v2957
    %3194 = vmatpush1.bf16.msra.mxu0 %v2956
    %3195 = vmatprep.subr.bf16.mxu0 %v2973
    %3196 = vmatpush1.bf16.msra.mxu0 %v2972
    %3197 = vmatprep.subr.bf16.mxu0 %v2989
    %3198 = vmatpush1.bf16.msra.mxu0 %v2988
    %3199 = vmatprep.subr.bf16.mxu0 %v3005
    %3200 = vmatpush1.bf16.msra.mxu0 %v3004
    %3201 = vmatprep.subr.bf16.mxu0 %v3021
    %3202 = vmatpush1.bf16.msra.mxu0 %v3020
    %3203 = vmatprep.subr.bf16.mxu0 %v3037
    %3204 = vmatpush1.bf16.msra.mxu0 %v3036
    %3205 = vmatprep.mubr.bf16.mxu0 0
    %3206 = vmatmul.mubr.bf16.gmra.mrb[0].mxu0 0
    %v3207 = vpop.f32.mrb[0].mxu0
    %v3208 = vadd.f32 %v3167, %v3207
    %v3209 = vpop.f32.mrb[0].mxu0
    %v3210 = vadd.f32 %v3169, %v3209
    %v3211 = vpop.f32.mrb[0].mxu0
    %v3212 = vpop.f32.mrb[0].mxu0
    %3213 = vdwg.mxu0
    %3214 = vmatprep.subr.bf16.mxu0 %v2543
    %3215 = vmatpush1.bf16.msra.mxu0 %v2542
    %3216 = vmatprep.subr.bf16.mxu0 %v2559
    %3217 = vmatpush1.bf16.msra.mxu0 %v2558
    %3218 = vmatprep.subr.bf16.mxu0 %v2575
    %3219 = vmatpush1.bf16.msra.mxu0 %v2574
    %3220 = vmatprep.subr.bf16.mxu0 %v2591
    %3221 = vmatpush1.bf16.msra.mxu0 %v2590
    %3222 = vmatprep.subr.bf16.mxu0 %v2607
    %3223 = vmatpush1.bf16.msra.mxu0 %v2606
    %3224 = vmatprep.subr.bf16.mxu0 %v2623
    %3225 = vmatpush1.bf16.msra.mxu0 %v2622
    %3226 = vmatprep.subr.bf16.mxu0 %v2639
    %3227 = vmatpush1.bf16.msra.mxu0 %v2638
    %3228 = vmatprep.subr.bf16.mxu0 %v2655
    %3229 = vmatpush1.bf16.msra.mxu0 %v2654
    %3230 = vmatprep.subr.bf16.mxu0 %v2671
    %3231 = vmatpush1.bf16.msra.mxu0 %v2670
    %3232 = vmatprep.subr.bf16.mxu0 %v2687
    %3233 = vmatpush1.bf16.msra.mxu0 %v2686
    %3234 = vmatprep.subr.bf16.mxu0 %v2703
    %3235 = vmatpush1.bf16.msra.mxu0 %v2702
    %3236 = vmatprep.subr.bf16.mxu0 %v2719
    %3237 = vmatpush1.bf16.msra.mxu0 %v2718
    %3238 = vmatprep.subr.bf16.mxu0 %v2735
    %3239 = vmatpush1.bf16.msra.mxu0 %v2734
    %3240 = vmatprep.subr.bf16.mxu0 %v2751
    %3241 = vmatpush1.bf16.msra.mxu0 %v2750
    %3242 = vmatprep.subr.bf16.mxu0 %v2767
    %3243 = vmatpush1.bf16.msra.mxu0 %v2766
    %3244 = vmatprep.subr.bf16.mxu0 %v2783
    %3245 = vmatpush1.bf16.msra.mxu0 %v2782
    %3246 = vmatprep.mubr.bf16.mxu0 0
    %3247 = vmatmul.mubr.bf16.gmra.mrb[0].mxu0 0
    %v3248 = vpop.f32.mrb[0].mxu0
    %v3249 = vadd.f32 0.0, %v3248
    %v3250 = vpop.f32.mrb[0].mxu0
    %v3251 = vadd.f32 0.0, %v3250
    %v3252 = vpop.f32.mrb[0].mxu0
    %v3253 = vpop.f32.mrb[0].mxu0
    %3254 = vdwg.mxu0
    %3255 = vmatprep.subr.bf16.mxu0 %v2799
    %3256 = vmatpush1.bf16.msra.mxu0 %v2798
    %3257 = vmatprep.subr.bf16.mxu0 %v2815
    %3258 = vmatpush1.bf16.msra.mxu0 %v2814
    %3259 = vmatprep.subr.bf16.mxu0 %v2831
    %3260 = vmatpush1.bf16.msra.mxu0 %v2830
    %3261 = vmatprep.subr.bf16.mxu0 %v2847
    %3262 = vmatpush1.bf16.msra.mxu0 %v2846
    %3263 = vmatprep.subr.bf16.mxu0 %v2863
    %3264 = vmatpush1.bf16.msra.mxu0 %v2862
    %3265 = vmatprep.subr.bf16.mxu0 %v2879
    %3266 = vmatpush1.bf16.msra.mxu0 %v2878
    %3267 = vmatprep.subr.bf16.mxu0 %v2895
    %3268 = vmatpush1.bf16.msra.mxu0 %v2894
    %3269 = vmatprep.subr.bf16.mxu0 %v2911
    %3270 = vmatpush1.bf16.msra.mxu0 %v2910
    %3271 = vmatprep.subr.bf16.mxu0 %v2927
    %3272 = vmatpush1.bf16.msra.mxu0 %v2926
    %3273 = vmatprep.subr.bf16.mxu0 %v2943
    %3274 = vmatpush1.bf16.msra.mxu0 %v2942
    %3275 = vmatprep.subr.bf16.mxu0 %v2959
    %3276 = vmatpush1.bf16.msra.mxu0 %v2958
    %3277 = vmatprep.subr.bf16.mxu0 %v2975
    %3278 = vmatpush1.bf16.msra.mxu0 %v2974
    %3279 = vmatprep.subr.bf16.mxu0 %v2991
    %3280 = vmatpush1.bf16.msra.mxu0 %v2990
    %3281 = vmatprep.subr.bf16.mxu0 %v3007
    %3282 = vmatpush1.bf16.msra.mxu0 %v3006
    %3283 = vmatprep.subr.bf16.mxu0 %v3023
    %3284 = vmatpush1.bf16.msra.mxu0 %v3022
    %3285 = vmatprep.subr.bf16.mxu0 %v3039
    %3286 = vmatpush1.bf16.msra.mxu0 %v3038
    %3287 = vmatprep.mubr.bf16.mxu0 0
    %3288 = vmatmul.mubr.bf16.gmra.mrb[0].mxu0 0
    %v3289 = vpop.f32.mrb[0].mxu0
    %v3290 = vadd.f32 %v3249, %v3289
    %v3291 = vpop.f32.mrb[0].mxu0
    %v3292 = vadd.f32 %v3251, %v3291
    %v3293 = vpop.f32.mrb[0].mxu0
    %v3294 = vpop.f32.mrb[0].mxu0
    %3295 = vdwg.mxu0
    %3296 = vmatprep.subr.bf16.mxu0 %v2545
    %3297 = vmatpush1.bf16.msra.mxu0 %v2544
    %3298 = vmatprep.subr.bf16.mxu0 %v2561
    %3299 = vmatpush1.bf16.msra.mxu0 %v2560
    %3300 = vmatprep.subr.bf16.mxu0 %v2577
    %3301 = vmatpush1.bf16.msra.mxu0 %v2576
    %3302 = vmatprep.subr.bf16.mxu0 %v2593
    %3303 = vmatpush1.bf16.msra.mxu0 %v2592
    %3304 = vmatprep.subr.bf16.mxu0 %v2609
    %3305 = vmatpush1.bf16.msra.mxu0 %v2608
    %3306 = vmatprep.subr.bf16.mxu0 %v2625
    %3307 = vmatpush1.bf16.msra.mxu0 %v2624
    %3308 = vmatprep.subr.bf16.mxu0 %v2641
    %3309 = vmatpush1.bf16.msra.mxu0 %v2640
    %3310 = vmatprep.subr.bf16.mxu0 %v2657
    %3311 = vmatpush1.bf16.msra.mxu0 %v2656
    %3312 = vmatprep.subr.bf16.mxu0 %v2673
    %3313 = vmatpush1.bf16.msra.mxu0 %v2672
    %3314 = vmatprep.subr.bf16.mxu0 %v2689
    %3315 = vmatpush1.bf16.msra.mxu0 %v2688
    %3316 = vmatprep.subr.bf16.mxu0 %v2705
    %3317 = vmatpush1.bf16.msra.mxu0 %v2704
    %3318 = vmatprep.subr.bf16.mxu0 %v2721
    %3319 = vmatpush1.bf16.msra.mxu0 %v2720
    %3320 = vmatprep.subr.bf16.mxu0 %v2737
    %3321 = vmatpush1.bf16.msra.mxu0 %v2736
    %3322 = vmatprep.subr.bf16.mxu0 %v2753
    %3323 = vmatpush1.bf16.msra.mxu0 %v2752
    %3324 = vmatprep.subr.bf16.mxu0 %v2769
    %3325 = vmatpush1.bf16.msra.mxu0 %v2768
    %3326 = vmatprep.subr.bf16.mxu0 %v2785
    %3327 = vmatpush1.bf16.msra.mxu0 %v2784
    %3328 = vmatprep.mubr.bf16.mxu0 0
    %3329 = vmatmul.mubr.bf16.gmra.mrb[0].mxu0 0
    %v3330 = vpop.f32.mrb[0].mxu0
    %v3331 = vadd.f32 0.0, %v3330
    %v3332 = vpop.f32.mrb[0].mxu0
    %v3333 = vadd.f32 0.0, %v3332
    %v3334 = vpop.f32.mrb[0].mxu0
    %v3335 = vpop.f32.mrb[0].mxu0
    %3336 = vdwg.mxu0
    %3337 = vmatprep.subr.bf16.mxu0 %v2801
    %3338 = vmatpush1.bf16.msra.mxu0 %v2800
    %3339 = vmatprep.subr.bf16.mxu0 %v2817
    %3340 = vmatpush1.bf16.msra.mxu0 %v2816
    %3341 = vmatprep.subr.bf16.mxu0 %v2833
    %3342 = vmatpush1.bf16.msra.mxu0 %v2832
    %3343 = vmatprep.subr.bf16.mxu0 %v2849
    %3344 = vmatpush1.bf16.msra.mxu0 %v2848
    %3345 = vmatprep.subr.bf16.mxu0 %v2865
    %3346 = vmatpush1.bf16.msra.mxu0 %v2864
    %3347 = vmatprep.subr.bf16.mxu0 %v2881
    %3348 = vmatpush1.bf16.msra.mxu0 %v2880
    %3349 = vmatprep.subr.bf16.mxu0 %v2897
    %3350 = vmatpush1.bf16.msra.mxu0 %v2896
    %3351 = vmatprep.subr.bf16.mxu0 %v2913
    %3352 = vmatpush1.bf16.msra.mxu0 %v2912
    %3353 = vmatprep.subr.bf16.mxu0 %v2929
    %3354 = vmatpush1.bf16.msra.mxu0 %v2928
    %3355 = vmatprep.subr.bf16.mxu0 %v2945
    %3356 = vmatpush1.bf16.msra.mxu0 %v2944
    %3357 = vmatprep.subr.bf16.mxu0 %v2961
    %3358 = vmatpush1.bf16.msra.mxu0 %v2960
    %3359 = vmatprep.subr.bf16.mxu0 %v2977
    %3360 = vmatpush1.bf16.msra.mxu0 %v2976
    %3361 = vmatprep.subr.bf16.mxu0 %v2993
    %3362 = vmatpush1.bf16.msra.mxu0 %v2992
    %3363 = vmatprep.subr.bf16.mxu0 %v3009
    %3364 = vmatpush1.bf16.msra.mxu0 %v3008
    %3365 = vmatprep.subr.bf16.mxu0 %v3025
    %3366 = vmatpush1.bf16.msra.mxu0 %v3024
    %3367 = vmatprep.subr.bf16.mxu0 %v3041
    %3368 = vmatpush1.bf16.msra.mxu0 %v3040
    %3369 = vmatprep.mubr.bf16.mxu0 0
    %3370 = vmatmul.mubr.bf16.gmra.mrb[0].mxu0 0
    %v3371 = vpop.f32.mrb[0].mxu0
    %v3372 = vadd.f32 %v3331, %v3371
    %v3373 = vpop.f32.mrb[0].mxu0
    %v3374 = vadd.f32 %v3333, %v3373
    %v3375 = vpop.f32.mrb[0].mxu0
    %v3376 = vpop.f32.mrb[0].mxu0
    %3377 = vdwg.mxu0
    %3378 = vmatprep.subr.bf16.mxu0 %v2547
    %3379 = vmatpush1.bf16.msra.mxu0 %v2546
    %3380 = vmatprep.subr.bf16.mxu0 %v2563
    %3381 = vmatpush1.bf16.msra.mxu0 %v2562
    %3382 = vmatprep.subr.bf16.mxu0 %v2579
    %3383 = vmatpush1.bf16.msra.mxu0 %v2578
    %3384 = vmatprep.subr.bf16.mxu0 %v2595
    %3385 = vmatpush1.bf16.msra.mxu0 %v2594
    %3386 = vmatprep.subr.bf16.mxu0 %v2611
    %3387 = vmatpush1.bf16.msra.mxu0 %v2610
    %3388 = vmatprep.subr.bf16.mxu0 %v2627
    %3389 = vmatpush1.bf16.msra.mxu0 %v2626
    %3390 = vmatprep.subr.bf16.mxu0 %v2643
    %3391 = vmatpush1.bf16.msra.mxu0 %v2642
    %3392 = vmatprep.subr.bf16.mxu0 %v2659
    %3393 = vmatpush1.bf16.msra.mxu0 %v2658
    %3394 = vmatprep.subr.bf16.mxu0 %v2675
    %3395 = vmatpush1.bf16.msra.mxu0 %v2674
    %3396 = vmatprep.subr.bf16.mxu0 %v2691
    %3397 = vmatpush1.bf16.msra.mxu0 %v2690
    %3398 = vmatprep.subr.bf16.mxu0 %v2707
    %3399 = vmatpush1.bf16.msra.mxu0 %v2706
    %3400 = vmatprep.subr.bf16.mxu0 %v2723
    %3401 = vmatpush1.bf16.msra.mxu0 %v2722
    %3402 = vmatprep.subr.bf16.mxu0 %v2739
    %3403 = vmatpush1.bf16.msra.mxu0 %v2738
    %3404 = vmatprep.subr.bf16.mxu0 %v2755
    %3405 = vmatpush1.bf16.msra.mxu0 %v2754
    %3406 = vmatprep.subr.bf16.mxu0 %v2771
    %3407 = vmatpush1.bf16.msra.mxu0 %v2770
    %3408 = vmatprep.subr.bf16.mxu0 %v2787
    %3409 = vmatpush1.bf16.msra.mxu0 %v2786
    %3410 = vmatprep.mubr.bf16.mxu0 0
    %3411 = vmatmul.mubr.bf16.gmra.mrb[0].mxu0 0
    %v3412 = vpop.f32.mrb[0].mxu0
    %v3413 = vadd.f32 0.0, %v3412
    %v3414 = vpop.f32.mrb[0].mxu0
    %v3415 = vadd.f32 0.0, %v3414
    %v3416 = vpop.f32.mrb[0].mxu0
    %v3417 = vpop.f32.mrb[0].mxu0
    %3418 = vdwg.mxu0
    %3419 = vmatprep.subr.bf16.mxu0 %v2803
    %3420 = vmatpush1.bf16.msra.mxu0 %v2802
    %3421 = vmatprep.subr.bf16.mxu0 %v2819
    %3422 = vmatpush1.bf16.msra.mxu0 %v2818
    %3423 = vmatprep.subr.bf16.mxu0 %v2835
    %3424 = vmatpush1.bf16.msra.mxu0 %v2834
    %3425 = vmatprep.subr.bf16.mxu0 %v2851
    %3426 = vmatpush1.bf16.msra.mxu0 %v2850
    %3427 = vmatprep.subr.bf16.mxu0 %v2867
    %3428 = vmatpush1.bf16.msra.mxu0 %v2866
    %3429 = vmatprep.subr.bf16.mxu0 %v2883
    %3430 = vmatpush1.bf16.msra.mxu0 %v2882
    %3431 = vmatprep.subr.bf16.mxu0 %v2899
    %3432 = vmatpush1.bf16.msra.mxu0 %v2898
    %3433 = vmatprep.subr.bf16.mxu0 %v2915
    %3434 = vmatpush1.bf16.msra.mxu0 %v2914
    %3435 = vmatprep.subr.bf16.mxu0 %v2931
    %3436 = vmatpush1.bf16.msra.mxu0 %v2930
    %3437 = vmatprep.subr.bf16.mxu0 %v2947
    %3438 = vmatpush1.bf16.msra.mxu0 %v2946
    %3439 = vmatprep.subr.bf16.mxu0 %v2963
    %3440 = vmatpush1.bf16.msra.mxu0 %v2962
    %3441 = vmatprep.subr.bf16.mxu0 %v2979
    %3442 = vmatpush1.bf16.msra.mxu0 %v2978
    %3443 = vmatprep.subr.bf16.mxu0 %v2995
    %3444 = vmatpush1.bf16.msra.mxu0 %v2994
    %3445 = vmatprep.subr.bf16.mxu0 %v3011
    %3446 = vmatpush1.bf16.msra.mxu0 %v3010
    %3447 = vmatprep.subr.bf16.mxu0 %v3027
    %3448 = vmatpush1.bf16.msra.mxu0 %v3026
    %3449 = vmatprep.subr.bf16.mxu0 %v3043
    %3450 = vmatpush1.bf16.msra.mxu0 %v3042
    %3451 = vmatprep.mubr.bf16.mxu0 0
    %3452 = vmatmul.mubr.bf16.gmra.mrb[0].mxu0 0
    %v3453 = vpop.f32.mrb[0].mxu0
    %v3454 = vadd.f32 %v3413, %v3453
    %v3455 = vpop.f32.mrb[0].mxu0
    %v3456 = vadd.f32 %v3415, %v3455
    %v3457 = vpop.f32.mrb[0].mxu0
    %v3458 = vpop.f32.mrb[0].mxu0
    %3459 = vdwg.mxu0
    %3460 = vmatprep.subr.bf16.mxu0 %v2549
    %3461 = vmatpush1.bf16.msra.mxu0 %v2548
    %3462 = vmatprep.subr.bf16.mxu0 %v2565
    %3463 = vmatpush1.bf16.msra.mxu0 %v2564
    %3464 = vmatprep.subr.bf16.mxu0 %v2581
    %3465 = vmatpush1.bf16.msra.mxu0 %v2580
    %3466 = vmatprep.subr.bf16.mxu0 %v2597
    %3467 = vmatpush1.bf16.msra.mxu0 %v2596
    %3468 = vmatprep.subr.bf16.mxu0 %v2613
    %3469 = vmatpush1.bf16.msra.mxu0 %v2612
    %3470 = vmatprep.subr.bf16.mxu0 %v2629
    %3471 = vmatpush1.bf16.msra.mxu0 %v2628
    %3472 = vmatprep.subr.bf16.mxu0 %v2645
    %3473 = vmatpush1.bf16.msra.mxu0 %v2644
    %3474 = vmatprep.subr.bf16.mxu0 %v2661
    %3475 = vmatpush1.bf16.msra.mxu0 %v2660
    %3476 = vmatprep.subr.bf16.mxu0 %v2677
    %3477 = vmatpush1.bf16.msra.mxu0 %v2676
    %3478 = vmatprep.subr.bf16.mxu0 %v2693
    %3479 = vmatpush1.bf16.msra.mxu0 %v2692
    %3480 = vmatprep.subr.bf16.mxu0 %v2709
    %3481 = vmatpush1.bf16.msra.mxu0 %v2708
    %3482 = vmatprep.subr.bf16.mxu0 %v2725
    %3483 = vmatpush1.bf16.msra.mxu0 %v2724
    %3484 = vmatprep.subr.bf16.mxu0 %v2741
    %3485 = vmatpush1.bf16.msra.mxu0 %v2740
    %3486 = vmatprep.subr.bf16.mxu0 %v2757
    %3487 = vmatpush1.bf16.msra.mxu0 %v2756
    %3488 = vmatprep.subr.bf16.mxu0 %v2773
    %3489 = vmatpush1.bf16.msra.mxu0 %v2772
    %3490 = vmatprep.subr.bf16.mxu0 %v2789
    %3491 = vmatpush1.bf16.msra.mxu0 %v2788
    %3492 = vmatprep.mubr.bf16.mxu0 0
    %3493 = vmatmul.mubr.bf16.gmra.mrb[0].mxu0 0
    %v3494 = vpop.f32.mrb[0].mxu0
    %v3495 = vadd.f32 0.0, %v3494
    %v3496 = vpop.f32.mrb[0].mxu0
    %v3497 = vadd.f32 0.0, %v3496
    %v3498 = vpop.f32.mrb[0].mxu0
    %v3499 = vpop.f32.mrb[0].mxu0
    %3500 = vdwg.mxu0
    %3501 = vmatprep.subr.bf16.mxu0 %v2805
    %3502 = vmatpush1.bf16.msra.mxu0 %v2804
    %3503 = vmatprep.subr.bf16.mxu0 %v2821
    %3504 = vmatpush1.bf16.msra.mxu0 %v2820
    %3505 = vmatprep.subr.bf16.mxu0 %v2837
    %3506 = vmatpush1.bf16.msra.mxu0 %v2836
    %3507 = vmatprep.subr.bf16.mxu0 %v2853
    %3508 = vmatpush1.bf16.msra.mxu0 %v2852
    %3509 = vmatprep.subr.bf16.mxu0 %v2869
    %3510 = vmatpush1.bf16.msra.mxu0 %v2868
    %3511 = vmatprep.subr.bf16.mxu0 %v2885
    %3512 = vmatpush1.bf16.msra.mxu0 %v2884
    %3513 = vmatprep.subr.bf16.mxu0 %v2901
    %3514 = vmatpush1.bf16.msra.mxu0 %v2900
    %3515 = vmatprep.subr.bf16.mxu0 %v2917
    %3516 = vmatpush1.bf16.msra.mxu0 %v2916
    %3517 = vmatprep.subr.bf16.mxu0 %v2933
    %3518 = vmatpush1.bf16.msra.mxu0 %v2932
    %3519 = vmatprep.subr.bf16.mxu0 %v2949
    %3520 = vmatpush1.bf16.msra.mxu0 %v2948
    %3521 = vmatprep.subr.bf16.mxu0 %v2965
    %3522 = vmatpush1.bf16.msra.mxu0 %v2964
    %3523 = vmatprep.subr.bf16.mxu0 %v2981
    %3524 = vmatpush1.bf16.msra.mxu0 %v2980
    %3525 = vmatprep.subr.bf16.mxu0 %v2997
    %3526 = vmatpush1.bf16.msra.mxu0 %v2996
    %3527 = vmatprep.subr.bf16.mxu0 %v3013
    %3528 = vmatpush1.bf16.msra.mxu0 %v3012
    %3529 = vmatprep.subr.bf16.mxu0 %v3029
    %3530 = vmatpush1.bf16.msra.mxu0 %v3028
    %3531 = vmatprep.subr.bf16.mxu0 %v3045
    %3532 = vmatpush1.bf16.msra.mxu0 %v3044
    %3533 = vmatprep.mubr.bf16.mxu0 0
    %3534 = vmatmul.mubr.bf16.gmra.mrb[0].mxu0 0
    %v3535 = vpop.f32.mrb[0].mxu0
    %v3536 = vadd.f32 %v3495, %v3535
    %v3537 = vpop.f32.mrb[0].mxu0
    %v3538 = vadd.f32 %v3497, %v3537
    %v3539 = vpop.f32.mrb[0].mxu0
    %v3540 = vpop.f32.mrb[0].mxu0
    %3541 = vdwg.mxu0
    %3542 = vmatprep.subr.bf16.mxu0 %v2551
    %3543 = vmatpush1.bf16.msra.mxu0 %v2550
    %3544 = vmatprep.subr.bf16.mxu0 %v2567
    %3545 = vmatpush1.bf16.msra.mxu0 %v2566
    %3546 = vmatprep.subr.bf16.mxu0 %v2583
    %3547 = vmatpush1.bf16.msra.mxu0 %v2582
    %3548 = vmatprep.subr.bf16.mxu0 %v2599
    %3549 = vmatpush1.bf16.msra.mxu0 %v2598
    %3550 = vmatprep.subr.bf16.mxu0 %v2615
    %3551 = vmatpush1.bf16.msra.mxu0 %v2614
    %3552 = vmatprep.subr.bf16.mxu0 %v2631
    %3553 = vmatpush1.bf16.msra.mxu0 %v2630
    %3554 = vmatprep.subr.bf16.mxu0 %v2647
    %3555 = vmatpush1.bf16.msra.mxu0 %v2646
    %3556 = vmatprep.subr.bf16.mxu0 %v2663
    %3557 = vmatpush1.bf16.msra.mxu0 %v2662
    %3558 = vmatprep.subr.bf16.mxu0 %v2679
    %3559 = vmatpush1.bf16.msra.mxu0 %v2678
    %3560 = vmatprep.subr.bf16.mxu0 %v2695
    %3561 = vmatpush1.bf16.msra.mxu0 %v2694
    %3562 = vmatprep.subr.bf16.mxu0 %v2711
    %3563 = vmatpush1.bf16.msra.mxu0 %v2710
    %3564 = vmatprep.subr.bf16.mxu0 %v2727
    %3565 = vmatpush1.bf16.msra.mxu0 %v2726
    %3566 = vmatprep.subr.bf16.mxu0 %v2743
    %3567 = vmatpush1.bf16.msra.mxu0 %v2742
    %3568 = vmatprep.subr.bf16.mxu0 %v2759
    %3569 = vmatpush1.bf16.msra.mxu0 %v2758
    %3570 = vmatprep.subr.bf16.mxu0 %v2775
    %3571 = vmatpush1.bf16.msra.mxu0 %v2774
    %3572 = vmatprep.subr.bf16.mxu0 %v2791
    %3573 = vmatpush1.bf16.msra.mxu0 %v2790
    %3574 = vmatprep.mubr.bf16.mxu0 0
    %3575 = vmatmul.mubr.bf16.gmra.mrb[0].mxu0 0
    %v3576 = vpop.f32.mrb[0].mxu0
    %v3577 = vadd.f32 0.0, %v3576
    %v3578 = vpop.f32.mrb[0].mxu0
    %v3579 = vadd.f32 0.0, %v3578
    %v3580 = vpop.f32.mrb[0].mxu0
    %v3581 = vpop.f32.mrb[0].mxu0
    %3582 = vdwg.mxu0
    %3583 = vmatprep.subr.bf16.mxu0 %v2807
    %3584 = vmatpush1.bf16.msra.mxu0 %v2806
    %3585 = vmatprep.subr.bf16.mxu0 %v2823
    %3586 = vmatpush1.bf16.msra.mxu0 %v2822
    %3587 = vmatprep.subr.bf16.mxu0 %v2839
    %3588 = vmatpush1.bf16.msra.mxu0 %v2838
    %3589 = vmatprep.subr.bf16.mxu0 %v2855
    %3590 = vmatpush1.bf16.msra.mxu0 %v2854
    %3591 = vmatprep.subr.bf16.mxu0 %v2871
    %3592 = vmatpush1.bf16.msra.mxu0 %v2870
    %3593 = vmatprep.subr.bf16.mxu0 %v2887
    %3594 = vmatpush1.bf16.msra.mxu0 %v2886
    %3595 = vmatprep.subr.bf16.mxu0 %v2903
    %3596 = vmatpush1.bf16.msra.mxu0 %v2902
    %3597 = vmatprep.subr.bf16.mxu0 %v2919
    %3598 = vmatpush1.bf16.msra.mxu0 %v2918
    %3599 = vmatprep.subr.bf16.mxu0 %v2935
    %3600 = vmatpush1.bf16.msra.mxu0 %v2934
    %3601 = vmatprep.subr.bf16.mxu0 %v2951
    %3602 = vmatpush1.bf16.msra.mxu0 %v2950
    %3603 = vmatprep.subr.bf16.mxu0 %v2967
    %3604 = vmatpush1.bf16.msra.mxu0 %v2966
    %3605 = vmatprep.subr.bf16.mxu0 %v2983
    %3606 = vmatpush1.bf16.msra.mxu0 %v2982
    %3607 = vmatprep.subr.bf16.mxu0 %v2999
    %3608 = vmatpush1.bf16.msra.mxu0 %v2998
    %3609 = vmatprep.subr.bf16.mxu0 %v3015
    %3610 = vmatpush1.bf16.msra.mxu0 %v3014
    %3611 = vmatprep.subr.bf16.mxu0 %v3031
    %3612 = vmatpush1.bf16.msra.mxu0 %v3030
    %3613 = vmatprep.subr.bf16.mxu0 %v3047
    %3614 = vmatpush1.bf16.msra.mxu0 %v3046
    %3615 = vmatprep.mubr.bf16.mxu0 0
    %3616 = vmatmul.mubr.bf16.gmra.mrb[0].mxu0 0
    %v3617 = vpop.f32.mrb[0].mxu0
    %v3618 = vadd.f32 %v3577, %v3617
    %v3619 = vpop.f32.mrb[0].mxu0
    %v3620 = vadd.f32 %v3579, %v3619
    %v3621 = vpop.f32.mrb[0].mxu0
    %v3622 = vpop.f32.mrb[0].mxu0
    %3623 = vdwg.mxu0
    %3624 = vmatprep.subr.bf16.mxu0 %v2553
    %3625 = vmatpush1.bf16.msra.mxu0 %v2552
    %3626 = vmatprep.subr.bf16.mxu0 %v2569
    %3627 = vmatpush1.bf16.msra.mxu0 %v2568
    %3628 = vmatprep.subr.bf16.mxu0 %v2585
    %3629 = vmatpush1.bf16.msra.mxu0 %v2584
    %3630 = vmatprep.subr.bf16.mxu0 %v2601
    %3631 = vmatpush1.bf16.msra.mxu0 %v2600
    %3632 = vmatprep.subr.bf16.mxu0 %v2617
    %3633 = vmatpush1.bf16.msra.mxu0 %v2616
    %3634 = vmatprep.subr.bf16.mxu0 %v2633
    %3635 = vmatpush1.bf16.msra.mxu0 %v2632
    %3636 = vmatprep.subr.bf16.mxu0 %v2649
    %3637 = vmatpush1.bf16.msra.mxu0 %v2648
    %3638 = vmatprep.subr.bf16.mxu0 %v2665
    %3639 = vmatpush1.bf16.msra.mxu0 %v2664
    %3640 = vmatprep.subr.bf16.mxu0 %v2681
    %3641 = vmatpush1.bf16.msra.mxu0 %v2680
    %3642 = vmatprep.subr.bf16.mxu0 %v2697
    %3643 = vmatpush1.bf16.msra.mxu0 %v2696
    %3644 = vmatprep.subr.bf16.mxu0 %v2713
    %3645 = vmatpush1.bf16.msra.mxu0 %v2712
    %3646 = vmatprep.subr.bf16.mxu0 %v2729
    %3647 = vmatpush1.bf16.msra.mxu0 %v2728
    %3648 = vmatprep.subr.bf16.mxu0 %v2745
    %3649 = vmatpush1.bf16.msra.mxu0 %v2744
    %3650 = vmatprep.subr.bf16.mxu0 %v2761
    %3651 = vmatpush1.bf16.msra.mxu0 %v2760
    %3652 = vmatprep.subr.bf16.mxu0 %v2777
    %3653 = vmatpush1.bf16.msra.mxu0 %v2776
    %3654 = vmatprep.subr.bf16.mxu0 %v2793
    %3655 = vmatpush1.bf16.msra.mxu0 %v2792
    %3656 = vmatprep.mubr.bf16.mxu0 0
    %3657 = vmatmul.mubr.bf16.gmra.mrb[0].mxu0 0
    %v3658 = vpop.f32.mrb[0].mxu0
    %v3659 = vadd.f32 0.0, %v3658
    %v3660 = vpop.f32.mrb[0].mxu0
    %v3661 = vadd.f32 0.0, %v3660
    %v3662 = vpop.f32.mrb[0].mxu0
    %v3663 = vpop.f32.mrb[0].mxu0
    %3664 = vdwg.mxu0
    %3665 = vmatprep.subr.bf16.mxu0 %v2809
    %3666 = vmatpush1.bf16.msra.mxu0 %v2808
    %3667 = vmatprep.subr.bf16.mxu0 %v2825
    %3668 = vmatpush1.bf16.msra.mxu0 %v2824
    %3669 = vmatprep.subr.bf16.mxu0 %v2841
    %3670 = vmatpush1.bf16.msra.mxu0 %v2840
    %3671 = vmatprep.subr.bf16.mxu0 %v2857
    %3672 = vmatpush1.bf16.msra.mxu0 %v2856
    %3673 = vmatprep.subr.bf16.mxu0 %v2873
    %3674 = vmatpush1.bf16.msra.mxu0 %v2872
    %3675 = vmatprep.subr.bf16.mxu0 %v2889
    %3676 = vmatpush1.bf16.msra.mxu0 %v2888
    %3677 = vmatprep.subr.bf16.mxu0 %v2905
    %3678 = vmatpush1.bf16.msra.mxu0 %v2904
    %3679 = vmatprep.subr.bf16.mxu0 %v2921
    %3680 = vmatpush1.bf16.msra.mxu0 %v2920
    %3681 = vmatprep.subr.bf16.mxu0 %v2937
    %3682 = vmatpush1.bf16.msra.mxu0 %v2936
    %3683 = vmatprep.subr.bf16.mxu0 %v2953
    %3684 = vmatpush1.bf16.msra.mxu0 %v2952
    %3685 = vmatprep.subr.bf16.mxu0 %v2969
    %3686 = vmatpush1.bf16.msra.mxu0 %v2968
    %3687 = vmatprep.subr.bf16.mxu0 %v2985
    %3688 = vmatpush1.bf16.msra.mxu0 %v2984
    %3689 = vmatprep.subr.bf16.mxu0 %v3001
    %3690 = vmatpush1.bf16.msra.mxu0 %v3000
    %3691 = vmatprep.subr.bf16.mxu0 %v3017
    %3692 = vmatpush1.bf16.msra.mxu0 %v3016
    %3693 = vmatprep.subr.bf16.mxu0 %v3033
    %3694 = vmatpush1.bf16.msra.mxu0 %v3032
    %3695 = vmatprep.subr.bf16.mxu0 %v3049
    %3696 = vmatpush1.bf16.msra.mxu0 %v3048
    %3697 = vmatprep.mubr.bf16.mxu0 0
    %3698 = vmatmul.mubr.bf16.gmra.mrb[0].mxu0 0
    %v3699 = vpop.f32.mrb[0].mxu0
    %v3700 = vadd.f32 %v3659, %v3699
    %v3701 = vpop.f32.mrb[0].mxu0
    %v3702 = vadd.f32 %v3661, %v3701
    %v3703 = vpop.f32.mrb[0].mxu0
    %v3704 = vpop.f32.mrb[0].mxu0
    %3705 = vdwg.mxu0
    %v3706 = vadd.f32 %v1833, %v3126
    %v3707 = vadd.f32 %v1835, %v3128
    %v3708 = vadd.f32 %v1906, %v3208
    %v3709 = vadd.f32 %v1908, %v3210
    %v3710 = vadd.f32 %v1979, %v3290
    %v3711 = vadd.f32 %v1981, %v3292
    %v3712 = vadd.f32 %v2052, %v3372
    %v3713 = vadd.f32 %v2054, %v3374
    %v3714 = vadd.f32 %v2125, %v3454
    %v3715 = vadd.f32 %v2127, %v3456
    %v3716 = vadd.f32 %v2198, %v3536
    %v3717 = vadd.f32 %v2200, %v3538
    %v3718 = vadd.f32 %v2271, %v3618
    %v3719 = vadd.f32 %v2273, %v3620
    %v3720 = vadd.f32 %v2344, %v3700
    %v3721 = vadd.f32 %v2346, %v3702
    %v3722 = vxor.u32 %v3706, 2147483648
    %v3723 = vxor.u32 %v3707, 2147483648
    %v3724 = vxor.u32 %v3708, 2147483648
    %v3725 = vxor.u32 %v3709, 2147483648
    %v3726 = vmul.f32 %v3722, 1.442695
    %v3727 = vpow.pop %v3726
    %v3728 = vmul.f32 %v3723, 1.442695
    %v3729 = vpow.pop %v3728
    %v3730 = vmul.f32 %v3724, 1.442695
    %v3731 = vpow.pop %v3730
    %v3732 = vmul.f32 %v3725, 1.442695
    %v3733 = vpow.pop %v3732
    %v3734 = vadd.f32 %v3727, 1.0
    %v3735 = vadd.f32 %v3729, 1.0
    %v3736 = vadd.f32 %v3731, 1.0
    %v3737 = vadd.f32 %v3733, 1.0
    %v3738 = vrcp.pop %v3734
    %v3739 = vmul.f32 1.0, %v3738
    %v3740 = vrcp.pop %v3735
    %v3741 = vmul.f32 1.0, %v3740
    %v3742 = vrcp.pop %v3736
    %v3743 = vmul.f32 1.0, %v3742
    %v3744 = vrcp.pop %v3737
    %v3745 = vmul.f32 1.0, %v3744
    %v3746 = vxor.u32 %v3710, 2147483648
    %v3747 = vxor.u32 %v3711, 2147483648
    %v3748 = vxor.u32 %v3712, 2147483648
    %v3749 = vxor.u32 %v3713, 2147483648
    %v3750 = vmul.f32 %v3746, 1.442695
    %v3751 = vpow.pop %v3750
    %v3752 = vmul.f32 %v3747, 1.442695
    %v3753 = vpow.pop %v3752
    %v3754 = vmul.f32 %v3748, 1.442695
    %v3755 = vpow.pop %v3754
    %v3756 = vmul.f32 %v3749, 1.442695
    %v3757 = vpow.pop %v3756
    %v3758 = vadd.f32 %v3751, 1.0
    %v3759 = vadd.f32 %v3753, 1.0
    %v3760 = vadd.f32 %v3755, 1.0
    %v3761 = vadd.f32 %v3757, 1.0
    %v3762 = vrcp.pop %v3758
    %v3763 = vmul.f32 1.0, %v3762
    %v3764 = vrcp.pop %v3759
    %v3765 = vmul.f32 1.0, %v3764
    %v3766 = vrcp.pop %v3760
    %v3767 = vmul.f32 1.0, %v3766
    %v3768 = vrcp.pop %v3761
    %v3769 = vmul.f32 1.0, %v3768
    %v3770 = vtanh.pop %v3714
    %v3771 = vtanh.pop %v3715
    %v3772 = vtanh.pop %v3716
    %v3773 = vtanh.pop %v3717
    %v3774 = vxor.u32 %v3718, 2147483648
    %v3775 = vxor.u32 %v3719, 2147483648
    %v3776 = vxor.u32 %v3720, 2147483648
    %v3777 = vxor.u32 %v3721, 2147483648
    %v3778 = vmul.f32 %v3774, 1.442695
    %v3779 = vpow.pop %v3778
    %v3780 = vmul.f32 %v3775, 1.442695
    %v3781 = vpow.pop %v3780
    %v3782 = vmul.f32 %v3776, 1.442695
    %v3783 = vpow.pop %v3782
    %v3784 = vmul.f32 %v3777, 1.442695
    %v3785 = vpow.pop %v3784
    %v3786 = vadd.f32 %v3779, 1.0
    %v3787 = vadd.f32 %v3781, 1.0
    %v3788 = vadd.f32 %v3783, 1.0
    %v3789 = vadd.f32 %v3785, 1.0
    %v3790 = vrcp.pop %v3786
    %v3791 = vmul.f32 1.0, %v3790
    %v3792 = vrcp.pop %v3787
    %v3793 = vmul.f32 1.0, %v3792
    %v3794 = vrcp.pop %v3788
    %v3795 = vmul.f32 1.0, %v3794
    %v3796 = vrcp.pop %v3789
    %v3797 = vmul.f32 1.0, %v3796
    %v3798 = vmul.f32 %v3763, 0.0
    %v3799 = vmul.f32 %v3765, 0.0
    %v3800 = vmul.f32 %v3767, 0.0
    %v3801 = vmul.f32 %v3769, 0.0
    %v3802 = vmul.f32 %v3739, %v3770
    %v3803 = vmul.f32 %v3741, %v3771
    %v3804 = vmul.f32 %v3743, %v3772
    %v3805 = vmul.f32 %v3745, %v3773
    %v3806 = vadd.f32 %v3798, %v3802
    %v3807 = vadd.f32 %v3799, %v3803
    %v3808 = vadd.f32 %v3800, %v3804
    %v3809 = vadd.f32 %v3801, %v3805
    %v3810 = vtanh.pop %v3806
    %v3811 = vtanh.pop %v3807
    %v3812 = vtanh.pop %v3808
    %v3813 = vtanh.pop %v3809
    %v3814 = vmul.f32 %v3791, %v3810
    %v3815 = vmul.f32 %v3793, %v3811
    %v3816 = vmul.f32 %v3795, %v3812
    %v3817 = vmul.f32 %v3797, %v3813
    %v3818 = vpack.c.bf16 %v3814, %v3814
    %v3819 = vpack.c.bf16 %v3815, %v3815
    %v3820 = vpack.c.bf16 %v3816, %v3816
    %v3821 = vpack.c.bf16 %v3817, %v3817
    %3822 = vmatprep.subr.bf16.mxu0 %v2539
    %3823 = vmatpush1.bf16.msra.mxu0 %v2538
    %3824 = vmatprep.subr.bf16.mxu0 %v2555
    %3825 = vmatpush1.bf16.msra.mxu0 %v2554
    %3826 = vmatprep.subr.bf16.mxu0 %v2571
    %3827 = vmatpush1.bf16.msra.mxu0 %v2570
    %3828 = vmatprep.subr.bf16.mxu0 %v2587
    %3829 = vmatpush1.bf16.msra.mxu0 %v2586
    %3830 = vmatprep.subr.bf16.mxu0 %v2603
    %3831 = vmatpush1.bf16.msra.mxu0 %v2602
    %3832 = vmatprep.subr.bf16.mxu0 %v2619
    %3833 = vmatpush1.bf16.msra.mxu0 %v2618
    %3834 = vmatprep.subr.bf16.mxu0 %v2635
    %3835 = vmatpush1.bf16.msra.mxu0 %v2634
    %3836 = vmatprep.subr.bf16.mxu0 %v2651
    %3837 = vmatpush1.bf16.msra.mxu0 %v2650
    %3838 = vmatprep.subr.bf16.mxu0 %v2667
    %3839 = vmatpush1.bf16.msra.mxu0 %v2666
    %3840 = vmatprep.subr.bf16.mxu0 %v2683
    %3841 = vmatpush1.bf16.msra.mxu0 %v2682
    %3842 = vmatprep.subr.bf16.mxu0 %v2699
    %3843 = vmatpush1.bf16.msra.mxu0 %v2698
    %3844 = vmatprep.subr.bf16.mxu0 %v2715
    %3845 = vmatpush1.bf16.msra.mxu0 %v2714
    %3846 = vmatprep.subr.bf16.mxu0 %v2731
    %3847 = vmatpush1.bf16.msra.mxu0 %v2730
    %3848 = vmatprep.subr.bf16.mxu0 %v2747
    %3849 = vmatpush1.bf16.msra.mxu0 %v2746
    %3850 = vmatprep.subr.bf16.mxu0 %v2763
    %3851 = vmatpush1.bf16.msra.mxu0 %v2762
    %3852 = vmatprep.subr.bf16.mxu0 %v2779
    %3853 = vmatpush1.bf16.msra.mxu0 %v2778
    %3854 = vmatprep.mubr.bf16.mxu0 %v3819
    %3855 = vmatmul.mubr.bf16.gmra.mrb[0].mxu0 %v3818
    %v3856 = vpop.f32.mrb[0].mxu0
    %v3857 = vadd.f32 0.0, %v3856
    %v3858 = vpop.f32.mrb[0].mxu0
    %v3859 = vadd.f32 0.0, %v3858
    %v3860 = vpop.f32.mrb[0].mxu0
    %v3861 = vpop.f32.mrb[0].mxu0
    %3862 = vdwg.mxu0
    %3863 = vmatprep.subr.bf16.mxu0 %v2795
    %3864 = vmatpush1.bf16.msra.mxu0 %v2794
    %3865 = vmatprep.subr.bf16.mxu0 %v2811
    %3866 = vmatpush1.bf16.msra.mxu0 %v2810
    %3867 = vmatprep.subr.bf16.mxu0 %v2827
    %3868 = vmatpush1.bf16.msra.mxu0 %v2826
    %3869 = vmatprep.subr.bf16.mxu0 %v2843
    %3870 = vmatpush1.bf16.msra.mxu0 %v2842
    %3871 = vmatprep.subr.bf16.mxu0 %v2859
    %3872 = vmatpush1.bf16.msra.mxu0 %v2858
    %3873 = vmatprep.subr.bf16.mxu0 %v2875
    %3874 = vmatpush1.bf16.msra.mxu0 %v2874
    %3875 = vmatprep.subr.bf16.mxu0 %v2891
    %3876 = vmatpush1.bf16.msra.mxu0 %v2890
    %3877 = vmatprep.subr.bf16.mxu0 %v2907
    %3878 = vmatpush1.bf16.msra.mxu0 %v2906
    %3879 = vmatprep.subr.bf16.mxu0 %v2923
    %3880 = vmatpush1.bf16.msra.mxu0 %v2922
    %3881 = vmatprep.subr.bf16.mxu0 %v2939
    %3882 = vmatpush1.bf16.msra.mxu0 %v2938
    %3883 = vmatprep.subr.bf16.mxu0 %v2955
    %3884 = vmatpush1.bf16.msra.mxu0 %v2954
    %3885 = vmatprep.subr.bf16.mxu0 %v2971
    %3886 = vmatpush1.bf16.msra.mxu0 %v2970
    %3887 = vmatprep.subr.bf16.mxu0 %v2987
    %3888 = vmatpush1.bf16.msra.mxu0 %v2986
    %3889 = vmatprep.subr.bf16.mxu0 %v3003
    %3890 = vmatpush1.bf16.msra.mxu0 %v3002
    %3891 = vmatprep.subr.bf16.mxu0 %v3019
    %3892 = vmatpush1.bf16.msra.mxu0 %v3018
    %3893 = vmatprep.subr.bf16.mxu0 %v3035
    %3894 = vmatpush1.bf16.msra.mxu0 %v3034
    %3895 = vmatprep.mubr.bf16.mxu0 %v3821
    %3896 = vmatmul.mubr.bf16.gmra.mrb[0].mxu0 %v3820
    %v3897 = vpop.f32.mrb[0].mxu0
    %v3898 = vadd.f32 %v3857, %v3897
    %v3899 = vpop.f32.mrb[0].mxu0
    %v3900 = vadd.f32 %v3859, %v3899
    %v3901 = vpop.f32.mrb[0].mxu0
    %v3902 = vpop.f32.mrb[0].mxu0
    %3903 = vdwg.mxu0
    %3904 = vmatprep.subr.bf16.mxu0 %v2541
    %3905 = vmatpush1.bf16.msra.mxu0 %v2540
    %3906 = vmatprep.subr.bf16.mxu0 %v2557
    %3907 = vmatpush1.bf16.msra.mxu0 %v2556
    %3908 = vmatprep.subr.bf16.mxu0 %v2573
    %3909 = vmatpush1.bf16.msra.mxu0 %v2572
    %3910 = vmatprep.subr.bf16.mxu0 %v2589
    %3911 = vmatpush1.bf16.msra.mxu0 %v2588
    %3912 = vmatprep.subr.bf16.mxu0 %v2605
    %3913 = vmatpush1.bf16.msra.mxu0 %v2604
    %3914 = vmatprep.subr.bf16.mxu0 %v2621
    %3915 = vmatpush1.bf16.msra.mxu0 %v2620
    %3916 = vmatprep.subr.bf16.mxu0 %v2637
    %3917 = vmatpush1.bf16.msra.mxu0 %v2636
    %3918 = vmatprep.subr.bf16.mxu0 %v2653
    %3919 = vmatpush1.bf16.msra.mxu0 %v2652
    %3920 = vmatprep.subr.bf16.mxu0 %v2669
    %3921 = vmatpush1.bf16.msra.mxu0 %v2668
    %3922 = vmatprep.subr.bf16.mxu0 %v2685
    %3923 = vmatpush1.bf16.msra.mxu0 %v2684
    %3924 = vmatprep.subr.bf16.mxu0 %v2701
    %3925 = vmatpush1.bf16.msra.mxu0 %v2700
    %3926 = vmatprep.subr.bf16.mxu0 %v2717
    %3927 = vmatpush1.bf16.msra.mxu0 %v2716
    %3928 = vmatprep.subr.bf16.mxu0 %v2733
    %3929 = vmatpush1.bf16.msra.mxu0 %v2732
    %3930 = vmatprep.subr.bf16.mxu0 %v2749
    %3931 = vmatpush1.bf16.msra.mxu0 %v2748
    %3932 = vmatprep.subr.bf16.mxu0 %v2765
    %3933 = vmatpush1.bf16.msra.mxu0 %v2764
    %3934 = vmatprep.subr.bf16.mxu0 %v2781
    %3935 = vmatpush1.bf16.msra.mxu0 %v2780
    %3936 = vmatprep.mubr.bf16.mxu0 %v3819
    %3937 = vmatmul.mubr.bf16.gmra.mrb[0].mxu0 %v3818
    %v3938 = vpop.f32.mrb[0].mxu0
    %v3939 = vadd.f32 0.0, %v3938
    %v3940 = vpop.f32.mrb[0].mxu0
    %v3941 = vadd.f32 0.0, %v3940
    %v3942 = vpop.f32.mrb[0].mxu0
    %v3943 = vpop.f32.mrb[0].mxu0
    %3944 = vdwg.mxu0
    %3945 = vmatprep.subr.bf16.mxu0 %v2797
    %3946 = vmatpush1.bf16.msra.mxu0 %v2796
    %3947 = vmatprep.subr.bf16.mxu0 %v2813
    %3948 = vmatpush1.bf16.msra.mxu0 %v2812
    %3949 = vmatprep.subr.bf16.mxu0 %v2829
    %3950 = vmatpush1.bf16.msra.mxu0 %v2828
    %3951 = vmatprep.subr.bf16.mxu0 %v2845
    %3952 = vmatpush1.bf16.msra.mxu0 %v2844
    %3953 = vmatprep.subr.bf16.mxu0 %v2861
    %3954 = vmatpush1.bf16.msra.mxu0 %v2860
    %3955 = vmatprep.subr.bf16.mxu0 %v2877
    %3956 = vmatpush1.bf16.msra.mxu0 %v2876
    %3957 = vmatprep.subr.bf16.mxu0 %v2893
    %3958 = vmatpush1.bf16.msra.mxu0 %v2892
    %3959 = vmatprep.subr.bf16.mxu0 %v2909
    %3960 = vmatpush1.bf16.msra.mxu0 %v2908
    %3961 = vmatprep.subr.bf16.mxu0 %v2925
    %3962 = vmatpush1.bf16.msra.mxu0 %v2924
    %3963 = vmatprep.subr.bf16.mxu0 %v2941
    %3964 = vmatpush1.bf16.msra.mxu0 %v2940
    %3965 = vmatprep.subr.bf16.mxu0 %v2957
    %3966 = vmatpush1.bf16.msra.mxu0 %v2956
    %3967 = vmatprep.subr.bf16.mxu0 %v2973
    %3968 = vmatpush1.bf16.msra.mxu0 %v2972
    %3969 = vmatprep.subr.bf16.mxu0 %v2989
    %3970 = vmatpush1.bf16.msra.mxu0 %v2988
    %3971 = vmatprep.subr.bf16.mxu0 %v3005
    %3972 = vmatpush1.bf16.msra.mxu0 %v3004
    %3973 = vmatprep.subr.bf16.mxu0 %v3021
    %3974 = vmatpush1.bf16.msra.mxu0 %v3020
    %3975 = vmatprep.subr.bf16.mxu0 %v3037
    %3976 = vmatpush1.bf16.msra.mxu0 %v3036
    %3977 = vmatprep.mubr.bf16.mxu0 %v3821
    %3978 = vmatmul.mubr.bf16.gmra.mrb[0].mxu0 %v3820
    %v3979 = vpop.f32.mrb[0].mxu0
    %v3980 = vadd.f32 %v3939, %v3979
    %v3981 = vpop.f32.mrb[0].mxu0
    %v3982 = vadd.f32 %v3941, %v3981
    %v3983 = vpop.f32.mrb[0].mxu0
    %v3984 = vpop.f32.mrb[0].mxu0
    %3985 = vdwg.mxu0
    %3986 = vmatprep.subr.bf16.mxu0 %v2543
    %3987 = vmatpush1.bf16.msra.mxu0 %v2542
    %3988 = vmatprep.subr.bf16.mxu0 %v2559
    %3989 = vmatpush1.bf16.msra.mxu0 %v2558
    %3990 = vmatprep.subr.bf16.mxu0 %v2575
    %3991 = vmatpush1.bf16.msra.mxu0 %v2574
    %3992 = vmatprep.subr.bf16.mxu0 %v2591
    %3993 = vmatpush1.bf16.msra.mxu0 %v2590
    %3994 = vmatprep.subr.bf16.mxu0 %v2607
    %3995 = vmatpush1.bf16.msra.mxu0 %v2606
    %3996 = vmatprep.subr.bf16.mxu0 %v2623
    %3997 = vmatpush1.bf16.msra.mxu0 %v2622
    %3998 = vmatprep.subr.bf16.mxu0 %v2639
    %3999 = vmatpush1.bf16.msra.mxu0 %v2638
    %4000 = vmatprep.subr.bf16.mxu0 %v2655
    %4001 = vmatpush1.bf16.msra.mxu0 %v2654
    %4002 = vmatprep.subr.bf16.mxu0 %v2671
    %4003 = vmatpush1.bf16.msra.mxu0 %v2670
    %4004 = vmatprep.subr.bf16.mxu0 %v2687
    %4005 = vmatpush1.bf16.msra.mxu0 %v2686
    %4006 = vmatprep.subr.bf16.mxu0 %v2703
    %4007 = vmatpush1.bf16.msra.mxu0 %v2702
    %4008 = vmatprep.subr.bf16.mxu0 %v2719
    %4009 = vmatpush1.bf16.msra.mxu0 %v2718
    %4010 = vmatprep.subr.bf16.mxu0 %v2735
    %4011 = vmatpush1.bf16.msra.mxu0 %v2734
    %4012 = vmatprep.subr.bf16.mxu0 %v2751
    %4013 = vmatpush1.bf16.msra.mxu0 %v2750
    %4014 = vmatprep.subr.bf16.mxu0 %v2767
    %4015 = vmatpush1.bf16.msra.mxu0 %v2766
    %4016 = vmatprep.subr.bf16.mxu0 %v2783
    %4017 = vmatpush1.bf16.msra.mxu0 %v2782
    %4018 = vmatprep.mubr.bf16.mxu0 %v3819
    %4019 = vmatmul.mubr.bf16.gmra.mrb[0].mxu0 %v3818
    %v4020 = vpop.f32.mrb[0].mxu0
    %v4021 = vadd.f32 0.0, %v4020
    %v4022 = vpop.f32.mrb[0].mxu0
    %v4023 = vadd.f32 0.0, %v4022
    %v4024 = vpop.f32.mrb[0].mxu0
    %v4025 = vpop.f32.mrb[0].mxu0
    %4026 = vdwg.mxu0
    %4027 = vmatprep.subr.bf16.mxu0 %v2799
    %4028 = vmatpush1.bf16.msra.mxu0 %v2798
    %4029 = vmatprep.subr.bf16.mxu0 %v2815
    %4030 = vmatpush1.bf16.msra.mxu0 %v2814
    %4031 = vmatprep.subr.bf16.mxu0 %v2831
    %4032 = vmatpush1.bf16.msra.mxu0 %v2830
    %4033 = vmatprep.subr.bf16.mxu0 %v2847
    %4034 = vmatpush1.bf16.msra.mxu0 %v2846
    %4035 = vmatprep.subr.bf16.mxu0 %v2863
    %4036 = vmatpush1.bf16.msra.mxu0 %v2862
    %4037 = vmatprep.subr.bf16.mxu0 %v2879
    %4038 = vmatpush1.bf16.msra.mxu0 %v2878
    %4039 = vmatprep.subr.bf16.mxu0 %v2895
    %4040 = vmatpush1.bf16.msra.mxu0 %v2894
    %4041 = vmatprep.subr.bf16.mxu0 %v2911
    %4042 = vmatpush1.bf16.msra.mxu0 %v2910
    %4043 = vmatprep.subr.bf16.mxu0 %v2927
    %4044 = vmatpush1.bf16.msra.mxu0 %v2926
    %4045 = vmatprep.subr.bf16.mxu0 %v2943
    %4046 = vmatpush1.bf16.msra.mxu0 %v2942
    %4047 = vmatprep.subr.bf16.mxu0 %v2959
    %4048 = vmatpush1.bf16.msra.mxu0 %v2958
    %4049 = vmatprep.subr.bf16.mxu0 %v2975
    %4050 = vmatpush1.bf16.msra.mxu0 %v2974
    %4051 = vmatprep.subr.bf16.mxu0 %v2991
    %4052 = vmatpush1.bf16.msra.mxu0 %v2990
    %4053 = vmatprep.subr.bf16.mxu0 %v3007
    %4054 = vmatpush1.bf16.msra.mxu0 %v3006
    %4055 = vmatprep.subr.bf16.mxu0 %v3023
    %4056 = vmatpush1.bf16.msra.mxu0 %v3022
    %4057 = vmatprep.subr.bf16.mxu0 %v3039
    %4058 = vmatpush1.bf16.msra.mxu0 %v3038
    %4059 = vmatprep.mubr.bf16.mxu0 %v3821
    %4060 = vmatmul.mubr.bf16.gmra.mrb[0].mxu0 %v3820
    %v4061 = vpop.f32.mrb[0].mxu0
    %v4062 = vadd.f32 %v4021, %v4061
    %v4063 = vpop.f32.mrb[0].mxu0
    %v4064 = vadd.f32 %v4023, %v4063
    %v4065 = vpop.f32.mrb[0].mxu0
    %v4066 = vpop.f32.mrb[0].mxu0
    %4067 = vdwg.mxu0
    %4068 = vmatprep.subr.bf16.mxu0 %v2545
    %4069 = vmatpush1.bf16.msra.mxu0 %v2544
    %4070 = vmatprep.subr.bf16.mxu0 %v2561
    %4071 = vmatpush1.bf16.msra.mxu0 %v2560
    %4072 = vmatprep.subr.bf16.mxu0 %v2577
    %4073 = vmatpush1.bf16.msra.mxu0 %v2576
    %4074 = vmatprep.subr.bf16.mxu0 %v2593
    %4075 = vmatpush1.bf16.msra.mxu0 %v2592
    %4076 = vmatprep.subr.bf16.mxu0 %v2609
    %4077 = vmatpush1.bf16.msra.mxu0 %v2608
    %4078 = vmatprep.subr.bf16.mxu0 %v2625
    %4079 = vmatpush1.bf16.msra.mxu0 %v2624
    %4080 = vmatprep.subr.bf16.mxu0 %v2641
    %4081 = vmatpush1.bf16.msra.mxu0 %v2640
    %4082 = vmatprep.subr.bf16.mxu0 %v2657
    %4083 = vmatpush1.bf16.msra.mxu0 %v2656
    %4084 = vmatprep.subr.bf16.mxu0 %v2673
    %4085 = vmatpush1.bf16.msra.mxu0 %v2672
    %4086 = vmatprep.subr.bf16.mxu0 %v2689
    %4087 = vmatpush1.bf16.msra.mxu0 %v2688
    %4088 = vmatprep.subr.bf16.mxu0 %v2705
    %4089 = vmatpush1.bf16.msra.mxu0 %v2704
    %4090 = vmatprep.subr.bf16.mxu0 %v2721
    %4091 = vmatpush1.bf16.msra.mxu0 %v2720
    %4092 = vmatprep.subr.bf16.mxu0 %v2737
    %4093 = vmatpush1.bf16.msra.mxu0 %v2736
    %4094 = vmatprep.subr.bf16.mxu0 %v2753
    %4095 = vmatpush1.bf16.msra.mxu0 %v2752
    %4096 = vmatprep.subr.bf16.mxu0 %v2769
    %4097 = vmatpush1.bf16.msra.mxu0 %v2768
    %4098 = vmatprep.subr.bf16.mxu0 %v2785
    %4099 = vmatpush1.bf16.msra.mxu0 %v2784
    %4100 = vmatprep.mubr.bf16.mxu0 %v3819
    %4101 = vmatmul.mubr.bf16.gmra.mrb[0].mxu0 %v3818
    %v4102 = vpop.f32.mrb[0].mxu0
    %v4103 = vadd.f32 0.0, %v4102
    %v4104 = vpop.f32.mrb[0].mxu0
    %v4105 = vadd.f32 0.0, %v4104
    %v4106 = vpop.f32.mrb[0].mxu0
    %v4107 = vpop.f32.mrb[0].mxu0
    %4108 = vdwg.mxu0
    %4109 = vmatprep.subr.bf16.mxu0 %v2801
    %4110 = vmatpush1.bf16.msra.mxu0 %v2800
    %4111 = vmatprep.subr.bf16.mxu0 %v2817
    %4112 = vmatpush1.bf16.msra.mxu0 %v2816
    %4113 = vmatprep.subr.bf16.mxu0 %v2833
    %4114 = vmatpush1.bf16.msra.mxu0 %v2832
    %4115 = vmatprep.subr.bf16.mxu0 %v2849
    %4116 = vmatpush1.bf16.msra.mxu0 %v2848
    %4117 = vmatprep.subr.bf16.mxu0 %v2865
    %4118 = vmatpush1.bf16.msra.mxu0 %v2864
    %4119 = vmatprep.subr.bf16.mxu0 %v2881
    %4120 = vmatpush1.bf16.msra.mxu0 %v2880
    %4121 = vmatprep.subr.bf16.mxu0 %v2897
    %4122 = vmatpush1.bf16.msra.mxu0 %v2896
    %4123 = vmatprep.subr.bf16.mxu0 %v2913
    %4124 = vmatpush1.bf16.msra.mxu0 %v2912
    %4125 = vmatprep.subr.bf16.mxu0 %v2929
    %4126 = vmatpush1.bf16.msra.mxu0 %v2928
    %4127 = vmatprep.subr.bf16.mxu0 %v2945
    %4128 = vmatpush1.bf16.msra.mxu0 %v2944
    %4129 = vmatprep.subr.bf16.mxu0 %v2961
    %4130 = vmatpush1.bf16.msra.mxu0 %v2960
    %4131 = vmatprep.subr.bf16.mxu0 %v2977
    %4132 = vmatpush1.bf16.msra.mxu0 %v2976
    %4133 = vmatprep.subr.bf16.mxu0 %v2993
    %4134 = vmatpush1.bf16.msra.mxu0 %v2992
    %4135 = vmatprep.subr.bf16.mxu0 %v3009
    %4136 = vmatpush1.bf16.msra.mxu0 %v3008
    %4137 = vmatprep.subr.bf16.mxu0 %v3025
    %4138 = vmatpush1.bf16.msra.mxu0 %v3024
    %4139 = vmatprep.subr.bf16.mxu0 %v3041
    %4140 = vmatpush1.bf16.msra.mxu0 %v3040
    %4141 = vmatprep.mubr.bf16.mxu0 %v3821
    %4142 = vmatmul.mubr.bf16.gmra.mrb[0].mxu0 %v3820
    %v4143 = vpop.f32.mrb[0].mxu0
    %v4144 = vadd.f32 %v4103, %v4143
    %v4145 = vpop.f32.mrb[0].mxu0
    %v4146 = vadd.f32 %v4105, %v4145
    %v4147 = vpop.f32.mrb[0].mxu0
    %v4148 = vpop.f32.mrb[0].mxu0
    %4149 = vdwg.mxu0
    %4150 = vmatprep.subr.bf16.mxu0 %v2547
    %4151 = vmatpush1.bf16.msra.mxu0 %v2546
    %4152 = vmatprep.subr.bf16.mxu0 %v2563
    %4153 = vmatpush1.bf16.msra.mxu0 %v2562
    %4154 = vmatprep.subr.bf16.mxu0 %v2579
    %4155 = vmatpush1.bf16.msra.mxu0 %v2578
    %4156 = vmatprep.subr.bf16.mxu0 %v2595
    %4157 = vmatpush1.bf16.msra.mxu0 %v2594
    %4158 = vmatprep.subr.bf16.mxu0 %v2611
    %4159 = vmatpush1.bf16.msra.mxu0 %v2610
    %4160 = vmatprep.subr.bf16.mxu0 %v2627
    %4161 = vmatpush1.bf16.msra.mxu0 %v2626
    %4162 = vmatprep.subr.bf16.mxu0 %v2643
    %4163 = vmatpush1.bf16.msra.mxu0 %v2642
    %4164 = vmatprep.subr.bf16.mxu0 %v2659
    %4165 = vmatpush1.bf16.msra.mxu0 %v2658
    %4166 = vmatprep.subr.bf16.mxu0 %v2675
    %4167 = vmatpush1.bf16.msra.mxu0 %v2674
    %4168 = vmatprep.subr.bf16.mxu0 %v2691
    %4169 = vmatpush1.bf16.msra.mxu0 %v2690
    %4170 = vmatprep.subr.bf16.mxu0 %v2707
    %4171 = vmatpush1.bf16.msra.mxu0 %v2706
    %4172 = vmatprep.subr.bf16.mxu0 %v2723
    %4173 = vmatpush1.bf16.msra.mxu0 %v2722
    %4174 = vmatprep.subr.bf16.mxu0 %v2739
    %4175 = vmatpush1.bf16.msra.mxu0 %v2738
    %4176 = vmatprep.subr.bf16.mxu0 %v2755
    %4177 = vmatpush1.bf16.msra.mxu0 %v2754
    %4178 = vmatprep.subr.bf16.mxu0 %v2771
    %4179 = vmatpush1.bf16.msra.mxu0 %v2770
    %4180 = vmatprep.subr.bf16.mxu0 %v2787
    %4181 = vmatpush1.bf16.msra.mxu0 %v2786
    %4182 = vmatprep.mubr.bf16.mxu0 %v3819
    %4183 = vmatmul.mubr.bf16.gmra.mrb[0].mxu0 %v3818
    %v4184 = vpop.f32.mrb[0].mxu0
    %v4185 = vadd.f32 0.0, %v4184
    %v4186 = vpop.f32.mrb[0].mxu0
    %v4187 = vadd.f32 0.0, %v4186
    %v4188 = vpop.f32.mrb[0].mxu0
    %v4189 = vpop.f32.mrb[0].mxu0
    %4190 = vdwg.mxu0
    %4191 = vmatprep.subr.bf16.mxu0 %v2803
    %4192 = vmatpush1.bf16.msra.mxu0 %v2802
    %4193 = vmatprep.subr.bf16.mxu0 %v2819
    %4194 = vmatpush1.bf16.msra.mxu0 %v2818
    %4195 = vmatprep.subr.bf16.mxu0 %v2835
    %4196 = vmatpush1.bf16.msra.mxu0 %v2834
    %4197 = vmatprep.subr.bf16.mxu0 %v2851
    %4198 = vmatpush1.bf16.msra.mxu0 %v2850
    %4199 = vmatprep.subr.bf16.mxu0 %v2867
    %4200 = vmatpush1.bf16.msra.mxu0 %v2866
    %4201 = vmatprep.subr.bf16.mxu0 %v2883
    %4202 = vmatpush1.bf16.msra.mxu0 %v2882
    %4203 = vmatprep.subr.bf16.mxu0 %v2899
    %4204 = vmatpush1.bf16.msra.mxu0 %v2898
    %4205 = vmatprep.subr.bf16.mxu0 %v2915
    %4206 = vmatpush1.bf16.msra.mxu0 %v2914
    %4207 = vmatprep.subr.bf16.mxu0 %v2931
    %4208 = vmatpush1.bf16.msra.mxu0 %v2930
    %4209 = vmatprep.subr.bf16.mxu0 %v2947
    %4210 = vmatpush1.bf16.msra.mxu0 %v2946
    %4211 = vmatprep.subr.bf16.mxu0 %v2963
    %4212 = vmatpush1.bf16.msra.mxu0 %v2962
    %4213 = vmatprep.subr.bf16.mxu0 %v2979
    %4214 = vmatpush1.bf16.msra.mxu0 %v2978
    %4215 = vmatprep.subr.bf16.mxu0 %v2995
    %4216 = vmatpush1.bf16.msra.mxu0 %v2994
    %4217 = vmatprep.subr.bf16.mxu0 %v3011
    %4218 = vmatpush1.bf16.msra.mxu0 %v3010
    %4219 = vmatprep.subr.bf16.mxu0 %v3027
    %4220 = vmatpush1.bf16.msra.mxu0 %v3026
    %4221 = vmatprep.subr.bf16.mxu0 %v3043
    %4222 = vmatpush1.bf16.msra.mxu0 %v3042
    %4223 = vmatprep.mubr.bf16.mxu0 %v3821
    %4224 = vmatmul.mubr.bf16.gmra.mrb[0].mxu0 %v3820
    %v4225 = vpop.f32.mrb[0].mxu0
    %v4226 = vadd.f32 %v4185, %v4225
    %v4227 = vpop.f32.mrb[0].mxu0
    %v4228 = vadd.f32 %v4187, %v4227
    %v4229 = vpop.f32.mrb[0].mxu0
    %v4230 = vpop.f32.mrb[0].mxu0
    %4231 = vdwg.mxu0
    %4232 = vmatprep.subr.bf16.mxu0 %v2549
    %4233 = vmatpush1.bf16.msra.mxu0 %v2548
    %4234 = vmatprep.subr.bf16.mxu0 %v2565
    %4235 = vmatpush1.bf16.msra.mxu0 %v2564
    %4236 = vmatprep.subr.bf16.mxu0 %v2581
    %4237 = vmatpush1.bf16.msra.mxu0 %v2580
    %4238 = vmatprep.subr.bf16.mxu0 %v2597
    %4239 = vmatpush1.bf16.msra.mxu0 %v2596
    %4240 = vmatprep.subr.bf16.mxu0 %v2613
    %4241 = vmatpush1.bf16.msra.mxu0 %v2612
    %4242 = vmatprep.subr.bf16.mxu0 %v2629
    %4243 = vmatpush1.bf16.msra.mxu0 %v2628
    %4244 = vmatprep.subr.bf16.mxu0 %v2645
    %4245 = vmatpush1.bf16.msra.mxu0 %v2644
    %4246 = vmatprep.subr.bf16.mxu0 %v2661
    %4247 = vmatpush1.bf16.msra.mxu0 %v2660
    %4248 = vmatprep.subr.bf16.mxu0 %v2677
    %4249 = vmatpush1.bf16.msra.mxu0 %v2676
    %4250 = vmatprep.subr.bf16.mxu0 %v2693
    %4251 = vmatpush1.bf16.msra.mxu0 %v2692
    %4252 = vmatprep.subr.bf16.mxu0 %v2709
    %4253 = vmatpush1.bf16.msra.mxu0 %v2708
    %4254 = vmatprep.subr.bf16.mxu0 %v2725
    %4255 = vmatpush1.bf16.msra.mxu0 %v2724
    %4256 = vmatprep.subr.bf16.mxu0 %v2741
    %4257 = vmatpush1.bf16.msra.mxu0 %v2740
    %4258 = vmatprep.subr.bf16.mxu0 %v2757
    %4259 = vmatpush1.bf16.msra.mxu0 %v2756
    %4260 = vmatprep.subr.bf16.mxu0 %v2773
    %4261 = vmatpush1.bf16.msra.mxu0 %v2772
    %4262 = vmatprep.subr.bf16.mxu0 %v2789
    %4263 = vmatpush1.bf16.msra.mxu0 %v2788
    %4264 = vmatprep.mubr.bf16.mxu0 %v3819
    %4265 = vmatmul.mubr.bf16.gmra.mrb[0].mxu0 %v3818
    %v4266 = vpop.f32.mrb[0].mxu0
    %v4267 = vadd.f32 0.0, %v4266
    %v4268 = vpop.f32.mrb[0].mxu0
    %v4269 = vadd.f32 0.0, %v4268
    %v4270 = vpop.f32.mrb[0].mxu0
    %v4271 = vpop.f32.mrb[0].mxu0
    %4272 = vdwg.mxu0
    %4273 = vmatprep.subr.bf16.mxu0 %v2805
    %4274 = vmatpush1.bf16.msra.mxu0 %v2804
    %4275 = vmatprep.subr.bf16.mxu0 %v2821
    %4276 = vmatpush1.bf16.msra.mxu0 %v2820
    %4277 = vmatprep.subr.bf16.mxu0 %v2837
    %4278 = vmatpush1.bf16.msra.mxu0 %v2836
    %4279 = vmatprep.subr.bf16.mxu0 %v2853
    %4280 = vmatpush1.bf16.msra.mxu0 %v2852
    %4281 = vmatprep.subr.bf16.mxu0 %v2869
    %4282 = vmatpush1.bf16.msra.mxu0 %v2868
    %4283 = vmatprep.subr.bf16.mxu0 %v2885
    %4284 = vmatpush1.bf16.msra.mxu0 %v2884
    %4285 = vmatprep.subr.bf16.mxu0 %v2901
    %4286 = vmatpush1.bf16.msra.mxu0 %v2900
    %4287 = vmatprep.subr.bf16.mxu0 %v2917
    %4288 = vmatpush1.bf16.msra.mxu0 %v2916
    %4289 = vmatprep.subr.bf16.mxu0 %v2933
    %4290 = vmatpush1.bf16.msra.mxu0 %v2932
    %4291 = vmatprep.subr.bf16.mxu0 %v2949
    %4292 = vmatpush1.bf16.msra.mxu0 %v2948
    %4293 = vmatprep.subr.bf16.mxu0 %v2965
    %4294 = vmatpush1.bf16.msra.mxu0 %v2964
    %4295 = vmatprep.subr.bf16.mxu0 %v2981
    %4296 = vmatpush1.bf16.msra.mxu0 %v2980
    %4297 = vmatprep.subr.bf16.mxu0 %v2997
    %4298 = vmatpush1.bf16.msra.mxu0 %v2996
    %4299 = vmatprep.subr.bf16.mxu0 %v3013
    %4300 = vmatpush1.bf16.msra.mxu0 %v3012
    %4301 = vmatprep.subr.bf16.mxu0 %v3029
    %4302 = vmatpush1.bf16.msra.mxu0 %v3028
    %4303 = vmatprep.subr.bf16.mxu0 %v3045
    %4304 = vmatpush1.bf16.msra.mxu0 %v3044
    %4305 = vmatprep.mubr.bf16.mxu0 %v3821
    %4306 = vmatmul.mubr.bf16.gmra.mrb[0].mxu0 %v3820
    %v4307 = vpop.f32.mrb[0].mxu0
    %v4308 = vadd.f32 %v4267, %v4307
    %v4309 = vpop.f32.mrb[0].mxu0
    %v4310 = vadd.f32 %v4269, %v4309
    %v4311 = vpop.f32.mrb[0].mxu0
    %v4312 = vpop.f32.mrb[0].mxu0
    %4313 = vdwg.mxu0
    %4314 = vmatprep.subr.bf16.mxu0 %v2551
    %4315 = vmatpush1.bf16.msra.mxu0 %v2550
    %4316 = vmatprep.subr.bf16.mxu0 %v2567
    %4317 = vmatpush1.bf16.msra.mxu0 %v2566
    %4318 = vmatprep.subr.bf16.mxu0 %v2583
    %4319 = vmatpush1.bf16.msra.mxu0 %v2582
    %4320 = vmatprep.subr.bf16.mxu0 %v2599
    %4321 = vmatpush1.bf16.msra.mxu0 %v2598
    %4322 = vmatprep.subr.bf16.mxu0 %v2615
    %4323 = vmatpush1.bf16.msra.mxu0 %v2614
    %4324 = vmatprep.subr.bf16.mxu0 %v2631
    %4325 = vmatpush1.bf16.msra.mxu0 %v2630
    %4326 = vmatprep.subr.bf16.mxu0 %v2647
    %4327 = vmatpush1.bf16.msra.mxu0 %v2646
    %4328 = vmatprep.subr.bf16.mxu0 %v2663
    %4329 = vmatpush1.bf16.msra.mxu0 %v2662
    %4330 = vmatprep.subr.bf16.mxu0 %v2679
    %4331 = vmatpush1.bf16.msra.mxu0 %v2678
    %4332 = vmatprep.subr.bf16.mxu0 %v2695
    %4333 = vmatpush1.bf16.msra.mxu0 %v2694
    %4334 = vmatprep.subr.bf16.mxu0 %v2711
    %4335 = vmatpush1.bf16.msra.mxu0 %v2710
    %4336 = vmatprep.subr.bf16.mxu0 %v2727
    %4337 = vmatpush1.bf16.msra.mxu0 %v2726
    %4338 = vmatprep.subr.bf16.mxu0 %v2743
    %4339 = vmatpush1.bf16.msra.mxu0 %v2742
    %4340 = vmatprep.subr.bf16.mxu0 %v2759
    %4341 = vmatpush1.bf16.msra.mxu0 %v2758
    %4342 = vmatprep.subr.bf16.mxu0 %v2775
    %4343 = vmatpush1.bf16.msra.mxu0 %v2774
    %4344 = vmatprep.subr.bf16.mxu0 %v2791
    %4345 = vmatpush1.bf16.msra.mxu0 %v2790
    %4346 = vmatprep.mubr.bf16.mxu0 %v3819
    %4347 = vmatmul.mubr.bf16.gmra.mrb[0].mxu0 %v3818
    %v4348 = vpop.f32.mrb[0].mxu0
    %v4349 = vadd.f32 0.0, %v4348
    %v4350 = vpop.f32.mrb[0].mxu0
    %v4351 = vadd.f32 0.0, %v4350
    %v4352 = vpop.f32.mrb[0].mxu0
    %v4353 = vpop.f32.mrb[0].mxu0
    %4354 = vdwg.mxu0
    %4355 = vmatprep.subr.bf16.mxu0 %v2807
    %4356 = vmatpush1.bf16.msra.mxu0 %v2806
    %4357 = vmatprep.subr.bf16.mxu0 %v2823
    %4358 = vmatpush1.bf16.msra.mxu0 %v2822
    %4359 = vmatprep.subr.bf16.mxu0 %v2839
    %4360 = vmatpush1.bf16.msra.mxu0 %v2838
    %4361 = vmatprep.subr.bf16.mxu0 %v2855
    %4362 = vmatpush1.bf16.msra.mxu0 %v2854
    %4363 = vmatprep.subr.bf16.mxu0 %v2871
    %4364 = vmatpush1.bf16.msra.mxu0 %v2870
    %4365 = vmatprep.subr.bf16.mxu0 %v2887
    %4366 = vmatpush1.bf16.msra.mxu0 %v2886
    %4367 = vmatprep.subr.bf16.mxu0 %v2903
    %4368 = vmatpush1.bf16.msra.mxu0 %v2902
    %4369 = vmatprep.subr.bf16.mxu0 %v2919
    %4370 = vmatpush1.bf16.msra.mxu0 %v2918
    %4371 = vmatprep.subr.bf16.mxu0 %v2935
    %4372 = vmatpush1.bf16.msra.mxu0 %v2934
    %4373 = vmatprep.subr.bf16.mxu0 %v2951
    %4374 = vmatpush1.bf16.msra.mxu0 %v2950
    %4375 = vmatprep.subr.bf16.mxu0 %v2967
    %4376 = vmatpush1.bf16.msra.mxu0 %v2966
    %4377 = vmatprep.subr.bf16.mxu0 %v2983
    %4378 = vmatpush1.bf16.msra.mxu0 %v2982
    %4379 = vmatprep.subr.bf16.mxu0 %v2999
    %4380 = vmatpush1.bf16.msra.mxu0 %v2998
    %4381 = vmatprep.subr.bf16.mxu0 %v3015
    %4382 = vmatpush1.bf16.msra.mxu0 %v3014
    %4383 = vmatprep.subr.bf16.mxu0 %v3031
    %4384 = vmatpush1.bf16.msra.mxu0 %v3030
    %4385 = vmatprep.subr.bf16.mxu0 %v3047
    %4386 = vmatpush1.bf16.msra.mxu0 %v3046
    %4387 = vmatprep.mubr.bf16.mxu0 %v3821
    %4388 = vmatmul.mubr.bf16.gmra.mrb[0].mxu0 %v3820
    %v4389 = vpop.f32.mrb[0].mxu0
    %v4390 = vadd.f32 %v4349, %v4389
    %v4391 = vpop.f32.mrb[0].mxu0
    %v4392 = vadd.f32 %v4351, %v4391
    %v4393 = vpop.f32.mrb[0].mxu0
    %v4394 = vpop.f32.mrb[0].mxu0
    %4395 = vdwg.mxu0
    %4396 = vmatprep.subr.bf16.mxu0 %v2553
    %4397 = vmatpush1.bf16.msra.mxu0 %v2552
    %4398 = vmatprep.subr.bf16.mxu0 %v2569
    %4399 = vmatpush1.bf16.msra.mxu0 %v2568
    %4400 = vmatprep.subr.bf16.mxu0 %v2585
    %4401 = vmatpush1.bf16.msra.mxu0 %v2584
    %4402 = vmatprep.subr.bf16.mxu0 %v2601
    %4403 = vmatpush1.bf16.msra.mxu0 %v2600
    %4404 = vmatprep.subr.bf16.mxu0 %v2617
    %4405 = vmatpush1.bf16.msra.mxu0 %v2616
    %4406 = vmatprep.subr.bf16.mxu0 %v2633
    %4407 = vmatpush1.bf16.msra.mxu0 %v2632
    %4408 = vmatprep.subr.bf16.mxu0 %v2649
    %4409 = vmatpush1.bf16.msra.mxu0 %v2648
    %4410 = vmatprep.subr.bf16.mxu0 %v2665
    %4411 = vmatpush1.bf16.msra.mxu0 %v2664
    %4412 = vmatprep.subr.bf16.mxu0 %v2681
    %4413 = vmatpush1.bf16.msra.mxu0 %v2680
    %4414 = vmatprep.subr.bf16.mxu0 %v2697
    %4415 = vmatpush1.bf16.msra.mxu0 %v2696
    %4416 = vmatprep.subr.bf16.mxu0 %v2713
    %4417 = vmatpush1.bf16.msra.mxu0 %v2712
    %4418 = vmatprep.subr.bf16.mxu0 %v2729
    %4419 = vmatpush1.bf16.msra.mxu0 %v2728
    %4420 = vmatprep.subr.bf16.mxu0 %v2745
    %4421 = vmatpush1.bf16.msra.mxu0 %v2744
    %4422 = vmatprep.subr.bf16.mxu0 %v2761
    %4423 = vmatpush1.bf16.msra.mxu0 %v2760
    %4424 = vmatprep.subr.bf16.mxu0 %v2777
    %4425 = vmatpush1.bf16.msra.mxu0 %v2776
    %4426 = vmatprep.subr.bf16.mxu0 %v2793
    %4427 = vmatpush1.bf16.msra.mxu0 %v2792
    %4428 = vmatprep.mubr.bf16.mxu0 %v3819
    %4429 = vmatmul.mubr.bf16.gmra.mrb[0].mxu0 %v3818
    %v4430 = vpop.f32.mrb[0].mxu0
    %v4431 = vadd.f32 0.0, %v4430
    %v4432 = vpop.f32.mrb[0].mxu0
    %v4433 = vadd.f32 0.0, %v4432
    %v4434 = vpop.f32.mrb[0].mxu0
    %v4435 = vpop.f32.mrb[0].mxu0
    %4436 = vdwg.mxu0
    %4437 = vmatprep.subr.bf16.mxu0 %v2809
    %4438 = vmatpush1.bf16.msra.mxu0 %v2808
    %4439 = vmatprep.subr.bf16.mxu0 %v2825
    %4440 = vmatpush1.bf16.msra.mxu0 %v2824
    %4441 = vmatprep.subr.bf16.mxu0 %v2841
    %4442 = vmatpush1.bf16.msra.mxu0 %v2840
    %4443 = vmatprep.subr.bf16.mxu0 %v2857
    %4444 = vmatpush1.bf16.msra.mxu0 %v2856
    %4445 = vmatprep.subr.bf16.mxu0 %v2873
    %4446 = vmatpush1.bf16.msra.mxu0 %v2872
    %4447 = vmatprep.subr.bf16.mxu0 %v2889
    %4448 = vmatpush1.bf16.msra.mxu0 %v2888
    %4449 = vmatprep.subr.bf16.mxu0 %v2905
    %4450 = vmatpush1.bf16.msra.mxu0 %v2904
    %4451 = vmatprep.subr.bf16.mxu0 %v2921
    %4452 = vmatpush1.bf16.msra.mxu0 %v2920
    %4453 = vmatprep.subr.bf16.mxu0 %v2937
    %4454 = vmatpush1.bf16.msra.mxu0 %v2936
    %4455 = vmatprep.subr.bf16.mxu0 %v2953
    %4456 = vmatpush1.bf16.msra.mxu0 %v2952
    %4457 = vmatprep.subr.bf16.mxu0 %v2969
    %4458 = vmatpush1.bf16.msra.mxu0 %v2968
    %4459 = vmatprep.subr.bf16.mxu0 %v2985
    %4460 = vmatpush1.bf16.msra.mxu0 %v2984
    %4461 = vmatprep.subr.bf16.mxu0 %v3001
    %4462 = vmatpush1.bf16.msra.mxu0 %v3000
    %4463 = vmatprep.subr.bf16.mxu0 %v3017
    %4464 = vmatpush1.bf16.msra.mxu0 %v3016
    %4465 = vmatprep.subr.bf16.mxu0 %v3033
    %4466 = vmatpush1.bf16.msra.mxu0 %v3032
    %4467 = vmatprep.subr.bf16.mxu0 %v3049
    %4468 = vmatpush1.bf16.msra.mxu0 %v3048
    %4469 = vmatprep.mubr.bf16.mxu0 %v3821
    %4470 = vmatmul.mubr.bf16.gmra.mrb[0].mxu0 %v3820
    %v4471 = vpop.f32.mrb[0].mxu0
    %v4472 = vadd.f32 %v4431, %v4471
    %v4473 = vpop.f32.mrb[0].mxu0
    %v4474 = vadd.f32 %v4433, %v4473
    %v4475 = vpop.f32.mrb[0].mxu0
    %v4476 = vpop.f32.mrb[0].mxu0
    %4477 = vdwg.mxu0
    %v4478 = vadd.f32 %v1837, %v3898
    %v4479 = vadd.f32 %v1839, %v3900
    %v4480 = vadd.f32 %v1910, %v3980
    %v4481 = vadd.f32 %v1912, %v3982
    %v4482 = vadd.f32 %v1983, %v4062
    %v4483 = vadd.f32 %v1985, %v4064
    %v4484 = vadd.f32 %v2056, %v4144
    %v4485 = vadd.f32 %v2058, %v4146
    %v4486 = vadd.f32 %v2129, %v4226
    %v4487 = vadd.f32 %v2131, %v4228
    %v4488 = vadd.f32 %v2202, %v4308
    %v4489 = vadd.f32 %v2204, %v4310
    %v4490 = vadd.f32 %v2275, %v4390
    %v4491 = vadd.f32 %v2277, %v4392
    %v4492 = vadd.f32 %v2348, %v4472
    %v4493 = vadd.f32 %v2350, %v4474
    %v4494 = vxor.u32 %v4478, 2147483648
    %v4495 = vxor.u32 %v4479, 2147483648
    %v4496 = vxor.u32 %v4480, 2147483648
    %v4497 = vxor.u32 %v4481, 2147483648
    %v4498 = vmul.f32 %v4494, 1.442695
    %v4499 = vpow.pop %v4498
    %v4500 = vmul.f32 %v4495, 1.442695
    %v4501 = vpow.pop %v4500
    %v4502 = vmul.f32 %v4496, 1.442695
    %v4503 = vpow.pop %v4502
    %v4504 = vmul.f32 %v4497, 1.442695
    %v4505 = vpow.pop %v4504
    %v4506 = vadd.f32 %v4499, 1.0
    %v4507 = vadd.f32 %v4501, 1.0
    %v4508 = vadd.f32 %v4503, 1.0
    %v4509 = vadd.f32 %v4505, 1.0
    %v4510 = vrcp.pop %v4506
    %v4511 = vmul.f32 1.0, %v4510
    %v4512 = vrcp.pop %v4507
    %v4513 = vmul.f32 1.0, %v4512
    %v4514 = vrcp.pop %v4508
    %v4515 = vmul.f32 1.0, %v4514
    %v4516 = vrcp.pop %v4509
    %v4517 = vmul.f32 1.0, %v4516
    %v4518 = vxor.u32 %v4482, 2147483648
    %v4519 = vxor.u32 %v4483, 2147483648
    %v4520 = vxor.u32 %v4484, 2147483648
    %v4521 = vxor.u32 %v4485, 2147483648
    %v4522 = vmul.f32 %v4518, 1.442695
    %v4523 = vpow.pop %v4522
    %v4524 = vmul.f32 %v4519, 1.442695
    %v4525 = vpow.pop %v4524
    %v4526 = vmul.f32 %v4520, 1.442695
    %v4527 = vpow.pop %v4526
    %v4528 = vmul.f32 %v4521, 1.442695
    %v4529 = vpow.pop %v4528
    %v4530 = vadd.f32 %v4523, 1.0
    %v4531 = vadd.f32 %v4525, 1.0
    %v4532 = vadd.f32 %v4527, 1.0
    %v4533 = vadd.f32 %v4529, 1.0
    %v4534 = vrcp.pop %v4530
    %v4535 = vmul.f32 1.0, %v4534
    %v4536 = vrcp.pop %v4531
    %v4537 = vmul.f32 1.0, %v4536
    %v4538 = vrcp.pop %v4532
    %v4539 = vmul.f32 1.0, %v4538
    %v4540 = vrcp.pop %v4533
    %v4541 = vmul.f32 1.0, %v4540
    %v4542 = vtanh.pop %v4486
    %v4543 = vtanh.pop %v4487
    %v4544 = vtanh.pop %v4488
    %v4545 = vtanh.pop %v4489
    %v4546 = vxor.u32 %v4490, 2147483648
    %v4547 = vxor.u32 %v4491, 2147483648
    %v4548 = vxor.u32 %v4492, 2147483648
    %v4549 = vxor.u32 %v4493, 2147483648
    %v4550 = vmul.f32 %v4546, 1.442695
    %v4551 = vpow.pop %v4550
    %v4552 = vmul.f32 %v4547, 1.442695
    %v4553 = vpow.pop %v4552
    %v4554 = vmul.f32 %v4548, 1.442695
    %v4555 = vpow.pop %v4554
    %v4556 = vmul.f32 %v4549, 1.442695
    %v4557 = vpow.pop %v4556
    %v4558 = vadd.f32 %v4551, 1.0
    %v4559 = vadd.f32 %v4553, 1.0
    %v4560 = vadd.f32 %v4555, 1.0
    %v4561 = vadd.f32 %v4557, 1.0
    %v4562 = vrcp.pop %v4558
    %v4563 = vmul.f32 1.0, %v4562
    %v4564 = vrcp.pop %v4559
    %v4565 = vmul.f32 1.0, %v4564
    %v4566 = vrcp.pop %v4560
    %v4567 = vmul.f32 1.0, %v4566
    %v4568 = vrcp.pop %v4561
    %v4569 = vmul.f32 1.0, %v4568
    %v4570 = vmul.f32 %v4535, %v3806
    %v4571 = vmul.f32 %v4537, %v3807
    %v4572 = vmul.f32 %v4539, %v3808
    %v4573 = vmul.f32 %v4541, %v3809
    %v4574 = vmul.f32 %v4511, %v4542
    %v4575 = vmul.f32 %v4513, %v4543
    %v4576 = vmul.f32 %v4515, %v4544
    %v4577 = vmul.f32 %v4517, %v4545
    %v4578 = vadd.f32 %v4570, %v4574
    %v4579 = vadd.f32 %v4571, %v4575
    %v4580 = vadd.f32 %v4572, %v4576
    %v4581 = vadd.f32 %v4573, %v4577
    %v4582 = vtanh.pop %v4578
    %v4583 = vtanh.pop %v4579
    %v4584 = vtanh.pop %v4580
    %v4585 = vtanh.pop %v4581
    %v4586 = vmul.f32 %v4563, %v4582
    %v4587 = vmul.f32 %v4565, %v4583
    %v4588 = vmul.f32 %v4567, %v4584
    %v4589 = vmul.f32 %v4569, %v4585
    %v4590 = vpack.c.bf16 %v4586, %v4586
    %v4591 = vpack.c.bf16 %v4587, %v4587
    %v4592 = vpack.c.bf16 %v4588, %v4588
    %v4593 = vpack.c.bf16 %v4589, %v4589
    %4594 = vmatprep.subr.bf16.mxu0 %v2539
    %4595 = vmatpush1.bf16.msra.mxu0 %v2538
    %4596 = vmatprep.subr.bf16.mxu0 %v2555
    %4597 = vmatpush1.bf16.msra.mxu0 %v2554
    %4598 = vmatprep.subr.bf16.mxu0 %v2571
    %4599 = vmatpush1.bf16.msra.mxu0 %v2570
    %4600 = vmatprep.subr.bf16.mxu0 %v2587
    %4601 = vmatpush1.bf16.msra.mxu0 %v2586
    %4602 = vmatprep.subr.bf16.mxu0 %v2603
    %4603 = vmatpush1.bf16.msra.mxu0 %v2602
    %4604 = vmatprep.subr.bf16.mxu0 %v2619
    %4605 = vmatpush1.bf16.msra.mxu0 %v2618
    %4606 = vmatprep.subr.bf16.mxu0 %v2635
    %4607 = vmatpush1.bf16.msra.mxu0 %v2634
    %4608 = vmatprep.subr.bf16.mxu0 %v2651
    %4609 = vmatpush1.bf16.msra.mxu0 %v2650
    %4610 = vmatprep.subr.bf16.mxu0 %v2667
    %4611 = vmatpush1.bf16.msra.mxu0 %v2666
    %4612 = vmatprep.subr.bf16.mxu0 %v2683
    %4613 = vmatpush1.bf16.msra.mxu0 %v2682
    %4614 = vmatprep.subr.bf16.mxu0 %v2699
    %4615 = vmatpush1.bf16.msra.mxu0 %v2698
    %4616 = vmatprep.subr.bf16.mxu0 %v2715
    %4617 = vmatpush1.bf16.msra.mxu0 %v2714
    %4618 = vmatprep.subr.bf16.mxu0 %v2731
    %4619 = vmatpush1.bf16.msra.mxu0 %v2730
    %4620 = vmatprep.subr.bf16.mxu0 %v2747
    %4621 = vmatpush1.bf16.msra.mxu0 %v2746
    %4622 = vmatprep.subr.bf16.mxu0 %v2763
    %4623 = vmatpush1.bf16.msra.mxu0 %v2762
    %4624 = vmatprep.subr.bf16.mxu0 %v2779
    %4625 = vmatpush1.bf16.msra.mxu0 %v2778
    %4626 = vmatprep.mubr.bf16.mxu0 %v4591
    %4627 = vmatmul.mubr.bf16.gmra.mrb[0].mxu0 %v4590
    %v4628 = vpop.f32.mrb[0].mxu0
    %v4629 = vadd.f32 0.0, %v4628
    %v4630 = vpop.f32.mrb[0].mxu0
    %v4631 = vadd.f32 0.0, %v4630
    %v4632 = vpop.f32.mrb[0].mxu0
    %v4633 = vpop.f32.mrb[0].mxu0
    %4634 = vdwg.mxu0
    %4635 = vmatprep.subr.bf16.mxu0 %v2795
    %4636 = vmatpush1.bf16.msra.mxu0 %v2794
    %4637 = vmatprep.subr.bf16.mxu0 %v2811
    %4638 = vmatpush1.bf16.msra.mxu0 %v2810
    %4639 = vmatprep.subr.bf16.mxu0 %v2827
    %4640 = vmatpush1.bf16.msra.mxu0 %v2826
    %4641 = vmatprep.subr.bf16.mxu0 %v2843
    %4642 = vmatpush1.bf16.msra.mxu0 %v2842
    %4643 = vmatprep.subr.bf16.mxu0 %v2859
    %4644 = vmatpush1.bf16.msra.mxu0 %v2858
    %4645 = vmatprep.subr.bf16.mxu0 %v2875
    %4646 = vmatpush1.bf16.msra.mxu0 %v2874
    %4647 = vmatprep.subr.bf16.mxu0 %v2891
    %4648 = vmatpush1.bf16.msra.mxu0 %v2890
    %4649 = vmatprep.subr.bf16.mxu0 %v2907
    %4650 = vmatpush1.bf16.msra.mxu0 %v2906
    %4651 = vmatprep.subr.bf16.mxu0 %v2923
    %4652 = vmatpush1.bf16.msra.mxu0 %v2922
    %4653 = vmatprep.subr.bf16.mxu0 %v2939
    %4654 = vmatpush1.bf16.msra.mxu0 %v2938
    %4655 = vmatprep.subr.bf16.mxu0 %v2955
    %4656 = vmatpush1.bf16.msra.mxu0 %v2954
    %4657 = vmatprep.subr.bf16.mxu0 %v2971
    %4658 = vmatpush1.bf16.msra.mxu0 %v2970
    %4659 = vmatprep.subr.bf16.mxu0 %v2987
    %4660 = vmatpush1.bf16.msra.mxu0 %v2986
    %4661 = vmatprep.subr.bf16.mxu0 %v3003
    %4662 = vmatpush1.bf16.msra.mxu0 %v3002
    %4663 = vmatprep.subr.bf16.mxu0 %v3019
    %4664 = vmatpush1.bf16.msra.mxu0 %v3018
    %4665 = vmatprep.subr.bf16.mxu0 %v3035
    %4666 = vmatpush1.bf16.msra.mxu0 %v3034
    %4667 = vmatprep.mubr.bf16.mxu0 %v4593
    %4668 = vmatmul.mubr.bf16.gmra.mrb[0].mxu0 %v4592
    %v4669 = vpop.f32.mrb[0].mxu0
    %v4670 = vadd.f32 %v4629, %v4669
    %v4671 = vpop.f32.mrb[0].mxu0
    %v4672 = vadd.f32 %v4631, %v4671
    %v4673 = vpop.f32.mrb[0].mxu0
    %v4674 = vpop.f32.mrb[0].mxu0
    %4675 = vdwg.mxu0
    %4676 = vmatprep.subr.bf16.mxu0 %v2541
    %4677 = vmatpush1.bf16.msra.mxu0 %v2540
    %4678 = vmatprep.subr.bf16.mxu0 %v2557
    %4679 = vmatpush1.bf16.msra.mxu0 %v2556
    %4680 = vmatprep.subr.bf16.mxu0 %v2573
    %4681 = vmatpush1.bf16.msra.mxu0 %v2572
    %4682 = vmatprep.subr.bf16.mxu0 %v2589
    %4683 = vmatpush1.bf16.msra.mxu0 %v2588
    %4684 = vmatprep.subr.bf16.mxu0 %v2605
    %4685 = vmatpush1.bf16.msra.mxu0 %v2604
    %4686 = vmatprep.subr.bf16.mxu0 %v2621
    %4687 = vmatpush1.bf16.msra.mxu0 %v2620
    %4688 = vmatprep.subr.bf16.mxu0 %v2637
    %4689 = vmatpush1.bf16.msra.mxu0 %v2636
    %4690 = vmatprep.subr.bf16.mxu0 %v2653
    %4691 = vmatpush1.bf16.msra.mxu0 %v2652
    %4692 = vmatprep.subr.bf16.mxu0 %v2669
    %4693 = vmatpush1.bf16.msra.mxu0 %v2668
    %4694 = vmatprep.subr.bf16.mxu0 %v2685
    %4695 = vmatpush1.bf16.msra.mxu0 %v2684
    %4696 = vmatprep.subr.bf16.mxu0 %v2701
    %4697 = vmatpush1.bf16.msra.mxu0 %v2700
    %4698 = vmatprep.subr.bf16.mxu0 %v2717
    %4699 = vmatpush1.bf16.msra.mxu0 %v2716
    %4700 = vmatprep.subr.bf16.mxu0 %v2733
    %4701 = vmatpush1.bf16.msra.mxu0 %v2732
    %4702 = vmatprep.subr.bf16.mxu0 %v2749
    %4703 = vmatpush1.bf16.msra.mxu0 %v2748
    %4704 = vmatprep.subr.bf16.mxu0 %v2765
    %4705 = vmatpush1.bf16.msra.mxu0 %v2764
    %4706 = vmatprep.subr.bf16.mxu0 %v2781
    %4707 = vmatpush1.bf16.msra.mxu0 %v2780
    %4708 = vmatprep.mubr.bf16.mxu0 %v4591
    %4709 = vmatmul.mubr.bf16.gmra.mrb[0].mxu0 %v4590
    %v4710 = vpop.f32.mrb[0].mxu0
    %v4711 = vadd.f32 0.0, %v4710
    %v4712 = vpop.f32.mrb[0].mxu0
    %v4713 = vadd.f32 0.0, %v4712
    %v4714 = vpop.f32.mrb[0].mxu0
    %v4715 = vpop.f32.mrb[0].mxu0
    %4716 = vdwg.mxu0
    %4717 = vmatprep.subr.bf16.mxu0 %v2797
    %4718 = vmatpush1.bf16.msra.mxu0 %v2796
    %4719 = vmatprep.subr.bf16.mxu0 %v2813
    %4720 = vmatpush1.bf16.msra.mxu0 %v2812
    %4721 = vmatprep.subr.bf16.mxu0 %v2829
    %4722 = vmatpush1.bf16.msra.mxu0 %v2828
    %4723 = vmatprep.subr.bf16.mxu0 %v2845
    %4724 = vmatpush1.bf16.msra.mxu0 %v2844
    %4725 = vmatprep.subr.bf16.mxu0 %v2861
    %4726 = vmatpush1.bf16.msra.mxu0 %v2860
    %4727 = vmatprep.subr.bf16.mxu0 %v2877
    %4728 = vmatpush1.bf16.msra.mxu0 %v2876
    %4729 = vmatprep.subr.bf16.mxu0 %v2893
    %4730 = vmatpush1.bf16.msra.mxu0 %v2892
    %4731 = vmatprep.subr.bf16.mxu0 %v2909
    %4732 = vmatpush1.bf16.msra.mxu0 %v2908
    %4733 = vmatprep.subr.bf16.mxu0 %v2925
    %4734 = vmatpush1.bf16.msra.mxu0 %v2924
    %4735 = vmatprep.subr.bf16.mxu0 %v2941
    %4736 = vmatpush1.bf16.msra.mxu0 %v2940
    %4737 = vmatprep.subr.bf16.mxu0 %v2957
    %4738 = vmatpush1.bf16.msra.mxu0 %v2956
    %4739 = vmatprep.subr.bf16.mxu0 %v2973
    %4740 = vmatpush1.bf16.msra.mxu0 %v2972
    %4741 = vmatprep.subr.bf16.mxu0 %v2989
    %4742 = vmatpush1.bf16.msra.mxu0 %v2988
    %4743 = vmatprep.subr.bf16.mxu0 %v3005
    %4744 = vmatpush1.bf16.msra.mxu0 %v3004
    %4745 = vmatprep.subr.bf16.mxu0 %v3021
    %4746 = vmatpush1.bf16.msra.mxu0 %v3020
    %4747 = vmatprep.subr.bf16.mxu0 %v3037
    %4748 = vmatpush1.bf16.msra.mxu0 %v3036
    %4749 = vmatprep.mubr.bf16.mxu0 %v4593
    %4750 = vmatmul.mubr.bf16.gmra.mrb[0].mxu0 %v4592
    %v4751 = vpop.f32.mrb[0].mxu0
    %v4752 = vadd.f32 %v4711, %v4751
    %v4753 = vpop.f32.mrb[0].mxu0
    %v4754 = vadd.f32 %v4713, %v4753
    %v4755 = vpop.f32.mrb[0].mxu0
    %v4756 = vpop.f32.mrb[0].mxu0
    %4757 = vdwg.mxu0
    %4758 = vmatprep.subr.bf16.mxu0 %v2543
    %4759 = vmatpush1.bf16.msra.mxu0 %v2542
    %4760 = vmatprep.subr.bf16.mxu0 %v2559
    %4761 = vmatpush1.bf16.msra.mxu0 %v2558
    %4762 = vmatprep.subr.bf16.mxu0 %v2575
    %4763 = vmatpush1.bf16.msra.mxu0 %v2574
    %4764 = vmatprep.subr.bf16.mxu0 %v2591
    %4765 = vmatpush1.bf16.msra.mxu0 %v2590
    %4766 = vmatprep.subr.bf16.mxu0 %v2607
    %4767 = vmatpush1.bf16.msra.mxu0 %v2606
    %4768 = vmatprep.subr.bf16.mxu0 %v2623
    %4769 = vmatpush1.bf16.msra.mxu0 %v2622
    %4770 = vmatprep.subr.bf16.mxu0 %v2639
    %4771 = vmatpush1.bf16.msra.mxu0 %v2638
    %4772 = vmatprep.subr.bf16.mxu0 %v2655
    %4773 = vmatpush1.bf16.msra.mxu0 %v2654
    %4774 = vmatprep.subr.bf16.mxu0 %v2671
    %4775 = vmatpush1.bf16.msra.mxu0 %v2670
    %4776 = vmatprep.subr.bf16.mxu0 %v2687
    %4777 = vmatpush1.bf16.msra.mxu0 %v2686
    %4778 = vmatprep.subr.bf16.mxu0 %v2703
    %4779 = vmatpush1.bf16.msra.mxu0 %v2702
    %4780 = vmatprep.subr.bf16.mxu0 %v2719
    %4781 = vmatpush1.bf16.msra.mxu0 %v2718
    %4782 = vmatprep.subr.bf16.mxu0 %v2735
    %4783 = vmatpush1.bf16.msra.mxu0 %v2734
    %4784 = vmatprep.subr.bf16.mxu0 %v2751
    %4785 = vmatpush1.bf16.msra.mxu0 %v2750
    %4786 = vmatprep.subr.bf16.mxu0 %v2767
    %4787 = vmatpush1.bf16.msra.mxu0 %v2766
    %4788 = vmatprep.subr.bf16.mxu0 %v2783
    %4789 = vmatpush1.bf16.msra.mxu0 %v2782
    %4790 = vmatprep.mubr.bf16.mxu0 %v4591
    %4791 = vmatmul.mubr.bf16.gmra.mrb[0].mxu0 %v4590
    %v4792 = vpop.f32.mrb[0].mxu0
    %v4793 = vadd.f32 0.0, %v4792
    %v4794 = vpop.f32.mrb[0].mxu0
    %v4795 = vadd.f32 0.0, %v4794
    %v4796 = vpop.f32.mrb[0].mxu0
    %v4797 = vpop.f32.mrb[0].mxu0
    %4798 = vdwg.mxu0
    %4799 = vmatprep.subr.bf16.mxu0 %v2799
    %4800 = vmatpush1.bf16.msra.mxu0 %v2798
    %4801 = vmatprep.subr.bf16.mxu0 %v2815
    %4802 = vmatpush1.bf16.msra.mxu0 %v2814
    %4803 = vmatprep.subr.bf16.mxu0 %v2831
    %4804 = vmatpush1.bf16.msra.mxu0 %v2830
    %4805 = vmatprep.subr.bf16.mxu0 %v2847
    %4806 = vmatpush1.bf16.msra.mxu0 %v2846
    %4807 = vmatprep.subr.bf16.mxu0 %v2863
    %4808 = vmatpush1.bf16.msra.mxu0 %v2862
    %4809 = vmatprep.subr.bf16.mxu0 %v2879
    %4810 = vmatpush1.bf16.msra.mxu0 %v2878
    %4811 = vmatprep.subr.bf16.mxu0 %v2895
    %4812 = vmatpush1.bf16.msra.mxu0 %v2894
    %4813 = vmatprep.subr.bf16.mxu0 %v2911
    %4814 = vmatpush1.bf16.msra.mxu0 %v2910
    %4815 = vmatprep.subr.bf16.mxu0 %v2927
    %4816 = vmatpush1.bf16.msra.mxu0 %v2926
    %4817 = vmatprep.subr.bf16.mxu0 %v2943
    %4818 = vmatpush1.bf16.msra.mxu0 %v2942
    %4819 = vmatprep.subr.bf16.mxu0 %v2959
    %4820 = vmatpush1.bf16.msra.mxu0 %v2958
    %4821 = vmatprep.subr.bf16.mxu0 %v2975
    %4822 = vmatpush1.bf16.msra.mxu0 %v2974
    %4823 = vmatprep.subr.bf16.mxu0 %v2991
    %4824 = vmatpush1.bf16.msra.mxu0 %v2990
    %4825 = vmatprep.subr.bf16.mxu0 %v3007
    %4826 = vmatpush1.bf16.msra.mxu0 %v3006
    %4827 = vmatprep.subr.bf16.mxu0 %v3023
    %4828 = vmatpush1.bf16.msra.mxu0 %v3022
    %4829 = vmatprep.subr.bf16.mxu0 %v3039
    %4830 = vmatpush1.bf16.msra.mxu0 %v3038
    %4831 = vmatprep.mubr.bf16.mxu0 %v4593
    %4832 = vmatmul.mubr.bf16.gmra.mrb[0].mxu0 %v4592
    %v4833 = vpop.f32.mrb[0].mxu0
    %v4834 = vadd.f32 %v4793, %v4833
    %v4835 = vpop.f32.mrb[0].mxu0
    %v4836 = vadd.f32 %v4795, %v4835
    %v4837 = vpop.f32.mrb[0].mxu0
    %v4838 = vpop.f32.mrb[0].mxu0
    %4839 = vdwg.mxu0
    %4840 = vmatprep.subr.bf16.mxu0 %v2545
    %4841 = vmatpush1.bf16.msra.mxu0 %v2544
    %4842 = vmatprep.subr.bf16.mxu0 %v2561
    %4843 = vmatpush1.bf16.msra.mxu0 %v2560
    %4844 = vmatprep.subr.bf16.mxu0 %v2577
    %4845 = vmatpush1.bf16.msra.mxu0 %v2576
    %4846 = vmatprep.subr.bf16.mxu0 %v2593
    %4847 = vmatpush1.bf16.msra.mxu0 %v2592
    %4848 = vmatprep.subr.bf16.mxu0 %v2609
    %4849 = vmatpush1.bf16.msra.mxu0 %v2608
    %4850 = vmatprep.subr.bf16.mxu0 %v2625
    %4851 = vmatpush1.bf16.msra.mxu0 %v2624
    %4852 = vmatprep.subr.bf16.mxu0 %v2641
    %4853 = vmatpush1.bf16.msra.mxu0 %v2640
    %4854 = vmatprep.subr.bf16.mxu0 %v2657
    %4855 = vmatpush1.bf16.msra.mxu0 %v2656
    %4856 = vmatprep.subr.bf16.mxu0 %v2673
    %4857 = vmatpush1.bf16.msra.mxu0 %v2672
    %4858 = vmatprep.subr.bf16.mxu0 %v2689
    %4859 = vmatpush1.bf16.msra.mxu0 %v2688
    %4860 = vmatprep.subr.bf16.mxu0 %v2705
    %4861 = vmatpush1.bf16.msra.mxu0 %v2704
    %4862 = vmatprep.subr.bf16.mxu0 %v2721
    %4863 = vmatpush1.bf16.msra.mxu0 %v2720
    %4864 = vmatprep.subr.bf16.mxu0 %v2737
    %4865 = vmatpush1.bf16.msra.mxu0 %v2736
    %4866 = vmatprep.subr.bf16.mxu0 %v2753
    %4867 = vmatpush1.bf16.msra.mxu0 %v2752
    %4868 = vmatprep.subr.bf16.mxu0 %v2769
    %4869 = vmatpush1.bf16.msra.mxu0 %v2768
    %4870 = vmatprep.subr.bf16.mxu0 %v2785
    %4871 = vmatpush1.bf16.msra.mxu0 %v2784
    %4872 = vmatprep.mubr.bf16.mxu0 %v4591
    %4873 = vmatmul.mubr.bf16.gmra.mrb[0].mxu0 %v4590
    %v4874 = vpop.f32.mrb[0].mxu0
    %v4875 = vadd.f32 0.0, %v4874
    %v4876 = vpop.f32.mrb[0].mxu0
    %v4877 = vadd.f32 0.0, %v4876
    %v4878 = vpop.f32.mrb[0].mxu0
    %v4879 = vpop.f32.mrb[0].mxu0
    %4880 = vdwg.mxu0
    %4881 = vmatprep.subr.bf16.mxu0 %v2801
    %4882 = vmatpush1.bf16.msra.mxu0 %v2800
    %4883 = vmatprep.subr.bf16.mxu0 %v2817
    %4884 = vmatpush1.bf16.msra.mxu0 %v2816
    %4885 = vmatprep.subr.bf16.mxu0 %v2833
    %4886 = vmatpush1.bf16.msra.mxu0 %v2832
    %4887 = vmatprep.subr.bf16.mxu0 %v2849
    %4888 = vmatpush1.bf16.msra.mxu0 %v2848
    %4889 = vmatprep.subr.bf16.mxu0 %v2865
    %4890 = vmatpush1.bf16.msra.mxu0 %v2864
    %4891 = vmatprep.subr.bf16.mxu0 %v2881
    %4892 = vmatpush1.bf16.msra.mxu0 %v2880
    %4893 = vmatprep.subr.bf16.mxu0 %v2897
    %4894 = vmatpush1.bf16.msra.mxu0 %v2896
    %4895 = vmatprep.subr.bf16.mxu0 %v2913
    %4896 = vmatpush1.bf16.msra.mxu0 %v2912
    %4897 = vmatprep.subr.bf16.mxu0 %v2929
    %4898 = vmatpush1.bf16.msra.mxu0 %v2928
    %4899 = vmatprep.subr.bf16.mxu0 %v2945
    %4900 = vmatpush1.bf16.msra.mxu0 %v2944
    %4901 = vmatprep.subr.bf16.mxu0 %v2961
    %4902 = vmatpush1.bf16.msra.mxu0 %v2960
    %4903 = vmatprep.subr.bf16.mxu0 %v2977
    %4904 = vmatpush1.bf16.msra.mxu0 %v2976
    %4905 = vmatprep.subr.bf16.mxu0 %v2993
    %4906 = vmatpush1.bf16.msra.mxu0 %v2992
    %4907 = vmatprep.subr.bf16.mxu0 %v3009
    %4908 = vmatpush1.bf16.msra.mxu0 %v3008
    %4909 = vmatprep.subr.bf16.mxu0 %v3025
    %4910 = vmatpush1.bf16.msra.mxu0 %v3024
    %4911 = vmatprep.subr.bf16.mxu0 %v3041
    %4912 = vmatpush1.bf16.msra.mxu0 %v3040
    %4913 = vmatprep.mubr.bf16.mxu0 %v4593
    %4914 = vmatmul.mubr.bf16.gmra.mrb[0].mxu0 %v4592
    %v4915 = vpop.f32.mrb[0].mxu0
    %v4916 = vadd.f32 %v4875, %v4915
    %v4917 = vpop.f32.mrb[0].mxu0
    %v4918 = vadd.f32 %v4877, %v4917
    %v4919 = vpop.f32.mrb[0].mxu0
    %v4920 = vpop.f32.mrb[0].mxu0
    %4921 = vdwg.mxu0
    %4922 = vmatprep.subr.bf16.mxu0 %v2547
    %4923 = vmatpush1.bf16.msra.mxu0 %v2546
    %4924 = vmatprep.subr.bf16.mxu0 %v2563
    %4925 = vmatpush1.bf16.msra.mxu0 %v2562
    %4926 = vmatprep.subr.bf16.mxu0 %v2579
    %4927 = vmatpush1.bf16.msra.mxu0 %v2578
    %4928 = vmatprep.subr.bf16.mxu0 %v2595
    %4929 = vmatpush1.bf16.msra.mxu0 %v2594
    %4930 = vmatprep.subr.bf16.mxu0 %v2611
    %4931 = vmatpush1.bf16.msra.mxu0 %v2610
    %4932 = vmatprep.subr.bf16.mxu0 %v2627
    %4933 = vmatpush1.bf16.msra.mxu0 %v2626
    %4934 = vmatprep.subr.bf16.mxu0 %v2643
    %4935 = vmatpush1.bf16.msra.mxu0 %v2642
    %4936 = vmatprep.subr.bf16.mxu0 %v2659
    %4937 = vmatpush1.bf16.msra.mxu0 %v2658
    %4938 = vmatprep.subr.bf16.mxu0 %v2675
    %4939 = vmatpush1.bf16.msra.mxu0 %v2674
    %4940 = vmatprep.subr.bf16.mxu0 %v2691
    %4941 = vmatpush1.bf16.msra.mxu0 %v2690
    %4942 = vmatprep.subr.bf16.mxu0 %v2707
    %4943 = vmatpush1.bf16.msra.mxu0 %v2706
    %4944 = vmatprep.subr.bf16.mxu0 %v2723
    %4945 = vmatpush1.bf16.msra.mxu0 %v2722
    %4946 = vmatprep.subr.bf16.mxu0 %v2739
    %4947 = vmatpush1.bf16.msra.mxu0 %v2738
    %4948 = vmatprep.subr.bf16.mxu0 %v2755
    %4949 = vmatpush1.bf16.msra.mxu0 %v2754
    %4950 = vmatprep.subr.bf16.mxu0 %v2771
    %4951 = vmatpush1.bf16.msra.mxu0 %v2770
    %4952 = vmatprep.subr.bf16.mxu0 %v2787
    %4953 = vmatpush1.bf16.msra.mxu0 %v2786
    %4954 = vmatprep.mubr.bf16.mxu0 %v4591
    %4955 = vmatmul.mubr.bf16.gmra.mrb[0].mxu0 %v4590
    %v4956 = vpop.f32.mrb[0].mxu0
    %v4957 = vadd.f32 0.0, %v4956
    %v4958 = vpop.f32.mrb[0].mxu0
    %v4959 = vadd.f32 0.0, %v4958
    %v4960 = vpop.f32.mrb[0].mxu0
    %v4961 = vpop.f32.mrb[0].mxu0
    %4962 = vdwg.mxu0
    %4963 = vmatprep.subr.bf16.mxu0 %v2803
    %4964 = vmatpush1.bf16.msra.mxu0 %v2802
    %4965 = vmatprep.subr.bf16.mxu0 %v2819
    %4966 = vmatpush1.bf16.msra.mxu0 %v2818
    %4967 = vmatprep.subr.bf16.mxu0 %v2835
    %4968 = vmatpush1.bf16.msra.mxu0 %v2834
    %4969 = vmatprep.subr.bf16.mxu0 %v2851
    %4970 = vmatpush1.bf16.msra.mxu0 %v2850
    %4971 = vmatprep.subr.bf16.mxu0 %v2867
    %4972 = vmatpush1.bf16.msra.mxu0 %v2866
    %4973 = vmatprep.subr.bf16.mxu0 %v2883
    %4974 = vmatpush1.bf16.msra.mxu0 %v2882
    %4975 = vmatprep.subr.bf16.mxu0 %v2899
    %4976 = vmatpush1.bf16.msra.mxu0 %v2898
    %4977 = vmatprep.subr.bf16.mxu0 %v2915
    %4978 = vmatpush1.bf16.msra.mxu0 %v2914
    %4979 = vmatprep.subr.bf16.mxu0 %v2931
    %4980 = vmatpush1.bf16.msra.mxu0 %v2930
    %4981 = vmatprep.subr.bf16.mxu0 %v2947
    %4982 = vmatpush1.bf16.msra.mxu0 %v2946
    %4983 = vmatprep.subr.bf16.mxu0 %v2963
    %4984 = vmatpush1.bf16.msra.mxu0 %v2962
    %4985 = vmatprep.subr.bf16.mxu0 %v2979
    %4986 = vmatpush1.bf16.msra.mxu0 %v2978
    %4987 = vmatprep.subr.bf16.mxu0 %v2995
    %4988 = vmatpush1.bf16.msra.mxu0 %v2994
    %4989 = vmatprep.subr.bf16.mxu0 %v3011
    %4990 = vmatpush1.bf16.msra.mxu0 %v3010
    %4991 = vmatprep.subr.bf16.mxu0 %v3027
    %4992 = vmatpush1.bf16.msra.mxu0 %v3026
    %4993 = vmatprep.subr.bf16.mxu0 %v3043
    %4994 = vmatpush1.bf16.msra.mxu0 %v3042
    %4995 = vmatprep.mubr.bf16.mxu0 %v4593
    %4996 = vmatmul.mubr.bf16.gmra.mrb[0].mxu0 %v4592
    %v4997 = vpop.f32.mrb[0].mxu0
    %v4998 = vadd.f32 %v4957, %v4997
    %v4999 = vpop.f32.mrb[0].mxu0
    %v5000 = vadd.f32 %v4959, %v4999
    %v5001 = vpop.f32.mrb[0].mxu0
    %v5002 = vpop.f32.mrb[0].mxu0
    %5003 = vdwg.mxu0
    %5004 = vmatprep.subr.bf16.mxu0 %v2549
    %5005 = vmatpush1.bf16.msra.mxu0 %v2548
    %5006 = vmatprep.subr.bf16.mxu0 %v2565
    %5007 = vmatpush1.bf16.msra.mxu0 %v2564
    %5008 = vmatprep.subr.bf16.mxu0 %v2581
    %5009 = vmatpush1.bf16.msra.mxu0 %v2580
    %5010 = vmatprep.subr.bf16.mxu0 %v2597
    %5011 = vmatpush1.bf16.msra.mxu0 %v2596
    %5012 = vmatprep.subr.bf16.mxu0 %v2613
    %5013 = vmatpush1.bf16.msra.mxu0 %v2612
    %5014 = vmatprep.subr.bf16.mxu0 %v2629
    %5015 = vmatpush1.bf16.msra.mxu0 %v2628
    %5016 = vmatprep.subr.bf16.mxu0 %v2645
    %5017 = vmatpush1.bf16.msra.mxu0 %v2644
    %5018 = vmatprep.subr.bf16.mxu0 %v2661
    %5019 = vmatpush1.bf16.msra.mxu0 %v2660
    %5020 = vmatprep.subr.bf16.mxu0 %v2677
    %5021 = vmatpush1.bf16.msra.mxu0 %v2676
    %5022 = vmatprep.subr.bf16.mxu0 %v2693
    %5023 = vmatpush1.bf16.msra.mxu0 %v2692
    %5024 = vmatprep.subr.bf16.mxu0 %v2709
    %5025 = vmatpush1.bf16.msra.mxu0 %v2708
    %5026 = vmatprep.subr.bf16.mxu0 %v2725
    %5027 = vmatpush1.bf16.msra.mxu0 %v2724
    %5028 = vmatprep.subr.bf16.mxu0 %v2741
    %5029 = vmatpush1.bf16.msra.mxu0 %v2740
    %5030 = vmatprep.subr.bf16.mxu0 %v2757
    %5031 = vmatpush1.bf16.msra.mxu0 %v2756
    %5032 = vmatprep.subr.bf16.mxu0 %v2773
    %5033 = vmatpush1.bf16.msra.mxu0 %v2772
    %5034 = vmatprep.subr.bf16.mxu0 %v2789
    %5035 = vmatpush1.bf16.msra.mxu0 %v2788
    %5036 = vmatprep.mubr.bf16.mxu0 %v4591
    %5037 = vmatmul.mubr.bf16.gmra.mrb[0].mxu0 %v4590
    %v5038 = vpop.f32.mrb[0].mxu0
    %v5039 = vadd.f32 0.0, %v5038
    %v5040 = vpop.f32.mrb[0].mxu0
    %v5041 = vadd.f32 0.0, %v5040
    %v5042 = vpop.f32.mrb[0].mxu0
    %v5043 = vpop.f32.mrb[0].mxu0
    %5044 = vdwg.mxu0
    %5045 = vmatprep.subr.bf16.mxu0 %v2805
    %5046 = vmatpush1.bf16.msra.mxu0 %v2804
    %5047 = vmatprep.subr.bf16.mxu0 %v2821
    %5048 = vmatpush1.bf16.msra.mxu0 %v2820
    %5049 = vmatprep.subr.bf16.mxu0 %v2837
    %5050 = vmatpush1.bf16.msra.mxu0 %v2836
    %5051 = vmatprep.subr.bf16.mxu0 %v2853
    %5052 = vmatpush1.bf16.msra.mxu0 %v2852
    %5053 = vmatprep.subr.bf16.mxu0 %v2869
    %5054 = vmatpush1.bf16.msra.mxu0 %v2868
    %5055 = vmatprep.subr.bf16.mxu0 %v2885
    %5056 = vmatpush1.bf16.msra.mxu0 %v2884
    %5057 = vmatprep.subr.bf16.mxu0 %v2901
    %5058 = vmatpush1.bf16.msra.mxu0 %v2900
    %5059 = vmatprep.subr.bf16.mxu0 %v2917
    %5060 = vmatpush1.bf16.msra.mxu0 %v2916
    %5061 = vmatprep.subr.bf16.mxu0 %v2933
    %5062 = vmatpush1.bf16.msra.mxu0 %v2932
    %5063 = vmatprep.subr.bf16.mxu0 %v2949
    %5064 = vmatpush1.bf16.msra.mxu0 %v2948
    %5065 = vmatprep.subr.bf16.mxu0 %v2965
    %5066 = vmatpush1.bf16.msra.mxu0 %v2964
    %5067 = vmatprep.subr.bf16.mxu0 %v2981
    %5068 = vmatpush1.bf16.msra.mxu0 %v2980
    %5069 = vmatprep.subr.bf16.mxu0 %v2997
    %5070 = vmatpush1.bf16.msra.mxu0 %v2996
    %5071 = vmatprep.subr.bf16.mxu0 %v3013
    %5072 = vmatpush1.bf16.msra.mxu0 %v3012
    %5073 = vmatprep.subr.bf16.mxu0 %v3029
    %5074 = vmatpush1.bf16.msra.mxu0 %v3028
    %5075 = vmatprep.subr.bf16.mxu0 %v3045
    %5076 = vmatpush1.bf16.msra.mxu0 %v3044
    %5077 = vmatprep.mubr.bf16.mxu0 %v4593
    %5078 = vmatmul.mubr.bf16.gmra.mrb[0].mxu0 %v4592
    %v5079 = vpop.f32.mrb[0].mxu0
    %v5080 = vadd.f32 %v5039, %v5079
    %v5081 = vpop.f32.mrb[0].mxu0
    %v5082 = vadd.f32 %v5041, %v5081
    %v5083 = vpop.f32.mrb[0].mxu0
    %v5084 = vpop.f32.mrb[0].mxu0
    %5085 = vdwg.mxu0
    %5086 = vmatprep.subr.bf16.mxu0 %v2551
    %5087 = vmatpush1.bf16.msra.mxu0 %v2550
    %5088 = vmatprep.subr.bf16.mxu0 %v2567
    %5089 = vmatpush1.bf16.msra.mxu0 %v2566
    %5090 = vmatprep.subr.bf16.mxu0 %v2583
    %5091 = vmatpush1.bf16.msra.mxu0 %v2582
    %5092 = vmatprep.subr.bf16.mxu0 %v2599
    %5093 = vmatpush1.bf16.msra.mxu0 %v2598
    %5094 = vmatprep.subr.bf16.mxu0 %v2615
    %5095 = vmatpush1.bf16.msra.mxu0 %v2614
    %5096 = vmatprep.subr.bf16.mxu0 %v2631
    %5097 = vmatpush1.bf16.msra.mxu0 %v2630
    %5098 = vmatprep.subr.bf16.mxu0 %v2647
    %5099 = vmatpush1.bf16.msra.mxu0 %v2646
    %5100 = vmatprep.subr.bf16.mxu0 %v2663
    %5101 = vmatpush1.bf16.msra.mxu0 %v2662
    %5102 = vmatprep.subr.bf16.mxu0 %v2679
    %5103 = vmatpush1.bf16.msra.mxu0 %v2678
    %5104 = vmatprep.subr.bf16.mxu0 %v2695
    %5105 = vmatpush1.bf16.msra.mxu0 %v2694
    %5106 = vmatprep.subr.bf16.mxu0 %v2711
    %5107 = vmatpush1.bf16.msra.mxu0 %v2710
    %5108 = vmatprep.subr.bf16.mxu0 %v2727
    %5109 = vmatpush1.bf16.msra.mxu0 %v2726
    %5110 = vmatprep.subr.bf16.mxu0 %v2743
    %5111 = vmatpush1.bf16.msra.mxu0 %v2742
    %5112 = vmatprep.subr.bf16.mxu0 %v2759
    %5113 = vmatpush1.bf16.msra.mxu0 %v2758
    %5114 = vmatprep.subr.bf16.mxu0 %v2775
    %5115 = vmatpush1.bf16.msra.mxu0 %v2774
    %5116 = vmatprep.subr.bf16.mxu0 %v2791
    %5117 = vmatpush1.bf16.msra.mxu0 %v2790
    %5118 = vmatprep.mubr.bf16.mxu0 %v4591
    %5119 = vmatmul.mubr.bf16.gmra.mrb[0].mxu0 %v4590
    %v5120 = vpop.f32.mrb[0].mxu0
    %v5121 = vadd.f32 0.0, %v5120
    %v5122 = vpop.f32.mrb[0].mxu0
    %v5123 = vadd.f32 0.0, %v5122
    %v5124 = vpop.f32.mrb[0].mxu0
    %v5125 = vpop.f32.mrb[0].mxu0
    %5126 = vdwg.mxu0
    %5127 = vmatprep.subr.bf16.mxu0 %v2807
    %5128 = vmatpush1.bf16.msra.mxu0 %v2806
    %5129 = vmatprep.subr.bf16.mxu0 %v2823
    %5130 = vmatpush1.bf16.msra.mxu0 %v2822
    %5131 = vmatprep.subr.bf16.mxu0 %v2839
    %5132 = vmatpush1.bf16.msra.mxu0 %v2838
    %5133 = vmatprep.subr.bf16.mxu0 %v2855
    %5134 = vmatpush1.bf16.msra.mxu0 %v2854
    %5135 = vmatprep.subr.bf16.mxu0 %v2871
    %5136 = vmatpush1.bf16.msra.mxu0 %v2870
    %5137 = vmatprep.subr.bf16.mxu0 %v2887
    %5138 = vmatpush1.bf16.msra.mxu0 %v2886
    %5139 = vmatprep.subr.bf16.mxu0 %v2903
    %5140 = vmatpush1.bf16.msra.mxu0 %v2902
    %5141 = vmatprep.subr.bf16.mxu0 %v2919
    %5142 = vmatpush1.bf16.msra.mxu0 %v2918
    %5143 = vmatprep.subr.bf16.mxu0 %v2935
    %5144 = vmatpush1.bf16.msra.mxu0 %v2934
    %5145 = vmatprep.subr.bf16.mxu0 %v2951
    %5146 = vmatpush1.bf16.msra.mxu0 %v2950
    %5147 = vmatprep.subr.bf16.mxu0 %v2967
    %5148 = vmatpush1.bf16.msra.mxu0 %v2966
    %5149 = vmatprep.subr.bf16.mxu0 %v2983
    %5150 = vmatpush1.bf16.msra.mxu0 %v2982
    %5151 = vmatprep.subr.bf16.mxu0 %v2999
    %5152 = vmatpush1.bf16.msra.mxu0 %v2998
    %5153 = vmatprep.subr.bf16.mxu0 %v3015
    %5154 = vmatpush1.bf16.msra.mxu0 %v3014
    %5155 = vmatprep.subr.bf16.mxu0 %v3031
    %5156 = vmatpush1.bf16.msra.mxu0 %v3030
    %5157 = vmatprep.subr.bf16.mxu0 %v3047
    %5158 = vmatpush1.bf16.msra.mxu0 %v3046
    %5159 = vmatprep.mubr.bf16.mxu0 %v4593
    %5160 = vmatmul.mubr.bf16.gmra.mrb[0].mxu0 %v4592
    %v5161 = vpop.f32.mrb[0].mxu0
    %v5162 = vadd.f32 %v5121, %v5161
    %v5163 = vpop.f32.mrb[0].mxu0
    %v5164 = vadd.f32 %v5123, %v5163
    %v5165 = vpop.f32.mrb[0].mxu0
    %v5166 = vpop.f32.mrb[0].mxu0
    %5167 = vdwg.mxu0
    %5168 = vmatprep.subr.bf16.mxu0 %v2553
    %5169 = vmatpush1.bf16.msra.mxu0 %v2552
    %5170 = vmatprep.subr.bf16.mxu0 %v2569
    %5171 = vmatpush1.bf16.msra.mxu0 %v2568
    %5172 = vmatprep.subr.bf16.mxu0 %v2585
    %5173 = vmatpush1.bf16.msra.mxu0 %v2584
    %5174 = vmatprep.subr.bf16.mxu0 %v2601
    %5175 = vmatpush1.bf16.msra.mxu0 %v2600
    %5176 = vmatprep.subr.bf16.mxu0 %v2617
    %5177 = vmatpush1.bf16.msra.mxu0 %v2616
    %5178 = vmatprep.subr.bf16.mxu0 %v2633
    %5179 = vmatpush1.bf16.msra.mxu0 %v2632
    %5180 = vmatprep.subr.bf16.mxu0 %v2649
    %5181 = vmatpush1.bf16.msra.mxu0 %v2648
    %5182 = vmatprep.subr.bf16.mxu0 %v2665
    %5183 = vmatpush1.bf16.msra.mxu0 %v2664
    %5184 = vmatprep.subr.bf16.mxu0 %v2681
    %5185 = vmatpush1.bf16.msra.mxu0 %v2680
    %5186 = vmatprep.subr.bf16.mxu0 %v2697
    %5187 = vmatpush1.bf16.msra.mxu0 %v2696
    %5188 = vmatprep.subr.bf16.mxu0 %v2713
    %5189 = vmatpush1.bf16.msra.mxu0 %v2712
    %5190 = vmatprep.subr.bf16.mxu0 %v2729
    %5191 = vmatpush1.bf16.msra.mxu0 %v2728
    %5192 = vmatprep.subr.bf16.mxu0 %v2745
    %5193 = vmatpush1.bf16.msra.mxu0 %v2744
    %5194 = vmatprep.subr.bf16.mxu0 %v2761
    %5195 = vmatpush1.bf16.msra.mxu0 %v2760
    %5196 = vmatprep.subr.bf16.mxu0 %v2777
    %5197 = vmatpush1.bf16.msra.mxu0 %v2776
    %5198 = vmatprep.subr.bf16.mxu0 %v2793
    %5199 = vmatpush1.bf16.msra.mxu0 %v2792
    %5200 = vmatprep.mubr.bf16.mxu0 %v4591
    %5201 = vmatmul.mubr.bf16.gmra.mrb[0].mxu0 %v4590
    %v5202 = vpop.f32.mrb[0].mxu0
    %v5203 = vadd.f32 0.0, %v5202
    %v5204 = vpop.f32.mrb[0].mxu0
    %v5205 = vadd.f32 0.0, %v5204
    %v5206 = vpop.f32.mrb[0].mxu0
    %v5207 = vpop.f32.mrb[0].mxu0
    %5208 = vdwg.mxu0
    %5209 = vmatprep.subr.bf16.mxu0 %v2809
    %5210 = vmatpush1.bf16.msra.mxu0 %v2808
    %5211 = vmatprep.subr.bf16.mxu0 %v2825
    %5212 = vmatpush1.bf16.msra.mxu0 %v2824
    %5213 = vmatprep.subr.bf16.mxu0 %v2841
    %5214 = vmatpush1.bf16.msra.mxu0 %v2840
    %5215 = vmatprep.subr.bf16.mxu0 %v2857
    %5216 = vmatpush1.bf16.msra.mxu0 %v2856
    %5217 = vmatprep.subr.bf16.mxu0 %v2873
    %5218 = vmatpush1.bf16.msra.mxu0 %v2872
    %5219 = vmatprep.subr.bf16.mxu0 %v2889
    %5220 = vmatpush1.bf16.msra.mxu0 %v2888
    %5221 = vmatprep.subr.bf16.mxu0 %v2905
    %5222 = vmatpush1.bf16.msra.mxu0 %v2904
    %5223 = vmatprep.subr.bf16.mxu0 %v2921
    %5224 = vmatpush1.bf16.msra.mxu0 %v2920
    %5225 = vmatprep.subr.bf16.mxu0 %v2937
    %5226 = vmatpush1.bf16.msra.mxu0 %v2936
    %5227 = vmatprep.subr.bf16.mxu0 %v2953
    %5228 = vmatpush1.bf16.msra.mxu0 %v2952
    %5229 = vmatprep.subr.bf16.mxu0 %v2969
    %5230 = vmatpush1.bf16.msra.mxu0 %v2968
    %5231 = vmatprep.subr.bf16.mxu0 %v2985
    %5232 = vmatpush1.bf16.msra.mxu0 %v2984
    %5233 = vmatprep.subr.bf16.mxu0 %v3001
    %5234 = vmatpush1.bf16.msra.mxu0 %v3000
    %5235 = vmatprep.subr.bf16.mxu0 %v3017
    %5236 = vmatpush1.bf16.msra.mxu0 %v3016
    %5237 = vmatprep.subr.bf16.mxu0 %v3033
    %5238 = vmatpush1.bf16.msra.mxu0 %v3032
    %5239 = vmatprep.subr.bf16.mxu0 %v3049
    %5240 = vmatpush1.bf16.msra.mxu0 %v3048
    %5241 = vmatprep.mubr.bf16.mxu0 %v4593
    %5242 = vmatmul.mubr.bf16.gmra.mrb[0].mxu0 %v4592
    %v5243 = vpop.f32.mrb[0].mxu0
    %v5244 = vadd.f32 %v5203, %v5243
    %v5245 = vpop.f32.mrb[0].mxu0
    %v5246 = vadd.f32 %v5205, %v5245
    %v5247 = vpop.f32.mrb[0].mxu0
    %v5248 = vpop.f32.mrb[0].mxu0
    %5249 = vdwg.mxu0
    %v5250 = vadd.f32 %v1843, %v4670
    %v5251 = vadd.f32 %v1845, %v4672
    %v5252 = vadd.f32 %v1916, %v4752
    %v5253 = vadd.f32 %v1918, %v4754
    %v5254 = vadd.f32 %v1989, %v4834
    %v5255 = vadd.f32 %v1991, %v4836
    %v5256 = vadd.f32 %v2062, %v4916
    %v5257 = vadd.f32 %v2064, %v4918
    %v5258 = vadd.f32 %v2135, %v4998
    %v5259 = vadd.f32 %v2137, %v5000
    %v5260 = vadd.f32 %v2208, %v5080
    %v5261 = vadd.f32 %v2210, %v5082
    %v5262 = vadd.f32 %v2281, %v5162
    %v5263 = vadd.f32 %v2283, %v5164
    %v5264 = vadd.f32 %v2354, %v5244
    %v5265 = vadd.f32 %v2356, %v5246
    %v5266 = vxor.u32 %v5250, 2147483648
    %v5267 = vxor.u32 %v5251, 2147483648
    %v5268 = vxor.u32 %v5252, 2147483648
    %v5269 = vxor.u32 %v5253, 2147483648
    %v5270 = vmul.f32 %v5266, 1.442695
    %v5271 = vpow.pop %v5270
    %v5272 = vmul.f32 %v5267, 1.442695
    %v5273 = vpow.pop %v5272
    %v5274 = vmul.f32 %v5268, 1.442695
    %v5275 = vpow.pop %v5274
    %v5276 = vmul.f32 %v5269, 1.442695
    %v5277 = vpow.pop %v5276
    %v5278 = vadd.f32 %v5271, 1.0
    %v5279 = vadd.f32 %v5273, 1.0
    %v5280 = vadd.f32 %v5275, 1.0
    %v5281 = vadd.f32 %v5277, 1.0
    %v5282 = vrcp.pop %v5278
    %v5283 = vmul.f32 1.0, %v5282
    %v5284 = vrcp.pop %v5279
    %v5285 = vmul.f32 1.0, %v5284
    %v5286 = vrcp.pop %v5280
    %v5287 = vmul.f32 1.0, %v5286
    %v5288 = vrcp.pop %v5281
    %v5289 = vmul.f32 1.0, %v5288
    %v5290 = vxor.u32 %v5254, 2147483648
    %v5291 = vxor.u32 %v5255, 2147483648
    %v5292 = vxor.u32 %v5256, 2147483648
    %v5293 = vxor.u32 %v5257, 2147483648
    %v5294 = vmul.f32 %v5290, 1.442695
    %v5295 = vpow.pop %v5294
    %v5296 = vmul.f32 %v5291, 1.442695
    %v5297 = vpow.pop %v5296
    %v5298 = vmul.f32 %v5292, 1.442695
    %v5299 = vpow.pop %v5298
    %v5300 = vmul.f32 %v5293, 1.442695
    %v5301 = vpow.pop %v5300
    %v5302 = vadd.f32 %v5295, 1.0
    %v5303 = vadd.f32 %v5297, 1.0
    %v5304 = vadd.f32 %v5299, 1.0
    %v5305 = vadd.f32 %v5301, 1.0
    %v5306 = vrcp.pop %v5302
    %v5307 = vmul.f32 1.0, %v5306
    %v5308 = vrcp.pop %v5303
    %v5309 = vmul.f32 1.0, %v5308
    %v5310 = vrcp.pop %v5304
    %v5311 = vmul.f32 1.0, %v5310
    %v5312 = vrcp.pop %v5305
    %v5313 = vmul.f32 1.0, %v5312
    %v5314 = vtanh.pop %v5258
    %v5315 = vtanh.pop %v5259
    %v5316 = vtanh.pop %v5260
    %v5317 = vtanh.pop %v5261
    %v5318 = vxor.u32 %v5262, 2147483648
    %v5319 = vxor.u32 %v5263, 2147483648
    %v5320 = vxor.u32 %v5264, 2147483648
    %v5321 = vxor.u32 %v5265, 2147483648
    %v5322 = vmul.f32 %v5318, 1.442695
    %v5323 = vpow.pop %v5322
    %v5324 = vmul.f32 %v5319, 1.442695
    %v5325 = vpow.pop %v5324
    %v5326 = vmul.f32 %v5320, 1.442695
    %v5327 = vpow.pop %v5326
    %v5328 = vmul.f32 %v5321, 1.442695
    %v5329 = vpow.pop %v5328
    %v5330 = vadd.f32 %v5323, 1.0
    %v5331 = vadd.f32 %v5325, 1.0
    %v5332 = vadd.f32 %v5327, 1.0
    %v5333 = vadd.f32 %v5329, 1.0
    %v5334 = vrcp.pop %v5330
    %v5335 = vmul.f32 1.0, %v5334
    %v5336 = vrcp.pop %v5331
    %v5337 = vmul.f32 1.0, %v5336
    %v5338 = vrcp.pop %v5332
    %v5339 = vmul.f32 1.0, %v5338
    %v5340 = vrcp.pop %v5333
    %v5341 = vmul.f32 1.0, %v5340
    %v5342 = vmul.f32 %v5307, %v4578
    %v5343 = vmul.f32 %v5309, %v4579
    %v5344 = vmul.f32 %v5311, %v4580
    %v5345 = vmul.f32 %v5313, %v4581
    %v5346 = vmul.f32 %v5283, %v5314
    %v5347 = vmul.f32 %v5285, %v5315
    %v5348 = vmul.f32 %v5287, %v5316
    %v5349 = vmul.f32 %v5289, %v5317
    %v5350 = vadd.f32 %v5342, %v5346
    %v5351 = vadd.f32 %v5343, %v5347
    %v5352 = vadd.f32 %v5344, %v5348
    %v5353 = vadd.f32 %v5345, %v5349
    %v5354 = vtanh.pop %v5350
    %v5355 = vtanh.pop %v5351
    %v5356 = vtanh.pop %v5352
    %v5357 = vtanh.pop %v5353
    %v5358 = vmul.f32 %v5335, %v5354
    %v5359 = vmul.f32 %v5337, %v5355
    %v5360 = vmul.f32 %v5339, %v5356
    %v5361 = vmul.f32 %v5341, %v5357
    %v5362 = vpack.c.bf16 %v5358, %v5358
    %v5363 = vpack.c.bf16 %v5359, %v5359
    %v5364 = vpack.c.bf16 %v5360, %v5360
    %v5365 = vpack.c.bf16 %v5361, %v5361
    %5366 = vmatprep.subr.bf16.mxu0 %v2539
    %5367 = vmatpush1.bf16.msra.mxu0 %v2538
    %5368 = vmatprep.subr.bf16.mxu0 %v2555
    %5369 = vmatpush1.bf16.msra.mxu0 %v2554
    %5370 = vmatprep.subr.bf16.mxu0 %v2571
    %5371 = vmatpush1.bf16.msra.mxu0 %v2570
    %5372 = vmatprep.subr.bf16.mxu0 %v2587
    %5373 = vmatpush1.bf16.msra.mxu0 %v2586
    %5374 = vmatprep.subr.bf16.mxu0 %v2603
    %5375 = vmatpush1.bf16.msra.mxu0 %v2602
    %5376 = vmatprep.subr.bf16.mxu0 %v2619
    %5377 = vmatpush1.bf16.msra.mxu0 %v2618
    %5378 = vmatprep.subr.bf16.mxu0 %v2635
    %5379 = vmatpush1.bf16.msra.mxu0 %v2634
    %5380 = vmatprep.subr.bf16.mxu0 %v2651
    %5381 = vmatpush1.bf16.msra.mxu0 %v2650
    %5382 = vmatprep.subr.bf16.mxu0 %v2667
    %5383 = vmatpush1.bf16.msra.mxu0 %v2666
    %5384 = vmatprep.subr.bf16.mxu0 %v2683
    %5385 = vmatpush1.bf16.msra.mxu0 %v2682
    %5386 = vmatprep.subr.bf16.mxu0 %v2699
    %5387 = vmatpush1.bf16.msra.mxu0 %v2698
    %5388 = vmatprep.subr.bf16.mxu0 %v2715
    %5389 = vmatpush1.bf16.msra.mxu0 %v2714
    %5390 = vmatprep.subr.bf16.mxu0 %v2731
    %5391 = vmatpush1.bf16.msra.mxu0 %v2730
    %5392 = vmatprep.subr.bf16.mxu0 %v2747
    %5393 = vmatpush1.bf16.msra.mxu0 %v2746
    %5394 = vmatprep.subr.bf16.mxu0 %v2763
    %5395 = vmatpush1.bf16.msra.mxu0 %v2762
    %5396 = vmatprep.subr.bf16.mxu0 %v2779
    %5397 = vmatpush1.bf16.msra.mxu0 %v2778
    %5398 = vmatprep.mubr.bf16.mxu0 %v5363
    %5399 = vmatmul.mubr.bf16.gmra.mrb[0].mxu0 %v5362
    %v5400 = vpop.f32.mrb[0].mxu0
    %v5401 = vadd.f32 0.0, %v5400
    %v5402 = vpop.f32.mrb[0].mxu0
    %v5403 = vadd.f32 0.0, %v5402
    %v5404 = vpop.f32.mrb[0].mxu0
    %v5405 = vpop.f32.mrb[0].mxu0
    %5406 = vdwg.mxu0
    %5407 = vmatprep.subr.bf16.mxu0 %v2795
    %5408 = vmatpush1.bf16.msra.mxu0 %v2794
    %5409 = vmatprep.subr.bf16.mxu0 %v2811
    %5410 = vmatpush1.bf16.msra.mxu0 %v2810
    %5411 = vmatprep.subr.bf16.mxu0 %v2827
    %5412 = vmatpush1.bf16.msra.mxu0 %v2826
    %5413 = vmatprep.subr.bf16.mxu0 %v2843
    %5414 = vmatpush1.bf16.msra.mxu0 %v2842
    %5415 = vmatprep.subr.bf16.mxu0 %v2859
    %5416 = vmatpush1.bf16.msra.mxu0 %v2858
    %5417 = vmatprep.subr.bf16.mxu0 %v2875
    %5418 = vmatpush1.bf16.msra.mxu0 %v2874
    %5419 = vmatprep.subr.bf16.mxu0 %v2891
    %5420 = vmatpush1.bf16.msra.mxu0 %v2890
    %5421 = vmatprep.subr.bf16.mxu0 %v2907
    %5422 = vmatpush1.bf16.msra.mxu0 %v2906
    %5423 = vmatprep.subr.bf16.mxu0 %v2923
    %5424 = vmatpush1.bf16.msra.mxu0 %v2922
    %5425 = vmatprep.subr.bf16.mxu0 %v2939
    %5426 = vmatpush1.bf16.msra.mxu0 %v2938
    %5427 = vmatprep.subr.bf16.mxu0 %v2955
    %5428 = vmatpush1.bf16.msra.mxu0 %v2954
    %5429 = vmatprep.subr.bf16.mxu0 %v2971
    %5430 = vmatpush1.bf16.msra.mxu0 %v2970
    %5431 = vmatprep.subr.bf16.mxu0 %v2987
    %5432 = vmatpush1.bf16.msra.mxu0 %v2986
    %5433 = vmatprep.subr.bf16.mxu0 %v3003
    %5434 = vmatpush1.bf16.msra.mxu0 %v3002
    %5435 = vmatprep.subr.bf16.mxu0 %v3019
    %5436 = vmatpush1.bf16.msra.mxu0 %v3018
    %5437 = vmatprep.subr.bf16.mxu0 %v3035
    %5438 = vmatpush1.bf16.msra.mxu0 %v3034
    %5439 = vmatprep.mubr.bf16.mxu0 %v5365
    %5440 = vmatmul.mubr.bf16.gmra.mrb[0].mxu0 %v5364
    %v5441 = vpop.f32.mrb[0].mxu0
    %v5442 = vadd.f32 %v5401, %v5441
    %v5443 = vpop.f32.mrb[0].mxu0
    %v5444 = vadd.f32 %v5403, %v5443
    %v5445 = vpop.f32.mrb[0].mxu0
    %v5446 = vpop.f32.mrb[0].mxu0
    %5447 = vdwg.mxu0
    %5448 = vmatprep.subr.bf16.mxu0 %v2541
    %5449 = vmatpush1.bf16.msra.mxu0 %v2540
    %5450 = vmatprep.subr.bf16.mxu0 %v2557
    %5451 = vmatpush1.bf16.msra.mxu0 %v2556
    %5452 = vmatprep.subr.bf16.mxu0 %v2573
    %5453 = vmatpush1.bf16.msra.mxu0 %v2572
    %5454 = vmatprep.subr.bf16.mxu0 %v2589
    %5455 = vmatpush1.bf16.msra.mxu0 %v2588
    %5456 = vmatprep.subr.bf16.mxu0 %v2605
    %5457 = vmatpush1.bf16.msra.mxu0 %v2604
    %5458 = vmatprep.subr.bf16.mxu0 %v2621
    %5459 = vmatpush1.bf16.msra.mxu0 %v2620
    %5460 = vmatprep.subr.bf16.mxu0 %v2637
    %5461 = vmatpush1.bf16.msra.mxu0 %v2636
    %5462 = vmatprep.subr.bf16.mxu0 %v2653
    %5463 = vmatpush1.bf16.msra.mxu0 %v2652
    %5464 = vmatprep.subr.bf16.mxu0 %v2669
    %5465 = vmatpush1.bf16.msra.mxu0 %v2668
    %5466 = vmatprep.subr.bf16.mxu0 %v2685
    %5467 = vmatpush1.bf16.msra.mxu0 %v2684
    %5468 = vmatprep.subr.bf16.mxu0 %v2701
    %5469 = vmatpush1.bf16.msra.mxu0 %v2700
    %5470 = vmatprep.subr.bf16.mxu0 %v2717
    %5471 = vmatpush1.bf16.msra.mxu0 %v2716
    %5472 = vmatprep.subr.bf16.mxu0 %v2733
    %5473 = vmatpush1.bf16.msra.mxu0 %v2732
    %5474 = vmatprep.subr.bf16.mxu0 %v2749
    %5475 = vmatpush1.bf16.msra.mxu0 %v2748
    %5476 = vmatprep.subr.bf16.mxu0 %v2765
    %5477 = vmatpush1.bf16.msra.mxu0 %v2764
    %5478 = vmatprep.subr.bf16.mxu0 %v2781
    %5479 = vmatpush1.bf16.msra.mxu0 %v2780
    %5480 = vmatprep.mubr.bf16.mxu0 %v5363
    %5481 = vmatmul.mubr.bf16.gmra.mrb[0].mxu0 %v5362
    %v5482 = vpop.f32.mrb[0].mxu0
    %v5483 = vadd.f32 0.0, %v5482
    %v5484 = vpop.f32.mrb[0].mxu0
    %v5485 = vadd.f32 0.0, %v5484
    %v5486 = vpop.f32.mrb[0].mxu0
    %v5487 = vpop.f32.mrb[0].mxu0
    %5488 = vdwg.mxu0
    %5489 = vmatprep.subr.bf16.mxu0 %v2797
    %5490 = vmatpush1.bf16.msra.mxu0 %v2796
    %5491 = vmatprep.subr.bf16.mxu0 %v2813
    %5492 = vmatpush1.bf16.msra.mxu0 %v2812
    %5493 = vmatprep.subr.bf16.mxu0 %v2829
    %5494 = vmatpush1.bf16.msra.mxu0 %v2828
    %5495 = vmatprep.subr.bf16.mxu0 %v2845
    %5496 = vmatpush1.bf16.msra.mxu0 %v2844
    %5497 = vmatprep.subr.bf16.mxu0 %v2861
    %5498 = vmatpush1.bf16.msra.mxu0 %v2860
    %5499 = vmatprep.subr.bf16.mxu0 %v2877
    %5500 = vmatpush1.bf16.msra.mxu0 %v2876
    %5501 = vmatprep.subr.bf16.mxu0 %v2893
    %5502 = vmatpush1.bf16.msra.mxu0 %v2892
    %5503 = vmatprep.subr.bf16.mxu0 %v2909
    %5504 = vmatpush1.bf16.msra.mxu0 %v2908
    %5505 = vmatprep.subr.bf16.mxu0 %v2925
    %5506 = vmatpush1.bf16.msra.mxu0 %v2924
    %5507 = vmatprep.subr.bf16.mxu0 %v2941
    %5508 = vmatpush1.bf16.msra.mxu0 %v2940
    %5509 = vmatprep.subr.bf16.mxu0 %v2957
    %5510 = vmatpush1.bf16.msra.mxu0 %v2956
    %5511 = vmatprep.subr.bf16.mxu0 %v2973
    %5512 = vmatpush1.bf16.msra.mxu0 %v2972
    %5513 = vmatprep.subr.bf16.mxu0 %v2989
    %5514 = vmatpush1.bf16.msra.mxu0 %v2988
    %5515 = vmatprep.subr.bf16.mxu0 %v3005
    %5516 = vmatpush1.bf16.msra.mxu0 %v3004
    %5517 = vmatprep.subr.bf16.mxu0 %v3021
    %5518 = vmatpush1.bf16.msra.mxu0 %v3020
    %5519 = vmatprep.subr.bf16.mxu0 %v3037
    %5520 = vmatpush1.bf16.msra.mxu0 %v3036
    %5521 = vmatprep.mubr.bf16.mxu0 %v5365
    %5522 = vmatmul.mubr.bf16.gmra.mrb[0].mxu0 %v5364
    %v5523 = vpop.f32.mrb[0].mxu0
    %v5524 = vadd.f32 %v5483, %v5523
    %v5525 = vpop.f32.mrb[0].mxu0
    %v5526 = vadd.f32 %v5485, %v5525
    %v5527 = vpop.f32.mrb[0].mxu0
    %v5528 = vpop.f32.mrb[0].mxu0
    %5529 = vdwg.mxu0
    %5530 = vmatprep.subr.bf16.mxu0 %v2543
    %5531 = vmatpush1.bf16.msra.mxu0 %v2542
    %5532 = vmatprep.subr.bf16.mxu0 %v2559
    %5533 = vmatpush1.bf16.msra.mxu0 %v2558
    %5534 = vmatprep.subr.bf16.mxu0 %v2575
    %5535 = vmatpush1.bf16.msra.mxu0 %v2574
    %5536 = vmatprep.subr.bf16.mxu0 %v2591
    %5537 = vmatpush1.bf16.msra.mxu0 %v2590
    %5538 = vmatprep.subr.bf16.mxu0 %v2607
    %5539 = vmatpush1.bf16.msra.mxu0 %v2606
    %5540 = vmatprep.subr.bf16.mxu0 %v2623
    %5541 = vmatpush1.bf16.msra.mxu0 %v2622
    %5542 = vmatprep.subr.bf16.mxu0 %v2639
    %5543 = vmatpush1.bf16.msra.mxu0 %v2638
    %5544 = vmatprep.subr.bf16.mxu0 %v2655
    %5545 = vmatpush1.bf16.msra.mxu0 %v2654
    %5546 = vmatprep.subr.bf16.mxu0 %v2671
    %5547 = vmatpush1.bf16.msra.mxu0 %v2670
    %5548 = vmatprep.subr.bf16.mxu0 %v2687
    %5549 = vmatpush1.bf16.msra.mxu0 %v2686
    %5550 = vmatprep.subr.bf16.mxu0 %v2703
    %5551 = vmatpush1.bf16.msra.mxu0 %v2702
    %5552 = vmatprep.subr.bf16.mxu0 %v2719
    %5553 = vmatpush1.bf16.msra.mxu0 %v2718
    %5554 = vmatprep.subr.bf16.mxu0 %v2735
    %5555 = vmatpush1.bf16.msra.mxu0 %v2734
    %5556 = vmatprep.subr.bf16.mxu0 %v2751
    %5557 = vmatpush1.bf16.msra.mxu0 %v2750
    %5558 = vmatprep.subr.bf16.mxu0 %v2767
    %5559 = vmatpush1.bf16.msra.mxu0 %v2766
    %5560 = vmatprep.subr.bf16.mxu0 %v2783
    %5561 = vmatpush1.bf16.msra.mxu0 %v2782
    %5562 = vmatprep.mubr.bf16.mxu0 %v5363
    %5563 = vmatmul.mubr.bf16.gmra.mrb[0].mxu0 %v5362
    %v5564 = vpop.f32.mrb[0].mxu0
    %v5565 = vadd.f32 0.0, %v5564
    %v5566 = vpop.f32.mrb[0].mxu0
    %v5567 = vadd.f32 0.0, %v5566
    %v5568 = vpop.f32.mrb[0].mxu0
    %v5569 = vpop.f32.mrb[0].mxu0
    %5570 = vdwg.mxu0
    %5571 = vmatprep.subr.bf16.mxu0 %v2799
    %5572 = vmatpush1.bf16.msra.mxu0 %v2798
    %5573 = vmatprep.subr.bf16.mxu0 %v2815
    %5574 = vmatpush1.bf16.msra.mxu0 %v2814
    %5575 = vmatprep.subr.bf16.mxu0 %v2831
    %5576 = vmatpush1.bf16.msra.mxu0 %v2830
    %5577 = vmatprep.subr.bf16.mxu0 %v2847
    %5578 = vmatpush1.bf16.msra.mxu0 %v2846
    %5579 = vmatprep.subr.bf16.mxu0 %v2863
    %5580 = vmatpush1.bf16.msra.mxu0 %v2862
    %5581 = vmatprep.subr.bf16.mxu0 %v2879
    %5582 = vmatpush1.bf16.msra.mxu0 %v2878
    %5583 = vmatprep.subr.bf16.mxu0 %v2895
    %5584 = vmatpush1.bf16.msra.mxu0 %v2894
    %5585 = vmatprep.subr.bf16.mxu0 %v2911
    %5586 = vmatpush1.bf16.msra.mxu0 %v2910
    %5587 = vmatprep.subr.bf16.mxu0 %v2927
    %5588 = vmatpush1.bf16.msra.mxu0 %v2926
    %5589 = vmatprep.subr.bf16.mxu0 %v2943
    %5590 = vmatpush1.bf16.msra.mxu0 %v2942
    %5591 = vmatprep.subr.bf16.mxu0 %v2959
    %5592 = vmatpush1.bf16.msra.mxu0 %v2958
    %5593 = vmatprep.subr.bf16.mxu0 %v2975
    %5594 = vmatpush1.bf16.msra.mxu0 %v2974
    %5595 = vmatprep.subr.bf16.mxu0 %v2991
    %5596 = vmatpush1.bf16.msra.mxu0 %v2990
    %5597 = vmatprep.subr.bf16.mxu0 %v3007
    %5598 = vmatpush1.bf16.msra.mxu0 %v3006
    %5599 = vmatprep.subr.bf16.mxu0 %v3023
    %5600 = vmatpush1.bf16.msra.mxu0 %v3022
    %5601 = vmatprep.subr.bf16.mxu0 %v3039
    %5602 = vmatpush1.bf16.msra.mxu0 %v3038
    %5603 = vmatprep.mubr.bf16.mxu0 %v5365
    %5604 = vmatmul.mubr.bf16.gmra.mrb[0].mxu0 %v5364
    %v5605 = vpop.f32.mrb[0].mxu0
    %v5606 = vadd.f32 %v5565, %v5605
    %v5607 = vpop.f32.mrb[0].mxu0
    %v5608 = vadd.f32 %v5567, %v5607
    %v5609 = vpop.f32.mrb[0].mxu0
    %v5610 = vpop.f32.mrb[0].mxu0
    %5611 = vdwg.mxu0
    %5612 = vmatprep.subr.bf16.mxu0 %v2545
    %5613 = vmatpush1.bf16.msra.mxu0 %v2544
    %5614 = vmatprep.subr.bf16.mxu0 %v2561
    %5615 = vmatpush1.bf16.msra.mxu0 %v2560
    %5616 = vmatprep.subr.bf16.mxu0 %v2577
    %5617 = vmatpush1.bf16.msra.mxu0 %v2576
    %5618 = vmatprep.subr.bf16.mxu0 %v2593
    %5619 = vmatpush1.bf16.msra.mxu0 %v2592
    %5620 = vmatprep.subr.bf16.mxu0 %v2609
    %5621 = vmatpush1.bf16.msra.mxu0 %v2608
    %5622 = vmatprep.subr.bf16.mxu0 %v2625
    %5623 = vmatpush1.bf16.msra.mxu0 %v2624
    %5624 = vmatprep.subr.bf16.mxu0 %v2641
    %5625 = vmatpush1.bf16.msra.mxu0 %v2640
    %5626 = vmatprep.subr.bf16.mxu0 %v2657
    %5627 = vmatpush1.bf16.msra.mxu0 %v2656
    %5628 = vmatprep.subr.bf16.mxu0 %v2673
    %5629 = vmatpush1.bf16.msra.mxu0 %v2672
    %5630 = vmatprep.subr.bf16.mxu0 %v2689
    %5631 = vmatpush1.bf16.msra.mxu0 %v2688
    %5632 = vmatprep.subr.bf16.mxu0 %v2705
    %5633 = vmatpush1.bf16.msra.mxu0 %v2704
    %5634 = vmatprep.subr.bf16.mxu0 %v2721
    %5635 = vmatpush1.bf16.msra.mxu0 %v2720
    %5636 = vmatprep.subr.bf16.mxu0 %v2737
    %5637 = vmatpush1.bf16.msra.mxu0 %v2736
    %5638 = vmatprep.subr.bf16.mxu0 %v2753
    %5639 = vmatpush1.bf16.msra.mxu0 %v2752
    %5640 = vmatprep.subr.bf16.mxu0 %v2769
    %5641 = vmatpush1.bf16.msra.mxu0 %v2768
    %5642 = vmatprep.subr.bf16.mxu0 %v2785
    %5643 = vmatpush1.bf16.msra.mxu0 %v2784
    %5644 = vmatprep.mubr.bf16.mxu0 %v5363
    %5645 = vmatmul.mubr.bf16.gmra.mrb[0].mxu0 %v5362
    %v5646 = vpop.f32.mrb[0].mxu0
    %v5647 = vadd.f32 0.0, %v5646
    %v5648 = vpop.f32.mrb[0].mxu0
    %v5649 = vadd.f32 0.0, %v5648
    %v5650 = vpop.f32.mrb[0].mxu0
    %v5651 = vpop.f32.mrb[0].mxu0
    %5652 = vdwg.mxu0
    %5653 = vmatprep.subr.bf16.mxu0 %v2801
    %5654 = vmatpush1.bf16.msra.mxu0 %v2800
    %5655 = vmatprep.subr.bf16.mxu0 %v2817
    %5656 = vmatpush1.bf16.msra.mxu0 %v2816
    %5657 = vmatprep.subr.bf16.mxu0 %v2833
    %5658 = vmatpush1.bf16.msra.mxu0 %v2832
    %5659 = vmatprep.subr.bf16.mxu0 %v2849
    %5660 = vmatpush1.bf16.msra.mxu0 %v2848
    %5661 = vmatprep.subr.bf16.mxu0 %v2865
    %5662 = vmatpush1.bf16.msra.mxu0 %v2864
    %5663 = vmatprep.subr.bf16.mxu0 %v2881
    %5664 = vmatpush1.bf16.msra.mxu0 %v2880
    %5665 = vmatprep.subr.bf16.mxu0 %v2897
    %5666 = vmatpush1.bf16.msra.mxu0 %v2896
    %5667 = vmatprep.subr.bf16.mxu0 %v2913
    %5668 = vmatpush1.bf16.msra.mxu0 %v2912
    %5669 = vmatprep.subr.bf16.mxu0 %v2929
    %5670 = vmatpush1.bf16.msra.mxu0 %v2928
    %5671 = vmatprep.subr.bf16.mxu0 %v2945
    %5672 = vmatpush1.bf16.msra.mxu0 %v2944
    %5673 = vmatprep.subr.bf16.mxu0 %v2961
    %5674 = vmatpush1.bf16.msra.mxu0 %v2960
    %5675 = vmatprep.subr.bf16.mxu0 %v2977
    %5676 = vmatpush1.bf16.msra.mxu0 %v2976
    %5677 = vmatprep.subr.bf16.mxu0 %v2993
    %5678 = vmatpush1.bf16.msra.mxu0 %v2992
    %5679 = vmatprep.subr.bf16.mxu0 %v3009
    %5680 = vmatpush1.bf16.msra.mxu0 %v3008
    %5681 = vmatprep.subr.bf16.mxu0 %v3025
    %5682 = vmatpush1.bf16.msra.mxu0 %v3024
    %5683 = vmatprep.subr.bf16.mxu0 %v3041
    %5684 = vmatpush1.bf16.msra.mxu0 %v3040
    %5685 = vmatprep.mubr.bf16.mxu0 %v5365
    %5686 = vmatmul.mubr.bf16.gmra.mrb[0].mxu0 %v5364
    %v5687 = vpop.f32.mrb[0].mxu0
    %v5688 = vadd.f32 %v5647, %v5687
    %v5689 = vpop.f32.mrb[0].mxu0
    %v5690 = vadd.f32 %v5649, %v5689
    %v5691 = vpop.f32.mrb[0].mxu0
    %v5692 = vpop.f32.mrb[0].mxu0
    %5693 = vdwg.mxu0
    %5694 = vmatprep.subr.bf16.mxu0 %v2547
    %5695 = vmatpush1.bf16.msra.mxu0 %v2546
    %5696 = vmatprep.subr.bf16.mxu0 %v2563
    %5697 = vmatpush1.bf16.msra.mxu0 %v2562
    %5698 = vmatprep.subr.bf16.mxu0 %v2579
    %5699 = vmatpush1.bf16.msra.mxu0 %v2578
    %5700 = vmatprep.subr.bf16.mxu0 %v2595
    %5701 = vmatpush1.bf16.msra.mxu0 %v2594
    %5702 = vmatprep.subr.bf16.mxu0 %v2611
    %5703 = vmatpush1.bf16.msra.mxu0 %v2610
    %5704 = vmatprep.subr.bf16.mxu0 %v2627
    %5705 = vmatpush1.bf16.msra.mxu0 %v2626
    %5706 = vmatprep.subr.bf16.mxu0 %v2643
    %5707 = vmatpush1.bf16.msra.mxu0 %v2642
    %5708 = vmatprep.subr.bf16.mxu0 %v2659
    %5709 = vmatpush1.bf16.msra.mxu0 %v2658
    %5710 = vmatprep.subr.bf16.mxu0 %v2675
    %5711 = vmatpush1.bf16.msra.mxu0 %v2674
    %5712 = vmatprep.subr.bf16.mxu0 %v2691
    %5713 = vmatpush1.bf16.msra.mxu0 %v2690
    %5714 = vmatprep.subr.bf16.mxu0 %v2707
    %5715 = vmatpush1.bf16.msra.mxu0 %v2706
    %5716 = vmatprep.subr.bf16.mxu0 %v2723
    %5717 = vmatpush1.bf16.msra.mxu0 %v2722
    %5718 = vmatprep.subr.bf16.mxu0 %v2739
    %5719 = vmatpush1.bf16.msra.mxu0 %v2738
    %5720 = vmatprep.subr.bf16.mxu0 %v2755
    %5721 = vmatpush1.bf16.msra.mxu0 %v2754
    %5722 = vmatprep.subr.bf16.mxu0 %v2771
    %5723 = vmatpush1.bf16.msra.mxu0 %v2770
    %5724 = vmatprep.subr.bf16.mxu0 %v2787
    %5725 = vmatpush1.bf16.msra.mxu0 %v2786
    %5726 = vmatprep.mubr.bf16.mxu0 %v5363
    %5727 = vmatmul.mubr.bf16.gmra.mrb[0].mxu0 %v5362
    %v5728 = vpop.f32.mrb[0].mxu0
    %v5729 = vadd.f32 0.0, %v5728
    %v5730 = vpop.f32.mrb[0].mxu0
    %v5731 = vadd.f32 0.0, %v5730
    %v5732 = vpop.f32.mrb[0].mxu0
    %v5733 = vpop.f32.mrb[0].mxu0
    %5734 = vdwg.mxu0
    %5735 = vmatprep.subr.bf16.mxu0 %v2803
    %5736 = vmatpush1.bf16.msra.mxu0 %v2802
    %5737 = vmatprep.subr.bf16.mxu0 %v2819
    %5738 = vmatpush1.bf16.msra.mxu0 %v2818
    %5739 = vmatprep.subr.bf16.mxu0 %v2835
    %5740 = vmatpush1.bf16.msra.mxu0 %v2834
    %5741 = vmatprep.subr.bf16.mxu0 %v2851
    %5742 = vmatpush1.bf16.msra.mxu0 %v2850
    %5743 = vmatprep.subr.bf16.mxu0 %v2867
    %5744 = vmatpush1.bf16.msra.mxu0 %v2866
    %5745 = vmatprep.subr.bf16.mxu0 %v2883
    %5746 = vmatpush1.bf16.msra.mxu0 %v2882
    %5747 = vmatprep.subr.bf16.mxu0 %v2899
    %5748 = vmatpush1.bf16.msra.mxu0 %v2898
    %5749 = vmatprep.subr.bf16.mxu0 %v2915
    %5750 = vmatpush1.bf16.msra.mxu0 %v2914
    %5751 = vmatprep.subr.bf16.mxu0 %v2931
    %5752 = vmatpush1.bf16.msra.mxu0 %v2930
    %5753 = vmatprep.subr.bf16.mxu0 %v2947
    %5754 = vmatpush1.bf16.msra.mxu0 %v2946
    %5755 = vmatprep.subr.bf16.mxu0 %v2963
    %5756 = vmatpush1.bf16.msra.mxu0 %v2962
    %5757 = vmatprep.subr.bf16.mxu0 %v2979
    %5758 = vmatpush1.bf16.msra.mxu0 %v2978
    %5759 = vmatprep.subr.bf16.mxu0 %v2995
    %5760 = vmatpush1.bf16.msra.mxu0 %v2994
    %5761 = vmatprep.subr.bf16.mxu0 %v3011
    %5762 = vmatpush1.bf16.msra.mxu0 %v3010
    %5763 = vmatprep.subr.bf16.mxu0 %v3027
    %5764 = vmatpush1.bf16.msra.mxu0 %v3026
    %5765 = vmatprep.subr.bf16.mxu0 %v3043
    %5766 = vmatpush1.bf16.msra.mxu0 %v3042
    %5767 = vmatprep.mubr.bf16.mxu0 %v5365
    %5768 = vmatmul.mubr.bf16.gmra.mrb[0].mxu0 %v5364
    %v5769 = vpop.f32.mrb[0].mxu0
    %v5770 = vadd.f32 %v5729, %v5769
    %v5771 = vpop.f32.mrb[0].mxu0
    %v5772 = vadd.f32 %v5731, %v5771
    %v5773 = vpop.f32.mrb[0].mxu0
    %v5774 = vpop.f32.mrb[0].mxu0
    %5775 = vdwg.mxu0
    %5776 = vmatprep.subr.bf16.mxu0 %v2549
    %5777 = vmatpush1.bf16.msra.mxu0 %v2548
    %5778 = vmatprep.subr.bf16.mxu0 %v2565
    %5779 = vmatpush1.bf16.msra.mxu0 %v2564
    %5780 = vmatprep.subr.bf16.mxu0 %v2581
    %5781 = vmatpush1.bf16.msra.mxu0 %v2580
    %5782 = vmatprep.subr.bf16.mxu0 %v2597
    %5783 = vmatpush1.bf16.msra.mxu0 %v2596
    %5784 = vmatprep.subr.bf16.mxu0 %v2613
    %5785 = vmatpush1.bf16.msra.mxu0 %v2612
    %5786 = vmatprep.subr.bf16.mxu0 %v2629
    %5787 = vmatpush1.bf16.msra.mxu0 %v2628
    %5788 = vmatprep.subr.bf16.mxu0 %v2645
    %5789 = vmatpush1.bf16.msra.mxu0 %v2644
    %5790 = vmatprep.subr.bf16.mxu0 %v2661
    %5791 = vmatpush1.bf16.msra.mxu0 %v2660
    %5792 = vmatprep.subr.bf16.mxu0 %v2677
    %5793 = vmatpush1.bf16.msra.mxu0 %v2676
    %5794 = vmatprep.subr.bf16.mxu0 %v2693
    %5795 = vmatpush1.bf16.msra.mxu0 %v2692
    %5796 = vmatprep.subr.bf16.mxu0 %v2709
    %5797 = vmatpush1.bf16.msra.mxu0 %v2708
    %5798 = vmatprep.subr.bf16.mxu0 %v2725
    %5799 = vmatpush1.bf16.msra.mxu0 %v2724
    %5800 = vmatprep.subr.bf16.mxu0 %v2741
    %5801 = vmatpush1.bf16.msra.mxu0 %v2740
    %5802 = vmatprep.subr.bf16.mxu0 %v2757
    %5803 = vmatpush1.bf16.msra.mxu0 %v2756
    %5804 = vmatprep.subr.bf16.mxu0 %v2773
    %5805 = vmatpush1.bf16.msra.mxu0 %v2772
    %5806 = vmatprep.subr.bf16.mxu0 %v2789
    %5807 = vmatpush1.bf16.msra.mxu0 %v2788
    %5808 = vmatprep.mubr.bf16.mxu0 %v5363
    %5809 = vmatmul.mubr.bf16.gmra.mrb[0].mxu0 %v5362
    %v5810 = vpop.f32.mrb[0].mxu0
    %v5811 = vadd.f32 0.0, %v5810
    %v5812 = vpop.f32.mrb[0].mxu0
    %v5813 = vadd.f32 0.0, %v5812
    %v5814 = vpop.f32.mrb[0].mxu0
    %v5815 = vpop.f32.mrb[0].mxu0
    %5816 = vdwg.mxu0
    %5817 = vmatprep.subr.bf16.mxu0 %v2805
    %5818 = vmatpush1.bf16.msra.mxu0 %v2804
    %5819 = vmatprep.subr.bf16.mxu0 %v2821
    %5820 = vmatpush1.bf16.msra.mxu0 %v2820
    %5821 = vmatprep.subr.bf16.mxu0 %v2837
    %5822 = vmatpush1.bf16.msra.mxu0 %v2836
    %5823 = vmatprep.subr.bf16.mxu0 %v2853
    %5824 = vmatpush1.bf16.msra.mxu0 %v2852
    %5825 = vmatprep.subr.bf16.mxu0 %v2869
    %5826 = vmatpush1.bf16.msra.mxu0 %v2868
    %5827 = vmatprep.subr.bf16.mxu0 %v2885
    %5828 = vmatpush1.bf16.msra.mxu0 %v2884
    %5829 = vmatprep.subr.bf16.mxu0 %v2901
    %5830 = vmatpush1.bf16.msra.mxu0 %v2900
    %5831 = vmatprep.subr.bf16.mxu0 %v2917
    %5832 = vmatpush1.bf16.msra.mxu0 %v2916
    %5833 = vmatprep.subr.bf16.mxu0 %v2933
    %5834 = vmatpush1.bf16.msra.mxu0 %v2932
    %5835 = vmatprep.subr.bf16.mxu0 %v2949
    %5836 = vmatpush1.bf16.msra.mxu0 %v2948
    %5837 = vmatprep.subr.bf16.mxu0 %v2965
    %5838 = vmatpush1.bf16.msra.mxu0 %v2964
    %5839 = vmatprep.subr.bf16.mxu0 %v2981
    %5840 = vmatpush1.bf16.msra.mxu0 %v2980
    %5841 = vmatprep.subr.bf16.mxu0 %v2997
    %5842 = vmatpush1.bf16.msra.mxu0 %v2996
    %5843 = vmatprep.subr.bf16.mxu0 %v3013
    %5844 = vmatpush1.bf16.msra.mxu0 %v3012
    %5845 = vmatprep.subr.bf16.mxu0 %v3029
    %5846 = vmatpush1.bf16.msra.mxu0 %v3028
    %5847 = vmatprep.subr.bf16.mxu0 %v3045
    %5848 = vmatpush1.bf16.msra.mxu0 %v3044
    %5849 = vmatprep.mubr.bf16.mxu0 %v5365
    %5850 = vmatmul.mubr.bf16.gmra.mrb[0].mxu0 %v5364
    %v5851 = vpop.f32.mrb[0].mxu0
    %v5852 = vadd.f32 %v5811, %v5851
    %v5853 = vpop.f32.mrb[0].mxu0
    %v5854 = vadd.f32 %v5813, %v5853
    %v5855 = vpop.f32.mrb[0].mxu0
    %v5856 = vpop.f32.mrb[0].mxu0
    %5857 = vdwg.mxu0
    %5858 = vmatprep.subr.bf16.mxu0 %v2551
    %5859 = vmatpush1.bf16.msra.mxu0 %v2550
    %5860 = vmatprep.subr.bf16.mxu0 %v2567
    %5861 = vmatpush1.bf16.msra.mxu0 %v2566
    %5862 = vmatprep.subr.bf16.mxu0 %v2583
    %5863 = vmatpush1.bf16.msra.mxu0 %v2582
    %5864 = vmatprep.subr.bf16.mxu0 %v2599
    %5865 = vmatpush1.bf16.msra.mxu0 %v2598
    %5866 = vmatprep.subr.bf16.mxu0 %v2615
    %5867 = vmatpush1.bf16.msra.mxu0 %v2614
    %5868 = vmatprep.subr.bf16.mxu0 %v2631
    %5869 = vmatpush1.bf16.msra.mxu0 %v2630
    %5870 = vmatprep.subr.bf16.mxu0 %v2647
    %5871 = vmatpush1.bf16.msra.mxu0 %v2646
    %5872 = vmatprep.subr.bf16.mxu0 %v2663
    %5873 = vmatpush1.bf16.msra.mxu0 %v2662
    %5874 = vmatprep.subr.bf16.mxu0 %v2679
    %5875 = vmatpush1.bf16.msra.mxu0 %v2678
    %5876 = vmatprep.subr.bf16.mxu0 %v2695
    %5877 = vmatpush1.bf16.msra.mxu0 %v2694
    %5878 = vmatprep.subr.bf16.mxu0 %v2711
    %5879 = vmatpush1.bf16.msra.mxu0 %v2710
    %5880 = vmatprep.subr.bf16.mxu0 %v2727
    %5881 = vmatpush1.bf16.msra.mxu0 %v2726
    %5882 = vmatprep.subr.bf16.mxu0 %v2743
    %5883 = vmatpush1.bf16.msra.mxu0 %v2742
    %5884 = vmatprep.subr.bf16.mxu0 %v2759
    %5885 = vmatpush1.bf16.msra.mxu0 %v2758
    %5886 = vmatprep.subr.bf16.mxu0 %v2775
    %5887 = vmatpush1.bf16.msra.mxu0 %v2774
    %5888 = vmatprep.subr.bf16.mxu0 %v2791
    %5889 = vmatpush1.bf16.msra.mxu0 %v2790
    %5890 = vmatprep.mubr.bf16.mxu0 %v5363
    %5891 = vmatmul.mubr.bf16.gmra.mrb[0].mxu0 %v5362
    %v5892 = vpop.f32.mrb[0].mxu0
    %v5893 = vadd.f32 0.0, %v5892
    %v5894 = vpop.f32.mrb[0].mxu0
    %v5895 = vadd.f32 0.0, %v5894
    %v5896 = vpop.f32.mrb[0].mxu0
    %v5897 = vpop.f32.mrb[0].mxu0
    %5898 = vdwg.mxu0
    %5899 = vmatprep.subr.bf16.mxu0 %v2807
    %5900 = vmatpush1.bf16.msra.mxu0 %v2806
    %5901 = vmatprep.subr.bf16.mxu0 %v2823
    %5902 = vmatpush1.bf16.msra.mxu0 %v2822
    %5903 = vmatprep.subr.bf16.mxu0 %v2839
    %5904 = vmatpush1.bf16.msra.mxu0 %v2838
    %5905 = vmatprep.subr.bf16.mxu0 %v2855
    %5906 = vmatpush1.bf16.msra.mxu0 %v2854
    %5907 = vmatprep.subr.bf16.mxu0 %v2871
    %5908 = vmatpush1.bf16.msra.mxu0 %v2870
    %5909 = vmatprep.subr.bf16.mxu0 %v2887
    %5910 = vmatpush1.bf16.msra.mxu0 %v2886
    %5911 = vmatprep.subr.bf16.mxu0 %v2903
    %5912 = vmatpush1.bf16.msra.mxu0 %v2902
    %5913 = vmatprep.subr.bf16.mxu0 %v2919
    %5914 = vmatpush1.bf16.msra.mxu0 %v2918
    %5915 = vmatprep.subr.bf16.mxu0 %v2935
    %5916 = vmatpush1.bf16.msra.mxu0 %v2934
    %5917 = vmatprep.subr.bf16.mxu0 %v2951
    %5918 = vmatpush1.bf16.msra.mxu0 %v2950
    %5919 = vmatprep.subr.bf16.mxu0 %v2967
    %5920 = vmatpush1.bf16.msra.mxu0 %v2966
    %5921 = vmatprep.subr.bf16.mxu0 %v2983
    %5922 = vmatpush1.bf16.msra.mxu0 %v2982
    %5923 = vmatprep.subr.bf16.mxu0 %v2999
    %5924 = vmatpush1.bf16.msra.mxu0 %v2998
    %5925 = vmatprep.subr.bf16.mxu0 %v3015
    %5926 = vmatpush1.bf16.msra.mxu0 %v3014
    %5927 = vmatprep.subr.bf16.mxu0 %v3031
    %5928 = vmatpush1.bf16.msra.mxu0 %v3030
    %5929 = vmatprep.subr.bf16.mxu0 %v3047
    %5930 = vmatpush1.bf16.msra.mxu0 %v3046
    %5931 = vmatprep.mubr.bf16.mxu0 %v5365
    %5932 = vmatmul.mubr.bf16.gmra.mrb[0].mxu0 %v5364
    %v5933 = vpop.f32.mrb[0].mxu0
    %v5934 = vadd.f32 %v5893, %v5933
    %v5935 = vpop.f32.mrb[0].mxu0
    %v5936 = vadd.f32 %v5895, %v5935
    %v5937 = vpop.f32.mrb[0].mxu0
    %v5938 = vpop.f32.mrb[0].mxu0
    %5939 = vdwg.mxu0
    %5940 = vmatprep.subr.bf16.mxu0 %v2553
    %5941 = vmatpush1.bf16.msra.mxu0 %v2552
    %5942 = vmatprep.subr.bf16.mxu0 %v2569
    %5943 = vmatpush1.bf16.msra.mxu0 %v2568
    %5944 = vmatprep.subr.bf16.mxu0 %v2585
    %5945 = vmatpush1.bf16.msra.mxu0 %v2584
    %5946 = vmatprep.subr.bf16.mxu0 %v2601
    %5947 = vmatpush1.bf16.msra.mxu0 %v2600
    %5948 = vmatprep.subr.bf16.mxu0 %v2617
    %5949 = vmatpush1.bf16.msra.mxu0 %v2616
    %5950 = vmatprep.subr.bf16.mxu0 %v2633
    %5951 = vmatpush1.bf16.msra.mxu0 %v2632
    %5952 = vmatprep.subr.bf16.mxu0 %v2649
    %5953 = vmatpush1.bf16.msra.mxu0 %v2648
    %5954 = vmatprep.subr.bf16.mxu0 %v2665
    %5955 = vmatpush1.bf16.msra.mxu0 %v2664
    %5956 = vmatprep.subr.bf16.mxu0 %v2681
    %5957 = vmatpush1.bf16.msra.mxu0 %v2680
    %5958 = vmatprep.subr.bf16.mxu0 %v2697
    %5959 = vmatpush1.bf16.msra.mxu0 %v2696
    %5960 = vmatprep.subr.bf16.mxu0 %v2713
    %5961 = vmatpush1.bf16.msra.mxu0 %v2712
    %5962 = vmatprep.subr.bf16.mxu0 %v2729
    %5963 = vmatpush1.bf16.msra.mxu0 %v2728
    %5964 = vmatprep.subr.bf16.mxu0 %v2745
    %5965 = vmatpush1.bf16.msra.mxu0 %v2744
    %5966 = vmatprep.subr.bf16.mxu0 %v2761
    %5967 = vmatpush1.bf16.msra.mxu0 %v2760
    %5968 = vmatprep.subr.bf16.mxu0 %v2777
    %5969 = vmatpush1.bf16.msra.mxu0 %v2776
    %5970 = vmatprep.subr.bf16.mxu0 %v2793
    %5971 = vmatpush1.bf16.msra.mxu0 %v2792
    %5972 = vmatprep.mubr.bf16.mxu0 %v5363
    %5973 = vmatmul.mubr.bf16.gmra.mrb[0].mxu0 %v5362
    %v5974 = vpop.f32.mrb[0].mxu0
    %v5975 = vadd.f32 0.0, %v5974
    %v5976 = vpop.f32.mrb[0].mxu0
    %v5977 = vadd.f32 0.0, %v5976
    %v5978 = vpop.f32.mrb[0].mxu0
    %v5979 = vpop.f32.mrb[0].mxu0
    %5980 = vdwg.mxu0
    %5981 = vmatprep.subr.bf16.mxu0 %v2809
    %5982 = vmatpush1.bf16.msra.mxu0 %v2808
    %5983 = vmatprep.subr.bf16.mxu0 %v2825
    %5984 = vmatpush1.bf16.msra.mxu0 %v2824
    %5985 = vmatprep.subr.bf16.mxu0 %v2841
    %5986 = vmatpush1.bf16.msra.mxu0 %v2840
    %5987 = vmatprep.subr.bf16.mxu0 %v2857
    %5988 = vmatpush1.bf16.msra.mxu0 %v2856
    %5989 = vmatprep.subr.bf16.mxu0 %v2873
    %5990 = vmatpush1.bf16.msra.mxu0 %v2872
    %5991 = vmatprep.subr.bf16.mxu0 %v2889
    %5992 = vmatpush1.bf16.msra.mxu0 %v2888
    %5993 = vmatprep.subr.bf16.mxu0 %v2905
    %5994 = vmatpush1.bf16.msra.mxu0 %v2904
    %5995 = vmatprep.subr.bf16.mxu0 %v2921
    %5996 = vmatpush1.bf16.msra.mxu0 %v2920
    %5997 = vmatprep.subr.bf16.mxu0 %v2937
    %5998 = vmatpush1.bf16.msra.mxu0 %v2936
    %5999 = vmatprep.subr.bf16.mxu0 %v2953
    %6000 = vmatpush1.bf16.msra.mxu0 %v2952
    %6001 = vmatprep.subr.bf16.mxu0 %v2969
    %6002 = vmatpush1.bf16.msra.mxu0 %v2968
    %6003 = vmatprep.subr.bf16.mxu0 %v2985
    %6004 = vmatpush1.bf16.msra.mxu0 %v2984
    %6005 = vmatprep.subr.bf16.mxu0 %v3001
    %6006 = vmatpush1.bf16.msra.mxu0 %v3000
    %6007 = vmatprep.subr.bf16.mxu0 %v3017
    %6008 = vmatpush1.bf16.msra.mxu0 %v3016
    %6009 = vmatprep.subr.bf16.mxu0 %v3033
    %6010 = vmatpush1.bf16.msra.mxu0 %v3032
    %6011 = vmatprep.subr.bf16.mxu0 %v3049
    %6012 = vmatpush1.bf16.msra.mxu0 %v3048
    %6013 = vmatprep.mubr.bf16.mxu0 %v5365
    %6014 = vmatmul.mubr.bf16.gmra.mrb[0].mxu0 %v5364
    %v6015 = vpop.f32.mrb[0].mxu0
    %v6016 = vadd.f32 %v5975, %v6015
    %v6017 = vpop.f32.mrb[0].mxu0
    %v6018 = vadd.f32 %v5977, %v6017
    %v6019 = vpop.f32.mrb[0].mxu0
    %v6020 = vpop.f32.mrb[0].mxu0
    %6021 = vdwg.mxu0
    %v6022 = vadd.f32 %v1847, %v5442
    %v6023 = vadd.f32 %v1849, %v5444
    %v6024 = vadd.f32 %v1920, %v5524
    %v6025 = vadd.f32 %v1922, %v5526
    %v6026 = vadd.f32 %v1993, %v5606
    %v6027 = vadd.f32 %v1995, %v5608
    %v6028 = vadd.f32 %v2066, %v5688
    %v6029 = vadd.f32 %v2068, %v5690
    %v6030 = vadd.f32 %v2139, %v5770
    %v6031 = vadd.f32 %v2141, %v5772
    %v6032 = vadd.f32 %v2212, %v5852
    %v6033 = vadd.f32 %v2214, %v5854
    %v6034 = vadd.f32 %v2285, %v5934
    %v6035 = vadd.f32 %v2287, %v5936
    %v6036 = vadd.f32 %v2358, %v6016
    %v6037 = vadd.f32 %v2360, %v6018
    %v6038 = vxor.u32 %v6022, 2147483648
    %v6039 = vxor.u32 %v6023, 2147483648
    %v6040 = vxor.u32 %v6024, 2147483648
    %v6041 = vxor.u32 %v6025, 2147483648
    %v6042 = vmul.f32 %v6038, 1.442695
    %v6043 = vpow.pop %v6042
    %v6044 = vmul.f32 %v6039, 1.442695
    %v6045 = vpow.pop %v6044
    %v6046 = vmul.f32 %v6040, 1.442695
    %v6047 = vpow.pop %v6046
    %v6048 = vmul.f32 %v6041, 1.442695
    %v6049 = vpow.pop %v6048
    %v6050 = vadd.f32 %v6043, 1.0
    %v6051 = vadd.f32 %v6045, 1.0
    %v6052 = vadd.f32 %v6047, 1.0
    %v6053 = vadd.f32 %v6049, 1.0
    %v6054 = vrcp.pop %v6050
    %v6055 = vmul.f32 1.0, %v6054
    %v6056 = vrcp.pop %v6051
    %v6057 = vmul.f32 1.0, %v6056
    %v6058 = vrcp.pop %v6052
    %v6059 = vmul.f32 1.0, %v6058
    %v6060 = vrcp.pop %v6053
    %v6061 = vmul.f32 1.0, %v6060
    %v6062 = vxor.u32 %v6026, 2147483648
    %v6063 = vxor.u32 %v6027, 2147483648
    %v6064 = vxor.u32 %v6028, 2147483648
    %v6065 = vxor.u32 %v6029, 2147483648
    %v6066 = vmul.f32 %v6062, 1.442695
    %v6067 = vpow.pop %v6066
    %v6068 = vmul.f32 %v6063, 1.442695
    %v6069 = vpow.pop %v6068
    %v6070 = vmul.f32 %v6064, 1.442695
    %v6071 = vpow.pop %v6070
    %v6072 = vmul.f32 %v6065, 1.442695
    %v6073 = vpow.pop %v6072
    %v6074 = vadd.f32 %v6067, 1.0
    %v6075 = vadd.f32 %v6069, 1.0
    %v6076 = vadd.f32 %v6071, 1.0
    %v6077 = vadd.f32 %v6073, 1.0
    %v6078 = vrcp.pop %v6074
    %v6079 = vmul.f32 1.0, %v6078
    %v6080 = vrcp.pop %v6075
    %v6081 = vmul.f32 1.0, %v6080
    %v6082 = vrcp.pop %v6076
    %v6083 = vmul.f32 1.0, %v6082
    %v6084 = vrcp.pop %v6077
    %v6085 = vmul.f32 1.0, %v6084
    %v6086 = vtanh.pop %v6030
    %v6087 = vtanh.pop %v6031
    %v6088 = vtanh.pop %v6032
    %v6089 = vtanh.pop %v6033
    %v6090 = vxor.u32 %v6034, 2147483648
    %v6091 = vxor.u32 %v6035, 2147483648
    %v6092 = vxor.u32 %v6036, 2147483648
    %v6093 = vxor.u32 %v6037, 2147483648
    %v6094 = vmul.f32 %v6090, 1.442695
    %v6095 = vpow.pop %v6094
    %v6096 = vmul.f32 %v6091, 1.442695
    %v6097 = vpow.pop %v6096
    %v6098 = vmul.f32 %v6092, 1.442695
    %v6099 = vpow.pop %v6098
    %v6100 = vmul.f32 %v6093, 1.442695
    %v6101 = vpow.pop %v6100
    %v6102 = vadd.f32 %v6095, 1.0
    %v6103 = vadd.f32 %v6097, 1.0
    %v6104 = vadd.f32 %v6099, 1.0
    %v6105 = vadd.f32 %v6101, 1.0
    %v6106 = vrcp.pop %v6102
    %v6107 = vmul.f32 1.0, %v6106
    %v6108 = vrcp.pop %v6103
    %v6109 = vmul.f32 1.0, %v6108
    %v6110 = vrcp.pop %v6104
    %v6111 = vmul.f32 1.0, %v6110
    %v6112 = vrcp.pop %v6105
    %v6113 = vmul.f32 1.0, %v6112
    %v6114 = vmul.f32 %v6079, %v5350
    %v6115 = vmul.f32 %v6081, %v5351
    %v6116 = vmul.f32 %v6083, %v5352
    %v6117 = vmul.f32 %v6085, %v5353
    %v6118 = vmul.f32 %v6055, %v6086
    %v6119 = vmul.f32 %v6057, %v6087
    %v6120 = vmul.f32 %v6059, %v6088
    %v6121 = vmul.f32 %v6061, %v6089
    %v6122 = vadd.f32 %v6114, %v6118
    %v6123 = vadd.f32 %v6115, %v6119
    %v6124 = vadd.f32 %v6116, %v6120
    %v6125 = vadd.f32 %v6117, %v6121
    %v6126 = vtanh.pop %v6122
    %v6127 = vtanh.pop %v6123
    %v6128 = vtanh.pop %v6124
    %v6129 = vtanh.pop %v6125
    %v6130 = vmul.f32 %v6107, %v6126
    %v6131 = vmul.f32 %v6109, %v6127
    %v6132 = vmul.f32 %v6111, %v6128
    %v6133 = vmul.f32 %v6113, %v6129
    %v6134 = vpack.c.bf16 %v6130, %v6130
    %v6135 = vpack.c.bf16 %v6131, %v6131
    %v6136 = vpack.c.bf16 %v6132, %v6132
    %v6137 = vpack.c.bf16 %v6133, %v6133
    %6138 = vmatprep.subr.bf16.mxu0 %v2539
    %6139 = vmatpush1.bf16.msra.mxu0 %v2538
    %6140 = vmatprep.subr.bf16.mxu0 %v2555
    %6141 = vmatpush1.bf16.msra.mxu0 %v2554
    %6142 = vmatprep.subr.bf16.mxu0 %v2571
    %6143 = vmatpush1.bf16.msra.mxu0 %v2570
    %6144 = vmatprep.subr.bf16.mxu0 %v2587
    %6145 = vmatpush1.bf16.msra.mxu0 %v2586
    %6146 = vmatprep.subr.bf16.mxu0 %v2603
    %6147 = vmatpush1.bf16.msra.mxu0 %v2602
    %6148 = vmatprep.subr.bf16.mxu0 %v2619
    %6149 = vmatpush1.bf16.msra.mxu0 %v2618
    %6150 = vmatprep.subr.bf16.mxu0 %v2635
    %6151 = vmatpush1.bf16.msra.mxu0 %v2634
    %6152 = vmatprep.subr.bf16.mxu0 %v2651
    %6153 = vmatpush1.bf16.msra.mxu0 %v2650
    %6154 = vmatprep.subr.bf16.mxu0 %v2667
    %6155 = vmatpush1.bf16.msra.mxu0 %v2666
    %6156 = vmatprep.subr.bf16.mxu0 %v2683
    %6157 = vmatpush1.bf16.msra.mxu0 %v2682
    %6158 = vmatprep.subr.bf16.mxu0 %v2699
    %6159 = vmatpush1.bf16.msra.mxu0 %v2698
    %6160 = vmatprep.subr.bf16.mxu0 %v2715
    %6161 = vmatpush1.bf16.msra.mxu0 %v2714
    %6162 = vmatprep.subr.bf16.mxu0 %v2731
    %6163 = vmatpush1.bf16.msra.mxu0 %v2730
    %6164 = vmatprep.subr.bf16.mxu0 %v2747
    %6165 = vmatpush1.bf16.msra.mxu0 %v2746
    %6166 = vmatprep.subr.bf16.mxu0 %v2763
    %6167 = vmatpush1.bf16.msra.mxu0 %v2762
    %6168 = vmatprep.subr.bf16.mxu0 %v2779
    %6169 = vmatpush1.bf16.msra.mxu0 %v2778
    %6170 = vmatprep.mubr.bf16.mxu0 %v6135
    %6171 = vmatmul.mubr.bf16.gmra.mrb[0].mxu0 %v6134
    %v6172 = vpop.f32.mrb[0].mxu0
    %v6173 = vadd.f32 0.0, %v6172
    %v6174 = vpop.f32.mrb[0].mxu0
    %v6175 = vadd.f32 0.0, %v6174
    %v6176 = vpop.f32.mrb[0].mxu0
    %v6177 = vpop.f32.mrb[0].mxu0
    %6178 = vdwg.mxu0
    %6179 = vmatprep.subr.bf16.mxu0 %v2795
    %6180 = vmatpush1.bf16.msra.mxu0 %v2794
    %6181 = vmatprep.subr.bf16.mxu0 %v2811
    %6182 = vmatpush1.bf16.msra.mxu0 %v2810
    %6183 = vmatprep.subr.bf16.mxu0 %v2827
    %6184 = vmatpush1.bf16.msra.mxu0 %v2826
    %6185 = vmatprep.subr.bf16.mxu0 %v2843
    %6186 = vmatpush1.bf16.msra.mxu0 %v2842
    %6187 = vmatprep.subr.bf16.mxu0 %v2859
    %6188 = vmatpush1.bf16.msra.mxu0 %v2858
    %6189 = vmatprep.subr.bf16.mxu0 %v2875
    %6190 = vmatpush1.bf16.msra.mxu0 %v2874
    %6191 = vmatprep.subr.bf16.mxu0 %v2891
    %6192 = vmatpush1.bf16.msra.mxu0 %v2890
    %6193 = vmatprep.subr.bf16.mxu0 %v2907
    %6194 = vmatpush1.bf16.msra.mxu0 %v2906
    %6195 = vmatprep.subr.bf16.mxu0 %v2923
    %6196 = vmatpush1.bf16.msra.mxu0 %v2922
    %6197 = vmatprep.subr.bf16.mxu0 %v2939
    %6198 = vmatpush1.bf16.msra.mxu0 %v2938
    %6199 = vmatprep.subr.bf16.mxu0 %v2955
    %6200 = vmatpush1.bf16.msra.mxu0 %v2954
    %6201 = vmatprep.subr.bf16.mxu0 %v2971
    %6202 = vmatpush1.bf16.msra.mxu0 %v2970
    %6203 = vmatprep.subr.bf16.mxu0 %v2987
    %6204 = vmatpush1.bf16.msra.mxu0 %v2986
    %6205 = vmatprep.subr.bf16.mxu0 %v3003
    %6206 = vmatpush1.bf16.msra.mxu0 %v3002
    %6207 = vmatprep.subr.bf16.mxu0 %v3019
    %6208 = vmatpush1.bf16.msra.mxu0 %v3018
    %6209 = vmatprep.subr.bf16.mxu0 %v3035
    %6210 = vmatpush1.bf16.msra.mxu0 %v3034
    %6211 = vmatprep.mubr.bf16.mxu0 %v6137
    %6212 = vmatmul.mubr.bf16.gmra.mrb[0].mxu0 %v6136
    %v6213 = vpop.f32.mrb[0].mxu0
    %v6214 = vadd.f32 %v6173, %v6213
    %v6215 = vpop.f32.mrb[0].mxu0
    %v6216 = vadd.f32 %v6175, %v6215
    %v6217 = vpop.f32.mrb[0].mxu0
    %v6218 = vpop.f32.mrb[0].mxu0
    %6219 = vdwg.mxu0
    %6220 = vmatprep.subr.bf16.mxu0 %v2541
    %6221 = vmatpush1.bf16.msra.mxu0 %v2540
    %6222 = vmatprep.subr.bf16.mxu0 %v2557
    %6223 = vmatpush1.bf16.msra.mxu0 %v2556
    %6224 = vmatprep.subr.bf16.mxu0 %v2573
    %6225 = vmatpush1.bf16.msra.mxu0 %v2572
    %6226 = vmatprep.subr.bf16.mxu0 %v2589
    %6227 = vmatpush1.bf16.msra.mxu0 %v2588
    %6228 = vmatprep.subr.bf16.mxu0 %v2605
    %6229 = vmatpush1.bf16.msra.mxu0 %v2604
    %6230 = vmatprep.subr.bf16.mxu0 %v2621
    %6231 = vmatpush1.bf16.msra.mxu0 %v2620
    %6232 = vmatprep.subr.bf16.mxu0 %v2637
    %6233 = vmatpush1.bf16.msra.mxu0 %v2636
    %6234 = vmatprep.subr.bf16.mxu0 %v2653
    %6235 = vmatpush1.bf16.msra.mxu0 %v2652
    %6236 = vmatprep.subr.bf16.mxu0 %v2669
    %6237 = vmatpush1.bf16.msra.mxu0 %v2668
    %6238 = vmatprep.subr.bf16.mxu0 %v2685
    %6239 = vmatpush1.bf16.msra.mxu0 %v2684
    %6240 = vmatprep.subr.bf16.mxu0 %v2701
    %6241 = vmatpush1.bf16.msra.mxu0 %v2700
    %6242 = vmatprep.subr.bf16.mxu0 %v2717
    %6243 = vmatpush1.bf16.msra.mxu0 %v2716
    %6244 = vmatprep.subr.bf16.mxu0 %v2733
    %6245 = vmatpush1.bf16.msra.mxu0 %v2732
    %6246 = vmatprep.subr.bf16.mxu0 %v2749
    %6247 = vmatpush1.bf16.msra.mxu0 %v2748
    %6248 = vmatprep.subr.bf16.mxu0 %v2765
    %6249 = vmatpush1.bf16.msra.mxu0 %v2764
    %6250 = vmatprep.subr.bf16.mxu0 %v2781
    %6251 = vmatpush1.bf16.msra.mxu0 %v2780
    %6252 = vmatprep.mubr.bf16.mxu0 %v6135
    %6253 = vmatmul.mubr.bf16.gmra.mrb[0].mxu0 %v6134
    %v6254 = vpop.f32.mrb[0].mxu0
    %v6255 = vadd.f32 0.0, %v6254
    %v6256 = vpop.f32.mrb[0].mxu0
    %v6257 = vadd.f32 0.0, %v6256
    %v6258 = vpop.f32.mrb[0].mxu0
    %v6259 = vpop.f32.mrb[0].mxu0
    %6260 = vdwg.mxu0
    %6261 = vmatprep.subr.bf16.mxu0 %v2797
    %6262 = vmatpush1.bf16.msra.mxu0 %v2796
    %6263 = vmatprep.subr.bf16.mxu0 %v2813
    %6264 = vmatpush1.bf16.msra.mxu0 %v2812
    %6265 = vmatprep.subr.bf16.mxu0 %v2829
    %6266 = vmatpush1.bf16.msra.mxu0 %v2828
    %6267 = vmatprep.subr.bf16.mxu0 %v2845
    %6268 = vmatpush1.bf16.msra.mxu0 %v2844
    %6269 = vmatprep.subr.bf16.mxu0 %v2861
    %6270 = vmatpush1.bf16.msra.mxu0 %v2860
    %6271 = vmatprep.subr.bf16.mxu0 %v2877
    %6272 = vmatpush1.bf16.msra.mxu0 %v2876
    %6273 = vmatprep.subr.bf16.mxu0 %v2893
    %6274 = vmatpush1.bf16.msra.mxu0 %v2892
    %6275 = vmatprep.subr.bf16.mxu0 %v2909
    %6276 = vmatpush1.bf16.msra.mxu0 %v2908
    %6277 = vmatprep.subr.bf16.mxu0 %v2925
    %6278 = vmatpush1.bf16.msra.mxu0 %v2924
    %6279 = vmatprep.subr.bf16.mxu0 %v2941
    %6280 = vmatpush1.bf16.msra.mxu0 %v2940
    %6281 = vmatprep.subr.bf16.mxu0 %v2957
    %6282 = vmatpush1.bf16.msra.mxu0 %v2956
    %6283 = vmatprep.subr.bf16.mxu0 %v2973
    %6284 = vmatpush1.bf16.msra.mxu0 %v2972
    %6285 = vmatprep.subr.bf16.mxu0 %v2989
    %6286 = vmatpush1.bf16.msra.mxu0 %v2988
    %6287 = vmatprep.subr.bf16.mxu0 %v3005
    %6288 = vmatpush1.bf16.msra.mxu0 %v3004
    %6289 = vmatprep.subr.bf16.mxu0 %v3021
    %6290 = vmatpush1.bf16.msra.mxu0 %v3020
    %6291 = vmatprep.subr.bf16.mxu0 %v3037
    %6292 = vmatpush1.bf16.msra.mxu0 %v3036
    %6293 = vmatprep.mubr.bf16.mxu0 %v6137
    %6294 = vmatmul.mubr.bf16.gmra.mrb[0].mxu0 %v6136
    %v6295 = vpop.f32.mrb[0].mxu0
    %v6296 = vadd.f32 %v6255, %v6295
    %v6297 = vpop.f32.mrb[0].mxu0
    %v6298 = vadd.f32 %v6257, %v6297
    %v6299 = vpop.f32.mrb[0].mxu0
    %v6300 = vpop.f32.mrb[0].mxu0
    %6301 = vdwg.mxu0
    %6302 = vmatprep.subr.bf16.mxu0 %v2543
    %6303 = vmatpush1.bf16.msra.mxu0 %v2542
    %6304 = vmatprep.subr.bf16.mxu0 %v2559
    %6305 = vmatpush1.bf16.msra.mxu0 %v2558
    %6306 = vmatprep.subr.bf16.mxu0 %v2575
    %6307 = vmatpush1.bf16.msra.mxu0 %v2574
    %6308 = vmatprep.subr.bf16.mxu0 %v2591
    %6309 = vmatpush1.bf16.msra.mxu0 %v2590
    %6310 = vmatprep.subr.bf16.mxu0 %v2607
    %6311 = vmatpush1.bf16.msra.mxu0 %v2606
    %6312 = vmatprep.subr.bf16.mxu0 %v2623
    %6313 = vmatpush1.bf16.msra.mxu0 %v2622
    %6314 = vmatprep.subr.bf16.mxu0 %v2639
    %6315 = vmatpush1.bf16.msra.mxu0 %v2638
    %6316 = vmatprep.subr.bf16.mxu0 %v2655
    %6317 = vmatpush1.bf16.msra.mxu0 %v2654
    %6318 = vmatprep.subr.bf16.mxu0 %v2671
    %6319 = vmatpush1.bf16.msra.mxu0 %v2670
    %6320 = vmatprep.subr.bf16.mxu0 %v2687
    %6321 = vmatpush1.bf16.msra.mxu0 %v2686
    %6322 = vmatprep.subr.bf16.mxu0 %v2703
    %6323 = vmatpush1.bf16.msra.mxu0 %v2702
    %6324 = vmatprep.subr.bf16.mxu0 %v2719
    %6325 = vmatpush1.bf16.msra.mxu0 %v2718
    %6326 = vmatprep.subr.bf16.mxu0 %v2735
    %6327 = vmatpush1.bf16.msra.mxu0 %v2734
    %6328 = vmatprep.subr.bf16.mxu0 %v2751
    %6329 = vmatpush1.bf16.msra.mxu0 %v2750
    %6330 = vmatprep.subr.bf16.mxu0 %v2767
    %6331 = vmatpush1.bf16.msra.mxu0 %v2766
    %6332 = vmatprep.subr.bf16.mxu0 %v2783
    %6333 = vmatpush1.bf16.msra.mxu0 %v2782
    %6334 = vmatprep.mubr.bf16.mxu0 %v6135
    %6335 = vmatmul.mubr.bf16.gmra.mrb[0].mxu0 %v6134
    %v6336 = vpop.f32.mrb[0].mxu0
    %v6337 = vadd.f32 0.0, %v6336
    %v6338 = vpop.f32.mrb[0].mxu0
    %v6339 = vadd.f32 0.0, %v6338
    %v6340 = vpop.f32.mrb[0].mxu0
    %v6341 = vpop.f32.mrb[0].mxu0
    %6342 = vdwg.mxu0
    %6343 = vmatprep.subr.bf16.mxu0 %v2799
    %6344 = vmatpush1.bf16.msra.mxu0 %v2798
    %6345 = vmatprep.subr.bf16.mxu0 %v2815
    %6346 = vmatpush1.bf16.msra.mxu0 %v2814
    %6347 = vmatprep.subr.bf16.mxu0 %v2831
    %6348 = vmatpush1.bf16.msra.mxu0 %v2830
    %6349 = vmatprep.subr.bf16.mxu0 %v2847
    %6350 = vmatpush1.bf16.msra.mxu0 %v2846
    %6351 = vmatprep.subr.bf16.mxu0 %v2863
    %6352 = vmatpush1.bf16.msra.mxu0 %v2862
    %6353 = vmatprep.subr.bf16.mxu0 %v2879
    %6354 = vmatpush1.bf16.msra.mxu0 %v2878
    %6355 = vmatprep.subr.bf16.mxu0 %v2895
    %6356 = vmatpush1.bf16.msra.mxu0 %v2894
    %6357 = vmatprep.subr.bf16.mxu0 %v2911
    %6358 = vmatpush1.bf16.msra.mxu0 %v2910
    %6359 = vmatprep.subr.bf16.mxu0 %v2927
    %6360 = vmatpush1.bf16.msra.mxu0 %v2926
    %6361 = vmatprep.subr.bf16.mxu0 %v2943
    %6362 = vmatpush1.bf16.msra.mxu0 %v2942
    %6363 = vmatprep.subr.bf16.mxu0 %v2959
    %6364 = vmatpush1.bf16.msra.mxu0 %v2958
    %6365 = vmatprep.subr.bf16.mxu0 %v2975
    %6366 = vmatpush1.bf16.msra.mxu0 %v2974
    %6367 = vmatprep.subr.bf16.mxu0 %v2991
    %6368 = vmatpush1.bf16.msra.mxu0 %v2990
    %6369 = vmatprep.subr.bf16.mxu0 %v3007
    %6370 = vmatpush1.bf16.msra.mxu0 %v3006
    %6371 = vmatprep.subr.bf16.mxu0 %v3023
    %6372 = vmatpush1.bf16.msra.mxu0 %v3022
    %6373 = vmatprep.subr.bf16.mxu0 %v3039
    %6374 = vmatpush1.bf16.msra.mxu0 %v3038
    %6375 = vmatprep.mubr.bf16.mxu0 %v6137
    %6376 = vmatmul.mubr.bf16.gmra.mrb[0].mxu0 %v6136
    %v6377 = vpop.f32.mrb[0].mxu0
    %v6378 = vadd.f32 %v6337, %v6377
    %v6379 = vpop.f32.mrb[0].mxu0
    %v6380 = vadd.f32 %v6339, %v6379
    %v6381 = vpop.f32.mrb[0].mxu0
    %v6382 = vpop.f32.mrb[0].mxu0
    %6383 = vdwg.mxu0
    %6384 = vmatprep.subr.bf16.mxu0 %v2545
    %6385 = vmatpush1.bf16.msra.mxu0 %v2544
    %6386 = vmatprep.subr.bf16.mxu0 %v2561
    %6387 = vmatpush1.bf16.msra.mxu0 %v2560
    %6388 = vmatprep.subr.bf16.mxu0 %v2577
    %6389 = vmatpush1.bf16.msra.mxu0 %v2576
    %6390 = vmatprep.subr.bf16.mxu0 %v2593
    %6391 = vmatpush1.bf16.msra.mxu0 %v2592
    %6392 = vmatprep.subr.bf16.mxu0 %v2609
    %6393 = vmatpush1.bf16.msra.mxu0 %v2608
    %6394 = vmatprep.subr.bf16.mxu0 %v2625
    %6395 = vmatpush1.bf16.msra.mxu0 %v2624
    %6396 = vmatprep.subr.bf16.mxu0 %v2641
    %6397 = vmatpush1.bf16.msra.mxu0 %v2640
    %6398 = vmatprep.subr.bf16.mxu0 %v2657
    %6399 = vmatpush1.bf16.msra.mxu0 %v2656
    %6400 = vmatprep.subr.bf16.mxu0 %v2673
    %6401 = vmatpush1.bf16.msra.mxu0 %v2672
    %6402 = vmatprep.subr.bf16.mxu0 %v2689
    %6403 = vmatpush1.bf16.msra.mxu0 %v2688
    %6404 = vmatprep.subr.bf16.mxu0 %v2705
    %6405 = vmatpush1.bf16.msra.mxu0 %v2704
    %6406 = vmatprep.subr.bf16.mxu0 %v2721
    %6407 = vmatpush1.bf16.msra.mxu0 %v2720
    %6408 = vmatprep.subr.bf16.mxu0 %v2737
    %6409 = vmatpush1.bf16.msra.mxu0 %v2736
    %6410 = vmatprep.subr.bf16.mxu0 %v2753
    %6411 = vmatpush1.bf16.msra.mxu0 %v2752
    %6412 = vmatprep.subr.bf16.mxu0 %v2769
    %6413 = vmatpush1.bf16.msra.mxu0 %v2768
    %6414 = vmatprep.subr.bf16.mxu0 %v2785
    %6415 = vmatpush1.bf16.msra.mxu0 %v2784
    %6416 = vmatprep.mubr.bf16.mxu0 %v6135
    %6417 = vmatmul.mubr.bf16.gmra.mrb[0].mxu0 %v6134
    %v6418 = vpop.f32.mrb[0].mxu0
    %v6419 = vadd.f32 0.0, %v6418
    %v6420 = vpop.f32.mrb[0].mxu0
    %v6421 = vadd.f32 0.0, %v6420
    %v6422 = vpop.f32.mrb[0].mxu0
    %v6423 = vpop.f32.mrb[0].mxu0
    %6424 = vdwg.mxu0
    %6425 = vmatprep.subr.bf16.mxu0 %v2801
    %6426 = vmatpush1.bf16.msra.mxu0 %v2800
    %6427 = vmatprep.subr.bf16.mxu0 %v2817
    %6428 = vmatpush1.bf16.msra.mxu0 %v2816
    %6429 = vmatprep.subr.bf16.mxu0 %v2833
    %6430 = vmatpush1.bf16.msra.mxu0 %v2832
    %6431 = vmatprep.subr.bf16.mxu0 %v2849
    %6432 = vmatpush1.bf16.msra.mxu0 %v2848
    %6433 = vmatprep.subr.bf16.mxu0 %v2865
    %6434 = vmatpush1.bf16.msra.mxu0 %v2864
    %6435 = vmatprep.subr.bf16.mxu0 %v2881
    %6436 = vmatpush1.bf16.msra.mxu0 %v2880
    %6437 = vmatprep.subr.bf16.mxu0 %v2897
    %6438 = vmatpush1.bf16.msra.mxu0 %v2896
    %6439 = vmatprep.subr.bf16.mxu0 %v2913
    %6440 = vmatpush1.bf16.msra.mxu0 %v2912
    %6441 = vmatprep.subr.bf16.mxu0 %v2929
    %6442 = vmatpush1.bf16.msra.mxu0 %v2928
    %6443 = vmatprep.subr.bf16.mxu0 %v2945
    %6444 = vmatpush1.bf16.msra.mxu0 %v2944
    %6445 = vmatprep.subr.bf16.mxu0 %v2961
    %6446 = vmatpush1.bf16.msra.mxu0 %v2960
    %6447 = vmatprep.subr.bf16.mxu0 %v2977
    %6448 = vmatpush1.bf16.msra.mxu0 %v2976
    %6449 = vmatprep.subr.bf16.mxu0 %v2993
    %6450 = vmatpush1.bf16.msra.mxu0 %v2992
    %6451 = vmatprep.subr.bf16.mxu0 %v3009
    %6452 = vmatpush1.bf16.msra.mxu0 %v3008
    %6453 = vmatprep.subr.bf16.mxu0 %v3025
    %6454 = vmatpush1.bf16.msra.mxu0 %v3024
    %6455 = vmatprep.subr.bf16.mxu0 %v3041
    %6456 = vmatpush1.bf16.msra.mxu0 %v3040
    %6457 = vmatprep.mubr.bf16.mxu0 %v6137
    %6458 = vmatmul.mubr.bf16.gmra.mrb[0].mxu0 %v6136
    %v6459 = vpop.f32.mrb[0].mxu0
    %v6460 = vadd.f32 %v6419, %v6459
    %v6461 = vpop.f32.mrb[0].mxu0
    %v6462 = vadd.f32 %v6421, %v6461
    %v6463 = vpop.f32.mrb[0].mxu0
    %v6464 = vpop.f32.mrb[0].mxu0
    %6465 = vdwg.mxu0
    %6466 = vmatprep.subr.bf16.mxu0 %v2547
    %6467 = vmatpush1.bf16.msra.mxu0 %v2546
    %6468 = vmatprep.subr.bf16.mxu0 %v2563
    %6469 = vmatpush1.bf16.msra.mxu0 %v2562
    %6470 = vmatprep.subr.bf16.mxu0 %v2579
    %6471 = vmatpush1.bf16.msra.mxu0 %v2578
    %6472 = vmatprep.subr.bf16.mxu0 %v2595
    %6473 = vmatpush1.bf16.msra.mxu0 %v2594
    %6474 = vmatprep.subr.bf16.mxu0 %v2611
    %6475 = vmatpush1.bf16.msra.mxu0 %v2610
    %6476 = vmatprep.subr.bf16.mxu0 %v2627
    %6477 = vmatpush1.bf16.msra.mxu0 %v2626
    %6478 = vmatprep.subr.bf16.mxu0 %v2643
    %6479 = vmatpush1.bf16.msra.mxu0 %v2642
    %6480 = vmatprep.subr.bf16.mxu0 %v2659
    %6481 = vmatpush1.bf16.msra.mxu0 %v2658
    %6482 = vmatprep.subr.bf16.mxu0 %v2675
    %6483 = vmatpush1.bf16.msra.mxu0 %v2674
    %6484 = vmatprep.subr.bf16.mxu0 %v2691
    %6485 = vmatpush1.bf16.msra.mxu0 %v2690
    %6486 = vmatprep.subr.bf16.mxu0 %v2707
    %6487 = vmatpush1.bf16.msra.mxu0 %v2706
    %6488 = vmatprep.subr.bf16.mxu0 %v2723
    %6489 = vmatpush1.bf16.msra.mxu0 %v2722
    %6490 = vmatprep.subr.bf16.mxu0 %v2739
    %6491 = vmatpush1.bf16.msra.mxu0 %v2738
    %6492 = vmatprep.subr.bf16.mxu0 %v2755
    %6493 = vmatpush1.bf16.msra.mxu0 %v2754
    %6494 = vmatprep.subr.bf16.mxu0 %v2771
    %6495 = vmatpush1.bf16.msra.mxu0 %v2770
    %6496 = vmatprep.subr.bf16.mxu0 %v2787
    %6497 = vmatpush1.bf16.msra.mxu0 %v2786
    %6498 = vmatprep.mubr.bf16.mxu0 %v6135
    %6499 = vmatmul.mubr.bf16.gmra.mrb[0].mxu0 %v6134
    %v6500 = vpop.f32.mrb[0].mxu0
    %v6501 = vadd.f32 0.0, %v6500
    %v6502 = vpop.f32.mrb[0].mxu0
    %v6503 = vadd.f32 0.0, %v6502
    %v6504 = vpop.f32.mrb[0].mxu0
    %v6505 = vpop.f32.mrb[0].mxu0
    %6506 = vdwg.mxu0
    %6507 = vmatprep.subr.bf16.mxu0 %v2803
    %6508 = vmatpush1.bf16.msra.mxu0 %v2802
    %6509 = vmatprep.subr.bf16.mxu0 %v2819
    %6510 = vmatpush1.bf16.msra.mxu0 %v2818
    %6511 = vmatprep.subr.bf16.mxu0 %v2835
    %6512 = vmatpush1.bf16.msra.mxu0 %v2834
    %6513 = vmatprep.subr.bf16.mxu0 %v2851
    %6514 = vmatpush1.bf16.msra.mxu0 %v2850
    %6515 = vmatprep.subr.bf16.mxu0 %v2867
    %6516 = vmatpush1.bf16.msra.mxu0 %v2866
    %6517 = vmatprep.subr.bf16.mxu0 %v2883
    %6518 = vmatpush1.bf16.msra.mxu0 %v2882
    %6519 = vmatprep.subr.bf16.mxu0 %v2899
    %6520 = vmatpush1.bf16.msra.mxu0 %v2898
    %6521 = vmatprep.subr.bf16.mxu0 %v2915
    %6522 = vmatpush1.bf16.msra.mxu0 %v2914
    %6523 = vmatprep.subr.bf16.mxu0 %v2931
    %6524 = vmatpush1.bf16.msra.mxu0 %v2930
    %6525 = vmatprep.subr.bf16.mxu0 %v2947
    %6526 = vmatpush1.bf16.msra.mxu0 %v2946
    %6527 = vmatprep.subr.bf16.mxu0 %v2963
    %6528 = vmatpush1.bf16.msra.mxu0 %v2962
    %6529 = vmatprep.subr.bf16.mxu0 %v2979
    %6530 = vmatpush1.bf16.msra.mxu0 %v2978
    %6531 = vmatprep.subr.bf16.mxu0 %v2995
    %6532 = vmatpush1.bf16.msra.mxu0 %v2994
    %6533 = vmatprep.subr.bf16.mxu0 %v3011
    %6534 = vmatpush1.bf16.msra.mxu0 %v3010
    %6535 = vmatprep.subr.bf16.mxu0 %v3027
    %6536 = vmatpush1.bf16.msra.mxu0 %v3026
    %6537 = vmatprep.subr.bf16.mxu0 %v3043
    %6538 = vmatpush1.bf16.msra.mxu0 %v3042
    %6539 = vmatprep.mubr.bf16.mxu0 %v6137
    %6540 = vmatmul.mubr.bf16.gmra.mrb[0].mxu0 %v6136
    %v6541 = vpop.f32.mrb[0].mxu0
    %v6542 = vadd.f32 %v6501, %v6541
    %v6543 = vpop.f32.mrb[0].mxu0
    %v6544 = vadd.f32 %v6503, %v6543
    %v6545 = vpop.f32.mrb[0].mxu0
    %v6546 = vpop.f32.mrb[0].mxu0
    %6547 = vdwg.mxu0
    %6548 = vmatprep.subr.bf16.mxu0 %v2549
    %6549 = vmatpush1.bf16.msra.mxu0 %v2548
    %6550 = vmatprep.subr.bf16.mxu0 %v2565
    %6551 = vmatpush1.bf16.msra.mxu0 %v2564
    %6552 = vmatprep.subr.bf16.mxu0 %v2581
    %6553 = vmatpush1.bf16.msra.mxu0 %v2580
    %6554 = vmatprep.subr.bf16.mxu0 %v2597
    %6555 = vmatpush1.bf16.msra.mxu0 %v2596
    %6556 = vmatprep.subr.bf16.mxu0 %v2613
    %6557 = vmatpush1.bf16.msra.mxu0 %v2612
    %6558 = vmatprep.subr.bf16.mxu0 %v2629
    %6559 = vmatpush1.bf16.msra.mxu0 %v2628
    %6560 = vmatprep.subr.bf16.mxu0 %v2645
    %6561 = vmatpush1.bf16.msra.mxu0 %v2644
    %6562 = vmatprep.subr.bf16.mxu0 %v2661
    %6563 = vmatpush1.bf16.msra.mxu0 %v2660
    %6564 = vmatprep.subr.bf16.mxu0 %v2677
    %6565 = vmatpush1.bf16.msra.mxu0 %v2676
    %6566 = vmatprep.subr.bf16.mxu0 %v2693
    %6567 = vmatpush1.bf16.msra.mxu0 %v2692
    %6568 = vmatprep.subr.bf16.mxu0 %v2709
    %6569 = vmatpush1.bf16.msra.mxu0 %v2708
    %6570 = vmatprep.subr.bf16.mxu0 %v2725
    %6571 = vmatpush1.bf16.msra.mxu0 %v2724
    %6572 = vmatprep.subr.bf16.mxu0 %v2741
    %6573 = vmatpush1.bf16.msra.mxu0 %v2740
    %6574 = vmatprep.subr.bf16.mxu0 %v2757
    %6575 = vmatpush1.bf16.msra.mxu0 %v2756
    %6576 = vmatprep.subr.bf16.mxu0 %v2773
    %6577 = vmatpush1.bf16.msra.mxu0 %v2772
    %6578 = vmatprep.subr.bf16.mxu0 %v2789
    %6579 = vmatpush1.bf16.msra.mxu0 %v2788
    %6580 = vmatprep.mubr.bf16.mxu0 %v6135
    %6581 = vmatmul.mubr.bf16.gmra.mrb[0].mxu0 %v6134
    %v6582 = vpop.f32.mrb[0].mxu0
    %v6583 = vadd.f32 0.0, %v6582
    %v6584 = vpop.f32.mrb[0].mxu0
    %v6585 = vadd.f32 0.0, %v6584
    %v6586 = vpop.f32.mrb[0].mxu0
    %v6587 = vpop.f32.mrb[0].mxu0
    %6588 = vdwg.mxu0
    %6589 = vmatprep.subr.bf16.mxu0 %v2805
    %6590 = vmatpush1.bf16.msra.mxu0 %v2804
    %6591 = vmatprep.subr.bf16.mxu0 %v2821
    %6592 = vmatpush1.bf16.msra.mxu0 %v2820
    %6593 = vmatprep.subr.bf16.mxu0 %v2837
    %6594 = vmatpush1.bf16.msra.mxu0 %v2836
    %6595 = vmatprep.subr.bf16.mxu0 %v2853
    %6596 = vmatpush1.bf16.msra.mxu0 %v2852
    %6597 = vmatprep.subr.bf16.mxu0 %v2869
    %6598 = vmatpush1.bf16.msra.mxu0 %v2868
    %6599 = vmatprep.subr.bf16.mxu0 %v2885
    %6600 = vmatpush1.bf16.msra.mxu0 %v2884
    %6601 = vmatprep.subr.bf16.mxu0 %v2901
    %6602 = vmatpush1.bf16.msra.mxu0 %v2900
    %6603 = vmatprep.subr.bf16.mxu0 %v2917
    %6604 = vmatpush1.bf16.msra.mxu0 %v2916
    %6605 = vmatprep.subr.bf16.mxu0 %v2933
    %6606 = vmatpush1.bf16.msra.mxu0 %v2932
    %6607 = vmatprep.subr.bf16.mxu0 %v2949
    %6608 = vmatpush1.bf16.msra.mxu0 %v2948
    %6609 = vmatprep.subr.bf16.mxu0 %v2965
    %6610 = vmatpush1.bf16.msra.mxu0 %v2964
    %6611 = vmatprep.subr.bf16.mxu0 %v2981
    %6612 = vmatpush1.bf16.msra.mxu0 %v2980
    %6613 = vmatprep.subr.bf16.mxu0 %v2997
    %6614 = vmatpush1.bf16.msra.mxu0 %v2996
    %6615 = vmatprep.subr.bf16.mxu0 %v3013
    %6616 = vmatpush1.bf16.msra.mxu0 %v3012
    %6617 = vmatprep.subr.bf16.mxu0 %v3029
    %6618 = vmatpush1.bf16.msra.mxu0 %v3028
    %6619 = vmatprep.subr.bf16.mxu0 %v3045
    %6620 = vmatpush1.bf16.msra.mxu0 %v3044
    %6621 = vmatprep.mubr.bf16.mxu0 %v6137
    %6622 = vmatmul.mubr.bf16.gmra.mrb[0].mxu0 %v6136
    %v6623 = vpop.f32.mrb[0].mxu0
    %v6624 = vadd.f32 %v6583, %v6623
    %v6625 = vpop.f32.mrb[0].mxu0
    %v6626 = vadd.f32 %v6585, %v6625
    %v6627 = vpop.f32.mrb[0].mxu0
    %v6628 = vpop.f32.mrb[0].mxu0
    %6629 = vdwg.mxu0
    %6630 = vmatprep.subr.bf16.mxu0 %v2551
    %6631 = vmatpush1.bf16.msra.mxu0 %v2550
    %6632 = vmatprep.subr.bf16.mxu0 %v2567
    %6633 = vmatpush1.bf16.msra.mxu0 %v2566
    %6634 = vmatprep.subr.bf16.mxu0 %v2583
    %6635 = vmatpush1.bf16.msra.mxu0 %v2582
    %6636 = vmatprep.subr.bf16.mxu0 %v2599
    %6637 = vmatpush1.bf16.msra.mxu0 %v2598
    %6638 = vmatprep.subr.bf16.mxu0 %v2615
    %6639 = vmatpush1.bf16.msra.mxu0 %v2614
    %6640 = vmatprep.subr.bf16.mxu0 %v2631
    %6641 = vmatpush1.bf16.msra.mxu0 %v2630
    %6642 = vmatprep.subr.bf16.mxu0 %v2647
    %6643 = vmatpush1.bf16.msra.mxu0 %v2646
    %6644 = vmatprep.subr.bf16.mxu0 %v2663
    %6645 = vmatpush1.bf16.msra.mxu0 %v2662
    %6646 = vmatprep.subr.bf16.mxu0 %v2679
    %6647 = vmatpush1.bf16.msra.mxu0 %v2678
    %6648 = vmatprep.subr.bf16.mxu0 %v2695
    %6649 = vmatpush1.bf16.msra.mxu0 %v2694
    %6650 = vmatprep.subr.bf16.mxu0 %v2711
    %6651 = vmatpush1.bf16.msra.mxu0 %v2710
    %6652 = vmatprep.subr.bf16.mxu0 %v2727
    %6653 = vmatpush1.bf16.msra.mxu0 %v2726
    %6654 = vmatprep.subr.bf16.mxu0 %v2743
    %6655 = vmatpush1.bf16.msra.mxu0 %v2742
    %6656 = vmatprep.subr.bf16.mxu0 %v2759
    %6657 = vmatpush1.bf16.msra.mxu0 %v2758
    %6658 = vmatprep.subr.bf16.mxu0 %v2775
    %6659 = vmatpush1.bf16.msra.mxu0 %v2774
    %6660 = vmatprep.subr.bf16.mxu0 %v2791
    %6661 = vmatpush1.bf16.msra.mxu0 %v2790
    %6662 = vmatprep.mubr.bf16.mxu0 %v6135
    %6663 = vmatmul.mubr.bf16.gmra.mrb[0].mxu0 %v6134
    %v6664 = vpop.f32.mrb[0].mxu0
    %v6665 = vadd.f32 0.0, %v6664
    %v6666 = vpop.f32.mrb[0].mxu0
    %v6667 = vadd.f32 0.0, %v6666
    %v6668 = vpop.f32.mrb[0].mxu0
    %v6669 = vpop.f32.mrb[0].mxu0
    %6670 = vdwg.mxu0
    %6671 = vmatprep.subr.bf16.mxu0 %v2807
    %6672 = vmatpush1.bf16.msra.mxu0 %v2806
    %6673 = vmatprep.subr.bf16.mxu0 %v2823
    %6674 = vmatpush1.bf16.msra.mxu0 %v2822
    %6675 = vmatprep.subr.bf16.mxu0 %v2839
    %6676 = vmatpush1.bf16.msra.mxu0 %v2838
    %6677 = vmatprep.subr.bf16.mxu0 %v2855
    %6678 = vmatpush1.bf16.msra.mxu0 %v2854
    %6679 = vmatprep.subr.bf16.mxu0 %v2871
    %6680 = vmatpush1.bf16.msra.mxu0 %v2870
    %6681 = vmatprep.subr.bf16.mxu0 %v2887
    %6682 = vmatpush1.bf16.msra.mxu0 %v2886
    %6683 = vmatprep.subr.bf16.mxu0 %v2903
    %6684 = vmatpush1.bf16.msra.mxu0 %v2902
    %6685 = vmatprep.subr.bf16.mxu0 %v2919
    %6686 = vmatpush1.bf16.msra.mxu0 %v2918
    %6687 = vmatprep.subr.bf16.mxu0 %v2935
    %6688 = vmatpush1.bf16.msra.mxu0 %v2934
    %6689 = vmatprep.subr.bf16.mxu0 %v2951
    %6690 = vmatpush1.bf16.msra.mxu0 %v2950
    %6691 = vmatprep.subr.bf16.mxu0 %v2967
    %6692 = vmatpush1.bf16.msra.mxu0 %v2966
    %6693 = vmatprep.subr.bf16.mxu0 %v2983
    %6694 = vmatpush1.bf16.msra.mxu0 %v2982
    %6695 = vmatprep.subr.bf16.mxu0 %v2999
    %6696 = vmatpush1.bf16.msra.mxu0 %v2998
    %6697 = vmatprep.subr.bf16.mxu0 %v3015
    %6698 = vmatpush1.bf16.msra.mxu0 %v3014
    %6699 = vmatprep.subr.bf16.mxu0 %v3031
    %6700 = vmatpush1.bf16.msra.mxu0 %v3030
    %6701 = vmatprep.subr.bf16.mxu0 %v3047
    %6702 = vmatpush1.bf16.msra.mxu0 %v3046
    %6703 = vmatprep.mubr.bf16.mxu0 %v6137
    %6704 = vmatmul.mubr.bf16.gmra.mrb[0].mxu0 %v6136
    %v6705 = vpop.f32.mrb[0].mxu0
    %v6706 = vadd.f32 %v6665, %v6705
    %v6707 = vpop.f32.mrb[0].mxu0
    %v6708 = vadd.f32 %v6667, %v6707
    %v6709 = vpop.f32.mrb[0].mxu0
    %v6710 = vpop.f32.mrb[0].mxu0
    %6711 = vdwg.mxu0
    %6712 = vmatprep.subr.bf16.mxu0 %v2553
    %6713 = vmatpush1.bf16.msra.mxu0 %v2552
    %6714 = vmatprep.subr.bf16.mxu0 %v2569
    %6715 = vmatpush1.bf16.msra.mxu0 %v2568
    %6716 = vmatprep.subr.bf16.mxu0 %v2585
    %6717 = vmatpush1.bf16.msra.mxu0 %v2584
    %6718 = vmatprep.subr.bf16.mxu0 %v2601
    %6719 = vmatpush1.bf16.msra.mxu0 %v2600
    %6720 = vmatprep.subr.bf16.mxu0 %v2617
    %6721 = vmatpush1.bf16.msra.mxu0 %v2616
    %6722 = vmatprep.subr.bf16.mxu0 %v2633
    %6723 = vmatpush1.bf16.msra.mxu0 %v2632
    %6724 = vmatprep.subr.bf16.mxu0 %v2649
    %6725 = vmatpush1.bf16.msra.mxu0 %v2648
    %6726 = vmatprep.subr.bf16.mxu0 %v2665
    %6727 = vmatpush1.bf16.msra.mxu0 %v2664
    %6728 = vmatprep.subr.bf16.mxu0 %v2681
    %6729 = vmatpush1.bf16.msra.mxu0 %v2680
    %6730 = vmatprep.subr.bf16.mxu0 %v2697
    %6731 = vmatpush1.bf16.msra.mxu0 %v2696
    %6732 = vmatprep.subr.bf16.mxu0 %v2713
    %6733 = vmatpush1.bf16.msra.mxu0 %v2712
    %6734 = vmatprep.subr.bf16.mxu0 %v2729
    %6735 = vmatpush1.bf16.msra.mxu0 %v2728
    %6736 = vmatprep.subr.bf16.mxu0 %v2745
    %6737 = vmatpush1.bf16.msra.mxu0 %v2744
    %6738 = vmatprep.subr.bf16.mxu0 %v2761
    %6739 = vmatpush1.bf16.msra.mxu0 %v2760
    %6740 = vmatprep.subr.bf16.mxu0 %v2777
    %6741 = vmatpush1.bf16.msra.mxu0 %v2776
    %6742 = vmatprep.subr.bf16.mxu0 %v2793
    %6743 = vmatpush1.bf16.msra.mxu0 %v2792
    %6744 = vmatprep.mubr.bf16.mxu0 %v6135
    %6745 = vmatmul.mubr.bf16.gmra.mrb[0].mxu0 %v6134
    %v6746 = vpop.f32.mrb[0].mxu0
    %v6747 = vadd.f32 0.0, %v6746
    %v6748 = vpop.f32.mrb[0].mxu0
    %v6749 = vadd.f32 0.0, %v6748
    %v6750 = vpop.f32.mrb[0].mxu0
    %v6751 = vpop.f32.mrb[0].mxu0
    %6752 = vdwg.mxu0
    %6753 = vmatprep.subr.bf16.mxu0 %v2809
    %6754 = vmatpush1.bf16.msra.mxu0 %v2808
    %6755 = vmatprep.subr.bf16.mxu0 %v2825
    %6756 = vmatpush1.bf16.msra.mxu0 %v2824
    %6757 = vmatprep.subr.bf16.mxu0 %v2841
    %6758 = vmatpush1.bf16.msra.mxu0 %v2840
    %6759 = vmatprep.subr.bf16.mxu0 %v2857
    %6760 = vmatpush1.bf16.msra.mxu0 %v2856
    %6761 = vmatprep.subr.bf16.mxu0 %v2873
    %6762 = vmatpush1.bf16.msra.mxu0 %v2872
    %6763 = vmatprep.subr.bf16.mxu0 %v2889
    %6764 = vmatpush1.bf16.msra.mxu0 %v2888
    %6765 = vmatprep.subr.bf16.mxu0 %v2905
    %6766 = vmatpush1.bf16.msra.mxu0 %v2904
    %6767 = vmatprep.subr.bf16.mxu0 %v2921
    %6768 = vmatpush1.bf16.msra.mxu0 %v2920
    %6769 = vmatprep.subr.bf16.mxu0 %v2937
    %6770 = vmatpush1.bf16.msra.mxu0 %v2936
    %6771 = vmatprep.subr.bf16.mxu0 %v2953
    %6772 = vmatpush1.bf16.msra.mxu0 %v2952
    %6773 = vmatprep.subr.bf16.mxu0 %v2969
    %6774 = vmatpush1.bf16.msra.mxu0 %v2968
    %6775 = vmatprep.subr.bf16.mxu0 %v2985
    %6776 = vmatpush1.bf16.msra.mxu0 %v2984
    %6777 = vmatprep.subr.bf16.mxu0 %v3001
    %6778 = vmatpush1.bf16.msra.mxu0 %v3000
    %6779 = vmatprep.subr.bf16.mxu0 %v3017
    %6780 = vmatpush1.bf16.msra.mxu0 %v3016
    %6781 = vmatprep.subr.bf16.mxu0 %v3033
    %6782 = vmatpush1.bf16.msra.mxu0 %v3032
    %6783 = vmatprep.subr.bf16.mxu0 %v3049
    %6784 = vmatpush1.bf16.msra.mxu0 %v3048
    %6785 = vmatprep.mubr.bf16.mxu0 %v6137
    %6786 = vmatmul.mubr.bf16.gmra.mrb[0].mxu0 %v6136
    %v6787 = vpop.f32.mrb[0].mxu0
    %v6788 = vadd.f32 %v6747, %v6787
    %v6789 = vpop.f32.mrb[0].mxu0
    %v6790 = vadd.f32 %v6749, %v6789
    %v6791 = vpop.f32.mrb[0].mxu0
    %v6792 = vpop.f32.mrb[0].mxu0
    %6793 = vdwg.mxu0
    %v6794 = vadd.f32 %v1853, %v6214
    %v6795 = vadd.f32 %v1855, %v6216
    %v6796 = vadd.f32 %v1926, %v6296
    %v6797 = vadd.f32 %v1928, %v6298
    %v6798 = vadd.f32 %v1999, %v6378
    %v6799 = vadd.f32 %v2001, %v6380
    %v6800 = vadd.f32 %v2072, %v6460
    %v6801 = vadd.f32 %v2074, %v6462
    %v6802 = vadd.f32 %v2145, %v6542
    %v6803 = vadd.f32 %v2147, %v6544
    %v6804 = vadd.f32 %v2218, %v6624
    %v6805 = vadd.f32 %v2220, %v6626
    %v6806 = vadd.f32 %v2291, %v6706
    %v6807 = vadd.f32 %v2293, %v6708
    %v6808 = vadd.f32 %v2364, %v6788
    %v6809 = vadd.f32 %v2366, %v6790
    %v6810 = vxor.u32 %v6794, 2147483648
    %v6811 = vxor.u32 %v6795, 2147483648
    %v6812 = vxor.u32 %v6796, 2147483648
    %v6813 = vxor.u32 %v6797, 2147483648
    %v6814 = vmul.f32 %v6810, 1.442695
    %v6815 = vpow.pop %v6814
    %v6816 = vmul.f32 %v6811, 1.442695
    %v6817 = vpow.pop %v6816
    %v6818 = vmul.f32 %v6812, 1.442695
    %v6819 = vpow.pop %v6818
    %v6820 = vmul.f32 %v6813, 1.442695
    %v6821 = vpow.pop %v6820
    %v6822 = vadd.f32 %v6815, 1.0
    %v6823 = vadd.f32 %v6817, 1.0
    %v6824 = vadd.f32 %v6819, 1.0
    %v6825 = vadd.f32 %v6821, 1.0
    %v6826 = vrcp.pop %v6822
    %v6827 = vmul.f32 1.0, %v6826
    %v6828 = vrcp.pop %v6823
    %v6829 = vmul.f32 1.0, %v6828
    %v6830 = vrcp.pop %v6824
    %v6831 = vmul.f32 1.0, %v6830
    %v6832 = vrcp.pop %v6825
    %v6833 = vmul.f32 1.0, %v6832
    %v6834 = vxor.u32 %v6798, 2147483648
    %v6835 = vxor.u32 %v6799, 2147483648
    %v6836 = vxor.u32 %v6800, 2147483648
    %v6837 = vxor.u32 %v6801, 2147483648
    %v6838 = vmul.f32 %v6834, 1.442695
    %v6839 = vpow.pop %v6838
    %v6840 = vmul.f32 %v6835, 1.442695
    %v6841 = vpow.pop %v6840
    %v6842 = vmul.f32 %v6836, 1.442695
    %v6843 = vpow.pop %v6842
    %v6844 = vmul.f32 %v6837, 1.442695
    %v6845 = vpow.pop %v6844
    %v6846 = vadd.f32 %v6839, 1.0
    %v6847 = vadd.f32 %v6841, 1.0
    %v6848 = vadd.f32 %v6843, 1.0
    %v6849 = vadd.f32 %v6845, 1.0
    %v6850 = vrcp.pop %v6846
    %v6851 = vmul.f32 1.0, %v6850
    %v6852 = vrcp.pop %v6847
    %v6853 = vmul.f32 1.0, %v6852
    %v6854 = vrcp.pop %v6848
    %v6855 = vmul.f32 1.0, %v6854
    %v6856 = vrcp.pop %v6849
    %v6857 = vmul.f32 1.0, %v6856
    %v6858 = vtanh.pop %v6802
    %v6859 = vtanh.pop %v6803
    %v6860 = vtanh.pop %v6804
    %v6861 = vtanh.pop %v6805
    %v6862 = vxor.u32 %v6806, 2147483648
    %v6863 = vxor.u32 %v6807, 2147483648
    %v6864 = vxor.u32 %v6808, 2147483648
    %v6865 = vxor.u32 %v6809, 2147483648
    %v6866 = vmul.f32 %v6862, 1.442695
    %v6867 = vpow.pop %v6866
    %v6868 = vmul.f32 %v6863, 1.442695
    %v6869 = vpow.pop %v6868
    %v6870 = vmul.f32 %v6864, 1.442695
    %v6871 = vpow.pop %v6870
    %v6872 = vmul.f32 %v6865, 1.442695
    %v6873 = vpow.pop %v6872
    %v6874 = vadd.f32 %v6867, 1.0
    %v6875 = vadd.f32 %v6869, 1.0
    %v6876 = vadd.f32 %v6871, 1.0
    %v6877 = vadd.f32 %v6873, 1.0
    %v6878 = vrcp.pop %v6874
    %v6879 = vmul.f32 1.0, %v6878
    %v6880 = vrcp.pop %v6875
    %v6881 = vmul.f32 1.0, %v6880
    %v6882 = vrcp.pop %v6876
    %v6883 = vmul.f32 1.0, %v6882
    %v6884 = vrcp.pop %v6877
    %v6885 = vmul.f32 1.0, %v6884
    %v6886 = vmul.f32 %v6851, %v6122
    %v6887 = vmul.f32 %v6853, %v6123
    %v6888 = vmul.f32 %v6855, %v6124
    %v6889 = vmul.f32 %v6857, %v6125
    %v6890 = vmul.f32 %v6827, %v6858
    %v6891 = vmul.f32 %v6829, %v6859
    %v6892 = vmul.f32 %v6831, %v6860
    %v6893 = vmul.f32 %v6833, %v6861
    %v6894 = vadd.f32 %v6886, %v6890
    %v6895 = vadd.f32 %v6887, %v6891
    %v6896 = vadd.f32 %v6888, %v6892
    %v6897 = vadd.f32 %v6889, %v6893
    %v6898 = vtanh.pop %v6894
    %v6899 = vtanh.pop %v6895
    %v6900 = vtanh.pop %v6896
    %v6901 = vtanh.pop %v6897
    %v6902 = vmul.f32 %v6879, %v6898
    %v6903 = vmul.f32 %v6881, %v6899
    %v6904 = vmul.f32 %v6883, %v6900
    %v6905 = vmul.f32 %v6885, %v6901
    %v6906 = vpack.c.bf16 %v6902, %v6902
    %v6907 = vpack.c.bf16 %v6903, %v6903
    %v6908 = vpack.c.bf16 %v6904, %v6904
    %v6909 = vpack.c.bf16 %v6905, %v6905
    %6910 = vmatprep.subr.bf16.mxu0 %v2539
    %6911 = vmatpush1.bf16.msra.mxu0 %v2538
    %6912 = vmatprep.subr.bf16.mxu0 %v2555
    %6913 = vmatpush1.bf16.msra.mxu0 %v2554
    %6914 = vmatprep.subr.bf16.mxu0 %v2571
    %6915 = vmatpush1.bf16.msra.mxu0 %v2570
    %6916 = vmatprep.subr.bf16.mxu0 %v2587
    %6917 = vmatpush1.bf16.msra.mxu0 %v2586
    %6918 = vmatprep.subr.bf16.mxu0 %v2603
    %6919 = vmatpush1.bf16.msra.mxu0 %v2602
    %6920 = vmatprep.subr.bf16.mxu0 %v2619
    %6921 = vmatpush1.bf16.msra.mxu0 %v2618
    %6922 = vmatprep.subr.bf16.mxu0 %v2635
    %6923 = vmatpush1.bf16.msra.mxu0 %v2634
    %6924 = vmatprep.subr.bf16.mxu0 %v2651
    %6925 = vmatpush1.bf16.msra.mxu0 %v2650
    %6926 = vmatprep.subr.bf16.mxu0 %v2667
    %6927 = vmatpush1.bf16.msra.mxu0 %v2666
    %6928 = vmatprep.subr.bf16.mxu0 %v2683
    %6929 = vmatpush1.bf16.msra.mxu0 %v2682
    %6930 = vmatprep.subr.bf16.mxu0 %v2699
    %6931 = vmatpush1.bf16.msra.mxu0 %v2698
    %6932 = vmatprep.subr.bf16.mxu0 %v2715
    %6933 = vmatpush1.bf16.msra.mxu0 %v2714
    %6934 = vmatprep.subr.bf16.mxu0 %v2731
    %6935 = vmatpush1.bf16.msra.mxu0 %v2730
    %6936 = vmatprep.subr.bf16.mxu0 %v2747
    %6937 = vmatpush1.bf16.msra.mxu0 %v2746
    %6938 = vmatprep.subr.bf16.mxu0 %v2763
    %6939 = vmatpush1.bf16.msra.mxu0 %v2762
    %6940 = vmatprep.subr.bf16.mxu0 %v2779
    %6941 = vmatpush1.bf16.msra.mxu0 %v2778
    %6942 = vmatprep.mubr.bf16.mxu0 %v6907
    %6943 = vmatmul.mubr.bf16.gmra.mrb[0].mxu0 %v6906
    %v6944 = vpop.f32.mrb[0].mxu0
    %v6945 = vadd.f32 0.0, %v6944
    %v6946 = vpop.f32.mrb[0].mxu0
    %v6947 = vadd.f32 0.0, %v6946
    %v6948 = vpop.f32.mrb[0].mxu0
    %v6949 = vpop.f32.mrb[0].mxu0
    %6950 = vdwg.mxu0
    %6951 = vmatprep.subr.bf16.mxu0 %v2795
    %6952 = vmatpush1.bf16.msra.mxu0 %v2794
    %6953 = vmatprep.subr.bf16.mxu0 %v2811
    %6954 = vmatpush1.bf16.msra.mxu0 %v2810
    %6955 = vmatprep.subr.bf16.mxu0 %v2827
    %6956 = vmatpush1.bf16.msra.mxu0 %v2826
    %6957 = vmatprep.subr.bf16.mxu0 %v2843
    %6958 = vmatpush1.bf16.msra.mxu0 %v2842
    %6959 = vmatprep.subr.bf16.mxu0 %v2859
    %6960 = vmatpush1.bf16.msra.mxu0 %v2858
    %6961 = vmatprep.subr.bf16.mxu0 %v2875
    %6962 = vmatpush1.bf16.msra.mxu0 %v2874
    %6963 = vmatprep.subr.bf16.mxu0 %v2891
    %6964 = vmatpush1.bf16.msra.mxu0 %v2890
    %6965 = vmatprep.subr.bf16.mxu0 %v2907
    %6966 = vmatpush1.bf16.msra.mxu0 %v2906
    %6967 = vmatprep.subr.bf16.mxu0 %v2923
    %6968 = vmatpush1.bf16.msra.mxu0 %v2922
    %6969 = vmatprep.subr.bf16.mxu0 %v2939
    %6970 = vmatpush1.bf16.msra.mxu0 %v2938
    %6971 = vmatprep.subr.bf16.mxu0 %v2955
    %6972 = vmatpush1.bf16.msra.mxu0 %v2954
    %6973 = vmatprep.subr.bf16.mxu0 %v2971
    %6974 = vmatpush1.bf16.msra.mxu0 %v2970
    %6975 = vmatprep.subr.bf16.mxu0 %v2987
    %6976 = vmatpush1.bf16.msra.mxu0 %v2986
    %6977 = vmatprep.subr.bf16.mxu0 %v3003
    %6978 = vmatpush1.bf16.msra.mxu0 %v3002
    %6979 = vmatprep.subr.bf16.mxu0 %v3019
    %6980 = vmatpush1.bf16.msra.mxu0 %v3018
    %6981 = vmatprep.subr.bf16.mxu0 %v3035
    %6982 = vmatpush1.bf16.msra.mxu0 %v3034
    %6983 = vmatprep.mubr.bf16.mxu0 %v6909
    %6984 = vmatmul.mubr.bf16.gmra.mrb[0].mxu0 %v6908
    %v6985 = vpop.f32.mrb[0].mxu0
    %v6986 = vadd.f32 %v6945, %v6985
    %v6987 = vpop.f32.mrb[0].mxu0
    %v6988 = vadd.f32 %v6947, %v6987
    %v6989 = vpop.f32.mrb[0].mxu0
    %v6990 = vpop.f32.mrb[0].mxu0
    %6991 = vdwg.mxu0
    %6992 = vmatprep.subr.bf16.mxu0 %v2541
    %6993 = vmatpush1.bf16.msra.mxu0 %v2540
    %6994 = vmatprep.subr.bf16.mxu0 %v2557
    %6995 = vmatpush1.bf16.msra.mxu0 %v2556
    %6996 = vmatprep.subr.bf16.mxu0 %v2573
    %6997 = vmatpush1.bf16.msra.mxu0 %v2572
    %6998 = vmatprep.subr.bf16.mxu0 %v2589
    %6999 = vmatpush1.bf16.msra.mxu0 %v2588
    %7000 = vmatprep.subr.bf16.mxu0 %v2605
    %7001 = vmatpush1.bf16.msra.mxu0 %v2604
    %7002 = vmatprep.subr.bf16.mxu0 %v2621
    %7003 = vmatpush1.bf16.msra.mxu0 %v2620
    %7004 = vmatprep.subr.bf16.mxu0 %v2637
    %7005 = vmatpush1.bf16.msra.mxu0 %v2636
    %7006 = vmatprep.subr.bf16.mxu0 %v2653
    %7007 = vmatpush1.bf16.msra.mxu0 %v2652
    %7008 = vmatprep.subr.bf16.mxu0 %v2669
    %7009 = vmatpush1.bf16.msra.mxu0 %v2668
    %7010 = vmatprep.subr.bf16.mxu0 %v2685
    %7011 = vmatpush1.bf16.msra.mxu0 %v2684
    %7012 = vmatprep.subr.bf16.mxu0 %v2701
    %7013 = vmatpush1.bf16.msra.mxu0 %v2700
    %7014 = vmatprep.subr.bf16.mxu0 %v2717
    %7015 = vmatpush1.bf16.msra.mxu0 %v2716
    %7016 = vmatprep.subr.bf16.mxu0 %v2733
    %7017 = vmatpush1.bf16.msra.mxu0 %v2732
    %7018 = vmatprep.subr.bf16.mxu0 %v2749
    %7019 = vmatpush1.bf16.msra.mxu0 %v2748
    %7020 = vmatprep.subr.bf16.mxu0 %v2765
    %7021 = vmatpush1.bf16.msra.mxu0 %v2764
    %7022 = vmatprep.subr.bf16.mxu0 %v2781
    %7023 = vmatpush1.bf16.msra.mxu0 %v2780
    %7024 = vmatprep.mubr.bf16.mxu0 %v6907
    %7025 = vmatmul.mubr.bf16.gmra.mrb[0].mxu0 %v6906
    %v7026 = vpop.f32.mrb[0].mxu0
    %v7027 = vadd.f32 0.0, %v7026
    %v7028 = vpop.f32.mrb[0].mxu0
    %v7029 = vadd.f32 0.0, %v7028
    %v7030 = vpop.f32.mrb[0].mxu0
    %v7031 = vpop.f32.mrb[0].mxu0
    %7032 = vdwg.mxu0
    %7033 = vmatprep.subr.bf16.mxu0 %v2797
    %7034 = vmatpush1.bf16.msra.mxu0 %v2796
    %7035 = vmatprep.subr.bf16.mxu0 %v2813
    %7036 = vmatpush1.bf16.msra.mxu0 %v2812
    %7037 = vmatprep.subr.bf16.mxu0 %v2829
    %7038 = vmatpush1.bf16.msra.mxu0 %v2828
    %7039 = vmatprep.subr.bf16.mxu0 %v2845
    %7040 = vmatpush1.bf16.msra.mxu0 %v2844
    %7041 = vmatprep.subr.bf16.mxu0 %v2861
    %7042 = vmatpush1.bf16.msra.mxu0 %v2860
    %7043 = vmatprep.subr.bf16.mxu0 %v2877
    %7044 = vmatpush1.bf16.msra.mxu0 %v2876
    %7045 = vmatprep.subr.bf16.mxu0 %v2893
    %7046 = vmatpush1.bf16.msra.mxu0 %v2892
    %7047 = vmatprep.subr.bf16.mxu0 %v2909
    %7048 = vmatpush1.bf16.msra.mxu0 %v2908
    %7049 = vmatprep.subr.bf16.mxu0 %v2925
    %7050 = vmatpush1.bf16.msra.mxu0 %v2924
    %7051 = vmatprep.subr.bf16.mxu0 %v2941
    %7052 = vmatpush1.bf16.msra.mxu0 %v2940
    %7053 = vmatprep.subr.bf16.mxu0 %v2957
    %7054 = vmatpush1.bf16.msra.mxu0 %v2956
    %7055 = vmatprep.subr.bf16.mxu0 %v2973
    %7056 = vmatpush1.bf16.msra.mxu0 %v2972
    %7057 = vmatprep.subr.bf16.mxu0 %v2989
    %7058 = vmatpush1.bf16.msra.mxu0 %v2988
    %7059 = vmatprep.subr.bf16.mxu0 %v3005
    %7060 = vmatpush1.bf16.msra.mxu0 %v3004
    %7061 = vmatprep.subr.bf16.mxu0 %v3021
    %7062 = vmatpush1.bf16.msra.mxu0 %v3020
    %7063 = vmatprep.subr.bf16.mxu0 %v3037
    %7064 = vmatpush1.bf16.msra.mxu0 %v3036
    %7065 = vmatprep.mubr.bf16.mxu0 %v6909
    %7066 = vmatmul.mubr.bf16.gmra.mrb[0].mxu0 %v6908
    %v7067 = vpop.f32.mrb[0].mxu0
    %v7068 = vadd.f32 %v7027, %v7067
    %v7069 = vpop.f32.mrb[0].mxu0
    %v7070 = vadd.f32 %v7029, %v7069
    %v7071 = vpop.f32.mrb[0].mxu0
    %v7072 = vpop.f32.mrb[0].mxu0
    %7073 = vdwg.mxu0
    %7074 = vmatprep.subr.bf16.mxu0 %v2543
    %7075 = vmatpush1.bf16.msra.mxu0 %v2542
    %7076 = vmatprep.subr.bf16.mxu0 %v2559
    %7077 = vmatpush1.bf16.msra.mxu0 %v2558
    %7078 = vmatprep.subr.bf16.mxu0 %v2575
    %7079 = vmatpush1.bf16.msra.mxu0 %v2574
    %7080 = vmatprep.subr.bf16.mxu0 %v2591
    %7081 = vmatpush1.bf16.msra.mxu0 %v2590
    %7082 = vmatprep.subr.bf16.mxu0 %v2607
    %7083 = vmatpush1.bf16.msra.mxu0 %v2606
    %7084 = vmatprep.subr.bf16.mxu0 %v2623
    %7085 = vmatpush1.bf16.msra.mxu0 %v2622
    %7086 = vmatprep.subr.bf16.mxu0 %v2639
    %7087 = vmatpush1.bf16.msra.mxu0 %v2638
    %7088 = vmatprep.subr.bf16.mxu0 %v2655
    %7089 = vmatpush1.bf16.msra.mxu0 %v2654
    %7090 = vmatprep.subr.bf16.mxu0 %v2671
    %7091 = vmatpush1.bf16.msra.mxu0 %v2670
    %7092 = vmatprep.subr.bf16.mxu0 %v2687
    %7093 = vmatpush1.bf16.msra.mxu0 %v2686
    %7094 = vmatprep.subr.bf16.mxu0 %v2703
    %7095 = vmatpush1.bf16.msra.mxu0 %v2702
    %7096 = vmatprep.subr.bf16.mxu0 %v2719
    %7097 = vmatpush1.bf16.msra.mxu0 %v2718
    %7098 = vmatprep.subr.bf16.mxu0 %v2735
    %7099 = vmatpush1.bf16.msra.mxu0 %v2734
    %7100 = vmatprep.subr.bf16.mxu0 %v2751
    %7101 = vmatpush1.bf16.msra.mxu0 %v2750
    %7102 = vmatprep.subr.bf16.mxu0 %v2767
    %7103 = vmatpush1.bf16.msra.mxu0 %v2766
    %7104 = vmatprep.subr.bf16.mxu0 %v2783
    %7105 = vmatpush1.bf16.msra.mxu0 %v2782
    %7106 = vmatprep.mubr.bf16.mxu0 %v6907
    %7107 = vmatmul.mubr.bf16.gmra.mrb[0].mxu0 %v6906
    %v7108 = vpop.f32.mrb[0].mxu0
    %v7109 = vadd.f32 0.0, %v7108
    %v7110 = vpop.f32.mrb[0].mxu0
    %v7111 = vadd.f32 0.0, %v7110
    %v7112 = vpop.f32.mrb[0].mxu0
    %v7113 = vpop.f32.mrb[0].mxu0
    %7114 = vdwg.mxu0
    %7115 = vmatprep.subr.bf16.mxu0 %v2799
    %7116 = vmatpush1.bf16.msra.mxu0 %v2798
    %7117 = vmatprep.subr.bf16.mxu0 %v2815
    %7118 = vmatpush1.bf16.msra.mxu0 %v2814
    %7119 = vmatprep.subr.bf16.mxu0 %v2831
    %7120 = vmatpush1.bf16.msra.mxu0 %v2830
    %7121 = vmatprep.subr.bf16.mxu0 %v2847
    %7122 = vmatpush1.bf16.msra.mxu0 %v2846
    %7123 = vmatprep.subr.bf16.mxu0 %v2863
    %7124 = vmatpush1.bf16.msra.mxu0 %v2862
    %7125 = vmatprep.subr.bf16.mxu0 %v2879
    %7126 = vmatpush1.bf16.msra.mxu0 %v2878
    %7127 = vmatprep.subr.bf16.mxu0 %v2895
    %7128 = vmatpush1.bf16.msra.mxu0 %v2894
    %7129 = vmatprep.subr.bf16.mxu0 %v2911
    %7130 = vmatpush1.bf16.msra.mxu0 %v2910
    %7131 = vmatprep.subr.bf16.mxu0 %v2927
    %7132 = vmatpush1.bf16.msra.mxu0 %v2926
    %7133 = vmatprep.subr.bf16.mxu0 %v2943
    %7134 = vmatpush1.bf16.msra.mxu0 %v2942
    %7135 = vmatprep.subr.bf16.mxu0 %v2959
    %7136 = vmatpush1.bf16.msra.mxu0 %v2958
    %7137 = vmatprep.subr.bf16.mxu0 %v2975
    %7138 = vmatpush1.bf16.msra.mxu0 %v2974
    %7139 = vmatprep.subr.bf16.mxu0 %v2991
    %7140 = vmatpush1.bf16.msra.mxu0 %v2990
    %7141 = vmatprep.subr.bf16.mxu0 %v3007
    %7142 = vmatpush1.bf16.msra.mxu0 %v3006
    %7143 = vmatprep.subr.bf16.mxu0 %v3023
    %7144 = vmatpush1.bf16.msra.mxu0 %v3022
    %7145 = vmatprep.subr.bf16.mxu0 %v3039
    %7146 = vmatpush1.bf16.msra.mxu0 %v3038
    %7147 = vmatprep.mubr.bf16.mxu0 %v6909
    %7148 = vmatmul.mubr.bf16.gmra.mrb[0].mxu0 %v6908
    %v7149 = vpop.f32.mrb[0].mxu0
    %v7150 = vadd.f32 %v7109, %v7149
    %v7151 = vpop.f32.mrb[0].mxu0
    %v7152 = vadd.f32 %v7111, %v7151
    %v7153 = vpop.f32.mrb[0].mxu0
    %v7154 = vpop.f32.mrb[0].mxu0
    %7155 = vdwg.mxu0
    %7156 = vmatprep.subr.bf16.mxu0 %v2545
    %7157 = vmatpush1.bf16.msra.mxu0 %v2544
    %7158 = vmatprep.subr.bf16.mxu0 %v2561
    %7159 = vmatpush1.bf16.msra.mxu0 %v2560
    %7160 = vmatprep.subr.bf16.mxu0 %v2577
    %7161 = vmatpush1.bf16.msra.mxu0 %v2576
    %7162 = vmatprep.subr.bf16.mxu0 %v2593
    %7163 = vmatpush1.bf16.msra.mxu0 %v2592
    %7164 = vmatprep.subr.bf16.mxu0 %v2609
    %7165 = vmatpush1.bf16.msra.mxu0 %v2608
    %7166 = vmatprep.subr.bf16.mxu0 %v2625
    %7167 = vmatpush1.bf16.msra.mxu0 %v2624
    %7168 = vmatprep.subr.bf16.mxu0 %v2641
    %7169 = vmatpush1.bf16.msra.mxu0 %v2640
    %7170 = vmatprep.subr.bf16.mxu0 %v2657
    %7171 = vmatpush1.bf16.msra.mxu0 %v2656
    %7172 = vmatprep.subr.bf16.mxu0 %v2673
    %7173 = vmatpush1.bf16.msra.mxu0 %v2672
    %7174 = vmatprep.subr.bf16.mxu0 %v2689
    %7175 = vmatpush1.bf16.msra.mxu0 %v2688
    %7176 = vmatprep.subr.bf16.mxu0 %v2705
    %7177 = vmatpush1.bf16.msra.mxu0 %v2704
    %7178 = vmatprep.subr.bf16.mxu0 %v2721
    %7179 = vmatpush1.bf16.msra.mxu0 %v2720
    %7180 = vmatprep.subr.bf16.mxu0 %v2737
    %7181 = vmatpush1.bf16.msra.mxu0 %v2736
    %7182 = vmatprep.subr.bf16.mxu0 %v2753
    %7183 = vmatpush1.bf16.msra.mxu0 %v2752
    %7184 = vmatprep.subr.bf16.mxu0 %v2769
    %7185 = vmatpush1.bf16.msra.mxu0 %v2768
    %7186 = vmatprep.subr.bf16.mxu0 %v2785
    %7187 = vmatpush1.bf16.msra.mxu0 %v2784
    %7188 = vmatprep.mubr.bf16.mxu0 %v6907
    %7189 = vmatmul.mubr.bf16.gmra.mrb[0].mxu0 %v6906
    %v7190 = vpop.f32.mrb[0].mxu0
    %v7191 = vadd.f32 0.0, %v7190
    %v7192 = vpop.f32.mrb[0].mxu0
    %v7193 = vadd.f32 0.0, %v7192
    %v7194 = vpop.f32.mrb[0].mxu0
    %v7195 = vpop.f32.mrb[0].mxu0
    %7196 = vdwg.mxu0
    %7197 = vmatprep.subr.bf16.mxu0 %v2801
    %7198 = vmatpush1.bf16.msra.mxu0 %v2800
    %7199 = vmatprep.subr.bf16.mxu0 %v2817
    %7200 = vmatpush1.bf16.msra.mxu0 %v2816
    %7201 = vmatprep.subr.bf16.mxu0 %v2833
    %7202 = vmatpush1.bf16.msra.mxu0 %v2832
    %7203 = vmatprep.subr.bf16.mxu0 %v2849
    %7204 = vmatpush1.bf16.msra.mxu0 %v2848
    %7205 = vmatprep.subr.bf16.mxu0 %v2865
    %7206 = vmatpush1.bf16.msra.mxu0 %v2864
    %7207 = vmatprep.subr.bf16.mxu0 %v2881
    %7208 = vmatpush1.bf16.msra.mxu0 %v2880
    %7209 = vmatprep.subr.bf16.mxu0 %v2897
    %7210 = vmatpush1.bf16.msra.mxu0 %v2896
    %7211 = vmatprep.subr.bf16.mxu0 %v2913
    %7212 = vmatpush1.bf16.msra.mxu0 %v2912
    %7213 = vmatprep.subr.bf16.mxu0 %v2929
    %7214 = vmatpush1.bf16.msra.mxu0 %v2928
    %7215 = vmatprep.subr.bf16.mxu0 %v2945
    %7216 = vmatpush1.bf16.msra.mxu0 %v2944
    %7217 = vmatprep.subr.bf16.mxu0 %v2961
    %7218 = vmatpush1.bf16.msra.mxu0 %v2960
    %7219 = vmatprep.subr.bf16.mxu0 %v2977
    %7220 = vmatpush1.bf16.msra.mxu0 %v2976
    %7221 = vmatprep.subr.bf16.mxu0 %v2993
    %7222 = vmatpush1.bf16.msra.mxu0 %v2992
    %7223 = vmatprep.subr.bf16.mxu0 %v3009
    %7224 = vmatpush1.bf16.msra.mxu0 %v3008
    %7225 = vmatprep.subr.bf16.mxu0 %v3025
    %7226 = vmatpush1.bf16.msra.mxu0 %v3024
    %7227 = vmatprep.subr.bf16.mxu0 %v3041
    %7228 = vmatpush1.bf16.msra.mxu0 %v3040
    %7229 = vmatprep.mubr.bf16.mxu0 %v6909
    %7230 = vmatmul.mubr.bf16.gmra.mrb[0].mxu0 %v6908
    %v7231 = vpop.f32.mrb[0].mxu0
    %v7232 = vadd.f32 %v7191, %v7231
    %v7233 = vpop.f32.mrb[0].mxu0
    %v7234 = vadd.f32 %v7193, %v7233
    %v7235 = vpop.f32.mrb[0].mxu0
    %v7236 = vpop.f32.mrb[0].mxu0
    %7237 = vdwg.mxu0
    %7238 = vmatprep.subr.bf16.mxu0 %v2547
    %7239 = vmatpush1.bf16.msra.mxu0 %v2546
    %7240 = vmatprep.subr.bf16.mxu0 %v2563
    %7241 = vmatpush1.bf16.msra.mxu0 %v2562
    %7242 = vmatprep.subr.bf16.mxu0 %v2579
    %7243 = vmatpush1.bf16.msra.mxu0 %v2578
    %7244 = vmatprep.subr.bf16.mxu0 %v2595
    %7245 = vmatpush1.bf16.msra.mxu0 %v2594
    %7246 = vmatprep.subr.bf16.mxu0 %v2611
    %7247 = vmatpush1.bf16.msra.mxu0 %v2610
    %7248 = vmatprep.subr.bf16.mxu0 %v2627
    %7249 = vmatpush1.bf16.msra.mxu0 %v2626
    %7250 = vmatprep.subr.bf16.mxu0 %v2643
    %7251 = vmatpush1.bf16.msra.mxu0 %v2642
    %7252 = vmatprep.subr.bf16.mxu0 %v2659
    %7253 = vmatpush1.bf16.msra.mxu0 %v2658
    %7254 = vmatprep.subr.bf16.mxu0 %v2675
    %7255 = vmatpush1.bf16.msra.mxu0 %v2674
    %7256 = vmatprep.subr.bf16.mxu0 %v2691
    %7257 = vmatpush1.bf16.msra.mxu0 %v2690
    %7258 = vmatprep.subr.bf16.mxu0 %v2707
    %7259 = vmatpush1.bf16.msra.mxu0 %v2706
    %7260 = vmatprep.subr.bf16.mxu0 %v2723
    %7261 = vmatpush1.bf16.msra.mxu0 %v2722
    %7262 = vmatprep.subr.bf16.mxu0 %v2739
    %7263 = vmatpush1.bf16.msra.mxu0 %v2738
    %7264 = vmatprep.subr.bf16.mxu0 %v2755
    %7265 = vmatpush1.bf16.msra.mxu0 %v2754
    %7266 = vmatprep.subr.bf16.mxu0 %v2771
    %7267 = vmatpush1.bf16.msra.mxu0 %v2770
    %7268 = vmatprep.subr.bf16.mxu0 %v2787
    %7269 = vmatpush1.bf16.msra.mxu0 %v2786
    %7270 = vmatprep.mubr.bf16.mxu0 %v6907
    %7271 = vmatmul.mubr.bf16.gmra.mrb[0].mxu0 %v6906
    %v7272 = vpop.f32.mrb[0].mxu0
    %v7273 = vadd.f32 0.0, %v7272
    %v7274 = vpop.f32.mrb[0].mxu0
    %v7275 = vadd.f32 0.0, %v7274
    %v7276 = vpop.f32.mrb[0].mxu0
    %v7277 = vpop.f32.mrb[0].mxu0
    %7278 = vdwg.mxu0
    %7279 = vmatprep.subr.bf16.mxu0 %v2803
    %7280 = vmatpush1.bf16.msra.mxu0 %v2802
    %7281 = vmatprep.subr.bf16.mxu0 %v2819
    %7282 = vmatpush1.bf16.msra.mxu0 %v2818
    %7283 = vmatprep.subr.bf16.mxu0 %v2835
    %7284 = vmatpush1.bf16.msra.mxu0 %v2834
    %7285 = vmatprep.subr.bf16.mxu0 %v2851
    %7286 = vmatpush1.bf16.msra.mxu0 %v2850
    %7287 = vmatprep.subr.bf16.mxu0 %v2867
    %7288 = vmatpush1.bf16.msra.mxu0 %v2866
    %7289 = vmatprep.subr.bf16.mxu0 %v2883
    %7290 = vmatpush1.bf16.msra.mxu0 %v2882
    %7291 = vmatprep.subr.bf16.mxu0 %v2899
    %7292 = vmatpush1.bf16.msra.mxu0 %v2898
    %7293 = vmatprep.subr.bf16.mxu0 %v2915
    %7294 = vmatpush1.bf16.msra.mxu0 %v2914
    %7295 = vmatprep.subr.bf16.mxu0 %v2931
    %7296 = vmatpush1.bf16.msra.mxu0 %v2930
    %7297 = vmatprep.subr.bf16.mxu0 %v2947
    %7298 = vmatpush1.bf16.msra.mxu0 %v2946
    %7299 = vmatprep.subr.bf16.mxu0 %v2963
    %7300 = vmatpush1.bf16.msra.mxu0 %v2962
    %7301 = vmatprep.subr.bf16.mxu0 %v2979
    %7302 = vmatpush1.bf16.msra.mxu0 %v2978
    %7303 = vmatprep.subr.bf16.mxu0 %v2995
    %7304 = vmatpush1.bf16.msra.mxu0 %v2994
    %7305 = vmatprep.subr.bf16.mxu0 %v3011
    %7306 = vmatpush1.bf16.msra.mxu0 %v3010
    %7307 = vmatprep.subr.bf16.mxu0 %v3027
    %7308 = vmatpush1.bf16.msra.mxu0 %v3026
    %7309 = vmatprep.subr.bf16.mxu0 %v3043
    %7310 = vmatpush1.bf16.msra.mxu0 %v3042
    %7311 = vmatprep.mubr.bf16.mxu0 %v6909
    %7312 = vmatmul.mubr.bf16.gmra.mrb[0].mxu0 %v6908
    %v7313 = vpop.f32.mrb[0].mxu0
    %v7314 = vadd.f32 %v7273, %v7313
    %v7315 = vpop.f32.mrb[0].mxu0
    %v7316 = vadd.f32 %v7275, %v7315
    %v7317 = vpop.f32.mrb[0].mxu0
    %v7318 = vpop.f32.mrb[0].mxu0
    %7319 = vdwg.mxu0
    %7320 = vmatprep.subr.bf16.mxu0 %v2549
    %7321 = vmatpush1.bf16.msra.mxu0 %v2548
    %7322 = vmatprep.subr.bf16.mxu0 %v2565
    %7323 = vmatpush1.bf16.msra.mxu0 %v2564
    %7324 = vmatprep.subr.bf16.mxu0 %v2581
    %7325 = vmatpush1.bf16.msra.mxu0 %v2580
    %7326 = vmatprep.subr.bf16.mxu0 %v2597
    %7327 = vmatpush1.bf16.msra.mxu0 %v2596
    %7328 = vmatprep.subr.bf16.mxu0 %v2613
    %7329 = vmatpush1.bf16.msra.mxu0 %v2612
    %7330 = vmatprep.subr.bf16.mxu0 %v2629
    %7331 = vmatpush1.bf16.msra.mxu0 %v2628
    %7332 = vmatprep.subr.bf16.mxu0 %v2645
    %7333 = vmatpush1.bf16.msra.mxu0 %v2644
    %7334 = vmatprep.subr.bf16.mxu0 %v2661
    %7335 = vmatpush1.bf16.msra.mxu0 %v2660
    %7336 = vmatprep.subr.bf16.mxu0 %v2677
    %7337 = vmatpush1.bf16.msra.mxu0 %v2676
    %7338 = vmatprep.subr.bf16.mxu0 %v2693
    %7339 = vmatpush1.bf16.msra.mxu0 %v2692
    %7340 = vmatprep.subr.bf16.mxu0 %v2709
    %7341 = vmatpush1.bf16.msra.mxu0 %v2708
    %7342 = vmatprep.subr.bf16.mxu0 %v2725
    %7343 = vmatpush1.bf16.msra.mxu0 %v2724
    %7344 = vmatprep.subr.bf16.mxu0 %v2741
    %7345 = vmatpush1.bf16.msra.mxu0 %v2740
    %7346 = vmatprep.subr.bf16.mxu0 %v2757
    %7347 = vmatpush1.bf16.msra.mxu0 %v2756
    %7348 = vmatprep.subr.bf16.mxu0 %v2773
    %7349 = vmatpush1.bf16.msra.mxu0 %v2772
    %7350 = vmatprep.subr.bf16.mxu0 %v2789
    %7351 = vmatpush1.bf16.msra.mxu0 %v2788
    %7352 = vmatprep.mubr.bf16.mxu0 %v6907
    %7353 = vmatmul.mubr.bf16.gmra.mrb[0].mxu0 %v6906
    %v7354 = vpop.f32.mrb[0].mxu0
    %v7355 = vadd.f32 0.0, %v7354
    %v7356 = vpop.f32.mrb[0].mxu0
    %v7357 = vadd.f32 0.0, %v7356
    %v7358 = vpop.f32.mrb[0].mxu0
    %v7359 = vpop.f32.mrb[0].mxu0
    %7360 = vdwg.mxu0
    %7361 = vmatprep.subr.bf16.mxu0 %v2805
    %7362 = vmatpush1.bf16.msra.mxu0 %v2804
    %7363 = vmatprep.subr.bf16.mxu0 %v2821
    %7364 = vmatpush1.bf16.msra.mxu0 %v2820
    %7365 = vmatprep.subr.bf16.mxu0 %v2837
    %7366 = vmatpush1.bf16.msra.mxu0 %v2836
    %7367 = vmatprep.subr.bf16.mxu0 %v2853
    %7368 = vmatpush1.bf16.msra.mxu0 %v2852
    %7369 = vmatprep.subr.bf16.mxu0 %v2869
    %7370 = vmatpush1.bf16.msra.mxu0 %v2868
    %7371 = vmatprep.subr.bf16.mxu0 %v2885
    %7372 = vmatpush1.bf16.msra.mxu0 %v2884
    %7373 = vmatprep.subr.bf16.mxu0 %v2901
    %7374 = vmatpush1.bf16.msra.mxu0 %v2900
    %7375 = vmatprep.subr.bf16.mxu0 %v2917
    %7376 = vmatpush1.bf16.msra.mxu0 %v2916
    %7377 = vmatprep.subr.bf16.mxu0 %v2933
    %7378 = vmatpush1.bf16.msra.mxu0 %v2932
    %7379 = vmatprep.subr.bf16.mxu0 %v2949
    %7380 = vmatpush1.bf16.msra.mxu0 %v2948
    %7381 = vmatprep.subr.bf16.mxu0 %v2965
    %7382 = vmatpush1.bf16.msra.mxu0 %v2964
    %7383 = vmatprep.subr.bf16.mxu0 %v2981
    %7384 = vmatpush1.bf16.msra.mxu0 %v2980
    %7385 = vmatprep.subr.bf16.mxu0 %v2997
    %7386 = vmatpush1.bf16.msra.mxu0 %v2996
    %7387 = vmatprep.subr.bf16.mxu0 %v3013
    %7388 = vmatpush1.bf16.msra.mxu0 %v3012
    %7389 = vmatprep.subr.bf16.mxu0 %v3029
    %7390 = vmatpush1.bf16.msra.mxu0 %v3028
    %7391 = vmatprep.subr.bf16.mxu0 %v3045
    %7392 = vmatpush1.bf16.msra.mxu0 %v3044
    %7393 = vmatprep.mubr.bf16.mxu0 %v6909
    %7394 = vmatmul.mubr.bf16.gmra.mrb[0].mxu0 %v6908
    %v7395 = vpop.f32.mrb[0].mxu0
    %v7396 = vadd.f32 %v7355, %v7395
    %v7397 = vpop.f32.mrb[0].mxu0
    %v7398 = vadd.f32 %v7357, %v7397
    %v7399 = vpop.f32.mrb[0].mxu0
    %v7400 = vpop.f32.mrb[0].mxu0
    %7401 = vdwg.mxu0
    %7402 = vmatprep.subr.bf16.mxu0 %v2551
    %7403 = vmatpush1.bf16.msra.mxu0 %v2550
    %7404 = vmatprep.subr.bf16.mxu0 %v2567
    %7405 = vmatpush1.bf16.msra.mxu0 %v2566
    %7406 = vmatprep.subr.bf16.mxu0 %v2583
    %7407 = vmatpush1.bf16.msra.mxu0 %v2582
    %7408 = vmatprep.subr.bf16.mxu0 %v2599
    %7409 = vmatpush1.bf16.msra.mxu0 %v2598
    %7410 = vmatprep.subr.bf16.mxu0 %v2615
    %7411 = vmatpush1.bf16.msra.mxu0 %v2614
    %7412 = vmatprep.subr.bf16.mxu0 %v2631
    %7413 = vmatpush1.bf16.msra.mxu0 %v2630
    %7414 = vmatprep.subr.bf16.mxu0 %v2647
    %7415 = vmatpush1.bf16.msra.mxu0 %v2646
    %7416 = vmatprep.subr.bf16.mxu0 %v2663
    %7417 = vmatpush1.bf16.msra.mxu0 %v2662
    %7418 = vmatprep.subr.bf16.mxu0 %v2679
    %7419 = vmatpush1.bf16.msra.mxu0 %v2678
    %7420 = vmatprep.subr.bf16.mxu0 %v2695
    %7421 = vmatpush1.bf16.msra.mxu0 %v2694
    %7422 = vmatprep.subr.bf16.mxu0 %v2711
    %7423 = vmatpush1.bf16.msra.mxu0 %v2710
    %7424 = vmatprep.subr.bf16.mxu0 %v2727
    %7425 = vmatpush1.bf16.msra.mxu0 %v2726
    %7426 = vmatprep.subr.bf16.mxu0 %v2743
    %7427 = vmatpush1.bf16.msra.mxu0 %v2742
    %7428 = vmatprep.subr.bf16.mxu0 %v2759
    %7429 = vmatpush1.bf16.msra.mxu0 %v2758
    %7430 = vmatprep.subr.bf16.mxu0 %v2775
    %7431 = vmatpush1.bf16.msra.mxu0 %v2774
    %7432 = vmatprep.subr.bf16.mxu0 %v2791
    %7433 = vmatpush1.bf16.msra.mxu0 %v2790
    %7434 = vmatprep.mubr.bf16.mxu0 %v6907
    %7435 = vmatmul.mubr.bf16.gmra.mrb[0].mxu0 %v6906
    %v7436 = vpop.f32.mrb[0].mxu0
    %v7437 = vadd.f32 0.0, %v7436
    %v7438 = vpop.f32.mrb[0].mxu0
    %v7439 = vadd.f32 0.0, %v7438
    %v7440 = vpop.f32.mrb[0].mxu0
    %v7441 = vpop.f32.mrb[0].mxu0
    %7442 = vdwg.mxu0
    %7443 = vmatprep.subr.bf16.mxu0 %v2807
    %7444 = vmatpush1.bf16.msra.mxu0 %v2806
    %7445 = vmatprep.subr.bf16.mxu0 %v2823
    %7446 = vmatpush1.bf16.msra.mxu0 %v2822
    %7447 = vmatprep.subr.bf16.mxu0 %v2839
    %7448 = vmatpush1.bf16.msra.mxu0 %v2838
    %7449 = vmatprep.subr.bf16.mxu0 %v2855
    %7450 = vmatpush1.bf16.msra.mxu0 %v2854
    %7451 = vmatprep.subr.bf16.mxu0 %v2871
    %7452 = vmatpush1.bf16.msra.mxu0 %v2870
    %7453 = vmatprep.subr.bf16.mxu0 %v2887
    %7454 = vmatpush1.bf16.msra.mxu0 %v2886
    %7455 = vmatprep.subr.bf16.mxu0 %v2903
    %7456 = vmatpush1.bf16.msra.mxu0 %v2902
    %7457 = vmatprep.subr.bf16.mxu0 %v2919
    %7458 = vmatpush1.bf16.msra.mxu0 %v2918
    %7459 = vmatprep.subr.bf16.mxu0 %v2935
    %7460 = vmatpush1.bf16.msra.mxu0 %v2934
    %7461 = vmatprep.subr.bf16.mxu0 %v2951
    %7462 = vmatpush1.bf16.msra.mxu0 %v2950
    %7463 = vmatprep.subr.bf16.mxu0 %v2967
    %7464 = vmatpush1.bf16.msra.mxu0 %v2966
    %7465 = vmatprep.subr.bf16.mxu0 %v2983
    %7466 = vmatpush1.bf16.msra.mxu0 %v2982
    %7467 = vmatprep.subr.bf16.mxu0 %v2999
    %7468 = vmatpush1.bf16.msra.mxu0 %v2998
    %7469 = vmatprep.subr.bf16.mxu0 %v3015
    %7470 = vmatpush1.bf16.msra.mxu0 %v3014
    %7471 = vmatprep.subr.bf16.mxu0 %v3031
    %7472 = vmatpush1.bf16.msra.mxu0 %v3030
    %7473 = vmatprep.subr.bf16.mxu0 %v3047
    %7474 = vmatpush1.bf16.msra.mxu0 %v3046
    %7475 = vmatprep.mubr.bf16.mxu0 %v6909
    %7476 = vmatmul.mubr.bf16.gmra.mrb[0].mxu0 %v6908
    %v7477 = vpop.f32.mrb[0].mxu0
    %v7478 = vadd.f32 %v7437, %v7477
    %v7479 = vpop.f32.mrb[0].mxu0
    %v7480 = vadd.f32 %v7439, %v7479
    %v7481 = vpop.f32.mrb[0].mxu0
    %v7482 = vpop.f32.mrb[0].mxu0
    %7483 = vdwg.mxu0
    %7484 = vmatprep.subr.bf16.mxu0 %v2553
    %7485 = vmatpush1.bf16.msra.mxu0 %v2552
    %7486 = vmatprep.subr.bf16.mxu0 %v2569
    %7487 = vmatpush1.bf16.msra.mxu0 %v2568
    %7488 = vmatprep.subr.bf16.mxu0 %v2585
    %7489 = vmatpush1.bf16.msra.mxu0 %v2584
    %7490 = vmatprep.subr.bf16.mxu0 %v2601
    %7491 = vmatpush1.bf16.msra.mxu0 %v2600
    %7492 = vmatprep.subr.bf16.mxu0 %v2617
    %7493 = vmatpush1.bf16.msra.mxu0 %v2616
    %7494 = vmatprep.subr.bf16.mxu0 %v2633
    %7495 = vmatpush1.bf16.msra.mxu0 %v2632
    %7496 = vmatprep.subr.bf16.mxu0 %v2649
    %7497 = vmatpush1.bf16.msra.mxu0 %v2648
    %7498 = vmatprep.subr.bf16.mxu0 %v2665
    %7499 = vmatpush1.bf16.msra.mxu0 %v2664
    %7500 = vmatprep.subr.bf16.mxu0 %v2681
    %7501 = vmatpush1.bf16.msra.mxu0 %v2680
    %7502 = vmatprep.subr.bf16.mxu0 %v2697
    %7503 = vmatpush1.bf16.msra.mxu0 %v2696
    %7504 = vmatprep.subr.bf16.mxu0 %v2713
    %7505 = vmatpush1.bf16.msra.mxu0 %v2712
    %7506 = vmatprep.subr.bf16.mxu0 %v2729
    %7507 = vmatpush1.bf16.msra.mxu0 %v2728
    %7508 = vmatprep.subr.bf16.mxu0 %v2745
    %7509 = vmatpush1.bf16.msra.mxu0 %v2744
    %7510 = vmatprep.subr.bf16.mxu0 %v2761
    %7511 = vmatpush1.bf16.msra.mxu0 %v2760
    %7512 = vmatprep.subr.bf16.mxu0 %v2777
    %7513 = vmatpush1.bf16.msra.mxu0 %v2776
    %7514 = vmatprep.subr.bf16.mxu0 %v2793
    %7515 = vmatpush1.bf16.msra.mxu0 %v2792
    %7516 = vmatprep.mubr.bf16.mxu0 %v6907
    %7517 = vmatmul.mubr.bf16.gmra.mrb[0].mxu0 %v6906
    %v7518 = vpop.f32.mrb[0].mxu0
    %v7519 = vadd.f32 0.0, %v7518
    %v7520 = vpop.f32.mrb[0].mxu0
    %v7521 = vadd.f32 0.0, %v7520
    %v7522 = vpop.f32.mrb[0].mxu0
    %v7523 = vpop.f32.mrb[0].mxu0
    %7524 = vdwg.mxu0
    %7525 = vmatprep.subr.bf16.mxu0 %v2809
    %7526 = vmatpush1.bf16.msra.mxu0 %v2808
    %7527 = vmatprep.subr.bf16.mxu0 %v2825
    %7528 = vmatpush1.bf16.msra.mxu0 %v2824
    %7529 = vmatprep.subr.bf16.mxu0 %v2841
    %7530 = vmatpush1.bf16.msra.mxu0 %v2840
    %7531 = vmatprep.subr.bf16.mxu0 %v2857
    %7532 = vmatpush1.bf16.msra.mxu0 %v2856
    %7533 = vmatprep.subr.bf16.mxu0 %v2873
    %7534 = vmatpush1.bf16.msra.mxu0 %v2872
    %7535 = vmatprep.subr.bf16.mxu0 %v2889
    %7536 = vmatpush1.bf16.msra.mxu0 %v2888
    %7537 = vmatprep.subr.bf16.mxu0 %v2905
    %7538 = vmatpush1.bf16.msra.mxu0 %v2904
    %7539 = vmatprep.subr.bf16.mxu0 %v2921
    %7540 = vmatpush1.bf16.msra.mxu0 %v2920
    %7541 = vmatprep.subr.bf16.mxu0 %v2937
    %7542 = vmatpush1.bf16.msra.mxu0 %v2936
    %7543 = vmatprep.subr.bf16.mxu0 %v2953
    %7544 = vmatpush1.bf16.msra.mxu0 %v2952
    %7545 = vmatprep.subr.bf16.mxu0 %v2969
    %7546 = vmatpush1.bf16.msra.mxu0 %v2968
    %7547 = vmatprep.subr.bf16.mxu0 %v2985
    %7548 = vmatpush1.bf16.msra.mxu0 %v2984
    %7549 = vmatprep.subr.bf16.mxu0 %v3001
    %7550 = vmatpush1.bf16.msra.mxu0 %v3000
    %7551 = vmatprep.subr.bf16.mxu0 %v3017
    %7552 = vmatpush1.bf16.msra.mxu0 %v3016
    %7553 = vmatprep.subr.bf16.mxu0 %v3033
    %7554 = vmatpush1.bf16.msra.mxu0 %v3032
    %7555 = vmatprep.subr.bf16.mxu0 %v3049
    %7556 = vmatpush1.bf16.msra.mxu0 %v3048
    %7557 = vmatprep.mubr.bf16.mxu0 %v6909
    %7558 = vmatmul.mubr.bf16.gmra.mrb[0].mxu0 %v6908
    %v7559 = vpop.f32.mrb[0].mxu0
    %v7560 = vadd.f32 %v7519, %v7559
    %v7561 = vpop.f32.mrb[0].mxu0
    %v7562 = vadd.f32 %v7521, %v7561
    %v7563 = vpop.f32.mrb[0].mxu0
    %v7564 = vpop.f32.mrb[0].mxu0
    %7565 = vdwg.mxu0
    %v7566 = vadd.f32 %v1857, %v6986
    %v7567 = vadd.f32 %v1859, %v6988
    %v7568 = vadd.f32 %v1930, %v7068
    %v7569 = vadd.f32 %v1932, %v7070
    %v7570 = vadd.f32 %v2003, %v7150
    %v7571 = vadd.f32 %v2005, %v7152
    %v7572 = vadd.f32 %v2076, %v7232
    %v7573 = vadd.f32 %v2078, %v7234
    %v7574 = vadd.f32 %v2149, %v7314
    %v7575 = vadd.f32 %v2151, %v7316
    %v7576 = vadd.f32 %v2222, %v7396
    %v7577 = vadd.f32 %v2224, %v7398
    %v7578 = vadd.f32 %v2295, %v7478
    %v7579 = vadd.f32 %v2297, %v7480
    %v7580 = vadd.f32 %v2368, %v7560
    %v7581 = vadd.f32 %v2370, %v7562
    %v7582 = vxor.u32 %v7566, 2147483648
    %v7583 = vxor.u32 %v7567, 2147483648
    %v7584 = vxor.u32 %v7568, 2147483648
    %v7585 = vxor.u32 %v7569, 2147483648
    %v7586 = vmul.f32 %v7582, 1.442695
    %v7587 = vpow.pop %v7586
    %v7588 = vmul.f32 %v7583, 1.442695
    %v7589 = vpow.pop %v7588
    %v7590 = vmul.f32 %v7584, 1.442695
    %v7591 = vpow.pop %v7590
    %v7592 = vmul.f32 %v7585, 1.442695
    %v7593 = vpow.pop %v7592
    %v7594 = vadd.f32 %v7587, 1.0
    %v7595 = vadd.f32 %v7589, 1.0
    %v7596 = vadd.f32 %v7591, 1.0
    %v7597 = vadd.f32 %v7593, 1.0
    %v7598 = vrcp.pop %v7594
    %v7599 = vmul.f32 1.0, %v7598
    %v7600 = vrcp.pop %v7595
    %v7601 = vmul.f32 1.0, %v7600
    %v7602 = vrcp.pop %v7596
    %v7603 = vmul.f32 1.0, %v7602
    %v7604 = vrcp.pop %v7597
    %v7605 = vmul.f32 1.0, %v7604
    %v7606 = vxor.u32 %v7570, 2147483648
    %v7607 = vxor.u32 %v7571, 2147483648
    %v7608 = vxor.u32 %v7572, 2147483648
    %v7609 = vxor.u32 %v7573, 2147483648
    %v7610 = vmul.f32 %v7606, 1.442695
    %v7611 = vpow.pop %v7610
    %v7612 = vmul.f32 %v7607, 1.442695
    %v7613 = vpow.pop %v7612
    %v7614 = vmul.f32 %v7608, 1.442695
    %v7615 = vpow.pop %v7614
    %v7616 = vmul.f32 %v7609, 1.442695
    %v7617 = vpow.pop %v7616
    %v7618 = vadd.f32 %v7611, 1.0
    %v7619 = vadd.f32 %v7613, 1.0
    %v7620 = vadd.f32 %v7615, 1.0
    %v7621 = vadd.f32 %v7617, 1.0
    %v7622 = vrcp.pop %v7618
    %v7623 = vmul.f32 1.0, %v7622
    %v7624 = vrcp.pop %v7619
    %v7625 = vmul.f32 1.0, %v7624
    %v7626 = vrcp.pop %v7620
    %v7627 = vmul.f32 1.0, %v7626
    %v7628 = vrcp.pop %v7621
    %v7629 = vmul.f32 1.0, %v7628
    %v7630 = vtanh.pop %v7574
    %v7631 = vtanh.pop %v7575
    %v7632 = vtanh.pop %v7576
    %v7633 = vtanh.pop %v7577
    %v7634 = vxor.u32 %v7578, 2147483648
    %v7635 = vxor.u32 %v7579, 2147483648
    %v7636 = vxor.u32 %v7580, 2147483648
    %v7637 = vxor.u32 %v7581, 2147483648
    %v7638 = vmul.f32 %v7634, 1.442695
    %v7639 = vpow.pop %v7638
    %v7640 = vmul.f32 %v7635, 1.442695
    %v7641 = vpow.pop %v7640
    %v7642 = vmul.f32 %v7636, 1.442695
    %v7643 = vpow.pop %v7642
    %v7644 = vmul.f32 %v7637, 1.442695
    %v7645 = vpow.pop %v7644
    %v7646 = vadd.f32 %v7639, 1.0
    %v7647 = vadd.f32 %v7641, 1.0
    %v7648 = vadd.f32 %v7643, 1.0
    %v7649 = vadd.f32 %v7645, 1.0
    %v7650 = vrcp.pop %v7646
    %v7651 = vmul.f32 1.0, %v7650
    %v7652 = vrcp.pop %v7647
    %v7653 = vmul.f32 1.0, %v7652
    %v7654 = vrcp.pop %v7648
    %v7655 = vmul.f32 1.0, %v7654
    %v7656 = vrcp.pop %v7649
    %v7657 = vmul.f32 1.0, %v7656
    %v7658 = vmul.f32 %v7623, %v6894
    %v7659 = vmul.f32 %v7625, %v6895
    %v7660 = vmul.f32 %v7627, %v6896
    %v7661 = vmul.f32 %v7629, %v6897
    %v7662 = vmul.f32 %v7599, %v7630
    %v7663 = vmul.f32 %v7601, %v7631
    %v7664 = vmul.f32 %v7603, %v7632
    %v7665 = vmul.f32 %v7605, %v7633
    %v7666 = vadd.f32 %v7658, %v7662
    %v7667 = vadd.f32 %v7659, %v7663
    %v7668 = vadd.f32 %v7660, %v7664
    %v7669 = vadd.f32 %v7661, %v7665
    %v7670 = vtanh.pop %v7666
    %v7671 = vtanh.pop %v7667
    %v7672 = vtanh.pop %v7668
    %v7673 = vtanh.pop %v7669
    %v7674 = vmul.f32 %v7651, %v7670
    %v7675 = vmul.f32 %v7653, %v7671
    %v7676 = vmul.f32 %v7655, %v7672
    %v7677 = vmul.f32 %v7657, %v7673
    %v7678 = vpack.c.bf16 %v7674, %v7674
    %v7679 = vpack.c.bf16 %v7675, %v7675
    %v7680 = vpack.c.bf16 %v7676, %v7676
    %v7681 = vpack.c.bf16 %v7677, %v7677
    %7682 = vmatprep.subr.bf16.mxu0 %v2539
    %7683 = vmatpush1.bf16.msra.mxu0 %v2538
    %7684 = vmatprep.subr.bf16.mxu0 %v2555
    %7685 = vmatpush1.bf16.msra.mxu0 %v2554
    %7686 = vmatprep.subr.bf16.mxu0 %v2571
    %7687 = vmatpush1.bf16.msra.mxu0 %v2570
    %7688 = vmatprep.subr.bf16.mxu0 %v2587
    %7689 = vmatpush1.bf16.msra.mxu0 %v2586
    %7690 = vmatprep.subr.bf16.mxu0 %v2603
    %7691 = vmatpush1.bf16.msra.mxu0 %v2602
    %7692 = vmatprep.subr.bf16.mxu0 %v2619
    %7693 = vmatpush1.bf16.msra.mxu0 %v2618
    %7694 = vmatprep.subr.bf16.mxu0 %v2635
    %7695 = vmatpush1.bf16.msra.mxu0 %v2634
    %7696 = vmatprep.subr.bf16.mxu0 %v2651
    %7697 = vmatpush1.bf16.msra.mxu0 %v2650
    %7698 = vmatprep.subr.bf16.mxu0 %v2667
    %7699 = vmatpush1.bf16.msra.mxu0 %v2666
    %7700 = vmatprep.subr.bf16.mxu0 %v2683
    %7701 = vmatpush1.bf16.msra.mxu0 %v2682
    %7702 = vmatprep.subr.bf16.mxu0 %v2699
    %7703 = vmatpush1.bf16.msra.mxu0 %v2698
    %7704 = vmatprep.subr.bf16.mxu0 %v2715
    %7705 = vmatpush1.bf16.msra.mxu0 %v2714
    %7706 = vmatprep.subr.bf16.mxu0 %v2731
    %7707 = vmatpush1.bf16.msra.mxu0 %v2730
    %7708 = vmatprep.subr.bf16.mxu0 %v2747
    %7709 = vmatpush1.bf16.msra.mxu0 %v2746
    %7710 = vmatprep.subr.bf16.mxu0 %v2763
    %7711 = vmatpush1.bf16.msra.mxu0 %v2762
    %7712 = vmatprep.subr.bf16.mxu0 %v2779
    %7713 = vmatpush1.bf16.msra.mxu0 %v2778
    %7714 = vmatprep.mubr.bf16.mxu0 %v7679
    %7715 = vmatmul.mubr.bf16.gmra.mrb[0].mxu0 %v7678
    %v7716 = vpop.f32.mrb[0].mxu0
    %v7717 = vadd.f32 0.0, %v7716
    %v7718 = vpop.f32.mrb[0].mxu0
    %v7719 = vadd.f32 0.0, %v7718
    %v7720 = vpop.f32.mrb[0].mxu0
    %v7721 = vpop.f32.mrb[0].mxu0
    %7722 = vdwg.mxu0
    %7723 = vmatprep.subr.bf16.mxu0 %v2795
    %7724 = vmatpush1.bf16.msra.mxu0 %v2794
    %7725 = vmatprep.subr.bf16.mxu0 %v2811
    %7726 = vmatpush1.bf16.msra.mxu0 %v2810
    %7727 = vmatprep.subr.bf16.mxu0 %v2827
    %7728 = vmatpush1.bf16.msra.mxu0 %v2826
    %7729 = vmatprep.subr.bf16.mxu0 %v2843
    %7730 = vmatpush1.bf16.msra.mxu0 %v2842
    %7731 = vmatprep.subr.bf16.mxu0 %v2859
    %7732 = vmatpush1.bf16.msra.mxu0 %v2858
    %7733 = vmatprep.subr.bf16.mxu0 %v2875
    %7734 = vmatpush1.bf16.msra.mxu0 %v2874
    %7735 = vmatprep.subr.bf16.mxu0 %v2891
    %7736 = vmatpush1.bf16.msra.mxu0 %v2890
    %7737 = vmatprep.subr.bf16.mxu0 %v2907
    %7738 = vmatpush1.bf16.msra.mxu0 %v2906
    %7739 = vmatprep.subr.bf16.mxu0 %v2923
    %7740 = vmatpush1.bf16.msra.mxu0 %v2922
    %7741 = vmatprep.subr.bf16.mxu0 %v2939
    %7742 = vmatpush1.bf16.msra.mxu0 %v2938
    %7743 = vmatprep.subr.bf16.mxu0 %v2955
    %7744 = vmatpush1.bf16.msra.mxu0 %v2954
    %7745 = vmatprep.subr.bf16.mxu0 %v2971
    %7746 = vmatpush1.bf16.msra.mxu0 %v2970
    %7747 = vmatprep.subr.bf16.mxu0 %v2987
    %7748 = vmatpush1.bf16.msra.mxu0 %v2986
    %7749 = vmatprep.subr.bf16.mxu0 %v3003
    %7750 = vmatpush1.bf16.msra.mxu0 %v3002
    %7751 = vmatprep.subr.bf16.mxu0 %v3019
    %7752 = vmatpush1.bf16.msra.mxu0 %v3018
    %7753 = vmatprep.subr.bf16.mxu0 %v3035
    %7754 = vmatpush1.bf16.msra.mxu0 %v3034
    %7755 = vmatprep.mubr.bf16.mxu0 %v7681
    %7756 = vmatmul.mubr.bf16.gmra.mrb[0].mxu0 %v7680
    %v7757 = vpop.f32.mrb[0].mxu0
    %v7758 = vadd.f32 %v7717, %v7757
    %v7759 = vpop.f32.mrb[0].mxu0
    %v7760 = vadd.f32 %v7719, %v7759
    %v7761 = vpop.f32.mrb[0].mxu0
    %v7762 = vpop.f32.mrb[0].mxu0
    %7763 = vdwg.mxu0
    %7764 = vmatprep.subr.bf16.mxu0 %v2541
    %7765 = vmatpush1.bf16.msra.mxu0 %v2540
    %7766 = vmatprep.subr.bf16.mxu0 %v2557
    %7767 = vmatpush1.bf16.msra.mxu0 %v2556
    %7768 = vmatprep.subr.bf16.mxu0 %v2573
    %7769 = vmatpush1.bf16.msra.mxu0 %v2572
    %7770 = vmatprep.subr.bf16.mxu0 %v2589
    %7771 = vmatpush1.bf16.msra.mxu0 %v2588
    %7772 = vmatprep.subr.bf16.mxu0 %v2605
    %7773 = vmatpush1.bf16.msra.mxu0 %v2604
    %7774 = vmatprep.subr.bf16.mxu0 %v2621
    %7775 = vmatpush1.bf16.msra.mxu0 %v2620
    %7776 = vmatprep.subr.bf16.mxu0 %v2637
    %7777 = vmatpush1.bf16.msra.mxu0 %v2636
    %7778 = vmatprep.subr.bf16.mxu0 %v2653
    %7779 = vmatpush1.bf16.msra.mxu0 %v2652
    %7780 = vmatprep.subr.bf16.mxu0 %v2669
    %7781 = vmatpush1.bf16.msra.mxu0 %v2668
    %7782 = vmatprep.subr.bf16.mxu0 %v2685
    %7783 = vmatpush1.bf16.msra.mxu0 %v2684
    %7784 = vmatprep.subr.bf16.mxu0 %v2701
    %7785 = vmatpush1.bf16.msra.mxu0 %v2700
    %7786 = vmatprep.subr.bf16.mxu0 %v2717
    %7787 = vmatpush1.bf16.msra.mxu0 %v2716
    %7788 = vmatprep.subr.bf16.mxu0 %v2733
    %7789 = vmatpush1.bf16.msra.mxu0 %v2732
    %7790 = vmatprep.subr.bf16.mxu0 %v2749
    %7791 = vmatpush1.bf16.msra.mxu0 %v2748
    %7792 = vmatprep.subr.bf16.mxu0 %v2765
    %7793 = vmatpush1.bf16.msra.mxu0 %v2764
    %7794 = vmatprep.subr.bf16.mxu0 %v2781
    %7795 = vmatpush1.bf16.msra.mxu0 %v2780
    %7796 = vmatprep.mubr.bf16.mxu0 %v7679
    %7797 = vmatmul.mubr.bf16.gmra.mrb[0].mxu0 %v7678
    %v7798 = vpop.f32.mrb[0].mxu0
    %v7799 = vadd.f32 0.0, %v7798
    %v7800 = vpop.f32.mrb[0].mxu0
    %v7801 = vadd.f32 0.0, %v7800
    %v7802 = vpop.f32.mrb[0].mxu0
    %v7803 = vpop.f32.mrb[0].mxu0
    %7804 = vdwg.mxu0
    %7805 = vmatprep.subr.bf16.mxu0 %v2797
    %7806 = vmatpush1.bf16.msra.mxu0 %v2796
    %7807 = vmatprep.subr.bf16.mxu0 %v2813
    %7808 = vmatpush1.bf16.msra.mxu0 %v2812
    %7809 = vmatprep.subr.bf16.mxu0 %v2829
    %7810 = vmatpush1.bf16.msra.mxu0 %v2828
    %7811 = vmatprep.subr.bf16.mxu0 %v2845
    %7812 = vmatpush1.bf16.msra.mxu0 %v2844
    %7813 = vmatprep.subr.bf16.mxu0 %v2861
    %7814 = vmatpush1.bf16.msra.mxu0 %v2860
    %7815 = vmatprep.subr.bf16.mxu0 %v2877
    %7816 = vmatpush1.bf16.msra.mxu0 %v2876
    %7817 = vmatprep.subr.bf16.mxu0 %v2893
    %7818 = vmatpush1.bf16.msra.mxu0 %v2892
    %7819 = vmatprep.subr.bf16.mxu0 %v2909
    %7820 = vmatpush1.bf16.msra.mxu0 %v2908
    %7821 = vmatprep.subr.bf16.mxu0 %v2925
    %7822 = vmatpush1.bf16.msra.mxu0 %v2924
    %7823 = vmatprep.subr.bf16.mxu0 %v2941
    %7824 = vmatpush1.bf16.msra.mxu0 %v2940
    %7825 = vmatprep.subr.bf16.mxu0 %v2957
    %7826 = vmatpush1.bf16.msra.mxu0 %v2956
    %7827 = vmatprep.subr.bf16.mxu0 %v2973
    %7828 = vmatpush1.bf16.msra.mxu0 %v2972
    %7829 = vmatprep.subr.bf16.mxu0 %v2989
    %7830 = vmatpush1.bf16.msra.mxu0 %v2988
    %7831 = vmatprep.subr.bf16.mxu0 %v3005
    %7832 = vmatpush1.bf16.msra.mxu0 %v3004
    %7833 = vmatprep.subr.bf16.mxu0 %v3021
    %7834 = vmatpush1.bf16.msra.mxu0 %v3020
    %7835 = vmatprep.subr.bf16.mxu0 %v3037
    %7836 = vmatpush1.bf16.msra.mxu0 %v3036
    %7837 = vmatprep.mubr.bf16.mxu0 %v7681
    %7838 = vmatmul.mubr.bf16.gmra.mrb[0].mxu0 %v7680
    %v7839 = vpop.f32.mrb[0].mxu0
    %v7840 = vadd.f32 %v7799, %v7839
    %v7841 = vpop.f32.mrb[0].mxu0
    %v7842 = vadd.f32 %v7801, %v7841
    %v7843 = vpop.f32.mrb[0].mxu0
    %v7844 = vpop.f32.mrb[0].mxu0
    %7845 = vdwg.mxu0
    %7846 = vmatprep.subr.bf16.mxu0 %v2543
    %7847 = vmatpush1.bf16.msra.mxu0 %v2542
    %7848 = vmatprep.subr.bf16.mxu0 %v2559
    %7849 = vmatpush1.bf16.msra.mxu0 %v2558
    %7850 = vmatprep.subr.bf16.mxu0 %v2575
    %7851 = vmatpush1.bf16.msra.mxu0 %v2574
    %7852 = vmatprep.subr.bf16.mxu0 %v2591
    %7853 = vmatpush1.bf16.msra.mxu0 %v2590
    %7854 = vmatprep.subr.bf16.mxu0 %v2607
    %7855 = vmatpush1.bf16.msra.mxu0 %v2606
    %7856 = vmatprep.subr.bf16.mxu0 %v2623
    %7857 = vmatpush1.bf16.msra.mxu0 %v2622
    %7858 = vmatprep.subr.bf16.mxu0 %v2639
    %7859 = vmatpush1.bf16.msra.mxu0 %v2638
    %7860 = vmatprep.subr.bf16.mxu0 %v2655
    %7861 = vmatpush1.bf16.msra.mxu0 %v2654
    %7862 = vmatprep.subr.bf16.mxu0 %v2671
    %7863 = vmatpush1.bf16.msra.mxu0 %v2670
    %7864 = vmatprep.subr.bf16.mxu0 %v2687
    %7865 = vmatpush1.bf16.msra.mxu0 %v2686
    %7866 = vmatprep.subr.bf16.mxu0 %v2703
    %7867 = vmatpush1.bf16.msra.mxu0 %v2702
    %7868 = vmatprep.subr.bf16.mxu0 %v2719
    %7869 = vmatpush1.bf16.msra.mxu0 %v2718
    %7870 = vmatprep.subr.bf16.mxu0 %v2735
    %7871 = vmatpush1.bf16.msra.mxu0 %v2734
    %7872 = vmatprep.subr.bf16.mxu0 %v2751
    %7873 = vmatpush1.bf16.msra.mxu0 %v2750
    %7874 = vmatprep.subr.bf16.mxu0 %v2767
    %7875 = vmatpush1.bf16.msra.mxu0 %v2766
    %7876 = vmatprep.subr.bf16.mxu0 %v2783
    %7877 = vmatpush1.bf16.msra.mxu0 %v2782
    %7878 = vmatprep.mubr.bf16.mxu0 %v7679
    %7879 = vmatmul.mubr.bf16.gmra.mrb[0].mxu0 %v7678
    %v7880 = vpop.f32.mrb[0].mxu0
    %v7881 = vadd.f32 0.0, %v7880
    %v7882 = vpop.f32.mrb[0].mxu0
    %v7883 = vadd.f32 0.0, %v7882
    %v7884 = vpop.f32.mrb[0].mxu0
    %v7885 = vpop.f32.mrb[0].mxu0
    %7886 = vdwg.mxu0
    %7887 = vmatprep.subr.bf16.mxu0 %v2799
    %7888 = vmatpush1.bf16.msra.mxu0 %v2798
    %7889 = vmatprep.subr.bf16.mxu0 %v2815
    %7890 = vmatpush1.bf16.msra.mxu0 %v2814
    %7891 = vmatprep.subr.bf16.mxu0 %v2831
    %7892 = vmatpush1.bf16.msra.mxu0 %v2830
    %7893 = vmatprep.subr.bf16.mxu0 %v2847
    %7894 = vmatpush1.bf16.msra.mxu0 %v2846
    %7895 = vmatprep.subr.bf16.mxu0 %v2863
    %7896 = vmatpush1.bf16.msra.mxu0 %v2862
    %7897 = vmatprep.subr.bf16.mxu0 %v2879
    %7898 = vmatpush1.bf16.msra.mxu0 %v2878
    %7899 = vmatprep.subr.bf16.mxu0 %v2895
    %7900 = vmatpush1.bf16.msra.mxu0 %v2894
    %7901 = vmatprep.subr.bf16.mxu0 %v2911
    %7902 = vmatpush1.bf16.msra.mxu0 %v2910
    %7903 = vmatprep.subr.bf16.mxu0 %v2927
    %7904 = vmatpush1.bf16.msra.mxu0 %v2926
    %7905 = vmatprep.subr.bf16.mxu0 %v2943
    %7906 = vmatpush1.bf16.msra.mxu0 %v2942
    %7907 = vmatprep.subr.bf16.mxu0 %v2959
    %7908 = vmatpush1.bf16.msra.mxu0 %v2958
    %7909 = vmatprep.subr.bf16.mxu0 %v2975
    %7910 = vmatpush1.bf16.msra.mxu0 %v2974
    %7911 = vmatprep.subr.bf16.mxu0 %v2991
    %7912 = vmatpush1.bf16.msra.mxu0 %v2990
    %7913 = vmatprep.subr.bf16.mxu0 %v3007
    %7914 = vmatpush1.bf16.msra.mxu0 %v3006
    %7915 = vmatprep.subr.bf16.mxu0 %v3023
    %7916 = vmatpush1.bf16.msra.mxu0 %v3022
    %7917 = vmatprep.subr.bf16.mxu0 %v3039
    %7918 = vmatpush1.bf16.msra.mxu0 %v3038
    %7919 = vmatprep.mubr.bf16.mxu0 %v7681
    %7920 = vmatmul.mubr.bf16.gmra.mrb[0].mxu0 %v7680
    %v7921 = vpop.f32.mrb[0].mxu0
    %v7922 = vadd.f32 %v7881, %v7921
    %v7923 = vpop.f32.mrb[0].mxu0
    %v7924 = vadd.f32 %v7883, %v7923
    %v7925 = vpop.f32.mrb[0].mxu0
    %v7926 = vpop.f32.mrb[0].mxu0
    %7927 = vdwg.mxu0
    %7928 = vmatprep.subr.bf16.mxu0 %v2545
    %7929 = vmatpush1.bf16.msra.mxu0 %v2544
    %7930 = vmatprep.subr.bf16.mxu0 %v2561
    %7931 = vmatpush1.bf16.msra.mxu0 %v2560
    %7932 = vmatprep.subr.bf16.mxu0 %v2577
    %7933 = vmatpush1.bf16.msra.mxu0 %v2576
    %7934 = vmatprep.subr.bf16.mxu0 %v2593
    %7935 = vmatpush1.bf16.msra.mxu0 %v2592
    %7936 = vmatprep.subr.bf16.mxu0 %v2609
    %7937 = vmatpush1.bf16.msra.mxu0 %v2608
    %7938 = vmatprep.subr.bf16.mxu0 %v2625
    %7939 = vmatpush1.bf16.msra.mxu0 %v2624
    %7940 = vmatprep.subr.bf16.mxu0 %v2641
    %7941 = vmatpush1.bf16.msra.mxu0 %v2640
    %7942 = vmatprep.subr.bf16.mxu0 %v2657
    %7943 = vmatpush1.bf16.msra.mxu0 %v2656
    %7944 = vmatprep.subr.bf16.mxu0 %v2673
    %7945 = vmatpush1.bf16.msra.mxu0 %v2672
    %7946 = vmatprep.subr.bf16.mxu0 %v2689
    %7947 = vmatpush1.bf16.msra.mxu0 %v2688
    %7948 = vmatprep.subr.bf16.mxu0 %v2705
    %7949 = vmatpush1.bf16.msra.mxu0 %v2704
    %7950 = vmatprep.subr.bf16.mxu0 %v2721
    %7951 = vmatpush1.bf16.msra.mxu0 %v2720
    %7952 = vmatprep.subr.bf16.mxu0 %v2737
    %7953 = vmatpush1.bf16.msra.mxu0 %v2736
    %7954 = vmatprep.subr.bf16.mxu0 %v2753
    %7955 = vmatpush1.bf16.msra.mxu0 %v2752
    %7956 = vmatprep.subr.bf16.mxu0 %v2769
    %7957 = vmatpush1.bf16.msra.mxu0 %v2768
    %7958 = vmatprep.subr.bf16.mxu0 %v2785
    %7959 = vmatpush1.bf16.msra.mxu0 %v2784
    %7960 = vmatprep.mubr.bf16.mxu0 %v7679
    %7961 = vmatmul.mubr.bf16.gmra.mrb[0].mxu0 %v7678
    %v7962 = vpop.f32.mrb[0].mxu0
    %v7963 = vadd.f32 0.0, %v7962
    %v7964 = vpop.f32.mrb[0].mxu0
    %v7965 = vadd.f32 0.0, %v7964
    %v7966 = vpop.f32.mrb[0].mxu0
    %v7967 = vpop.f32.mrb[0].mxu0
    %7968 = vdwg.mxu0
    %7969 = vmatprep.subr.bf16.mxu0 %v2801
    %7970 = vmatpush1.bf16.msra.mxu0 %v2800
    %7971 = vmatprep.subr.bf16.mxu0 %v2817
    %7972 = vmatpush1.bf16.msra.mxu0 %v2816
    %7973 = vmatprep.subr.bf16.mxu0 %v2833
    %7974 = vmatpush1.bf16.msra.mxu0 %v2832
    %7975 = vmatprep.subr.bf16.mxu0 %v2849
    %7976 = vmatpush1.bf16.msra.mxu0 %v2848
    %7977 = vmatprep.subr.bf16.mxu0 %v2865
    %7978 = vmatpush1.bf16.msra.mxu0 %v2864
    %7979 = vmatprep.subr.bf16.mxu0 %v2881
    %7980 = vmatpush1.bf16.msra.mxu0 %v2880
    %7981 = vmatprep.subr.bf16.mxu0 %v2897
    %7982 = vmatpush1.bf16.msra.mxu0 %v2896
    %7983 = vmatprep.subr.bf16.mxu0 %v2913
    %7984 = vmatpush1.bf16.msra.mxu0 %v2912
    %7985 = vmatprep.subr.bf16.mxu0 %v2929
    %7986 = vmatpush1.bf16.msra.mxu0 %v2928
    %7987 = vmatprep.subr.bf16.mxu0 %v2945
    %7988 = vmatpush1.bf16.msra.mxu0 %v2944
    %7989 = vmatprep.subr.bf16.mxu0 %v2961
    %7990 = vmatpush1.bf16.msra.mxu0 %v2960
    %7991 = vmatprep.subr.bf16.mxu0 %v2977
    %7992 = vmatpush1.bf16.msra.mxu0 %v2976
    %7993 = vmatprep.subr.bf16.mxu0 %v2993
    %7994 = vmatpush1.bf16.msra.mxu0 %v2992
    %7995 = vmatprep.subr.bf16.mxu0 %v3009
    %7996 = vmatpush1.bf16.msra.mxu0 %v3008
    %7997 = vmatprep.subr.bf16.mxu0 %v3025
    %7998 = vmatpush1.bf16.msra.mxu0 %v3024
    %7999 = vmatprep.subr.bf16.mxu0 %v3041
    %8000 = vmatpush1.bf16.msra.mxu0 %v3040
    %8001 = vmatprep.mubr.bf16.mxu0 %v7681
    %8002 = vmatmul.mubr.bf16.gmra.mrb[0].mxu0 %v7680
    %v8003 = vpop.f32.mrb[0].mxu0
    %v8004 = vadd.f32 %v7963, %v8003
    %v8005 = vpop.f32.mrb[0].mxu0
    %v8006 = vadd.f32 %v7965, %v8005
    %v8007 = vpop.f32.mrb[0].mxu0
    %v8008 = vpop.f32.mrb[0].mxu0
    %8009 = vdwg.mxu0
    %8010 = vmatprep.subr.bf16.mxu0 %v2547
    %8011 = vmatpush1.bf16.msra.mxu0 %v2546
    %8012 = vmatprep.subr.bf16.mxu0 %v2563
    %8013 = vmatpush1.bf16.msra.mxu0 %v2562
    %8014 = vmatprep.subr.bf16.mxu0 %v2579
    %8015 = vmatpush1.bf16.msra.mxu0 %v2578
    %8016 = vmatprep.subr.bf16.mxu0 %v2595
    %8017 = vmatpush1.bf16.msra.mxu0 %v2594
    %8018 = vmatprep.subr.bf16.mxu0 %v2611
    %8019 = vmatpush1.bf16.msra.mxu0 %v2610
    %8020 = vmatprep.subr.bf16.mxu0 %v2627
    %8021 = vmatpush1.bf16.msra.mxu0 %v2626
    %8022 = vmatprep.subr.bf16.mxu0 %v2643
    %8023 = vmatpush1.bf16.msra.mxu0 %v2642
    %8024 = vmatprep.subr.bf16.mxu0 %v2659
    %8025 = vmatpush1.bf16.msra.mxu0 %v2658
    %8026 = vmatprep.subr.bf16.mxu0 %v2675
    %8027 = vmatpush1.bf16.msra.mxu0 %v2674
    %8028 = vmatprep.subr.bf16.mxu0 %v2691
    %8029 = vmatpush1.bf16.msra.mxu0 %v2690
    %8030 = vmatprep.subr.bf16.mxu0 %v2707
    %8031 = vmatpush1.bf16.msra.mxu0 %v2706
    %8032 = vmatprep.subr.bf16.mxu0 %v2723
    %8033 = vmatpush1.bf16.msra.mxu0 %v2722
    %8034 = vmatprep.subr.bf16.mxu0 %v2739
    %8035 = vmatpush1.bf16.msra.mxu0 %v2738
    %8036 = vmatprep.subr.bf16.mxu0 %v2755
    %8037 = vmatpush1.bf16.msra.mxu0 %v2754
    %8038 = vmatprep.subr.bf16.mxu0 %v2771
    %8039 = vmatpush1.bf16.msra.mxu0 %v2770
    %8040 = vmatprep.subr.bf16.mxu0 %v2787
    %8041 = vmatpush1.bf16.msra.mxu0 %v2786
    %8042 = vmatprep.mubr.bf16.mxu0 %v7679
    %8043 = vmatmul.mubr.bf16.gmra.mrb[0].mxu0 %v7678
    %v8044 = vpop.f32.mrb[0].mxu0
    %v8045 = vadd.f32 0.0, %v8044
    %v8046 = vpop.f32.mrb[0].mxu0
    %v8047 = vadd.f32 0.0, %v8046
    %v8048 = vpop.f32.mrb[0].mxu0
    %v8049 = vpop.f32.mrb[0].mxu0
    %8050 = vdwg.mxu0
    %8051 = vmatprep.subr.bf16.mxu0 %v2803
    %8052 = vmatpush1.bf16.msra.mxu0 %v2802
    %8053 = vmatprep.subr.bf16.mxu0 %v2819
    %8054 = vmatpush1.bf16.msra.mxu0 %v2818
    %8055 = vmatprep.subr.bf16.mxu0 %v2835
    %8056 = vmatpush1.bf16.msra.mxu0 %v2834
    %8057 = vmatprep.subr.bf16.mxu0 %v2851
    %8058 = vmatpush1.bf16.msra.mxu0 %v2850
    %8059 = vmatprep.subr.bf16.mxu0 %v2867
    %8060 = vmatpush1.bf16.msra.mxu0 %v2866
    %8061 = vmatprep.subr.bf16.mxu0 %v2883
    %8062 = vmatpush1.bf16.msra.mxu0 %v2882
    %8063 = vmatprep.subr.bf16.mxu0 %v2899
    %8064 = vmatpush1.bf16.msra.mxu0 %v2898
    %8065 = vmatprep.subr.bf16.mxu0 %v2915
    %8066 = vmatpush1.bf16.msra.mxu0 %v2914
    %8067 = vmatprep.subr.bf16.mxu0 %v2931
    %8068 = vmatpush1.bf16.msra.mxu0 %v2930
    %8069 = vmatprep.subr.bf16.mxu0 %v2947
    %8070 = vmatpush1.bf16.msra.mxu0 %v2946
    %8071 = vmatprep.subr.bf16.mxu0 %v2963
    %8072 = vmatpush1.bf16.msra.mxu0 %v2962
    %8073 = vmatprep.subr.bf16.mxu0 %v2979
    %8074 = vmatpush1.bf16.msra.mxu0 %v2978
    %8075 = vmatprep.subr.bf16.mxu0 %v2995
    %8076 = vmatpush1.bf16.msra.mxu0 %v2994
    %8077 = vmatprep.subr.bf16.mxu0 %v3011
    %8078 = vmatpush1.bf16.msra.mxu0 %v3010
    %8079 = vmatprep.subr.bf16.mxu0 %v3027
    %8080 = vmatpush1.bf16.msra.mxu0 %v3026
    %8081 = vmatprep.subr.bf16.mxu0 %v3043
    %8082 = vmatpush1.bf16.msra.mxu0 %v3042
    %8083 = vmatprep.mubr.bf16.mxu0 %v7681
    %8084 = vmatmul.mubr.bf16.gmra.mrb[0].mxu0 %v7680
    %v8085 = vpop.f32.mrb[0].mxu0
    %v8086 = vadd.f32 %v8045, %v8085
    %v8087 = vpop.f32.mrb[0].mxu0
    %v8088 = vadd.f32 %v8047, %v8087
    %v8089 = vpop.f32.mrb[0].mxu0
    %v8090 = vpop.f32.mrb[0].mxu0
    %8091 = vdwg.mxu0
    %8092 = vmatprep.subr.bf16.mxu0 %v2549
    %8093 = vmatpush1.bf16.msra.mxu0 %v2548
    %8094 = vmatprep.subr.bf16.mxu0 %v2565
    %8095 = vmatpush1.bf16.msra.mxu0 %v2564
    %8096 = vmatprep.subr.bf16.mxu0 %v2581
    %8097 = vmatpush1.bf16.msra.mxu0 %v2580
    %8098 = vmatprep.subr.bf16.mxu0 %v2597
    %8099 = vmatpush1.bf16.msra.mxu0 %v2596
    %8100 = vmatprep.subr.bf16.mxu0 %v2613
    %8101 = vmatpush1.bf16.msra.mxu0 %v2612
    %8102 = vmatprep.subr.bf16.mxu0 %v2629
    %8103 = vmatpush1.bf16.msra.mxu0 %v2628
    %8104 = vmatprep.subr.bf16.mxu0 %v2645
    %8105 = vmatpush1.bf16.msra.mxu0 %v2644
    %8106 = vmatprep.subr.bf16.mxu0 %v2661
    %8107 = vmatpush1.bf16.msra.mxu0 %v2660
    %8108 = vmatprep.subr.bf16.mxu0 %v2677
    %8109 = vmatpush1.bf16.msra.mxu0 %v2676
    %8110 = vmatprep.subr.bf16.mxu0 %v2693
    %8111 = vmatpush1.bf16.msra.mxu0 %v2692
    %8112 = vmatprep.subr.bf16.mxu0 %v2709
    %8113 = vmatpush1.bf16.msra.mxu0 %v2708
    %8114 = vmatprep.subr.bf16.mxu0 %v2725
    %8115 = vmatpush1.bf16.msra.mxu0 %v2724
    %8116 = vmatprep.subr.bf16.mxu0 %v2741
    %8117 = vmatpush1.bf16.msra.mxu0 %v2740
    %8118 = vmatprep.subr.bf16.mxu0 %v2757
    %8119 = vmatpush1.bf16.msra.mxu0 %v2756
    %8120 = vmatprep.subr.bf16.mxu0 %v2773
    %8121 = vmatpush1.bf16.msra.mxu0 %v2772
    %8122 = vmatprep.subr.bf16.mxu0 %v2789
    %8123 = vmatpush1.bf16.msra.mxu0 %v2788
    %8124 = vmatprep.mubr.bf16.mxu0 %v7679
    %8125 = vmatmul.mubr.bf16.gmra.mrb[0].mxu0 %v7678
    %v8126 = vpop.f32.mrb[0].mxu0
    %v8127 = vadd.f32 0.0, %v8126
    %v8128 = vpop.f32.mrb[0].mxu0
    %v8129 = vadd.f32 0.0, %v8128
    %v8130 = vpop.f32.mrb[0].mxu0
    %v8131 = vpop.f32.mrb[0].mxu0
    %8132 = vdwg.mxu0
    %8133 = vmatprep.subr.bf16.mxu0 %v2805
    %8134 = vmatpush1.bf16.msra.mxu0 %v2804
    %8135 = vmatprep.subr.bf16.mxu0 %v2821
    %8136 = vmatpush1.bf16.msra.mxu0 %v2820
    %8137 = vmatprep.subr.bf16.mxu0 %v2837
    %8138 = vmatpush1.bf16.msra.mxu0 %v2836
    %8139 = vmatprep.subr.bf16.mxu0 %v2853
    %8140 = vmatpush1.bf16.msra.mxu0 %v2852
    %8141 = vmatprep.subr.bf16.mxu0 %v2869
    %8142 = vmatpush1.bf16.msra.mxu0 %v2868
    %8143 = vmatprep.subr.bf16.mxu0 %v2885
    %8144 = vmatpush1.bf16.msra.mxu0 %v2884
    %8145 = vmatprep.subr.bf16.mxu0 %v2901
    %8146 = vmatpush1.bf16.msra.mxu0 %v2900
    %8147 = vmatprep.subr.bf16.mxu0 %v2917
    %8148 = vmatpush1.bf16.msra.mxu0 %v2916
    %8149 = vmatprep.subr.bf16.mxu0 %v2933
    %8150 = vmatpush1.bf16.msra.mxu0 %v2932
    %8151 = vmatprep.subr.bf16.mxu0 %v2949
    %8152 = vmatpush1.bf16.msra.mxu0 %v2948
    %8153 = vmatprep.subr.bf16.mxu0 %v2965
    %8154 = vmatpush1.bf16.msra.mxu0 %v2964
    %8155 = vmatprep.subr.bf16.mxu0 %v2981
    %8156 = vmatpush1.bf16.msra.mxu0 %v2980
    %8157 = vmatprep.subr.bf16.mxu0 %v2997
    %8158 = vmatpush1.bf16.msra.mxu0 %v2996
    %8159 = vmatprep.subr.bf16.mxu0 %v3013
    %8160 = vmatpush1.bf16.msra.mxu0 %v3012
    %8161 = vmatprep.subr.bf16.mxu0 %v3029
    %8162 = vmatpush1.bf16.msra.mxu0 %v3028
    %8163 = vmatprep.subr.bf16.mxu0 %v3045
    %8164 = vmatpush1.bf16.msra.mxu0 %v3044
    %8165 = vmatprep.mubr.bf16.mxu0 %v7681
    %8166 = vmatmul.mubr.bf16.gmra.mrb[0].mxu0 %v7680
    %v8167 = vpop.f32.mrb[0].mxu0
    %v8168 = vadd.f32 %v8127, %v8167
    %v8169 = vpop.f32.mrb[0].mxu0
    %v8170 = vadd.f32 %v8129, %v8169
    %v8171 = vpop.f32.mrb[0].mxu0
    %v8172 = vpop.f32.mrb[0].mxu0
    %8173 = vdwg.mxu0
    %8174 = vmatprep.subr.bf16.mxu0 %v2551
    %8175 = vmatpush1.bf16.msra.mxu0 %v2550
    %8176 = vmatprep.subr.bf16.mxu0 %v2567
    %8177 = vmatpush1.bf16.msra.mxu0 %v2566
    %8178 = vmatprep.subr.bf16.mxu0 %v2583
    %8179 = vmatpush1.bf16.msra.mxu0 %v2582
    %8180 = vmatprep.subr.bf16.mxu0 %v2599
    %8181 = vmatpush1.bf16.msra.mxu0 %v2598
    %8182 = vmatprep.subr.bf16.mxu0 %v2615
    %8183 = vmatpush1.bf16.msra.mxu0 %v2614
    %8184 = vmatprep.subr.bf16.mxu0 %v2631
    %8185 = vmatpush1.bf16.msra.mxu0 %v2630
    %8186 = vmatprep.subr.bf16.mxu0 %v2647
    %8187 = vmatpush1.bf16.msra.mxu0 %v2646
    %8188 = vmatprep.subr.bf16.mxu0 %v2663
    %8189 = vmatpush1.bf16.msra.mxu0 %v2662
    %8190 = vmatprep.subr.bf16.mxu0 %v2679
    %8191 = vmatpush1.bf16.msra.mxu0 %v2678
    %8192 = vmatprep.subr.bf16.mxu0 %v2695
    %8193 = vmatpush1.bf16.msra.mxu0 %v2694
    %8194 = vmatprep.subr.bf16.mxu0 %v2711
    %8195 = vmatpush1.bf16.msra.mxu0 %v2710
    %8196 = vmatprep.subr.bf16.mxu0 %v2727
    %8197 = vmatpush1.bf16.msra.mxu0 %v2726
    %8198 = vmatprep.subr.bf16.mxu0 %v2743
    %8199 = vmatpush1.bf16.msra.mxu0 %v2742
    %8200 = vmatprep.subr.bf16.mxu0 %v2759
    %8201 = vmatpush1.bf16.msra.mxu0 %v2758
    %8202 = vmatprep.subr.bf16.mxu0 %v2775
    %8203 = vmatpush1.bf16.msra.mxu0 %v2774
    %8204 = vmatprep.subr.bf16.mxu0 %v2791
    %8205 = vmatpush1.bf16.msra.mxu0 %v2790
    %8206 = vmatprep.mubr.bf16.mxu0 %v7679
    %8207 = vmatmul.mubr.bf16.gmra.mrb[0].mxu0 %v7678
    %v8208 = vpop.f32.mrb[0].mxu0
    %v8209 = vadd.f32 0.0, %v8208
    %v8210 = vpop.f32.mrb[0].mxu0
    %v8211 = vadd.f32 0.0, %v8210
    %v8212 = vpop.f32.mrb[0].mxu0
    %v8213 = vpop.f32.mrb[0].mxu0
    %8214 = vdwg.mxu0
    %8215 = vmatprep.subr.bf16.mxu0 %v2807
    %8216 = vmatpush1.bf16.msra.mxu0 %v2806
    %8217 = vmatprep.subr.bf16.mxu0 %v2823
    %8218 = vmatpush1.bf16.msra.mxu0 %v2822
    %8219 = vmatprep.subr.bf16.mxu0 %v2839
    %8220 = vmatpush1.bf16.msra.mxu0 %v2838
    %8221 = vmatprep.subr.bf16.mxu0 %v2855
    %8222 = vmatpush1.bf16.msra.mxu0 %v2854
    %8223 = vmatprep.subr.bf16.mxu0 %v2871
    %8224 = vmatpush1.bf16.msra.mxu0 %v2870
    %8225 = vmatprep.subr.bf16.mxu0 %v2887
    %8226 = vmatpush1.bf16.msra.mxu0 %v2886
    %8227 = vmatprep.subr.bf16.mxu0 %v2903
    %8228 = vmatpush1.bf16.msra.mxu0 %v2902
    %8229 = vmatprep.subr.bf16.mxu0 %v2919
    %8230 = vmatpush1.bf16.msra.mxu0 %v2918
    %8231 = vmatprep.subr.bf16.mxu0 %v2935
    %8232 = vmatpush1.bf16.msra.mxu0 %v2934
    %8233 = vmatprep.subr.bf16.mxu0 %v2951
    %8234 = vmatpush1.bf16.msra.mxu0 %v2950
    %8235 = vmatprep.subr.bf16.mxu0 %v2967
    %8236 = vmatpush1.bf16.msra.mxu0 %v2966
    %8237 = vmatprep.subr.bf16.mxu0 %v2983
    %8238 = vmatpush1.bf16.msra.mxu0 %v2982
    %8239 = vmatprep.subr.bf16.mxu0 %v2999
    %8240 = vmatpush1.bf16.msra.mxu0 %v2998
    %8241 = vmatprep.subr.bf16.mxu0 %v3015
    %8242 = vmatpush1.bf16.msra.mxu0 %v3014
    %8243 = vmatprep.subr.bf16.mxu0 %v3031
    %8244 = vmatpush1.bf16.msra.mxu0 %v3030
    %8245 = vmatprep.subr.bf16.mxu0 %v3047
    %8246 = vmatpush1.bf16.msra.mxu0 %v3046
    %8247 = vmatprep.mubr.bf16.mxu0 %v7681
    %8248 = vmatmul.mubr.bf16.gmra.mrb[0].mxu0 %v7680
    %v8249 = vpop.f32.mrb[0].mxu0
    %v8250 = vadd.f32 %v8209, %v8249
    %v8251 = vpop.f32.mrb[0].mxu0
    %v8252 = vadd.f32 %v8211, %v8251
    %v8253 = vpop.f32.mrb[0].mxu0
    %v8254 = vpop.f32.mrb[0].mxu0
    %8255 = vdwg.mxu0
    %8256 = vmatprep.subr.bf16.mxu0 %v2553
    %8257 = vmatpush1.bf16.msra.mxu0 %v2552
    %8258 = vmatprep.subr.bf16.mxu0 %v2569
    %8259 = vmatpush1.bf16.msra.mxu0 %v2568
    %8260 = vmatprep.subr.bf16.mxu0 %v2585
    %8261 = vmatpush1.bf16.msra.mxu0 %v2584
    %8262 = vmatprep.subr.bf16.mxu0 %v2601
    %8263 = vmatpush1.bf16.msra.mxu0 %v2600
    %8264 = vmatprep.subr.bf16.mxu0 %v2617
    %8265 = vmatpush1.bf16.msra.mxu0 %v2616
    %8266 = vmatprep.subr.bf16.mxu0 %v2633
    %8267 = vmatpush1.bf16.msra.mxu0 %v2632
    %8268 = vmatprep.subr.bf16.mxu0 %v2649
    %8269 = vmatpush1.bf16.msra.mxu0 %v2648
    %8270 = vmatprep.subr.bf16.mxu0 %v2665
    %8271 = vmatpush1.bf16.msra.mxu0 %v2664
    %8272 = vmatprep.subr.bf16.mxu0 %v2681
    %8273 = vmatpush1.bf16.msra.mxu0 %v2680
    %8274 = vmatprep.subr.bf16.mxu0 %v2697
    %8275 = vmatpush1.bf16.msra.mxu0 %v2696
    %8276 = vmatprep.subr.bf16.mxu0 %v2713
    %8277 = vmatpush1.bf16.msra.mxu0 %v2712
    %8278 = vmatprep.subr.bf16.mxu0 %v2729
    %8279 = vmatpush1.bf16.msra.mxu0 %v2728
    %8280 = vmatprep.subr.bf16.mxu0 %v2745
    %8281 = vmatpush1.bf16.msra.mxu0 %v2744
    %8282 = vmatprep.subr.bf16.mxu0 %v2761
    %8283 = vmatpush1.bf16.msra.mxu0 %v2760
    %8284 = vmatprep.subr.bf16.mxu0 %v2777
    %8285 = vmatpush1.bf16.msra.mxu0 %v2776
    %8286 = vmatprep.subr.bf16.mxu0 %v2793
    %8287 = vmatpush1.bf16.msra.mxu0 %v2792
    %8288 = vmatprep.mubr.bf16.mxu0 %v7679
    %8289 = vmatmul.mubr.bf16.gmra.mrb[0].mxu0 %v7678
    %v8290 = vpop.f32.mrb[0].mxu0
    %v8291 = vadd.f32 0.0, %v8290
    %v8292 = vpop.f32.mrb[0].mxu0
    %v8293 = vadd.f32 0.0, %v8292
    %v8294 = vpop.f32.mrb[0].mxu0
    %v8295 = vpop.f32.mrb[0].mxu0
    %8296 = vdwg.mxu0
    %8297 = vmatprep.subr.bf16.mxu0 %v2809
    %8298 = vmatpush1.bf16.msra.mxu0 %v2808
    %8299 = vmatprep.subr.bf16.mxu0 %v2825
    %8300 = vmatpush1.bf16.msra.mxu0 %v2824
    %8301 = vmatprep.subr.bf16.mxu0 %v2841
    %8302 = vmatpush1.bf16.msra.mxu0 %v2840
    %8303 = vmatprep.subr.bf16.mxu0 %v2857
    %8304 = vmatpush1.bf16.msra.mxu0 %v2856
    %8305 = vmatprep.subr.bf16.mxu0 %v2873
    %8306 = vmatpush1.bf16.msra.mxu0 %v2872
    %8307 = vmatprep.subr.bf16.mxu0 %v2889
    %8308 = vmatpush1.bf16.msra.mxu0 %v2888
    %8309 = vmatprep.subr.bf16.mxu0 %v2905
    %8310 = vmatpush1.bf16.msra.mxu0 %v2904
    %8311 = vmatprep.subr.bf16.mxu0 %v2921
    %8312 = vmatpush1.bf16.msra.mxu0 %v2920
    %8313 = vmatprep.subr.bf16.mxu0 %v2937
    %8314 = vmatpush1.bf16.msra.mxu0 %v2936
    %8315 = vmatprep.subr.bf16.mxu0 %v2953
    %8316 = vmatpush1.bf16.msra.mxu0 %v2952
    %8317 = vmatprep.subr.bf16.mxu0 %v2969
    %8318 = vmatpush1.bf16.msra.mxu0 %v2968
    %8319 = vmatprep.subr.bf16.mxu0 %v2985
    %8320 = vmatpush1.bf16.msra.mxu0 %v2984
    %8321 = vmatprep.subr.bf16.mxu0 %v3001
    %8322 = vmatpush1.bf16.msra.mxu0 %v3000
    %8323 = vmatprep.subr.bf16.mxu0 %v3017
    %8324 = vmatpush1.bf16.msra.mxu0 %v3016
    %8325 = vmatprep.subr.bf16.mxu0 %v3033
    %8326 = vmatpush1.bf16.msra.mxu0 %v3032
    %8327 = vmatprep.subr.bf16.mxu0 %v3049
    %8328 = vmatpush1.bf16.msra.mxu0 %v3048
    %8329 = vmatprep.mubr.bf16.mxu0 %v7681
    %8330 = vmatmul.mubr.bf16.gmra.mrb[0].mxu0 %v7680
    %v8331 = vpop.f32.mrb[0].mxu0
    %v8332 = vadd.f32 %v8291, %v8331
    %v8333 = vpop.f32.mrb[0].mxu0
    %v8334 = vadd.f32 %v8293, %v8333
    %v8335 = vpop.f32.mrb[0].mxu0
    %v8336 = vpop.f32.mrb[0].mxu0
    %8337 = vdwg.mxu0
    %v8338 = vadd.f32 %v1863, %v7758
    %v8339 = vadd.f32 %v1865, %v7760
    %v8340 = vadd.f32 %v1936, %v7840
    %v8341 = vadd.f32 %v1938, %v7842
    %v8342 = vadd.f32 %v2009, %v7922
    %v8343 = vadd.f32 %v2011, %v7924
    %v8344 = vadd.f32 %v2082, %v8004
    %v8345 = vadd.f32 %v2084, %v8006
    %v8346 = vadd.f32 %v2155, %v8086
    %v8347 = vadd.f32 %v2157, %v8088
    %v8348 = vadd.f32 %v2228, %v8168
    %v8349 = vadd.f32 %v2230, %v8170
    %v8350 = vadd.f32 %v2301, %v8250
    %v8351 = vadd.f32 %v2303, %v8252
    %v8352 = vadd.f32 %v2374, %v8332
    %v8353 = vadd.f32 %v2376, %v8334
    %v8354 = vxor.u32 %v8338, 2147483648
    %v8355 = vxor.u32 %v8339, 2147483648
    %v8356 = vxor.u32 %v8340, 2147483648
    %v8357 = vxor.u32 %v8341, 2147483648
    %v8358 = vmul.f32 %v8354, 1.442695
    %v8359 = vpow.pop %v8358
    %v8360 = vmul.f32 %v8355, 1.442695
    %v8361 = vpow.pop %v8360
    %v8362 = vmul.f32 %v8356, 1.442695
    %v8363 = vpow.pop %v8362
    %v8364 = vmul.f32 %v8357, 1.442695
    %v8365 = vpow.pop %v8364
    %v8366 = vadd.f32 %v8359, 1.0
    %v8367 = vadd.f32 %v8361, 1.0
    %v8368 = vadd.f32 %v8363, 1.0
    %v8369 = vadd.f32 %v8365, 1.0
    %v8370 = vrcp.pop %v8366
    %v8371 = vmul.f32 1.0, %v8370
    %v8372 = vrcp.pop %v8367
    %v8373 = vmul.f32 1.0, %v8372
    %v8374 = vrcp.pop %v8368
    %v8375 = vmul.f32 1.0, %v8374
    %v8376 = vrcp.pop %v8369
    %v8377 = vmul.f32 1.0, %v8376
    %v8378 = vxor.u32 %v8342, 2147483648
    %v8379 = vxor.u32 %v8343, 2147483648
    %v8380 = vxor.u32 %v8344, 2147483648
    %v8381 = vxor.u32 %v8345, 2147483648
    %v8382 = vmul.f32 %v8378, 1.442695
    %v8383 = vpow.pop %v8382
    %v8384 = vmul.f32 %v8379, 1.442695
    %v8385 = vpow.pop %v8384
    %v8386 = vmul.f32 %v8380, 1.442695
    %v8387 = vpow.pop %v8386
    %v8388 = vmul.f32 %v8381, 1.442695
    %v8389 = vpow.pop %v8388
    %v8390 = vadd.f32 %v8383, 1.0
    %v8391 = vadd.f32 %v8385, 1.0
    %v8392 = vadd.f32 %v8387, 1.0
    %v8393 = vadd.f32 %v8389, 1.0
    %v8394 = vrcp.pop %v8390
    %v8395 = vmul.f32 1.0, %v8394
    %v8396 = vrcp.pop %v8391
    %v8397 = vmul.f32 1.0, %v8396
    %v8398 = vrcp.pop %v8392
    %v8399 = vmul.f32 1.0, %v8398
    %v8400 = vrcp.pop %v8393
    %v8401 = vmul.f32 1.0, %v8400
    %v8402 = vtanh.pop %v8346
    %v8403 = vtanh.pop %v8347
    %v8404 = vtanh.pop %v8348
    %v8405 = vtanh.pop %v8349
    %v8406 = vxor.u32 %v8350, 2147483648
    %v8407 = vxor.u32 %v8351, 2147483648
    %v8408 = vxor.u32 %v8352, 2147483648
    %v8409 = vxor.u32 %v8353, 2147483648
    %v8410 = vmul.f32 %v8406, 1.442695
    %v8411 = vpow.pop %v8410
    %v8412 = vmul.f32 %v8407, 1.442695
    %v8413 = vpow.pop %v8412
    %v8414 = vmul.f32 %v8408, 1.442695
    %v8415 = vpow.pop %v8414
    %v8416 = vmul.f32 %v8409, 1.442695
    %v8417 = vpow.pop %v8416
    %v8418 = vadd.f32 %v8411, 1.0
    %v8419 = vadd.f32 %v8413, 1.0
    %v8420 = vadd.f32 %v8415, 1.0
    %v8421 = vadd.f32 %v8417, 1.0
    %v8422 = vrcp.pop %v8418
    %v8423 = vmul.f32 1.0, %v8422
    %v8424 = vrcp.pop %v8419
    %v8425 = vmul.f32 1.0, %v8424
    %v8426 = vrcp.pop %v8420
    %v8427 = vmul.f32 1.0, %v8426
    %v8428 = vrcp.pop %v8421
    %v8429 = vmul.f32 1.0, %v8428
    %v8430 = vmul.f32 %v8395, %v7666
    %v8431 = vmul.f32 %v8397, %v7667
    %v8432 = vmul.f32 %v8399, %v7668
    %v8433 = vmul.f32 %v8401, %v7669
    %v8434 = vmul.f32 %v8371, %v8402
    %v8435 = vmul.f32 %v8373, %v8403
    %v8436 = vmul.f32 %v8375, %v8404
    %v8437 = vmul.f32 %v8377, %v8405
    %v8438 = vadd.f32 %v8430, %v8434
    %v8439 = vadd.f32 %v8431, %v8435
    %v8440 = vadd.f32 %v8432, %v8436
    %v8441 = vadd.f32 %v8433, %v8437
    %v8442 = vtanh.pop %v8438
    %v8443 = vtanh.pop %v8439
    %v8444 = vtanh.pop %v8440
    %v8445 = vtanh.pop %v8441
    %v8446 = vmul.f32 %v8423, %v8442
    %v8447 = vmul.f32 %v8425, %v8443
    %v8448 = vmul.f32 %v8427, %v8444
    %v8449 = vmul.f32 %v8429, %v8445
    %v8450 = vpack.c.bf16 %v8446, %v8446
    %v8451 = vpack.c.bf16 %v8447, %v8447
    %v8452 = vpack.c.bf16 %v8448, %v8448
    %v8453 = vpack.c.bf16 %v8449, %v8449
    %8454 = vmatprep.subr.bf16.mxu0 %v2539
    %8455 = vmatpush1.bf16.msra.mxu0 %v2538
    %8456 = vmatprep.subr.bf16.mxu0 %v2555
    %8457 = vmatpush1.bf16.msra.mxu0 %v2554
    %8458 = vmatprep.subr.bf16.mxu0 %v2571
    %8459 = vmatpush1.bf16.msra.mxu0 %v2570
    %8460 = vmatprep.subr.bf16.mxu0 %v2587
    %8461 = vmatpush1.bf16.msra.mxu0 %v2586
    %8462 = vmatprep.subr.bf16.mxu0 %v2603
    %8463 = vmatpush1.bf16.msra.mxu0 %v2602
    %8464 = vmatprep.subr.bf16.mxu0 %v2619
    %8465 = vmatpush1.bf16.msra.mxu0 %v2618
    %8466 = vmatprep.subr.bf16.mxu0 %v2635
    %8467 = vmatpush1.bf16.msra.mxu0 %v2634
    %8468 = vmatprep.subr.bf16.mxu0 %v2651
    %8469 = vmatpush1.bf16.msra.mxu0 %v2650
    %8470 = vmatprep.subr.bf16.mxu0 %v2667
    %8471 = vmatpush1.bf16.msra.mxu0 %v2666
    %8472 = vmatprep.subr.bf16.mxu0 %v2683
    %8473 = vmatpush1.bf16.msra.mxu0 %v2682
    %8474 = vmatprep.subr.bf16.mxu0 %v2699
    %8475 = vmatpush1.bf16.msra.mxu0 %v2698
    %8476 = vmatprep.subr.bf16.mxu0 %v2715
    %8477 = vmatpush1.bf16.msra.mxu0 %v2714
    %8478 = vmatprep.subr.bf16.mxu0 %v2731
    %8479 = vmatpush1.bf16.msra.mxu0 %v2730
    %8480 = vmatprep.subr.bf16.mxu0 %v2747
    %8481 = vmatpush1.bf16.msra.mxu0 %v2746
    %8482 = vmatprep.subr.bf16.mxu0 %v2763
    %8483 = vmatpush1.bf16.msra.mxu0 %v2762
    %8484 = vmatprep.subr.bf16.mxu0 %v2779
    %8485 = vmatpush1.bf16.msra.mxu0 %v2778
    %8486 = vmatprep.mubr.bf16.mxu0 %v8451
    %8487 = vmatmul.mubr.bf16.gmra.mrb[0].mxu0 %v8450
    %v8488 = vpop.f32.mrb[0].mxu0
    %v8489 = vadd.f32 0.0, %v8488
    %v8490 = vpop.f32.mrb[0].mxu0
    %v8491 = vadd.f32 0.0, %v8490
    %v8492 = vpop.f32.mrb[0].mxu0
    %v8493 = vpop.f32.mrb[0].mxu0
    %8494 = vdwg.mxu0
    %8495 = vmatprep.subr.bf16.mxu0 %v2795
    %8496 = vmatpush1.bf16.msra.mxu0 %v2794
    %8497 = vmatprep.subr.bf16.mxu0 %v2811
    %8498 = vmatpush1.bf16.msra.mxu0 %v2810
    %8499 = vmatprep.subr.bf16.mxu0 %v2827
    %8500 = vmatpush1.bf16.msra.mxu0 %v2826
    %8501 = vmatprep.subr.bf16.mxu0 %v2843
    %8502 = vmatpush1.bf16.msra.mxu0 %v2842
    %8503 = vmatprep.subr.bf16.mxu0 %v2859
    %8504 = vmatpush1.bf16.msra.mxu0 %v2858
    %8505 = vmatprep.subr.bf16.mxu0 %v2875
    %8506 = vmatpush1.bf16.msra.mxu0 %v2874
    %8507 = vmatprep.subr.bf16.mxu0 %v2891
    %8508 = vmatpush1.bf16.msra.mxu0 %v2890
    %8509 = vmatprep.subr.bf16.mxu0 %v2907
    %8510 = vmatpush1.bf16.msra.mxu0 %v2906
    %8511 = vmatprep.subr.bf16.mxu0 %v2923
    %8512 = vmatpush1.bf16.msra.mxu0 %v2922
    %8513 = vmatprep.subr.bf16.mxu0 %v2939
    %8514 = vmatpush1.bf16.msra.mxu0 %v2938
    %8515 = vmatprep.subr.bf16.mxu0 %v2955
    %8516 = vmatpush1.bf16.msra.mxu0 %v2954
    %8517 = vmatprep.subr.bf16.mxu0 %v2971
    %8518 = vmatpush1.bf16.msra.mxu0 %v2970
    %8519 = vmatprep.subr.bf16.mxu0 %v2987
    %8520 = vmatpush1.bf16.msra.mxu0 %v2986
    %8521 = vmatprep.subr.bf16.mxu0 %v3003
    %8522 = vmatpush1.bf16.msra.mxu0 %v3002
    %8523 = vmatprep.subr.bf16.mxu0 %v3019
    %8524 = vmatpush1.bf16.msra.mxu0 %v3018
    %8525 = vmatprep.subr.bf16.mxu0 %v3035
    %8526 = vmatpush1.bf16.msra.mxu0 %v3034
    %8527 = vmatprep.mubr.bf16.mxu0 %v8453
    %8528 = vmatmul.mubr.bf16.gmra.mrb[0].mxu0 %v8452
    %v8529 = vpop.f32.mrb[0].mxu0
    %v8530 = vadd.f32 %v8489, %v8529
    %v8531 = vpop.f32.mrb[0].mxu0
    %v8532 = vadd.f32 %v8491, %v8531
    %v8533 = vpop.f32.mrb[0].mxu0
    %v8534 = vpop.f32.mrb[0].mxu0
    %8535 = vdwg.mxu0
    %8536 = vmatprep.subr.bf16.mxu0 %v2541
    %8537 = vmatpush1.bf16.msra.mxu0 %v2540
    %8538 = vmatprep.subr.bf16.mxu0 %v2557
    %8539 = vmatpush1.bf16.msra.mxu0 %v2556
    %8540 = vmatprep.subr.bf16.mxu0 %v2573
    %8541 = vmatpush1.bf16.msra.mxu0 %v2572
    %8542 = vmatprep.subr.bf16.mxu0 %v2589
    %8543 = vmatpush1.bf16.msra.mxu0 %v2588
    %8544 = vmatprep.subr.bf16.mxu0 %v2605
    %8545 = vmatpush1.bf16.msra.mxu0 %v2604
    %8546 = vmatprep.subr.bf16.mxu0 %v2621
    %8547 = vmatpush1.bf16.msra.mxu0 %v2620
    %8548 = vmatprep.subr.bf16.mxu0 %v2637
    %8549 = vmatpush1.bf16.msra.mxu0 %v2636
    %8550 = vmatprep.subr.bf16.mxu0 %v2653
    %8551 = vmatpush1.bf16.msra.mxu0 %v2652
    %8552 = vmatprep.subr.bf16.mxu0 %v2669
    %8553 = vmatpush1.bf16.msra.mxu0 %v2668
    %8554 = vmatprep.subr.bf16.mxu0 %v2685
    %8555 = vmatpush1.bf16.msra.mxu0 %v2684
    %8556 = vmatprep.subr.bf16.mxu0 %v2701
    %8557 = vmatpush1.bf16.msra.mxu0 %v2700
    %8558 = vmatprep.subr.bf16.mxu0 %v2717
    %8559 = vmatpush1.bf16.msra.mxu0 %v2716
    %8560 = vmatprep.subr.bf16.mxu0 %v2733
    %8561 = vmatpush1.bf16.msra.mxu0 %v2732
    %8562 = vmatprep.subr.bf16.mxu0 %v2749
    %8563 = vmatpush1.bf16.msra.mxu0 %v2748
    %8564 = vmatprep.subr.bf16.mxu0 %v2765
    %8565 = vmatpush1.bf16.msra.mxu0 %v2764
    %8566 = vmatprep.subr.bf16.mxu0 %v2781
    %8567 = vmatpush1.bf16.msra.mxu0 %v2780
    %8568 = vmatprep.mubr.bf16.mxu0 %v8451
    %8569 = vmatmul.mubr.bf16.gmra.mrb[0].mxu0 %v8450
    %v8570 = vpop.f32.mrb[0].mxu0
    %v8571 = vadd.f32 0.0, %v8570
    %v8572 = vpop.f32.mrb[0].mxu0
    %v8573 = vadd.f32 0.0, %v8572
    %v8574 = vpop.f32.mrb[0].mxu0
    %v8575 = vpop.f32.mrb[0].mxu0
    %8576 = vdwg.mxu0
    %8577 = vmatprep.subr.bf16.mxu0 %v2797
    %8578 = vmatpush1.bf16.msra.mxu0 %v2796
    %8579 = vmatprep.subr.bf16.mxu0 %v2813
    %8580 = vmatpush1.bf16.msra.mxu0 %v2812
    %8581 = vmatprep.subr.bf16.mxu0 %v2829
    %8582 = vmatpush1.bf16.msra.mxu0 %v2828
    %8583 = vmatprep.subr.bf16.mxu0 %v2845
    %8584 = vmatpush1.bf16.msra.mxu0 %v2844
    %8585 = vmatprep.subr.bf16.mxu0 %v2861
    %8586 = vmatpush1.bf16.msra.mxu0 %v2860
    %8587 = vmatprep.subr.bf16.mxu0 %v2877
    %8588 = vmatpush1.bf16.msra.mxu0 %v2876
    %8589 = vmatprep.subr.bf16.mxu0 %v2893
    %8590 = vmatpush1.bf16.msra.mxu0 %v2892
    %8591 = vmatprep.subr.bf16.mxu0 %v2909
    %8592 = vmatpush1.bf16.msra.mxu0 %v2908
    %8593 = vmatprep.subr.bf16.mxu0 %v2925
    %8594 = vmatpush1.bf16.msra.mxu0 %v2924
    %8595 = vmatprep.subr.bf16.mxu0 %v2941
    %8596 = vmatpush1.bf16.msra.mxu0 %v2940
    %8597 = vmatprep.subr.bf16.mxu0 %v2957
    %8598 = vmatpush1.bf16.msra.mxu0 %v2956
    %8599 = vmatprep.subr.bf16.mxu0 %v2973
    %8600 = vmatpush1.bf16.msra.mxu0 %v2972
    %8601 = vmatprep.subr.bf16.mxu0 %v2989
    %8602 = vmatpush1.bf16.msra.mxu0 %v2988
    %8603 = vmatprep.subr.bf16.mxu0 %v3005
    %8604 = vmatpush1.bf16.msra.mxu0 %v3004
    %8605 = vmatprep.subr.bf16.mxu0 %v3021
    %8606 = vmatpush1.bf16.msra.mxu0 %v3020
    %8607 = vmatprep.subr.bf16.mxu0 %v3037
    %8608 = vmatpush1.bf16.msra.mxu0 %v3036
    %8609 = vmatprep.mubr.bf16.mxu0 %v8453
    %8610 = vmatmul.mubr.bf16.gmra.mrb[0].mxu0 %v8452
    %v8611 = vpop.f32.mrb[0].mxu0
    %v8612 = vadd.f32 %v8571, %v8611
    %v8613 = vpop.f32.mrb[0].mxu0
    %v8614 = vadd.f32 %v8573, %v8613
    %v8615 = vpop.f32.mrb[0].mxu0
    %v8616 = vpop.f32.mrb[0].mxu0
    %8617 = vdwg.mxu0
    %8618 = vmatprep.subr.bf16.mxu0 %v2543
    %8619 = vmatpush1.bf16.msra.mxu0 %v2542
    %8620 = vmatprep.subr.bf16.mxu0 %v2559
    %8621 = vmatpush1.bf16.msra.mxu0 %v2558
    %8622 = vmatprep.subr.bf16.mxu0 %v2575
    %8623 = vmatpush1.bf16.msra.mxu0 %v2574
    %8624 = vmatprep.subr.bf16.mxu0 %v2591
    %8625 = vmatpush1.bf16.msra.mxu0 %v2590
    %8626 = vmatprep.subr.bf16.mxu0 %v2607
    %8627 = vmatpush1.bf16.msra.mxu0 %v2606
    %8628 = vmatprep.subr.bf16.mxu0 %v2623
    %8629 = vmatpush1.bf16.msra.mxu0 %v2622
    %8630 = vmatprep.subr.bf16.mxu0 %v2639
    %8631 = vmatpush1.bf16.msra.mxu0 %v2638
    %8632 = vmatprep.subr.bf16.mxu0 %v2655
    %8633 = vmatpush1.bf16.msra.mxu0 %v2654
    %8634 = vmatprep.subr.bf16.mxu0 %v2671
    %8635 = vmatpush1.bf16.msra.mxu0 %v2670
    %8636 = vmatprep.subr.bf16.mxu0 %v2687
    %8637 = vmatpush1.bf16.msra.mxu0 %v2686
    %8638 = vmatprep.subr.bf16.mxu0 %v2703
    %8639 = vmatpush1.bf16.msra.mxu0 %v2702
    %8640 = vmatprep.subr.bf16.mxu0 %v2719
    %8641 = vmatpush1.bf16.msra.mxu0 %v2718
    %8642 = vmatprep.subr.bf16.mxu0 %v2735
    %8643 = vmatpush1.bf16.msra.mxu0 %v2734
    %8644 = vmatprep.subr.bf16.mxu0 %v2751
    %8645 = vmatpush1.bf16.msra.mxu0 %v2750
    %8646 = vmatprep.subr.bf16.mxu0 %v2767
    %8647 = vmatpush1.bf16.msra.mxu0 %v2766
    %8648 = vmatprep.subr.bf16.mxu0 %v2783
    %8649 = vmatpush1.bf16.msra.mxu0 %v2782
    %8650 = vmatprep.mubr.bf16.mxu0 %v8451
    %8651 = vmatmul.mubr.bf16.gmra.mrb[0].mxu0 %v8450
    %v8652 = vpop.f32.mrb[0].mxu0
    %v8653 = vadd.f32 0.0, %v8652
    %v8654 = vpop.f32.mrb[0].mxu0
    %v8655 = vadd.f32 0.0, %v8654
    %v8656 = vpop.f32.mrb[0].mxu0
    %v8657 = vpop.f32.mrb[0].mxu0
    %8658 = vdwg.mxu0
    %8659 = vmatprep.subr.bf16.mxu0 %v2799
    %8660 = vmatpush1.bf16.msra.mxu0 %v2798
    %8661 = vmatprep.subr.bf16.mxu0 %v2815
    %8662 = vmatpush1.bf16.msra.mxu0 %v2814
    %8663 = vmatprep.subr.bf16.mxu0 %v2831
    %8664 = vmatpush1.bf16.msra.mxu0 %v2830
    %8665 = vmatprep.subr.bf16.mxu0 %v2847
    %8666 = vmatpush1.bf16.msra.mxu0 %v2846
    %8667 = vmatprep.subr.bf16.mxu0 %v2863
    %8668 = vmatpush1.bf16.msra.mxu0 %v2862
    %8669 = vmatprep.subr.bf16.mxu0 %v2879
    %8670 = vmatpush1.bf16.msra.mxu0 %v2878
    %8671 = vmatprep.subr.bf16.mxu0 %v2895
    %8672 = vmatpush1.bf16.msra.mxu0 %v2894
    %8673 = vmatprep.subr.bf16.mxu0 %v2911
    %8674 = vmatpush1.bf16.msra.mxu0 %v2910
    %8675 = vmatprep.subr.bf16.mxu0 %v2927
    %8676 = vmatpush1.bf16.msra.mxu0 %v2926
    %8677 = vmatprep.subr.bf16.mxu0 %v2943
    %8678 = vmatpush1.bf16.msra.mxu0 %v2942
    %8679 = vmatprep.subr.bf16.mxu0 %v2959
    %8680 = vmatpush1.bf16.msra.mxu0 %v2958
    %8681 = vmatprep.subr.bf16.mxu0 %v2975
    %8682 = vmatpush1.bf16.msra.mxu0 %v2974
    %8683 = vmatprep.subr.bf16.mxu0 %v2991
    %8684 = vmatpush1.bf16.msra.mxu0 %v2990
    %8685 = vmatprep.subr.bf16.mxu0 %v3007
    %8686 = vmatpush1.bf16.msra.mxu0 %v3006
    %8687 = vmatprep.subr.bf16.mxu0 %v3023
    %8688 = vmatpush1.bf16.msra.mxu0 %v3022
    %8689 = vmatprep.subr.bf16.mxu0 %v3039
    %8690 = vmatpush1.bf16.msra.mxu0 %v3038
    %8691 = vmatprep.mubr.bf16.mxu0 %v8453
    %8692 = vmatmul.mubr.bf16.gmra.mrb[0].mxu0 %v8452
    %v8693 = vpop.f32.mrb[0].mxu0
    %v8694 = vadd.f32 %v8653, %v8693
    %v8695 = vpop.f32.mrb[0].mxu0
    %v8696 = vadd.f32 %v8655, %v8695
    %v8697 = vpop.f32.mrb[0].mxu0
    %v8698 = vpop.f32.mrb[0].mxu0
    %8699 = vdwg.mxu0
    %8700 = vmatprep.subr.bf16.mxu0 %v2545
    %8701 = vmatpush1.bf16.msra.mxu0 %v2544
    %8702 = vmatprep.subr.bf16.mxu0 %v2561
    %8703 = vmatpush1.bf16.msra.mxu0 %v2560
    %8704 = vmatprep.subr.bf16.mxu0 %v2577
    %8705 = vmatpush1.bf16.msra.mxu0 %v2576
    %8706 = vmatprep.subr.bf16.mxu0 %v2593
    %8707 = vmatpush1.bf16.msra.mxu0 %v2592
    %8708 = vmatprep.subr.bf16.mxu0 %v2609
    %8709 = vmatpush1.bf16.msra.mxu0 %v2608
    %8710 = vmatprep.subr.bf16.mxu0 %v2625
    %8711 = vmatpush1.bf16.msra.mxu0 %v2624
    %8712 = vmatprep.subr.bf16.mxu0 %v2641
    %8713 = vmatpush1.bf16.msra.mxu0 %v2640
    %8714 = vmatprep.subr.bf16.mxu0 %v2657
    %8715 = vmatpush1.bf16.msra.mxu0 %v2656
    %8716 = vmatprep.subr.bf16.mxu0 %v2673
    %8717 = vmatpush1.bf16.msra.mxu0 %v2672
    %8718 = vmatprep.subr.bf16.mxu0 %v2689
    %8719 = vmatpush1.bf16.msra.mxu0 %v2688
    %8720 = vmatprep.subr.bf16.mxu0 %v2705
    %8721 = vmatpush1.bf16.msra.mxu0 %v2704
    %8722 = vmatprep.subr.bf16.mxu0 %v2721
    %8723 = vmatpush1.bf16.msra.mxu0 %v2720
    %8724 = vmatprep.subr.bf16.mxu0 %v2737
    %8725 = vmatpush1.bf16.msra.mxu0 %v2736
    %8726 = vmatprep.subr.bf16.mxu0 %v2753
    %8727 = vmatpush1.bf16.msra.mxu0 %v2752
    %8728 = vmatprep.subr.bf16.mxu0 %v2769
    %8729 = vmatpush1.bf16.msra.mxu0 %v2768
    %8730 = vmatprep.subr.bf16.mxu0 %v2785
    %8731 = vmatpush1.bf16.msra.mxu0 %v2784
    %8732 = vmatprep.mubr.bf16.mxu0 %v8451
    %8733 = vmatmul.mubr.bf16.gmra.mrb[0].mxu0 %v8450
    %v8734 = vpop.f32.mrb[0].mxu0
    %v8735 = vadd.f32 0.0, %v8734
    %v8736 = vpop.f32.mrb[0].mxu0
    %v8737 = vadd.f32 0.0, %v8736
    %v8738 = vpop.f32.mrb[0].mxu0
    %v8739 = vpop.f32.mrb[0].mxu0
    %8740 = vdwg.mxu0
    %8741 = vmatprep.subr.bf16.mxu0 %v2801
    %8742 = vmatpush1.bf16.msra.mxu0 %v2800
    %8743 = vmatprep.subr.bf16.mxu0 %v2817
    %8744 = vmatpush1.bf16.msra.mxu0 %v2816
    %8745 = vmatprep.subr.bf16.mxu0 %v2833
    %8746 = vmatpush1.bf16.msra.mxu0 %v2832
    %8747 = vmatprep.subr.bf16.mxu0 %v2849
    %8748 = vmatpush1.bf16.msra.mxu0 %v2848
    %8749 = vmatprep.subr.bf16.mxu0 %v2865
    %8750 = vmatpush1.bf16.msra.mxu0 %v2864
    %8751 = vmatprep.subr.bf16.mxu0 %v2881
    %8752 = vmatpush1.bf16.msra.mxu0 %v2880
    %8753 = vmatprep.subr.bf16.mxu0 %v2897
    %8754 = vmatpush1.bf16.msra.mxu0 %v2896
    %8755 = vmatprep.subr.bf16.mxu0 %v2913
    %8756 = vmatpush1.bf16.msra.mxu0 %v2912
    %8757 = vmatprep.subr.bf16.mxu0 %v2929
    %8758 = vmatpush1.bf16.msra.mxu0 %v2928
    %8759 = vmatprep.subr.bf16.mxu0 %v2945
    %8760 = vmatpush1.bf16.msra.mxu0 %v2944
    %8761 = vmatprep.subr.bf16.mxu0 %v2961
    %8762 = vmatpush1.bf16.msra.mxu0 %v2960
    %8763 = vmatprep.subr.bf16.mxu0 %v2977
    %8764 = vmatpush1.bf16.msra.mxu0 %v2976
    %8765 = vmatprep.subr.bf16.mxu0 %v2993
    %8766 = vmatpush1.bf16.msra.mxu0 %v2992
    %8767 = vmatprep.subr.bf16.mxu0 %v3009
    %8768 = vmatpush1.bf16.msra.mxu0 %v3008
    %8769 = vmatprep.subr.bf16.mxu0 %v3025
    %8770 = vmatpush1.bf16.msra.mxu0 %v3024
    %8771 = vmatprep.subr.bf16.mxu0 %v3041
    %8772 = vmatpush1.bf16.msra.mxu0 %v3040
    %8773 = vmatprep.mubr.bf16.mxu0 %v8453
    %8774 = vmatmul.mubr.bf16.gmra.mrb[0].mxu0 %v8452
    %v8775 = vpop.f32.mrb[0].mxu0
    %v8776 = vadd.f32 %v8735, %v8775
    %v8777 = vpop.f32.mrb[0].mxu0
    %v8778 = vadd.f32 %v8737, %v8777
    %v8779 = vpop.f32.mrb[0].mxu0
    %v8780 = vpop.f32.mrb[0].mxu0
    %8781 = vdwg.mxu0
    %8782 = vmatprep.subr.bf16.mxu0 %v2547
    %8783 = vmatpush1.bf16.msra.mxu0 %v2546
    %8784 = vmatprep.subr.bf16.mxu0 %v2563
    %8785 = vmatpush1.bf16.msra.mxu0 %v2562
    %8786 = vmatprep.subr.bf16.mxu0 %v2579
    %8787 = vmatpush1.bf16.msra.mxu0 %v2578
    %8788 = vmatprep.subr.bf16.mxu0 %v2595
    %8789 = vmatpush1.bf16.msra.mxu0 %v2594
    %8790 = vmatprep.subr.bf16.mxu0 %v2611
    %8791 = vmatpush1.bf16.msra.mxu0 %v2610
    %8792 = vmatprep.subr.bf16.mxu0 %v2627
    %8793 = vmatpush1.bf16.msra.mxu0 %v2626
    %8794 = vmatprep.subr.bf16.mxu0 %v2643
    %8795 = vmatpush1.bf16.msra.mxu0 %v2642
    %8796 = vmatprep.subr.bf16.mxu0 %v2659
    %8797 = vmatpush1.bf16.msra.mxu0 %v2658
    %8798 = vmatprep.subr.bf16.mxu0 %v2675
    %8799 = vmatpush1.bf16.msra.mxu0 %v2674
    %8800 = vmatprep.subr.bf16.mxu0 %v2691
    %8801 = vmatpush1.bf16.msra.mxu0 %v2690
    %8802 = vmatprep.subr.bf16.mxu0 %v2707
    %8803 = vmatpush1.bf16.msra.mxu0 %v2706
    %8804 = vmatprep.subr.bf16.mxu0 %v2723
    %8805 = vmatpush1.bf16.msra.mxu0 %v2722
    %8806 = vmatprep.subr.bf16.mxu0 %v2739
    %8807 = vmatpush1.bf16.msra.mxu0 %v2738
    %8808 = vmatprep.subr.bf16.mxu0 %v2755
    %8809 = vmatpush1.bf16.msra.mxu0 %v2754
    %8810 = vmatprep.subr.bf16.mxu0 %v2771
    %8811 = vmatpush1.bf16.msra.mxu0 %v2770
    %8812 = vmatprep.subr.bf16.mxu0 %v2787
    %8813 = vmatpush1.bf16.msra.mxu0 %v2786
    %8814 = vmatprep.mubr.bf16.mxu0 %v8451
    %8815 = vmatmul.mubr.bf16.gmra.mrb[0].mxu0 %v8450
    %v8816 = vpop.f32.mrb[0].mxu0
    %v8817 = vadd.f32 0.0, %v8816
    %v8818 = vpop.f32.mrb[0].mxu0
    %v8819 = vadd.f32 0.0, %v8818
    %v8820 = vpop.f32.mrb[0].mxu0
    %v8821 = vpop.f32.mrb[0].mxu0
    %8822 = vdwg.mxu0
    %8823 = vmatprep.subr.bf16.mxu0 %v2803
    %8824 = vmatpush1.bf16.msra.mxu0 %v2802
    %8825 = vmatprep.subr.bf16.mxu0 %v2819
    %8826 = vmatpush1.bf16.msra.mxu0 %v2818
    %8827 = vmatprep.subr.bf16.mxu0 %v2835
    %8828 = vmatpush1.bf16.msra.mxu0 %v2834
    %8829 = vmatprep.subr.bf16.mxu0 %v2851
    %8830 = vmatpush1.bf16.msra.mxu0 %v2850
    %8831 = vmatprep.subr.bf16.mxu0 %v2867
    %8832 = vmatpush1.bf16.msra.mxu0 %v2866
    %8833 = vmatprep.subr.bf16.mxu0 %v2883
    %8834 = vmatpush1.bf16.msra.mxu0 %v2882
    %8835 = vmatprep.subr.bf16.mxu0 %v2899
    %8836 = vmatpush1.bf16.msra.mxu0 %v2898
    %8837 = vmatprep.subr.bf16.mxu0 %v2915
    %8838 = vmatpush1.bf16.msra.mxu0 %v2914
    %8839 = vmatprep.subr.bf16.mxu0 %v2931
    %8840 = vmatpush1.bf16.msra.mxu0 %v2930
    %8841 = vmatprep.subr.bf16.mxu0 %v2947
    %8842 = vmatpush1.bf16.msra.mxu0 %v2946
    %8843 = vmatprep.subr.bf16.mxu0 %v2963
    %8844 = vmatpush1.bf16.msra.mxu0 %v2962
    %8845 = vmatprep.subr.bf16.mxu0 %v2979
    %8846 = vmatpush1.bf16.msra.mxu0 %v2978
    %8847 = vmatprep.subr.bf16.mxu0 %v2995
    %8848 = vmatpush1.bf16.msra.mxu0 %v2994
    %8849 = vmatprep.subr.bf16.mxu0 %v3011
    %8850 = vmatpush1.bf16.msra.mxu0 %v3010
    %8851 = vmatprep.subr.bf16.mxu0 %v3027
    %8852 = vmatpush1.bf16.msra.mxu0 %v3026
    %8853 = vmatprep.subr.bf16.mxu0 %v3043
    %8854 = vmatpush1.bf16.msra.mxu0 %v3042
    %8855 = vmatprep.mubr.bf16.mxu0 %v8453
    %8856 = vmatmul.mubr.bf16.gmra.mrb[0].mxu0 %v8452
    %v8857 = vpop.f32.mrb[0].mxu0
    %v8858 = vadd.f32 %v8817, %v8857
    %v8859 = vpop.f32.mrb[0].mxu0
    %v8860 = vadd.f32 %v8819, %v8859
    %v8861 = vpop.f32.mrb[0].mxu0
    %v8862 = vpop.f32.mrb[0].mxu0
    %8863 = vdwg.mxu0
    %8864 = vmatprep.subr.bf16.mxu0 %v2549
    %8865 = vmatpush1.bf16.msra.mxu0 %v2548
    %8866 = vmatprep.subr.bf16.mxu0 %v2565
    %8867 = vmatpush1.bf16.msra.mxu0 %v2564
    %8868 = vmatprep.subr.bf16.mxu0 %v2581
    %8869 = vmatpush1.bf16.msra.mxu0 %v2580
    %8870 = vmatprep.subr.bf16.mxu0 %v2597
    %8871 = vmatpush1.bf16.msra.mxu0 %v2596
    %8872 = vmatprep.subr.bf16.mxu0 %v2613
    %8873 = vmatpush1.bf16.msra.mxu0 %v2612
    %8874 = vmatprep.subr.bf16.mxu0 %v2629
    %8875 = vmatpush1.bf16.msra.mxu0 %v2628
    %8876 = vmatprep.subr.bf16.mxu0 %v2645
    %8877 = vmatpush1.bf16.msra.mxu0 %v2644
    %8878 = vmatprep.subr.bf16.mxu0 %v2661
    %8879 = vmatpush1.bf16.msra.mxu0 %v2660
    %8880 = vmatprep.subr.bf16.mxu0 %v2677
    %8881 = vmatpush1.bf16.msra.mxu0 %v2676
    %8882 = vmatprep.subr.bf16.mxu0 %v2693
    %8883 = vmatpush1.bf16.msra.mxu0 %v2692
    %8884 = vmatprep.subr.bf16.mxu0 %v2709
    %8885 = vmatpush1.bf16.msra.mxu0 %v2708
    %8886 = vmatprep.subr.bf16.mxu0 %v2725
    %8887 = vmatpush1.bf16.msra.mxu0 %v2724
    %8888 = vmatprep.subr.bf16.mxu0 %v2741
    %8889 = vmatpush1.bf16.msra.mxu0 %v2740
    %8890 = vmatprep.subr.bf16.mxu0 %v2757
    %8891 = vmatpush1.bf16.msra.mxu0 %v2756
    %8892 = vmatprep.subr.bf16.mxu0 %v2773
    %8893 = vmatpush1.bf16.msra.mxu0 %v2772
    %8894 = vmatprep.subr.bf16.mxu0 %v2789
    %8895 = vmatpush1.bf16.msra.mxu0 %v2788
    %8896 = vmatprep.mubr.bf16.mxu0 %v8451
    %8897 = vmatmul.mubr.bf16.gmra.mrb[0].mxu0 %v8450
    %v8898 = vpop.f32.mrb[0].mxu0
    %v8899 = vadd.f32 0.0, %v8898
    %v8900 = vpop.f32.mrb[0].mxu0
    %v8901 = vadd.f32 0.0, %v8900
    %v8902 = vpop.f32.mrb[0].mxu0
    %v8903 = vpop.f32.mrb[0].mxu0
    %8904 = vdwg.mxu0
    %8905 = vmatprep.subr.bf16.mxu0 %v2805
    %8906 = vmatpush1.bf16.msra.mxu0 %v2804
    %8907 = vmatprep.subr.bf16.mxu0 %v2821
    %8908 = vmatpush1.bf16.msra.mxu0 %v2820
    %8909 = vmatprep.subr.bf16.mxu0 %v2837
    %8910 = vmatpush1.bf16.msra.mxu0 %v2836
    %8911 = vmatprep.subr.bf16.mxu0 %v2853
    %8912 = vmatpush1.bf16.msra.mxu0 %v2852
    %8913 = vmatprep.subr.bf16.mxu0 %v2869
    %8914 = vmatpush1.bf16.msra.mxu0 %v2868
    %8915 = vmatprep.subr.bf16.mxu0 %v2885
    %8916 = vmatpush1.bf16.msra.mxu0 %v2884
    %8917 = vmatprep.subr.bf16.mxu0 %v2901
    %8918 = vmatpush1.bf16.msra.mxu0 %v2900
    %8919 = vmatprep.subr.bf16.mxu0 %v2917
    %8920 = vmatpush1.bf16.msra.mxu0 %v2916
    %8921 = vmatprep.subr.bf16.mxu0 %v2933
    %8922 = vmatpush1.bf16.msra.mxu0 %v2932
    %8923 = vmatprep.subr.bf16.mxu0 %v2949
    %8924 = vmatpush1.bf16.msra.mxu0 %v2948
    %8925 = vmatprep.subr.bf16.mxu0 %v2965
    %8926 = vmatpush1.bf16.msra.mxu0 %v2964
    %8927 = vmatprep.subr.bf16.mxu0 %v2981
    %8928 = vmatpush1.bf16.msra.mxu0 %v2980
    %8929 = vmatprep.subr.bf16.mxu0 %v2997
    %8930 = vmatpush1.bf16.msra.mxu0 %v2996
    %8931 = vmatprep.subr.bf16.mxu0 %v3013
    %8932 = vmatpush1.bf16.msra.mxu0 %v3012
    %8933 = vmatprep.subr.bf16.mxu0 %v3029
    %8934 = vmatpush1.bf16.msra.mxu0 %v3028
    %8935 = vmatprep.subr.bf16.mxu0 %v3045
    %8936 = vmatpush1.bf16.msra.mxu0 %v3044
    %8937 = vmatprep.mubr.bf16.mxu0 %v8453
    %8938 = vmatmul.mubr.bf16.gmra.mrb[0].mxu0 %v8452
    %v8939 = vpop.f32.mrb[0].mxu0
    %v8940 = vadd.f32 %v8899, %v8939
    %v8941 = vpop.f32.mrb[0].mxu0
    %v8942 = vadd.f32 %v8901, %v8941
    %v8943 = vpop.f32.mrb[0].mxu0
    %v8944 = vpop.f32.mrb[0].mxu0
    %8945 = vdwg.mxu0
    %8946 = vmatprep.subr.bf16.mxu0 %v2551
    %8947 = vmatpush1.bf16.msra.mxu0 %v2550
    %8948 = vmatprep.subr.bf16.mxu0 %v2567
    %8949 = vmatpush1.bf16.msra.mxu0 %v2566
    %8950 = vmatprep.subr.bf16.mxu0 %v2583
    %8951 = vmatpush1.bf16.msra.mxu0 %v2582
    %8952 = vmatprep.subr.bf16.mxu0 %v2599
    %8953 = vmatpush1.bf16.msra.mxu0 %v2598
    %8954 = vmatprep.subr.bf16.mxu0 %v2615
    %8955 = vmatpush1.bf16.msra.mxu0 %v2614
    %8956 = vmatprep.subr.bf16.mxu0 %v2631
    %8957 = vmatpush1.bf16.msra.mxu0 %v2630
    %8958 = vmatprep.subr.bf16.mxu0 %v2647
    %8959 = vmatpush1.bf16.msra.mxu0 %v2646
    %8960 = vmatprep.subr.bf16.mxu0 %v2663
    %8961 = vmatpush1.bf16.msra.mxu0 %v2662
    %8962 = vmatprep.subr.bf16.mxu0 %v2679
    %8963 = vmatpush1.bf16.msra.mxu0 %v2678
    %8964 = vmatprep.subr.bf16.mxu0 %v2695
    %8965 = vmatpush1.bf16.msra.mxu0 %v2694
    %8966 = vmatprep.subr.bf16.mxu0 %v2711
    %8967 = vmatpush1.bf16.msra.mxu0 %v2710
    %8968 = vmatprep.subr.bf16.mxu0 %v2727
    %8969 = vmatpush1.bf16.msra.mxu0 %v2726
    %8970 = vmatprep.subr.bf16.mxu0 %v2743
    %8971 = vmatpush1.bf16.msra.mxu0 %v2742
    %8972 = vmatprep.subr.bf16.mxu0 %v2759
    %8973 = vmatpush1.bf16.msra.mxu0 %v2758
    %8974 = vmatprep.subr.bf16.mxu0 %v2775
    %8975 = vmatpush1.bf16.msra.mxu0 %v2774
    %8976 = vmatprep.subr.bf16.mxu0 %v2791
    %8977 = vmatpush1.bf16.msra.mxu0 %v2790
    %8978 = vmatprep.mubr.bf16.mxu0 %v8451
    %8979 = vmatmul.mubr.bf16.gmra.mrb[0].mxu0 %v8450
    %v8980 = vpop.f32.mrb[0].mxu0
    %v8981 = vadd.f32 0.0, %v8980
    %v8982 = vpop.f32.mrb[0].mxu0
    %v8983 = vadd.f32 0.0, %v8982
    %v8984 = vpop.f32.mrb[0].mxu0
    %v8985 = vpop.f32.mrb[0].mxu0
    %8986 = vdwg.mxu0
    %8987 = vmatprep.subr.bf16.mxu0 %v2807
    %8988 = vmatpush1.bf16.msra.mxu0 %v2806
    %8989 = vmatprep.subr.bf16.mxu0 %v2823
    %8990 = vmatpush1.bf16.msra.mxu0 %v2822
    %8991 = vmatprep.subr.bf16.mxu0 %v2839
    %8992 = vmatpush1.bf16.msra.mxu0 %v2838
    %8993 = vmatprep.subr.bf16.mxu0 %v2855
    %8994 = vmatpush1.bf16.msra.mxu0 %v2854
    %8995 = vmatprep.subr.bf16.mxu0 %v2871
    %8996 = vmatpush1.bf16.msra.mxu0 %v2870
    %8997 = vmatprep.subr.bf16.mxu0 %v2887
    %8998 = vmatpush1.bf16.msra.mxu0 %v2886
    %8999 = vmatprep.subr.bf16.mxu0 %v2903
    %9000 = vmatpush1.bf16.msra.mxu0 %v2902
    %9001 = vmatprep.subr.bf16.mxu0 %v2919
    %9002 = vmatpush1.bf16.msra.mxu0 %v2918
    %9003 = vmatprep.subr.bf16.mxu0 %v2935
    %9004 = vmatpush1.bf16.msra.mxu0 %v2934
    %9005 = vmatprep.subr.bf16.mxu0 %v2951
    %9006 = vmatpush1.bf16.msra.mxu0 %v2950
    %9007 = vmatprep.subr.bf16.mxu0 %v2967
    %9008 = vmatpush1.bf16.msra.mxu0 %v2966
    %9009 = vmatprep.subr.bf16.mxu0 %v2983
    %9010 = vmatpush1.bf16.msra.mxu0 %v2982
    %9011 = vmatprep.subr.bf16.mxu0 %v2999
    %9012 = vmatpush1.bf16.msra.mxu0 %v2998
    %9013 = vmatprep.subr.bf16.mxu0 %v3015
    %9014 = vmatpush1.bf16.msra.mxu0 %v3014
    %9015 = vmatprep.subr.bf16.mxu0 %v3031
    %9016 = vmatpush1.bf16.msra.mxu0 %v3030
    %9017 = vmatprep.subr.bf16.mxu0 %v3047
    %9018 = vmatpush1.bf16.msra.mxu0 %v3046
    %9019 = vmatprep.mubr.bf16.mxu0 %v8453
    %9020 = vmatmul.mubr.bf16.gmra.mrb[0].mxu0 %v8452
    %v9021 = vpop.f32.mrb[0].mxu0
    %v9022 = vadd.f32 %v8981, %v9021
    %v9023 = vpop.f32.mrb[0].mxu0
    %v9024 = vadd.f32 %v8983, %v9023
    %v9025 = vpop.f32.mrb[0].mxu0
    %v9026 = vpop.f32.mrb[0].mxu0
    %9027 = vdwg.mxu0
    %9028 = vmatprep.subr.bf16.mxu0 %v2553
    %9029 = vmatpush1.bf16.msra.mxu0 %v2552
    %9030 = vmatprep.subr.bf16.mxu0 %v2569
    %9031 = vmatpush1.bf16.msra.mxu0 %v2568
    %9032 = vmatprep.subr.bf16.mxu0 %v2585
    %9033 = vmatpush1.bf16.msra.mxu0 %v2584
    %9034 = vmatprep.subr.bf16.mxu0 %v2601
    %9035 = vmatpush1.bf16.msra.mxu0 %v2600
    %9036 = vmatprep.subr.bf16.mxu0 %v2617
    %9037 = vmatpush1.bf16.msra.mxu0 %v2616
    %9038 = vmatprep.subr.bf16.mxu0 %v2633
    %9039 = vmatpush1.bf16.msra.mxu0 %v2632
    %9040 = vmatprep.subr.bf16.mxu0 %v2649
    %9041 = vmatpush1.bf16.msra.mxu0 %v2648
    %9042 = vmatprep.subr.bf16.mxu0 %v2665
    %9043 = vmatpush1.bf16.msra.mxu0 %v2664
    %9044 = vmatprep.subr.bf16.mxu0 %v2681
    %9045 = vmatpush1.bf16.msra.mxu0 %v2680
    %9046 = vmatprep.subr.bf16.mxu0 %v2697
    %9047 = vmatpush1.bf16.msra.mxu0 %v2696
    %9048 = vmatprep.subr.bf16.mxu0 %v2713
    %9049 = vmatpush1.bf16.msra.mxu0 %v2712
    %9050 = vmatprep.subr.bf16.mxu0 %v2729
    %9051 = vmatpush1.bf16.msra.mxu0 %v2728
    %9052 = vmatprep.subr.bf16.mxu0 %v2745
    %9053 = vmatpush1.bf16.msra.mxu0 %v2744
    %9054 = vmatprep.subr.bf16.mxu0 %v2761
    %9055 = vmatpush1.bf16.msra.mxu0 %v2760
    %9056 = vmatprep.subr.bf16.mxu0 %v2777
    %9057 = vmatpush1.bf16.msra.mxu0 %v2776
    %9058 = vmatprep.subr.bf16.mxu0 %v2793
    %9059 = vmatpush1.bf16.msra.mxu0 %v2792
    %9060 = vmatprep.mubr.bf16.mxu0 %v8451
    %9061 = vmatmul.mubr.bf16.gmra.mrb[0].mxu0 %v8450
    %v9062 = vpop.f32.mrb[0].mxu0
    %v9063 = vadd.f32 0.0, %v9062
    %v9064 = vpop.f32.mrb[0].mxu0
    %v9065 = vadd.f32 0.0, %v9064
    %v9066 = vpop.f32.mrb[0].mxu0
    %v9067 = vpop.f32.mrb[0].mxu0
    %9068 = vdwg.mxu0
    %9069 = vmatprep.subr.bf16.mxu0 %v2809
    %9070 = vmatpush1.bf16.msra.mxu0 %v2808
    %9071 = vmatprep.subr.bf16.mxu0 %v2825
    %9072 = vmatpush1.bf16.msra.mxu0 %v2824
    %9073 = vmatprep.subr.bf16.mxu0 %v2841
    %9074 = vmatpush1.bf16.msra.mxu0 %v2840
    %9075 = vmatprep.subr.bf16.mxu0 %v2857
    %9076 = vmatpush1.bf16.msra.mxu0 %v2856
    %9077 = vmatprep.subr.bf16.mxu0 %v2873
    %9078 = vmatpush1.bf16.msra.mxu0 %v2872
    %9079 = vmatprep.subr.bf16.mxu0 %v2889
    %9080 = vmatpush1.bf16.msra.mxu0 %v2888
    %9081 = vmatprep.subr.bf16.mxu0 %v2905
    %9082 = vmatpush1.bf16.msra.mxu0 %v2904
    %9083 = vmatprep.subr.bf16.mxu0 %v2921
    %9084 = vmatpush1.bf16.msra.mxu0 %v2920
    %9085 = vmatprep.subr.bf16.mxu0 %v2937
    %9086 = vmatpush1.bf16.msra.mxu0 %v2936
    %9087 = vmatprep.subr.bf16.mxu0 %v2953
    %9088 = vmatpush1.bf16.msra.mxu0 %v2952
    %9089 = vmatprep.subr.bf16.mxu0 %v2969
    %9090 = vmatpush1.bf16.msra.mxu0 %v2968
    %9091 = vmatprep.subr.bf16.mxu0 %v2985
    %9092 = vmatpush1.bf16.msra.mxu0 %v2984
    %9093 = vmatprep.subr.bf16.mxu0 %v3001
    %9094 = vmatpush1.bf16.msra.mxu0 %v3000
    %9095 = vmatprep.subr.bf16.mxu0 %v3017
    %9096 = vmatpush1.bf16.msra.mxu0 %v3016
    %9097 = vmatprep.subr.bf16.mxu0 %v3033
    %9098 = vmatpush1.bf16.msra.mxu0 %v3032
    %9099 = vmatprep.subr.bf16.mxu0 %v3049
    %9100 = vmatpush1.bf16.msra.mxu0 %v3048
    %9101 = vmatprep.mubr.bf16.mxu0 %v8453
    %9102 = vmatmul.mubr.bf16.gmra.mrb[0].mxu0 %v8452
    %v9103 = vpop.f32.mrb[0].mxu0
    %v9104 = vadd.f32 %v9063, %v9103
    %v9105 = vpop.f32.mrb[0].mxu0
    %v9106 = vadd.f32 %v9065, %v9105
    %v9107 = vpop.f32.mrb[0].mxu0
    %v9108 = vpop.f32.mrb[0].mxu0
    %9109 = vdwg.mxu0
    %v9110 = vadd.f32 %v1867, %v8530
    %v9111 = vadd.f32 %v1869, %v8532
    %v9112 = vadd.f32 %v1940, %v8612
    %v9113 = vadd.f32 %v1942, %v8614
    %v9114 = vadd.f32 %v2013, %v8694
    %v9115 = vadd.f32 %v2015, %v8696
    %v9116 = vadd.f32 %v2086, %v8776
    %v9117 = vadd.f32 %v2088, %v8778
    %v9118 = vadd.f32 %v2159, %v8858
    %v9119 = vadd.f32 %v2161, %v8860
    %v9120 = vadd.f32 %v2232, %v8940
    %v9121 = vadd.f32 %v2234, %v8942
    %v9122 = vadd.f32 %v2305, %v9022
    %v9123 = vadd.f32 %v2307, %v9024
    %v9124 = vadd.f32 %v2378, %v9104
    %v9125 = vadd.f32 %v2380, %v9106
    %v9126 = vxor.u32 %v9110, 2147483648
    %v9127 = vxor.u32 %v9111, 2147483648
    %v9128 = vxor.u32 %v9112, 2147483648
    %v9129 = vxor.u32 %v9113, 2147483648
    %v9130 = vmul.f32 %v9126, 1.442695
    %v9131 = vpow.pop %v9130
    %v9132 = vmul.f32 %v9127, 1.442695
    %v9133 = vpow.pop %v9132
    %v9134 = vmul.f32 %v9128, 1.442695
    %v9135 = vpow.pop %v9134
    %v9136 = vmul.f32 %v9129, 1.442695
    %v9137 = vpow.pop %v9136
    %v9138 = vadd.f32 %v9131, 1.0
    %v9139 = vadd.f32 %v9133, 1.0
    %v9140 = vadd.f32 %v9135, 1.0
    %v9141 = vadd.f32 %v9137, 1.0
    %v9142 = vrcp.pop %v9138
    %v9143 = vmul.f32 1.0, %v9142
    %v9144 = vrcp.pop %v9139
    %v9145 = vmul.f32 1.0, %v9144
    %v9146 = vrcp.pop %v9140
    %v9147 = vmul.f32 1.0, %v9146
    %v9148 = vrcp.pop %v9141
    %v9149 = vmul.f32 1.0, %v9148
    %v9150 = vxor.u32 %v9114, 2147483648
    %v9151 = vxor.u32 %v9115, 2147483648
    %v9152 = vxor.u32 %v9116, 2147483648
    %v9153 = vxor.u32 %v9117, 2147483648
    %v9154 = vmul.f32 %v9150, 1.442695
    %v9155 = vpow.pop %v9154
    %v9156 = vmul.f32 %v9151, 1.442695
    %v9157 = vpow.pop %v9156
    %v9158 = vmul.f32 %v9152, 1.442695
    %v9159 = vpow.pop %v9158
    %v9160 = vmul.f32 %v9153, 1.442695
    %v9161 = vpow.pop %v9160
    %v9162 = vadd.f32 %v9155, 1.0
    %v9163 = vadd.f32 %v9157, 1.0
    %v9164 = vadd.f32 %v9159, 1.0
    %v9165 = vadd.f32 %v9161, 1.0
    %v9166 = vrcp.pop %v9162
    %v9167 = vmul.f32 1.0, %v9166
    %v9168 = vrcp.pop %v9163
    %v9169 = vmul.f32 1.0, %v9168
    %v9170 = vrcp.pop %v9164
    %v9171 = vmul.f32 1.0, %v9170
    %v9172 = vrcp.pop %v9165
    %v9173 = vmul.f32 1.0, %v9172
    %v9174 = vtanh.pop %v9118
    %v9175 = vtanh.pop %v9119
    %v9176 = vtanh.pop %v9120
    %v9177 = vtanh.pop %v9121
    %v9178 = vxor.u32 %v9122, 2147483648
    %v9179 = vxor.u32 %v9123, 2147483648
    %v9180 = vxor.u32 %v9124, 2147483648
    %v9181 = vxor.u32 %v9125, 2147483648
    %v9182 = vmul.f32 %v9178, 1.442695
    %v9183 = vpow.pop %v9182
    %v9184 = vmul.f32 %v9179, 1.442695
    %v9185 = vpow.pop %v9184
    %v9186 = vmul.f32 %v9180, 1.442695
    %v9187 = vpow.pop %v9186
    %v9188 = vmul.f32 %v9181, 1.442695
    %v9189 = vpow.pop %v9188
    %v9190 = vadd.f32 %v9183, 1.0
    %v9191 = vadd.f32 %v9185, 1.0
    %v9192 = vadd.f32 %v9187, 1.0
    %v9193 = vadd.f32 %v9189, 1.0
    %v9194 = vrcp.pop %v9190
    %v9195 = vmul.f32 1.0, %v9194
    %v9196 = vrcp.pop %v9191
    %v9197 = vmul.f32 1.0, %v9196
    %v9198 = vrcp.pop %v9192
    %v9199 = vmul.f32 1.0, %v9198
    %v9200 = vrcp.pop %v9193
    %v9201 = vmul.f32 1.0, %v9200
    %v9202 = vmul.f32 %v9167, %v8438
    %v9203 = vmul.f32 %v9169, %v8439
    %v9204 = vmul.f32 %v9171, %v8440
    %v9205 = vmul.f32 %v9173, %v8441
    %v9206 = vmul.f32 %v9143, %v9174
    %v9207 = vmul.f32 %v9145, %v9175
    %v9208 = vmul.f32 %v9147, %v9176
    %v9209 = vmul.f32 %v9149, %v9177
    %v9210 = vadd.f32 %v9202, %v9206
    %v9211 = vadd.f32 %v9203, %v9207
    %v9212 = vadd.f32 %v9204, %v9208
    %v9213 = vadd.f32 %v9205, %v9209
    %v9214 = vtanh.pop %v9210
    %v9215 = vtanh.pop %v9211
    %v9216 = vtanh.pop %v9212
    %v9217 = vtanh.pop %v9213
    %v9218 = vmul.f32 %v9195, %v9214
    %v9219 = vmul.f32 %v9197, %v9215
    %v9220 = vmul.f32 %v9199, %v9216
    %v9221 = vmul.f32 %v9201, %v9217
    %s9222 = smul.u32 %s2534, 2
    %s9223 = sshll.u32 %s9222, 4
    %9224 = dma.done %s2382, %s9223
    %s9225 = smul.u32 4, 32
    %s9226 = smul.u32 %s9225, 1
    %s9227 = sshll.u32 %s9226, 4
    %9228 = dma.done %s2417, %s9227
    %s9229 = smul.u32 4, 16
    %s9230 = smul.u32 %s9229, 4
    %s9231 = sshll.u32 %s9230, 4
    %9232 = dma.done %s2429, %s9231
    %s9233 = smul.u32 %s2534, 5
    %s9234 = sshll.u32 %s9233, 4
    %9235 = dma.done %s2464, %s9234
    %s9236 = smul.u32 4, 80
    %s9237 = smul.u32 %s9236, 2
    %s9238 = sshll.u32 %s9237, 4
    %9239 = dma.done %s2499, %s9238
    %v9240 = vpack.c.bf16 %v9218, %v9218
    %v9241 = vpack.c.bf16 %v9219, %v9219
    %v9242 = vpack.c.bf16 %v9220, %v9220
    %v9243 = vpack.c.bf16 %v9221, %v9221
    %v9244 = vld [vmem:[#allocation3] sm:$0xff]
    %v9245 = vld [vmem:[#allocation3 + $0x8] sm:$0xff]
    %v9246 = vld [vmem:[#allocation3 + $0x10] sm:$0xff]
    %v9247 = vld [vmem:[#allocation3 + $0x18] sm:$0xff]
    %v9248 = vld [vmem:[#allocation3 + $0x20] sm:$0xff]
    %v9249 = vld [vmem:[#allocation3 + $0x28] sm:$0xff]
    %v9250 = vld [vmem:[#allocation3 + $0x30] sm:$0xff]
    %v9251 = vld [vmem:[#allocation3 + $0x38] sm:$0xff]
    %v9252 = vld [vmem:[#allocation3 + $0x40] sm:$0xff]
    %v9253 = vld [vmem:[#allocation3 + $0x48] sm:$0xff]
    %v9254 = vld [vmem:[#allocation3 + $0x50] sm:$0xff]
    %v9255 = vld [vmem:[#allocation3 + $0x58] sm:$0xff]
    %v9256 = vld [vmem:[#allocation3 + $0x60] sm:$0xff]
    %v9257 = vld [vmem:[#allocation3 + $0x68] sm:$0xff]
    %v9258 = vld [vmem:[#allocation3 + $0x70] sm:$0xff]
    %v9259 = vld [vmem:[#allocation3 + $0x78] sm:$0xff]
    %v9260 = vld [vmem:[#allocation3 + $0x80] sm:$0xff]
    %v9261 = vld [vmem:[#allocation3 + $0x88] sm:$0xff]
    %v9262 = vld [vmem:[#allocation3 + $0x90] sm:$0xff]
    %v9263 = vld [vmem:[#allocation3 + $0x98] sm:$0xff]
    %v9264 = vld [vmem:[#allocation3 + $0xa0] sm:$0xff]
    %v9265 = vld [vmem:[#allocation3 + $0xa8] sm:$0xff]
    %v9266 = vld [vmem:[#allocation3 + $0xb0] sm:$0xff]
    %v9267 = vld [vmem:[#allocation3 + $0xb8] sm:$0xff]
    %v9268 = vld [vmem:[#allocation3 + $0xc0] sm:$0xff]
    %v9269 = vld [vmem:[#allocation3 + $0xc8] sm:$0xff]
    %v9270 = vld [vmem:[#allocation3 + $0xd0] sm:$0xff]
    %v9271 = vld [vmem:[#allocation3 + $0xd8] sm:$0xff]
    %v9272 = vld [vmem:[#allocation3 + $0xe0] sm:$0xff]
    %v9273 = vld [vmem:[#allocation3 + $0xe8] sm:$0xff]
    %v9274 = vld [vmem:[#allocation3 + $0xf0] sm:$0xff]
    %v9275 = vld [vmem:[#allocation3 + $0xf8] sm:$0xff]
    %v9276 = vld [vmem:[#allocation3 + $0x100] sm:$0xff]
    %v9277 = vld [vmem:[#allocation3 + $0x108] sm:$0xff]
    %v9278 = vld [vmem:[#allocation3 + $0x110] sm:$0xff]
    %v9279 = vld [vmem:[#allocation3 + $0x118] sm:$0xff]
    %v9280 = vld [vmem:[#allocation3 + $0x120] sm:$0xff]
    %v9281 = vld [vmem:[#allocation3 + $0x128] sm:$0xff]
    %v9282 = vld [vmem:[#allocation3 + $0x130] sm:$0xff]
    %v9283 = vld [vmem:[#allocation3 + $0x138] sm:$0xff]
    %v9284 = vld [vmem:[#allocation3 + $0x140] sm:$0xff]
    %v9285 = vld [vmem:[#allocation3 + $0x148] sm:$0xff]
    %v9286 = vld [vmem:[#allocation3 + $0x150] sm:$0xff]
    %v9287 = vld [vmem:[#allocation3 + $0x158] sm:$0xff]
    %v9288 = vld [vmem:[#allocation3 + $0x160] sm:$0xff]
    %v9289 = vld [vmem:[#allocation3 + $0x168] sm:$0xff]
    %v9290 = vld [vmem:[#allocation3 + $0x170] sm:$0xff]
    %v9291 = vld [vmem:[#allocation3 + $0x178] sm:$0xff]
    %v9292 = vld [vmem:[#allocation3 + $0x180] sm:$0xff]
    %v9293 = vld [vmem:[#allocation3 + $0x188] sm:$0xff]
    %v9294 = vld [vmem:[#allocation3 + $0x190] sm:$0xff]
    %v9295 = vld [vmem:[#allocation3 + $0x198] sm:$0xff]
    %v9296 = vld [vmem:[#allocation3 + $0x1a0] sm:$0xff]
    %v9297 = vld [vmem:[#allocation3 + $0x1a8] sm:$0xff]
    %v9298 = vld [vmem:[#allocation3 + $0x1b0] sm:$0xff]
    %v9299 = vld [vmem:[#allocation3 + $0x1b8] sm:$0xff]
    %v9300 = vld [vmem:[#allocation3 + $0x1c0] sm:$0xff]
    %v9301 = vld [vmem:[#allocation3 + $0x1c8] sm:$0xff]
    %v9302 = vld [vmem:[#allocation3 + $0x1d0] sm:$0xff]
    %v9303 = vld [vmem:[#allocation3 + $0x1d8] sm:$0xff]
    %v9304 = vld [vmem:[#allocation3 + $0x1e0] sm:$0xff]
    %v9305 = vld [vmem:[#allocation3 + $0x1e8] sm:$0xff]
    %v9306 = vld [vmem:[#allocation3 + $0x1f0] sm:$0xff]
    %v9307 = vld [vmem:[#allocation3 + $0x1f8] sm:$0xff]
    %v9308 = vld [vmem:[#allocation13] sm:$0x3]
    %v9310 = vlaneseq
    %v9311 = vshrl.u32 %v9310, 7
    %v9312 = vsub.s32 0, %v9311
    %v9313 = vrot.slane %v9308, %v9312
    %v9314 = vlaneseq
    %v9315 = vshrl.u32 %v9314, 7
    %v9316 = vsub.s32 1, %v9315
    %v9317 = vrot.slane %v9308, %v9316
    %9320 = vmatprep.subr.bf16.mxu0 %v9245
    %9321 = vmatpush1.bf16.msra.mxu0 %v9244
    %9322 = vmatprep.subr.bf16.mxu0 %v9247
    %9323 = vmatpush1.bf16.msra.mxu0 %v9246
    %9324 = vmatprep.subr.bf16.mxu0 %v9249
    %9325 = vmatpush1.bf16.msra.mxu0 %v9248
    %9326 = vmatprep.subr.bf16.mxu0 %v9251
    %9327 = vmatpush1.bf16.msra.mxu0 %v9250
    %9328 = vmatprep.subr.bf16.mxu0 %v9253
    %9329 = vmatpush1.bf16.msra.mxu0 %v9252
    %9330 = vmatprep.subr.bf16.mxu0 %v9255
    %9331 = vmatpush1.bf16.msra.mxu0 %v9254
    %9332 = vmatprep.subr.bf16.mxu0 %v9257
    %9333 = vmatpush1.bf16.msra.mxu0 %v9256
    %9334 = vmatprep.subr.bf16.mxu0 %v9259
    %9335 = vmatpush1.bf16.msra.mxu0 %v9258
    %9336 = vmatprep.subr.bf16.mxu0 %v9261
    %9337 = vmatpush1.bf16.msra.mxu0 %v9260
    %9338 = vmatprep.subr.bf16.mxu0 %v9263
    %9339 = vmatpush1.bf16.msra.mxu0 %v9262
    %9340 = vmatprep.subr.bf16.mxu0 %v9265
    %9341 = vmatpush1.bf16.msra.mxu0 %v9264
    %9342 = vmatprep.subr.bf16.mxu0 %v9267
    %9343 = vmatpush1.bf16.msra.mxu0 %v9266
    %9344 = vmatprep.subr.bf16.mxu0 %v9269
    %9345 = vmatpush1.bf16.msra.mxu0 %v9268
    %9346 = vmatprep.subr.bf16.mxu0 %v9271
    %9347 = vmatpush1.bf16.msra.mxu0 %v9270
    %9348 = vmatprep.subr.bf16.mxu0 %v9273
    %9349 = vmatpush1.bf16.msra.mxu0 %v9272
    %9350 = vmatprep.subr.bf16.mxu0 %v9275
    %9351 = vmatpush1.bf16.msra.mxu0 %v9274
    %9352 = vmatprep.mubr.bf16.mxu0 %v9241
    %9353 = vmatmul.mubr.bf16.gmra.mrb[0].mxu0 %v9240
    %v9354 = vpop.f32.mrb[0].mxu0
    %v9355 = vadd.f32 %v9313, %v9354
    %v9356 = vpop.f32.mrb[0].mxu0
    %v9357 = vadd.f32 %v9317, %v9356
    %v9358 = vpop.f32.mrb[0].mxu0
    %v9359 = vpop.f32.mrb[0].mxu0
    %9360 = vdwg.mxu0
    %9361 = vmatprep.subr.bf16.mxu0 %v9277
    %9362 = vmatpush1.bf16.msra.mxu0 %v9276
    %9363 = vmatprep.subr.bf16.mxu0 %v9279
    %9364 = vmatpush1.bf16.msra.mxu0 %v9278
    %9365 = vmatprep.subr.bf16.mxu0 %v9281
    %9366 = vmatpush1.bf16.msra.mxu0 %v9280
    %9367 = vmatprep.subr.bf16.mxu0 %v9283
    %9368 = vmatpush1.bf16.msra.mxu0 %v9282
    %9369 = vmatprep.subr.bf16.mxu0 %v9285
    %9370 = vmatpush1.bf16.msra.mxu0 %v9284
    %9371 = vmatprep.subr.bf16.mxu0 %v9287
    %9372 = vmatpush1.bf16.msra.mxu0 %v9286
    %9373 = vmatprep.subr.bf16.mxu0 %v9289
    %9374 = vmatpush1.bf16.msra.mxu0 %v9288
    %9375 = vmatprep.subr.bf16.mxu0 %v9291
    %9376 = vmatpush1.bf16.msra.mxu0 %v9290
    %9377 = vmatprep.subr.bf16.mxu0 %v9293
    %9378 = vmatpush1.bf16.msra.mxu0 %v9292
    %9379 = vmatprep.subr.bf16.mxu0 %v9295
    %9380 = vmatpush1.bf16.msra.mxu0 %v9294
    %9381 = vmatprep.subr.bf16.mxu0 %v9297
    %9382 = vmatpush1.bf16.msra.mxu0 %v9296
    %9383 = vmatprep.subr.bf16.mxu0 %v9299
    %9384 = vmatpush1.bf16.msra.mxu0 %v9298
    %9385 = vmatprep.subr.bf16.mxu0 %v9301
    %9386 = vmatpush1.bf16.msra.mxu0 %v9300
    %9387 = vmatprep.subr.bf16.mxu0 %v9303
    %9388 = vmatpush1.bf16.msra.mxu0 %v9302
    %9389 = vmatprep.subr.bf16.mxu0 %v9305
    %9390 = vmatpush1.bf16.msra.mxu0 %v9304
    %9391 = vmatprep.subr.bf16.mxu0 %v9307
    %9392 = vmatpush1.bf16.msra.mxu0 %v9306
    %9393 = vmatprep.mubr.bf16.mxu0 %v9243
    %9394 = vmatmul.mubr.bf16.gmra.mrb[0].mxu0 %v9242
    %v9395 = vpop.f32.mrb[0].mxu0
    %v9396 = vadd.f32 %v9355, %v9395
    %v9397 = vpop.f32.mrb[0].mxu0
    %v9398 = vadd.f32 %v9357, %v9397
    %v9399 = vpop.f32.mrb[0].mxu0
    %v9400 = vpop.f32.mrb[0].mxu0
    %9401 = vdwg.mxu0
    %v9402 = vtanh.pop %v9396
    %v9403 = vtanh.pop %v9398
    %v9404 = vpack.c.bf16 %v9402, %v9402
    %v9405 = vpack.c.bf16 %v9403, %v9403
    %v9406 = vld [vmem:[#allocation4] sm:$0xff]
    %v9407 = vld [vmem:[#allocation4 + $0x8] sm:$0xff]
    %v9408 = vld [vmem:[#allocation4 + $0x10] sm:$0xff]
    %v9409 = vld [vmem:[#allocation4 + $0x18] sm:$0xff]
    %v9410 = vld [vmem:[#allocation4 + $0x20] sm:$0xff]
    %v9411 = vld [vmem:[#allocation4 + $0x28] sm:$0xff]
    %v9412 = vld [vmem:[#allocation4 + $0x30] sm:$0xff]
    %v9413 = vld [vmem:[#allocation4 + $0x38] sm:$0xff]
    %v9414 = vld [vmem:[#allocation4 + $0x40] sm:$0xff]
    %v9415 = vld [vmem:[#allocation4 + $0x48] sm:$0xff]
    %v9416 = vld [vmem:[#allocation4 + $0x50] sm:$0xff]
    %v9417 = vld [vmem:[#allocation4 + $0x58] sm:$0xff]
    %v9418 = vld [vmem:[#allocation4 + $0x60] sm:$0xff]
    %v9419 = vld [vmem:[#allocation4 + $0x68] sm:$0xff]
    %v9420 = vld [vmem:[#allocation4 + $0x70] sm:$0xff]
    %v9421 = vld [vmem:[#allocation4 + $0x78] sm:$0xff]
    %v9422 = vld [vmem:[#allocation14] sm:$0x1]
    %v9424 = vlaneseq
    %v9425 = vshrl.u32 %v9424, 7
    %v9426 = vsub.s32 0, %v9425
    %v9427 = vrot.slane %v9422, %v9426
    %9429 = vmatprep.subr.bf16.mxu0 0
    %9430 = vmatpush1.bf16.msra.mxu0 %v9406
    %9431 = vmatprep.subr.bf16.mxu0 0
    %9432 = vmatpush1.bf16.msra.mxu0 %v9407
    %9433 = vmatprep.subr.bf16.mxu0 0
    %9434 = vmatpush1.bf16.msra.mxu0 %v9408
    %9435 = vmatprep.subr.bf16.mxu0 0
    %9436 = vmatpush1.bf16.msra.mxu0 %v9409
    %9437 = vmatprep.subr.bf16.mxu0 0
    %9438 = vmatpush1.bf16.msra.mxu0 %v9410
    %9439 = vmatprep.subr.bf16.mxu0 0
    %9440 = vmatpush1.bf16.msra.mxu0 %v9411
    %9441 = vmatprep.subr.bf16.mxu0 0
    %9442 = vmatpush1.bf16.msra.mxu0 %v9412
    %9443 = vmatprep.subr.bf16.mxu0 0
    %9444 = vmatpush1.bf16.msra.mxu0 %v9413
    %9445 = vmatprep.subr.bf16.mxu0 0
    %9446 = vmatpush1.bf16.msra.mxu0 %v9414
    %9447 = vmatprep.subr.bf16.mxu0 0
    %9448 = vmatpush1.bf16.msra.mxu0 %v9415
    %9449 = vmatprep.subr.bf16.mxu0 0
    %9450 = vmatpush1.bf16.msra.mxu0 %v9416
    %9451 = vmatprep.subr.bf16.mxu0 0
    %9452 = vmatpush1.bf16.msra.mxu0 %v9417
    %9453 = vmatprep.subr.bf16.mxu0 0
    %9454 = vmatpush1.bf16.msra.mxu0 %v9418
    %9455 = vmatprep.subr.bf16.mxu0 0
    %9456 = vmatpush1.bf16.msra.mxu0 %v9419
    %9457 = vmatprep.subr.bf16.mxu0 0
    %9458 = vmatpush1.bf16.msra.mxu0 %v9420
    %9459 = vmatprep.subr.bf16.mxu0 0
    %9460 = vmatpush1.bf16.msra.mxu0 %v9421
    %9461 = vmatprep.mubr.bf16.mxu0 %v9405
    %9462 = vmatmul.mubr.bf16.gmra.mrb[0].mxu0 %v9404
    %v9463 = vpop.f32.mrb[0].mxu0
    %v9464 = vadd.f32 %v9427, %v9463
    %v9465 = vpop.f32.mrb[0].mxu0
    %v9466 = vpop.f32.mrb[0].mxu0
    %v9467 = vpop.f32.mrb[0].mxu0
    %9468 = vdwg.mxu0
    %v9469 = vtanh.pop %v9464
    %v9470 = vpack.c.bf16 %v9469, %v9469
    %v9471 = vld [vmem:[#allocation5] sm:$0xff]
    %v9472 = vld [vmem:[#allocation5 + $0x8] sm:$0xff]
    %v9473 = vld [vmem:[#allocation5 + $0x10] sm:$0xff]
    %v9474 = vld [vmem:[#allocation5 + $0x18] sm:$0xff]
    %v9475 = vld [vmem:[#allocation5 + $0x20] sm:$0xff]
    %v9476 = vld [vmem:[#allocation5 + $0x28] sm:$0xff]
    %v9477 = vld [vmem:[#allocation5 + $0x30] sm:$0xff]
    %v9478 = vld [vmem:[#allocation5 + $0x38] sm:$0xff]
    %v9479 = vld [vmem:[#allocation5 + $0x40] sm:$0xff]
    %v9480 = vld [vmem:[#allocation5 + $0x48] sm:$0xff]
    %v9481 = vld [vmem:[#allocation5 + $0x50] sm:$0xff]
    %v9482 = vld [vmem:[#allocation5 + $0x58] sm:$0xff]
    %v9483 = vld [vmem:[#allocation5 + $0x60] sm:$0xff]
    %v9484 = vld [vmem:[#allocation5 + $0x68] sm:$0xff]
    %v9485 = vld [vmem:[#allocation5 + $0x70] sm:$0xff]
    %v9486 = vld [vmem:[#allocation5 + $0x78] sm:$0xff]
    %v9487 = vld [vmem:[#allocation5 + $0x80] sm:$0xff]
    %v9488 = vld [vmem:[#allocation5 + $0x88] sm:$0xff]
    %v9489 = vld [vmem:[#allocation5 + $0x90] sm:$0xff]
    %v9490 = vld [vmem:[#allocation5 + $0x98] sm:$0xff]
    %v9491 = vld [vmem:[#allocation5 + $0xa0] sm:$0xff]
    %v9492 = vld [vmem:[#allocation5 + $0xa8] sm:$0xff]
    %v9493 = vld [vmem:[#allocation5 + $0xb0] sm:$0xff]
    %v9494 = vld [vmem:[#allocation5 + $0xb8] sm:$0xff]
    %v9495 = vld [vmem:[#allocation5 + $0xc0] sm:$0xff]
    %v9496 = vld [vmem:[#allocation5 + $0xc8] sm:$0xff]
    %v9497 = vld [vmem:[#allocation5 + $0xd0] sm:$0xff]
    %v9498 = vld [vmem:[#allocation5 + $0xd8] sm:$0xff]
    %v9499 = vld [vmem:[#allocation5 + $0xe0] sm:$0xff]
    %v9500 = vld [vmem:[#allocation5 + $0xe8] sm:$0xff]
    %v9501 = vld [vmem:[#allocation5 + $0xf0] sm:$0xff]
    %v9502 = vld [vmem:[#allocation5 + $0xf8] sm:$0xff]
    %v9503 = vld [vmem:[#allocation16] sm:$0xf]
    %v9505 = vlaneseq
    %v9506 = vshrl.u32 %v9505, 7
    %v9507 = vsub.s32 0, %v9506
    %v9508 = vrot.slane %v9503, %v9507
    %v9509 = vlaneseq
    %v9510 = vshrl.u32 %v9509, 7
    %v9511 = vsub.s32 1, %v9510
    %v9512 = vrot.slane %v9503, %v9511
    %v9513 = vlaneseq
    %v9514 = vshrl.u32 %v9513, 7
    %v9515 = vsub.s32 2, %v9514
    %v9516 = vrot.slane %v9503, %v9515
    %v9517 = vlaneseq
    %v9518 = vshrl.u32 %v9517, 7
    %v9519 = vsub.s32 3, %v9518
    %v9520 = vrot.slane %v9503, %v9519
    %9525 = vmatprep.subr.bf16.mxu0 %v9472
    %9526 = vmatpush1.bf16.msra.mxu0 %v9471
    %9527 = vmatprep.subr.bf16.mxu0 %v9476
    %9528 = vmatpush1.bf16.msra.mxu0 %v9475
    %9529 = vmatprep.subr.bf16.mxu0 %v9480
    %9530 = vmatpush1.bf16.msra.mxu0 %v9479
    %9531 = vmatprep.subr.bf16.mxu0 %v9484
    %9532 = vmatpush1.bf16.msra.mxu0 %v9483
    %9533 = vmatprep.subr.bf16.mxu0 %v9488
    %9534 = vmatpush1.bf16.msra.mxu0 %v9487
    %9535 = vmatprep.subr.bf16.mxu0 %v9492
    %9536 = vmatpush1.bf16.msra.mxu0 %v9491
    %9537 = vmatprep.subr.bf16.mxu0 %v9496
    %9538 = vmatpush1.bf16.msra.mxu0 %v9495
    %9539 = vmatprep.subr.bf16.mxu0 %v9500
    %9540 = vmatpush1.bf16.msra.mxu0 %v9499
    %9541 = vmatprep.subr.bf16.mxu0 0
    %9542 = vmatpush1.bf16.msra.mxu0 0
    %9543 = vmatprep.subr.bf16.mxu0 0
    %9544 = vmatpush1.bf16.msra.mxu0 0
    %9545 = vmatprep.subr.bf16.mxu0 0
    %9546 = vmatpush1.bf16.msra.mxu0 0
    %9547 = vmatprep.subr.bf16.mxu0 0
    %9548 = vmatpush1.bf16.msra.mxu0 0
    %9549 = vmatprep.subr.bf16.mxu0 0
    %9550 = vmatpush1.bf16.msra.mxu0 0
    %9551 = vmatprep.subr.bf16.mxu0 0
    %9552 = vmatpush1.bf16.msra.mxu0 0
    %9553 = vmatprep.subr.bf16.mxu0 0
    %9554 = vmatpush1.bf16.msra.mxu0 0
    %9555 = vmatprep.subr.bf16.mxu0 0
    %9556 = vmatpush1.bf16.msra.mxu0 0
    %9557 = vmatprep.mubr.bf16.mxu0 0
    %9558 = vmatmul.mubr.bf16.gmra.mrb[0].mxu0 %v9470
    %v9559 = vpop.f32.mrb[0].mxu0
    %v9560 = vadd.f32 %v9508, %v9559
    %v9561 = vpop.f32.mrb[0].mxu0
    %v9562 = vadd.f32 %v9512, %v9561
    %v9563 = vpop.f32.mrb[0].mxu0
    %v9564 = vpop.f32.mrb[0].mxu0
    %9565 = vdwg.mxu0
    %9566 = vmatprep.subr.bf16.mxu0 %v9474
    %9567 = vmatpush1.bf16.msra.mxu0 %v9473
    %9568 = vmatprep.subr.bf16.mxu0 %v9478
    %9569 = vmatpush1.bf16.msra.mxu0 %v9477
    %9570 = vmatprep.subr.bf16.mxu0 %v9482
    %9571 = vmatpush1.bf16.msra.mxu0 %v9481
    %9572 = vmatprep.subr.bf16.mxu0 %v9486
    %9573 = vmatpush1.bf16.msra.mxu0 %v9485
    %9574 = vmatprep.subr.bf16.mxu0 %v9490
    %9575 = vmatpush1.bf16.msra.mxu0 %v9489
    %9576 = vmatprep.subr.bf16.mxu0 %v9494
    %9577 = vmatpush1.bf16.msra.mxu0 %v9493
    %9578 = vmatprep.subr.bf16.mxu0 %v9498
    %9579 = vmatpush1.bf16.msra.mxu0 %v9497
    %9580 = vmatprep.subr.bf16.mxu0 %v9502
    %9581 = vmatpush1.bf16.msra.mxu0 %v9501
    %9582 = vmatprep.subr.bf16.mxu0 0
    %9583 = vmatpush1.bf16.msra.mxu0 0
    %9584 = vmatprep.subr.bf16.mxu0 0
    %9585 = vmatpush1.bf16.msra.mxu0 0
    %9586 = vmatprep.subr.bf16.mxu0 0
    %9587 = vmatpush1.bf16.msra.mxu0 0
    %9588 = vmatprep.subr.bf16.mxu0 0
    %9589 = vmatpush1.bf16.msra.mxu0 0
    %9590 = vmatprep.subr.bf16.mxu0 0
    %9591 = vmatpush1.bf16.msra.mxu0 0
    %9592 = vmatprep.subr.bf16.mxu0 0
    %9593 = vmatpush1.bf16.msra.mxu0 0
    %9594 = vmatprep.subr.bf16.mxu0 0
    %9595 = vmatpush1.bf16.msra.mxu0 0
    %9596 = vmatprep.subr.bf16.mxu0 0
    %9597 = vmatpush1.bf16.msra.mxu0 0
    %9598 = vmatprep.mubr.bf16.mxu0 0
    %9599 = vmatmul.mubr.bf16.gmra.mrb[0].mxu0 %v9470
    %v9600 = vpop.f32.mrb[0].mxu0
    %v9601 = vadd.f32 %v9516, %v9600
    %v9602 = vpop.f32.mrb[0].mxu0
    %v9603 = vadd.f32 %v9520, %v9602
    %v9604 = vpop.f32.mrb[0].mxu0
    %v9605 = vpop.f32.mrb[0].mxu0
    %9606 = vdwg.mxu0
    %v9607 = vtanh.pop %v9560
    %v9608 = vtanh.pop %v9562
    %v9609 = vtanh.pop %v9601
    %v9610 = vtanh.pop %v9603
    %v9611 = vpack.c.bf16 %v9607, %v9607
    %v9612 = vpack.c.bf16 %v9608, %v9608
    %v9613 = vpack.c.bf16 %v9609, %v9609
    %v9614 = vpack.c.bf16 %v9610, %v9610
    %v9615 = vld [vmem:[#allocation6] sm:$0xff]
    %v9616 = vld [vmem:[#allocation6 + $0x8] sm:$0xff]
    %v9617 = vld [vmem:[#allocation6 + $0x10] sm:$0xff]
    %v9618 = vld [vmem:[#allocation6 + $0x18] sm:$0xff]
    %v9619 = vld [vmem:[#allocation6 + $0x20] sm:$0xff]
    %v9620 = vld [vmem:[#allocation6 + $0x28] sm:$0xff]
    %v9621 = vld [vmem:[#allocation6 + $0x30] sm:$0xff]
    %v9622 = vld [vmem:[#allocation6 + $0x38] sm:$0xff]
    %v9623 = vld [vmem:[#allocation6 + $0x40] sm:$0xff]
    %v9624 = vld [vmem:[#allocation6 + $0x48] sm:$0xff]
    %v9625 = vld [vmem:[#allocation6 + $0x50] sm:$0xff]
    %v9626 = vld [vmem:[#allocation6 + $0x58] sm:$0xff]
    %v9627 = vld [vmem:[#allocation6 + $0x60] sm:$0xff]
    %v9628 = vld [vmem:[#allocation6 + $0x68] sm:$0xff]
    %v9629 = vld [vmem:[#allocation6 + $0x70] sm:$0xff]
    %v9630 = vld [vmem:[#allocation6 + $0x78] sm:$0xff]
    %v9631 = vld [vmem:[#allocation6 + $0x80] sm:$0xff]
    %v9632 = vld [vmem:[#allocation6 + $0x88] sm:$0xff]
    %v9633 = vld [vmem:[#allocation6 + $0x90] sm:$0xff]
    %v9634 = vld [vmem:[#allocation6 + $0x98] sm:$0xff]
    %v9635 = vld [vmem:[#allocation6 + $0xa0] sm:$0xff]
    %v9636 = vld [vmem:[#allocation6 + $0xa8] sm:$0xff]
    %v9637 = vld [vmem:[#allocation6 + $0xb0] sm:$0xff]
    %v9638 = vld [vmem:[#allocation6 + $0xb8] sm:$0xff]
    %v9639 = vld [vmem:[#allocation6 + $0xc0] sm:$0xff]
    %v9640 = vld [vmem:[#allocation6 + $0xc8] sm:$0xff]
    %v9641 = vld [vmem:[#allocation6 + $0xd0] sm:$0xff]
    %v9642 = vld [vmem:[#allocation6 + $0xd8] sm:$0xff]
    %v9643 = vld [vmem:[#allocation6 + $0xe0] sm:$0xff]
    %v9644 = vld [vmem:[#allocation6 + $0xe8] sm:$0xff]
    %v9645 = vld [vmem:[#allocation6 + $0xf0] sm:$0xff]
    %v9646 = vld [vmem:[#allocation6 + $0xf8] sm:$0xff]
    %v9647 = vld [vmem:[#allocation6 + $0x100] sm:$0xff]
    %v9648 = vld [vmem:[#allocation6 + $0x108] sm:$0xff]
    %v9649 = vld [vmem:[#allocation6 + $0x110] sm:$0xff]
    %v9650 = vld [vmem:[#allocation6 + $0x118] sm:$0xff]
    %v9651 = vld [vmem:[#allocation6 + $0x120] sm:$0xff]
    %v9652 = vld [vmem:[#allocation6 + $0x128] sm:$0xff]
    %v9653 = vld [vmem:[#allocation6 + $0x130] sm:$0xff]
    %v9654 = vld [vmem:[#allocation6 + $0x138] sm:$0xff]
    %v9655 = vld [vmem:[#allocation6 + $0x140] sm:$0xff]
    %v9656 = vld [vmem:[#allocation6 + $0x148] sm:$0xff]
    %v9657 = vld [vmem:[#allocation6 + $0x150] sm:$0xff]
    %v9658 = vld [vmem:[#allocation6 + $0x158] sm:$0xff]
    %v9659 = vld [vmem:[#allocation6 + $0x160] sm:$0xff]
    %v9660 = vld [vmem:[#allocation6 + $0x168] sm:$0xff]
    %v9661 = vld [vmem:[#allocation6 + $0x170] sm:$0xff]
    %v9662 = vld [vmem:[#allocation6 + $0x178] sm:$0xff]
    %v9663 = vld [vmem:[#allocation6 + $0x180] sm:$0xff]
    %v9664 = vld [vmem:[#allocation6 + $0x188] sm:$0xff]
    %v9665 = vld [vmem:[#allocation6 + $0x190] sm:$0xff]
    %v9666 = vld [vmem:[#allocation6 + $0x198] sm:$0xff]
    %v9667 = vld [vmem:[#allocation6 + $0x1a0] sm:$0xff]
    %v9668 = vld [vmem:[#allocation6 + $0x1a8] sm:$0xff]
    %v9669 = vld [vmem:[#allocation6 + $0x1b0] sm:$0xff]
    %v9670 = vld [vmem:[#allocation6 + $0x1b8] sm:$0xff]
    %v9671 = vld [vmem:[#allocation6 + $0x1c0] sm:$0xff]
    %v9672 = vld [vmem:[#allocation6 + $0x1c8] sm:$0xff]
    %v9673 = vld [vmem:[#allocation6 + $0x1d0] sm:$0xff]
    %v9674 = vld [vmem:[#allocation6 + $0x1d8] sm:$0xff]
    %v9675 = vld [vmem:[#allocation6 + $0x1e0] sm:$0xff]
    %v9676 = vld [vmem:[#allocation6 + $0x1e8] sm:$0xff]
    %v9677 = vld [vmem:[#allocation6 + $0x1f0] sm:$0xff]
    %v9678 = vld [vmem:[#allocation6 + $0x1f8] sm:$0xff]
    %v9679 = vld [vmem:[#allocation6 + $0x200] sm:$0xff]
    %v9680 = vld [vmem:[#allocation6 + $0x208] sm:$0xff]
    %v9681 = vld [vmem:[#allocation6 + $0x210] sm:$0xff]
    %v9682 = vld [vmem:[#allocation6 + $0x218] sm:$0xff]
    %v9683 = vld [vmem:[#allocation6 + $0x220] sm:$0xff]
    %v9684 = vld [vmem:[#allocation6 + $0x228] sm:$0xff]
    %v9685 = vld [vmem:[#allocation6 + $0x230] sm:$0xff]
    %v9686 = vld [vmem:[#allocation6 + $0x238] sm:$0xff]
    %v9687 = vld [vmem:[#allocation6 + $0x240] sm:$0xff]
    %v9688 = vld [vmem:[#allocation6 + $0x248] sm:$0xff]
    %v9689 = vld [vmem:[#allocation6 + $0x250] sm:$0xff]
    %v9690 = vld [vmem:[#allocation6 + $0x258] sm:$0xff]
    %v9691 = vld [vmem:[#allocation6 + $0x260] sm:$0xff]
    %v9692 = vld [vmem:[#allocation6 + $0x268] sm:$0xff]
    %v9693 = vld [vmem:[#allocation6 + $0x270] sm:$0xff]
    %v9694 = vld [vmem:[#allocation6 + $0x278] sm:$0xff]
    %v9695 = vld [vmem:[#allocation6 + $0x280] sm:$0xff]
    %v9696 = vld [vmem:[#allocation6 + $0x288] sm:$0xff]
    %v9697 = vld [vmem:[#allocation6 + $0x290] sm:$0xff]
    %v9698 = vld [vmem:[#allocation6 + $0x298] sm:$0xff]
    %v9699 = vld [vmem:[#allocation6 + $0x2a0] sm:$0xff]
    %v9700 = vld [vmem:[#allocation6 + $0x2a8] sm:$0xff]
    %v9701 = vld [vmem:[#allocation6 + $0x2b0] sm:$0xff]
    %v9702 = vld [vmem:[#allocation6 + $0x2b8] sm:$0xff]
    %v9703 = vld [vmem:[#allocation6 + $0x2c0] sm:$0xff]
    %v9704 = vld [vmem:[#allocation6 + $0x2c8] sm:$0xff]
    %v9705 = vld [vmem:[#allocation6 + $0x2d0] sm:$0xff]
    %v9706 = vld [vmem:[#allocation6 + $0x2d8] sm:$0xff]
    %v9707 = vld [vmem:[#allocation6 + $0x2e0] sm:$0xff]
    %v9708 = vld [vmem:[#allocation6 + $0x2e8] sm:$0xff]
    %v9709 = vld [vmem:[#allocation6 + $0x2f0] sm:$0xff]
    %v9710 = vld [vmem:[#allocation6 + $0x2f8] sm:$0xff]
    %v9711 = vld [vmem:[#allocation6 + $0x300] sm:$0xff]
    %v9712 = vld [vmem:[#allocation6 + $0x308] sm:$0xff]
    %v9713 = vld [vmem:[#allocation6 + $0x310] sm:$0xff]
    %v9714 = vld [vmem:[#allocation6 + $0x318] sm:$0xff]
    %v9715 = vld [vmem:[#allocation6 + $0x320] sm:$0xff]
    %v9716 = vld [vmem:[#allocation6 + $0x328] sm:$0xff]
    %v9717 = vld [vmem:[#allocation6 + $0x330] sm:$0xff]
    %v9718 = vld [vmem:[#allocation6 + $0x338] sm:$0xff]
    %v9719 = vld [vmem:[#allocation6 + $0x340] sm:$0xff]
    %v9720 = vld [vmem:[#allocation6 + $0x348] sm:$0xff]
    %v9721 = vld [vmem:[#allocation6 + $0x350] sm:$0xff]
    %v9722 = vld [vmem:[#allocation6 + $0x358] sm:$0xff]
    %v9723 = vld [vmem:[#allocation6 + $0x360] sm:$0xff]
    %v9724 = vld [vmem:[#allocation6 + $0x368] sm:$0xff]
    %v9725 = vld [vmem:[#allocation6 + $0x370] sm:$0xff]
    %v9726 = vld [vmem:[#allocation6 + $0x378] sm:$0xff]
    %v9727 = vld [vmem:[#allocation6 + $0x380] sm:$0xff]
    %v9728 = vld [vmem:[#allocation6 + $0x388] sm:$0xff]
    %v9729 = vld [vmem:[#allocation6 + $0x390] sm:$0xff]
    %v9730 = vld [vmem:[#allocation6 + $0x398] sm:$0xff]
    %v9731 = vld [vmem:[#allocation6 + $0x3a0] sm:$0xff]
    %v9732 = vld [vmem:[#allocation6 + $0x3a8] sm:$0xff]
    %v9733 = vld [vmem:[#allocation6 + $0x3b0] sm:$0xff]
    %v9734 = vld [vmem:[#allocation6 + $0x3b8] sm:$0xff]
    %v9735 = vld [vmem:[#allocation6 + $0x3c0] sm:$0xff]
    %v9736 = vld [vmem:[#allocation6 + $0x3c8] sm:$0xff]
    %v9737 = vld [vmem:[#allocation6 + $0x3d0] sm:$0xff]
    %v9738 = vld [vmem:[#allocation6 + $0x3d8] sm:$0xff]
    %v9739 = vld [vmem:[#allocation6 + $0x3e0] sm:$0xff]
    %v9740 = vld [vmem:[#allocation6 + $0x3e8] sm:$0xff]
    %v9741 = vld [vmem:[#allocation6 + $0x3f0] sm:$0xff]
    %v9742 = vld [vmem:[#allocation6 + $0x3f8] sm:$0xff]
    %v9743 = vld [vmem:[#allocation6 + $0x400] sm:$0xff]
    %v9744 = vld [vmem:[#allocation6 + $0x408] sm:$0xff]
    %v9745 = vld [vmem:[#allocation6 + $0x410] sm:$0xff]
    %v9746 = vld [vmem:[#allocation6 + $0x418] sm:$0xff]
    %v9747 = vld [vmem:[#allocation6 + $0x420] sm:$0xff]
    %v9748 = vld [vmem:[#allocation6 + $0x428] sm:$0xff]
    %v9749 = vld [vmem:[#allocation6 + $0x430] sm:$0xff]
    %v9750 = vld [vmem:[#allocation6 + $0x438] sm:$0xff]
    %v9751 = vld [vmem:[#allocation6 + $0x440] sm:$0xff]
    %v9752 = vld [vmem:[#allocation6 + $0x448] sm:$0xff]
    %v9753 = vld [vmem:[#allocation6 + $0x450] sm:$0xff]
    %v9754 = vld [vmem:[#allocation6 + $0x458] sm:$0xff]
    %v9755 = vld [vmem:[#allocation6 + $0x460] sm:$0xff]
    %v9756 = vld [vmem:[#allocation6 + $0x468] sm:$0xff]
    %v9757 = vld [vmem:[#allocation6 + $0x470] sm:$0xff]
    %v9758 = vld [vmem:[#allocation6 + $0x478] sm:$0xff]
    %v9759 = vld [vmem:[#allocation6 + $0x480] sm:$0xff]
    %v9760 = vld [vmem:[#allocation6 + $0x488] sm:$0xff]
    %v9761 = vld [vmem:[#allocation6 + $0x490] sm:$0xff]
    %v9762 = vld [vmem:[#allocation6 + $0x498] sm:$0xff]
    %v9763 = vld [vmem:[#allocation6 + $0x4a0] sm:$0xff]
    %v9764 = vld [vmem:[#allocation6 + $0x4a8] sm:$0xff]
    %v9765 = vld [vmem:[#allocation6 + $0x4b0] sm:$0xff]
    %v9766 = vld [vmem:[#allocation6 + $0x4b8] sm:$0xff]
    %v9767 = vld [vmem:[#allocation6 + $0x4c0] sm:$0xff]
    %v9768 = vld [vmem:[#allocation6 + $0x4c8] sm:$0xff]
    %v9769 = vld [vmem:[#allocation6 + $0x4d0] sm:$0xff]
    %v9770 = vld [vmem:[#allocation6 + $0x4d8] sm:$0xff]
    %v9771 = vld [vmem:[#allocation6 + $0x4e0] sm:$0xff]
    %v9772 = vld [vmem:[#allocation6 + $0x4e8] sm:$0xff]
    %v9773 = vld [vmem:[#allocation6 + $0x4f0] sm:$0xff]
    %v9774 = vld [vmem:[#allocation6 + $0x4f8] sm:$0xff]
    %v9775 = vld [vmem:[#allocation17] sm:$0x1f]
    %v9777 = vlaneseq
    %v9778 = vshrl.u32 %v9777, 7
    %v9779 = vsub.s32 0, %v9778
    %v9780 = vrot.slane %v9775, %v9779
    %v9781 = vlaneseq
    %v9782 = vshrl.u32 %v9781, 7
    %v9783 = vsub.s32 1, %v9782
    %v9784 = vrot.slane %v9775, %v9783
    %v9785 = vlaneseq
    %v9786 = vshrl.u32 %v9785, 7
    %v9787 = vsub.s32 2, %v9786
    %v9788 = vrot.slane %v9775, %v9787
    %v9789 = vlaneseq
    %v9790 = vshrl.u32 %v9789, 7
    %v9791 = vsub.s32 3, %v9790
    %v9792 = vrot.slane %v9775, %v9791
    %v9793 = vlaneseq
    %v9794 = vshrl.u32 %v9793, 7
    %v9795 = vsub.s32 4, %v9794
    %v9796 = vrot.slane %v9775, %v9795
    %9802 = vmatprep.subr.bf16.mxu0 %v9616
    %9803 = vmatpush1.bf16.msra.mxu0 %v9615
    %9804 = vmatprep.subr.bf16.mxu0 %v9621
    %9805 = vmatpush1.bf16.msra.mxu0 %v9620
    %9806 = vmatprep.subr.bf16.mxu0 %v9626
    %9807 = vmatpush1.bf16.msra.mxu0 %v9625
    %9808 = vmatprep.subr.bf16.mxu0 %v9631
    %9809 = vmatpush1.bf16.msra.mxu0 %v9630
    %9810 = vmatprep.subr.bf16.mxu0 %v9636
    %9811 = vmatpush1.bf16.msra.mxu0 %v9635
    %9812 = vmatprep.subr.bf16.mxu0 %v9641
    %9813 = vmatpush1.bf16.msra.mxu0 %v9640
    %9814 = vmatprep.subr.bf16.mxu0 %v9646
    %9815 = vmatpush1.bf16.msra.mxu0 %v9645
    %9816 = vmatprep.subr.bf16.mxu0 %v9651
    %9817 = vmatpush1.bf16.msra.mxu0 %v9650
    %9818 = vmatprep.subr.bf16.mxu0 %v9656
    %9819 = vmatpush1.bf16.msra.mxu0 %v9655
    %9820 = vmatprep.subr.bf16.mxu0 %v9661
    %9821 = vmatpush1.bf16.msra.mxu0 %v9660
    %9822 = vmatprep.subr.bf16.mxu0 %v9666
    %9823 = vmatpush1.bf16.msra.mxu0 %v9665
    %9824 = vmatprep.subr.bf16.mxu0 %v9671
    %9825 = vmatpush1.bf16.msra.mxu0 %v9670
    %9826 = vmatprep.subr.bf16.mxu0 %v9676
    %9827 = vmatpush1.bf16.msra.mxu0 %v9675
    %9828 = vmatprep.subr.bf16.mxu0 %v9681
    %9829 = vmatpush1.bf16.msra.mxu0 %v9680
    %9830 = vmatprep.subr.bf16.mxu0 %v9686
    %9831 = vmatpush1.bf16.msra.mxu0 %v9685
    %9832 = vmatprep.subr.bf16.mxu0 %v9691
    %9833 = vmatpush1.bf16.msra.mxu0 %v9690
    %9834 = vmatprep.mubr.bf16.mxu0 %v9612
    %9835 = vmatmul.mubr.bf16.gmra.mrb[0].mxu0 %v9611
    %v9836 = vpop.f32.mrb[0].mxu0
    %v9837 = vadd.f32 %v9780, %v9836
    %v9838 = vpop.f32.mrb[0].mxu0
    %v9839 = vadd.f32 %v9784, %v9838
    %v9840 = vpop.f32.mrb[0].mxu0
    %v9841 = vpop.f32.mrb[0].mxu0
    %9842 = vdwg.mxu0
    %9843 = vmatprep.subr.bf16.mxu0 %v9696
    %9844 = vmatpush1.bf16.msra.mxu0 %v9695
    %9845 = vmatprep.subr.bf16.mxu0 %v9701
    %9846 = vmatpush1.bf16.msra.mxu0 %v9700
    %9847 = vmatprep.subr.bf16.mxu0 %v9706
    %9848 = vmatpush1.bf16.msra.mxu0 %v9705
    %9849 = vmatprep.subr.bf16.mxu0 %v9711
    %9850 = vmatpush1.bf16.msra.mxu0 %v9710
    %9851 = vmatprep.subr.bf16.mxu0 %v9716
    %9852 = vmatpush1.bf16.msra.mxu0 %v9715
    %9853 = vmatprep.subr.bf16.mxu0 %v9721
    %9854 = vmatpush1.bf16.msra.mxu0 %v9720
    %9855 = vmatprep.subr.bf16.mxu0 %v9726
    %9856 = vmatpush1.bf16.msra.mxu0 %v9725
    %9857 = vmatprep.subr.bf16.mxu0 %v9731
    %9858 = vmatpush1.bf16.msra.mxu0 %v9730
    %9859 = vmatprep.subr.bf16.mxu0 %v9736
    %9860 = vmatpush1.bf16.msra.mxu0 %v9735
    %9861 = vmatprep.subr.bf16.mxu0 %v9741
    %9862 = vmatpush1.bf16.msra.mxu0 %v9740
    %9863 = vmatprep.subr.bf16.mxu0 %v9746
    %9864 = vmatpush1.bf16.msra.mxu0 %v9745
    %9865 = vmatprep.subr.bf16.mxu0 %v9751
    %9866 = vmatpush1.bf16.msra.mxu0 %v9750
    %9867 = vmatprep.subr.bf16.mxu0 %v9756
    %9868 = vmatpush1.bf16.msra.mxu0 %v9755
    %9869 = vmatprep.subr.bf16.mxu0 %v9761
    %9870 = vmatpush1.bf16.msra.mxu0 %v9760
    %9871 = vmatprep.subr.bf16.mxu0 %v9766
    %9872 = vmatpush1.bf16.msra.mxu0 %v9765
    %9873 = vmatprep.subr.bf16.mxu0 %v9771
    %9874 = vmatpush1.bf16.msra.mxu0 %v9770
    %9875 = vmatprep.mubr.bf16.mxu0 %v9614
    %9876 = vmatmul.mubr.bf16.gmra.mrb[0].mxu0 %v9613
    %v9877 = vpop.f32.mrb[0].mxu0
    %v9878 = vadd.f32 %v9837, %v9877
    %v9879 = vpop.f32.mrb[0].mxu0
    %v9880 = vadd.f32 %v9839, %v9879
    %v9881 = vpop.f32.mrb[0].mxu0
    %v9882 = vpop.f32.mrb[0].mxu0
    %9883 = vdwg.mxu0
    %9884 = vmatprep.subr.bf16.mxu0 %v9618
    %9885 = vmatpush1.bf16.msra.mxu0 %v9617
    %9886 = vmatprep.subr.bf16.mxu0 %v9623
    %9887 = vmatpush1.bf16.msra.mxu0 %v9622
    %9888 = vmatprep.subr.bf16.mxu0 %v9628
    %9889 = vmatpush1.bf16.msra.mxu0 %v9627
    %9890 = vmatprep.subr.bf16.mxu0 %v9633
    %9891 = vmatpush1.bf16.msra.mxu0 %v9632
    %9892 = vmatprep.subr.bf16.mxu0 %v9638
    %9893 = vmatpush1.bf16.msra.mxu0 %v9637
    %9894 = vmatprep.subr.bf16.mxu0 %v9643
    %9895 = vmatpush1.bf16.msra.mxu0 %v9642
    %9896 = vmatprep.subr.bf16.mxu0 %v9648
    %9897 = vmatpush1.bf16.msra.mxu0 %v9647
    %9898 = vmatprep.subr.bf16.mxu0 %v9653
    %9899 = vmatpush1.bf16.msra.mxu0 %v9652
    %9900 = vmatprep.subr.bf16.mxu0 %v9658
    %9901 = vmatpush1.bf16.msra.mxu0 %v9657
    %9902 = vmatprep.subr.bf16.mxu0 %v9663
    %9903 = vmatpush1.bf16.msra.mxu0 %v9662
    %9904 = vmatprep.subr.bf16.mxu0 %v9668
    %9905 = vmatpush1.bf16.msra.mxu0 %v9667
    %9906 = vmatprep.subr.bf16.mxu0 %v9673
    %9907 = vmatpush1.bf16.msra.mxu0 %v9672
    %9908 = vmatprep.subr.bf16.mxu0 %v9678
    %9909 = vmatpush1.bf16.msra.mxu0 %v9677
    %9910 = vmatprep.subr.bf16.mxu0 %v9683
    %9911 = vmatpush1.bf16.msra.mxu0 %v9682
    %9912 = vmatprep.subr.bf16.mxu0 %v9688
    %9913 = vmatpush1.bf16.msra.mxu0 %v9687
    %9914 = vmatprep.subr.bf16.mxu0 %v9693
    %9915 = vmatpush1.bf16.msra.mxu0 %v9692
    %9916 = vmatprep.mubr.bf16.mxu0 %v9612
    %9917 = vmatmul.mubr.bf16.gmra.mrb[0].mxu0 %v9611
    %v9918 = vpop.f32.mrb[0].mxu0
    %v9919 = vadd.f32 %v9788, %v9918
    %v9920 = vpop.f32.mrb[0].mxu0
    %v9921 = vadd.f32 %v9792, %v9920
    %v9922 = vpop.f32.mrb[0].mxu0
    %v9923 = vpop.f32.mrb[0].mxu0
    %9924 = vdwg.mxu0
    %9925 = vmatprep.subr.bf16.mxu0 %v9698
    %9926 = vmatpush1.bf16.msra.mxu0 %v9697
    %9927 = vmatprep.subr.bf16.mxu0 %v9703
    %9928 = vmatpush1.bf16.msra.mxu0 %v9702
    %9929 = vmatprep.subr.bf16.mxu0 %v9708
    %9930 = vmatpush1.bf16.msra.mxu0 %v9707
    %9931 = vmatprep.subr.bf16.mxu0 %v9713
    %9932 = vmatpush1.bf16.msra.mxu0 %v9712
    %9933 = vmatprep.subr.bf16.mxu0 %v9718
    %9934 = vmatpush1.bf16.msra.mxu0 %v9717
    %9935 = vmatprep.subr.bf16.mxu0 %v9723
    %9936 = vmatpush1.bf16.msra.mxu0 %v9722
    %9937 = vmatprep.subr.bf16.mxu0 %v9728
    %9938 = vmatpush1.bf16.msra.mxu0 %v9727
    %9939 = vmatprep.subr.bf16.mxu0 %v9733
    %9940 = vmatpush1.bf16.msra.mxu0 %v9732
    %9941 = vmatprep.subr.bf16.mxu0 %v9738
    %9942 = vmatpush1.bf16.msra.mxu0 %v9737
    %9943 = vmatprep.subr.bf16.mxu0 %v9743
    %9944 = vmatpush1.bf16.msra.mxu0 %v9742
    %9945 = vmatprep.subr.bf16.mxu0 %v9748
    %9946 = vmatpush1.bf16.msra.mxu0 %v9747
    %9947 = vmatprep.subr.bf16.mxu0 %v9753
    %9948 = vmatpush1.bf16.msra.mxu0 %v9752
    %9949 = vmatprep.subr.bf16.mxu0 %v9758
    %9950 = vmatpush1.bf16.msra.mxu0 %v9757
    %9951 = vmatprep.subr.bf16.mxu0 %v9763
    %9952 = vmatpush1.bf16.msra.mxu0 %v9762
    %9953 = vmatprep.subr.bf16.mxu0 %v9768
    %9954 = vmatpush1.bf16.msra.mxu0 %v9767
    %9955 = vmatprep.subr.bf16.mxu0 %v9773
    %9956 = vmatpush1.bf16.msra.mxu0 %v9772
    %9957 = vmatprep.mubr.bf16.mxu0 %v9614
    %9958 = vmatmul.mubr.bf16.gmra.mrb[0].mxu0 %v9613
    %v9959 = vpop.f32.mrb[0].mxu0
    %v9960 = vadd.f32 %v9919, %v9959
    %v9961 = vpop.f32.mrb[0].mxu0
    %v9962 = vadd.f32 %v9921, %v9961
    %v9963 = vpop.f32.mrb[0].mxu0
    %v9964 = vpop.f32.mrb[0].mxu0
    %9965 = vdwg.mxu0
    %9966 = vmatprep.subr.bf16.mxu0 0
    %9967 = vmatpush1.bf16.msra.mxu0 %v9619
    %9968 = vmatprep.subr.bf16.mxu0 0
    %9969 = vmatpush1.bf16.msra.mxu0 %v9624
    %9970 = vmatprep.subr.bf16.mxu0 0
    %9971 = vmatpush1.bf16.msra.mxu0 %v9629
    %9972 = vmatprep.subr.bf16.mxu0 0
    %9973 = vmatpush1.bf16.msra.mxu0 %v9634
    %9974 = vmatprep.subr.bf16.mxu0 0
    %9975 = vmatpush1.bf16.msra.mxu0 %v9639
    %9976 = vmatprep.subr.bf16.mxu0 0
    %9977 = vmatpush1.bf16.msra.mxu0 %v9644
    %9978 = vmatprep.subr.bf16.mxu0 0
    %9979 = vmatpush1.bf16.msra.mxu0 %v9649
    %9980 = vmatprep.subr.bf16.mxu0 0
    %9981 = vmatpush1.bf16.msra.mxu0 %v9654
    %9982 = vmatprep.subr.bf16.mxu0 0
    %9983 = vmatpush1.bf16.msra.mxu0 %v9659
    %9984 = vmatprep.subr.bf16.mxu0 0
    %9985 = vmatpush1.bf16.msra.mxu0 %v9664
    %9986 = vmatprep.subr.bf16.mxu0 0
    %9987 = vmatpush1.bf16.msra.mxu0 %v9669
    %9988 = vmatprep.subr.bf16.mxu0 0
    %9989 = vmatpush1.bf16.msra.mxu0 %v9674
    %9990 = vmatprep.subr.bf16.mxu0 0
    %9991 = vmatpush1.bf16.msra.mxu0 %v9679
    %9992 = vmatprep.subr.bf16.mxu0 0
    %9993 = vmatpush1.bf16.msra.mxu0 %v9684
    %9994 = vmatprep.subr.bf16.mxu0 0
    %9995 = vmatpush1.bf16.msra.mxu0 %v9689
    %9996 = vmatprep.subr.bf16.mxu0 0
    %9997 = vmatpush1.bf16.msra.mxu0 %v9694
    %9998 = vmatprep.mubr.bf16.mxu0 %v9612
    %9999 = vmatmul.mubr.bf16.gmra.mrb[0].mxu0 %v9611
    %v10000 = vpop.f32.mrb[0].mxu0
    %v10001 = vadd.f32 %v9796, %v10000
    %v10002 = vpop.f32.mrb[0].mxu0
    %v10003 = vpop.f32.mrb[0].mxu0
    %v10004 = vpop.f32.mrb[0].mxu0
    %10005 = vdwg.mxu0
    %10006 = vmatprep.subr.bf16.mxu0 0
    %10007 = vmatpush1.bf16.msra.mxu0 %v9699
    %10008 = vmatprep.subr.bf16.mxu0 0
    %10009 = vmatpush1.bf16.msra.mxu0 %v9704
    %10010 = vmatprep.subr.bf16.mxu0 0
    %10011 = vmatpush1.bf16.msra.mxu0 %v9709
    %10012 = vmatprep.subr.bf16.mxu0 0
    %10013 = vmatpush1.bf16.msra.mxu0 %v9714
    %10014 = vmatprep.subr.bf16.mxu0 0
    %10015 = vmatpush1.bf16.msra.mxu0 %v9719
    %10016 = vmatprep.subr.bf16.mxu0 0
    %10017 = vmatpush1.bf16.msra.mxu0 %v9724
    %10018 = vmatprep.subr.bf16.mxu0 0
    %10019 = vmatpush1.bf16.msra.mxu0 %v9729
    %10020 = vmatprep.subr.bf16.mxu0 0
    %10021 = vmatpush1.bf16.msra.mxu0 %v9734
    %10022 = vmatprep.subr.bf16.mxu0 0
    %10023 = vmatpush1.bf16.msra.mxu0 %v9739
    %10024 = vmatprep.subr.bf16.mxu0 0
    %10025 = vmatpush1.bf16.msra.mxu0 %v9744
    %10026 = vmatprep.subr.bf16.mxu0 0
    %10027 = vmatpush1.bf16.msra.mxu0 %v9749
    %10028 = vmatprep.subr.bf16.mxu0 0
    %10029 = vmatpush1.bf16.msra.mxu0 %v9754
    %10030 = vmatprep.subr.bf16.mxu0 0
    %10031 = vmatpush1.bf16.msra.mxu0 %v9759
    %10032 = vmatprep.subr.bf16.mxu0 0
    %10033 = vmatpush1.bf16.msra.mxu0 %v9764
    %10034 = vmatprep.subr.bf16.mxu0 0
    %10035 = vmatpush1.bf16.msra.mxu0 %v9769
    %10036 = vmatprep.subr.bf16.mxu0 0
    %10037 = vmatpush1.bf16.msra.mxu0 %v9774
    %10038 = vmatprep.mubr.bf16.mxu0 %v9614
    %10039 = vmatmul.mubr.bf16.gmra.mrb[0].mxu0 %v9613
    %v10040 = vpop.f32.mrb[0].mxu0
    %v10041 = vadd.f32 %v10001, %v10040
    %v10042 = vpop.f32.mrb[0].mxu0
    %v10043 = vpop.f32.mrb[0].mxu0
    %v10044 = vpop.f32.mrb[0].mxu0
    %10045 = vdwg.mxu0
    %v10046 = vtanh.pop %v9878
    %v10047 = vtanh.pop %v9880
    %v10048 = vtanh.pop %v9960
    %v10049 = vtanh.pop %v9962
    %v10050 = vtanh.pop %v10041
    %v10051 = vpack.c.bf16 %v10046, %v10046
    %v10052 = vpack.c.bf16 %v10047, %v10047
    %v10053 = vpack.c.bf16 %v10048, %v10048
    %v10054 = vpack.c.bf16 %v10049, %v10049
    %v10055 = vpack.c.bf16 %v10050, %v10050
    %v10056 = vld [vmem:[#allocation7] sm:$0xff]
    %v10057 = vld [vmem:[#allocation7 + $0x8] sm:$0xff]
    %v10058 = vld [vmem:[#allocation7 + $0x10] sm:$0xff]
    %v10059 = vld [vmem:[#allocation7 + $0x18] sm:$0xff]
    %v10060 = vld [vmem:[#allocation7 + $0x20] sm:$0xff]
    %v10061 = vld [vmem:[#allocation7 + $0x28] sm:$0xff]
    %v10062 = vld [vmem:[#allocation7 + $0x30] sm:$0xff]
    %v10063 = vld [vmem:[#allocation7 + $0x38] sm:$0xff]
    %v10064 = vld [vmem:[#allocation7 + $0x40] sm:$0xff]
    %v10065 = vld [vmem:[#allocation7 + $0x48] sm:$0xff]
    %v10066 = vld [vmem:[#allocation7 + $0x50] sm:$0xff]
    %v10067 = vld [vmem:[#allocation7 + $0x58] sm:$0xff]
    %v10068 = vld [vmem:[#allocation7 + $0x60] sm:$0xff]
    %v10069 = vld [vmem:[#allocation7 + $0x68] sm:$0xff]
    %v10070 = vld [vmem:[#allocation7 + $0x70] sm:$0xff]
    %v10071 = vld [vmem:[#allocation7 + $0x78] sm:$0xff]
    %v10072 = vld [vmem:[#allocation7 + $0x80] sm:$0xff]
    %v10073 = vld [vmem:[#allocation7 + $0x88] sm:$0xff]
    %v10074 = vld [vmem:[#allocation7 + $0x90] sm:$0xff]
    %v10075 = vld [vmem:[#allocation7 + $0x98] sm:$0xff]
    %v10076 = vld [vmem:[#allocation7 + $0xa0] sm:$0xff]
    %v10077 = vld [vmem:[#allocation7 + $0xa8] sm:$0xff]
    %v10078 = vld [vmem:[#allocation7 + $0xb0] sm:$0xff]
    %v10079 = vld [vmem:[#allocation7 + $0xb8] sm:$0xff]
    %v10080 = vld [vmem:[#allocation7 + $0xc0] sm:$0xff]
    %v10081 = vld [vmem:[#allocation7 + $0xc8] sm:$0xff]
    %v10082 = vld [vmem:[#allocation7 + $0xd0] sm:$0xff]
    %v10083 = vld [vmem:[#allocation7 + $0xd8] sm:$0xff]
    %v10084 = vld [vmem:[#allocation7 + $0xe0] sm:$0xff]
    %v10085 = vld [vmem:[#allocation7 + $0xe8] sm:$0xff]
    %v10086 = vld [vmem:[#allocation7 + $0xf0] sm:$0xff]
    %v10087 = vld [vmem:[#allocation7 + $0xf8] sm:$0xff]
    %v10088 = vld [vmem:[#allocation7 + $0x100] sm:$0xff]
    %v10089 = vld [vmem:[#allocation7 + $0x108] sm:$0xff]
    %v10090 = vld [vmem:[#allocation7 + $0x110] sm:$0xff]
    %v10091 = vld [vmem:[#allocation7 + $0x118] sm:$0xff]
    %v10092 = vld [vmem:[#allocation7 + $0x120] sm:$0xff]
    %v10093 = vld [vmem:[#allocation7 + $0x128] sm:$0xff]
    %v10094 = vld [vmem:[#allocation7 + $0x130] sm:$0xff]
    %v10095 = vld [vmem:[#allocation7 + $0x138] sm:$0xff]
    %v10096 = vld [vmem:[#allocation7 + $0x140] sm:$0xff]
    %v10097 = vld [vmem:[#allocation7 + $0x148] sm:$0xff]
    %v10098 = vld [vmem:[#allocation7 + $0x150] sm:$0xff]
    %v10099 = vld [vmem:[#allocation7 + $0x158] sm:$0xff]
    %v10100 = vld [vmem:[#allocation7 + $0x160] sm:$0xff]
    %v10101 = vld [vmem:[#allocation7 + $0x168] sm:$0xff]
    %v10102 = vld [vmem:[#allocation7 + $0x170] sm:$0xff]
    %v10103 = vld [vmem:[#allocation7 + $0x178] sm:$0xff]
    %v10104 = vld [vmem:[#allocation7 + $0x180] sm:$0xff]
    %v10105 = vld [vmem:[#allocation7 + $0x188] sm:$0xff]
    %v10106 = vld [vmem:[#allocation7 + $0x190] sm:$0xff]
    %v10107 = vld [vmem:[#allocation7 + $0x198] sm:$0xff]
    %v10108 = vld [vmem:[#allocation7 + $0x1a0] sm:$0xff]
    %v10109 = vld [vmem:[#allocation7 + $0x1a8] sm:$0xff]
    %v10110 = vld [vmem:[#allocation7 + $0x1b0] sm:$0xff]
    %v10111 = vld [vmem:[#allocation7 + $0x1b8] sm:$0xff]
    %v10112 = vld [vmem:[#allocation7 + $0x1c0] sm:$0xff]
    %v10113 = vld [vmem:[#allocation7 + $0x1c8] sm:$0xff]
    %v10114 = vld [vmem:[#allocation7 + $0x1d0] sm:$0xff]
    %v10115 = vld [vmem:[#allocation7 + $0x1d8] sm:$0xff]
    %v10116 = vld [vmem:[#allocation7 + $0x1e0] sm:$0xff]
    %v10117 = vld [vmem:[#allocation7 + $0x1e8] sm:$0xff]
    %v10118 = vld [vmem:[#allocation7 + $0x1f0] sm:$0xff]
    %v10119 = vld [vmem:[#allocation7 + $0x1f8] sm:$0xff]
    %v10120 = vld [vmem:[#allocation7 + $0x200] sm:$0xff]
    %v10121 = vld [vmem:[#allocation7 + $0x208] sm:$0xff]
    %v10122 = vld [vmem:[#allocation7 + $0x210] sm:$0xff]
    %v10123 = vld [vmem:[#allocation7 + $0x218] sm:$0xff]
    %v10124 = vld [vmem:[#allocation7 + $0x220] sm:$0xff]
    %v10125 = vld [vmem:[#allocation7 + $0x228] sm:$0xff]
    %v10126 = vld [vmem:[#allocation7 + $0x230] sm:$0xff]
    %v10127 = vld [vmem:[#allocation7 + $0x238] sm:$0xff]
    %v10128 = vld [vmem:[#allocation7 + $0x240] sm:$0xff]
    %v10129 = vld [vmem:[#allocation7 + $0x248] sm:$0xff]
    %v10130 = vld [vmem:[#allocation7 + $0x250] sm:$0xff]
    %v10131 = vld [vmem:[#allocation7 + $0x258] sm:$0xff]
    %v10132 = vld [vmem:[#allocation7 + $0x260] sm:$0xff]
    %v10133 = vld [vmem:[#allocation7 + $0x268] sm:$0xff]
    %v10134 = vld [vmem:[#allocation7 + $0x270] sm:$0xff]
    %v10135 = vld [vmem:[#allocation7 + $0x278] sm:$0xff]
    %v10136 = vld [vmem:[#allocation19] sm:$0x3]
    %v10138 = vlaneseq
    %v10139 = vshrl.u32 %v10138, 7
    %v10140 = vsub.s32 0, %v10139
    %v10141 = vrot.slane %v10136, %v10140
    %v10142 = vlaneseq
    %v10143 = vshrl.u32 %v10142, 7
    %v10144 = vsub.s32 1, %v10143
    %v10145 = vrot.slane %v10136, %v10144
    %10148 = vmatprep.subr.bf16.mxu0 %v10057
    %10149 = vmatpush1.bf16.msra.mxu0 %v10056
    %10150 = vmatprep.subr.bf16.mxu0 %v10059
    %10151 = vmatpush1.bf16.msra.mxu0 %v10058
    %10152 = vmatprep.subr.bf16.mxu0 %v10061
    %10153 = vmatpush1.bf16.msra.mxu0 %v10060
    %10154 = vmatprep.subr.bf16.mxu0 %v10063
    %10155 = vmatpush1.bf16.msra.mxu0 %v10062
    %10156 = vmatprep.subr.bf16.mxu0 %v10065
    %10157 = vmatpush1.bf16.msra.mxu0 %v10064
    %10158 = vmatprep.subr.bf16.mxu0 %v10067
    %10159 = vmatpush1.bf16.msra.mxu0 %v10066
    %10160 = vmatprep.subr.bf16.mxu0 %v10069
    %10161 = vmatpush1.bf16.msra.mxu0 %v10068
    %10162 = vmatprep.subr.bf16.mxu0 %v10071
    %10163 = vmatpush1.bf16.msra.mxu0 %v10070
    %10164 = vmatprep.subr.bf16.mxu0 %v10073
    %10165 = vmatpush1.bf16.msra.mxu0 %v10072
    %10166 = vmatprep.subr.bf16.mxu0 %v10075
    %10167 = vmatpush1.bf16.msra.mxu0 %v10074
    %10168 = vmatprep.subr.bf16.mxu0 %v10077
    %10169 = vmatpush1.bf16.msra.mxu0 %v10076
    %10170 = vmatprep.subr.bf16.mxu0 %v10079
    %10171 = vmatpush1.bf16.msra.mxu0 %v10078
    %10172 = vmatprep.subr.bf16.mxu0 %v10081
    %10173 = vmatpush1.bf16.msra.mxu0 %v10080
    %10174 = vmatprep.subr.bf16.mxu0 %v10083
    %10175 = vmatpush1.bf16.msra.mxu0 %v10082
    %10176 = vmatprep.subr.bf16.mxu0 %v10085
    %10177 = vmatpush1.bf16.msra.mxu0 %v10084
    %10178 = vmatprep.subr.bf16.mxu0 %v10087
    %10179 = vmatpush1.bf16.msra.mxu0 %v10086
    %10180 = vmatprep.mubr.bf16.mxu0 %v10052
    %10181 = vmatmul.mubr.bf16.gmra.mrb[0].mxu0 %v10051
    %v10182 = vpop.f32.mrb[0].mxu0
    %v10183 = vadd.f32 %v10141, %v10182
    %v10184 = vpop.f32.mrb[0].mxu0
    %v10185 = vadd.f32 %v10145, %v10184
    %v10186 = vpop.f32.mrb[0].mxu0
    %v10187 = vpop.f32.mrb[0].mxu0
    %10188 = vdwg.mxu0
    %10189 = vmatprep.subr.bf16.mxu0 %v10089
    %10190 = vmatpush1.bf16.msra.mxu0 %v10088
    %10191 = vmatprep.subr.bf16.mxu0 %v10091
    %10192 = vmatpush1.bf16.msra.mxu0 %v10090
    %10193 = vmatprep.subr.bf16.mxu0 %v10093
    %10194 = vmatpush1.bf16.msra.mxu0 %v10092
    %10195 = vmatprep.subr.bf16.mxu0 %v10095
    %10196 = vmatpush1.bf16.msra.mxu0 %v10094
    %10197 = vmatprep.subr.bf16.mxu0 %v10097
    %10198 = vmatpush1.bf16.msra.mxu0 %v10096
    %10199 = vmatprep.subr.bf16.mxu0 %v10099
    %10200 = vmatpush1.bf16.msra.mxu0 %v10098
    %10201 = vmatprep.subr.bf16.mxu0 %v10101
    %10202 = vmatpush1.bf16.msra.mxu0 %v10100
    %10203 = vmatprep.subr.bf16.mxu0 %v10103
    %10204 = vmatpush1.bf16.msra.mxu0 %v10102
    %10205 = vmatprep.subr.bf16.mxu0 %v10105
    %10206 = vmatpush1.bf16.msra.mxu0 %v10104
    %10207 = vmatprep.subr.bf16.mxu0 %v10107
    %10208 = vmatpush1.bf16.msra.mxu0 %v10106
    %10209 = vmatprep.subr.bf16.mxu0 %v10109
    %10210 = vmatpush1.bf16.msra.mxu0 %v10108
    %10211 = vmatprep.subr.bf16.mxu0 %v10111
    %10212 = vmatpush1.bf16.msra.mxu0 %v10110
    %10213 = vmatprep.subr.bf16.mxu0 %v10113
    %10214 = vmatpush1.bf16.msra.mxu0 %v10112
    %10215 = vmatprep.subr.bf16.mxu0 %v10115
    %10216 = vmatpush1.bf16.msra.mxu0 %v10114
    %10217 = vmatprep.subr.bf16.mxu0 %v10117
    %10218 = vmatpush1.bf16.msra.mxu0 %v10116
    %10219 = vmatprep.subr.bf16.mxu0 %v10119
    %10220 = vmatpush1.bf16.msra.mxu0 %v10118
    %10221 = vmatprep.mubr.bf16.mxu0 %v10054
    %10222 = vmatmul.mubr.bf16.gmra.mrb[0].mxu0 %v10053
    %v10223 = vpop.f32.mrb[0].mxu0
    %v10224 = vadd.f32 %v10183, %v10223
    %v10225 = vpop.f32.mrb[0].mxu0
    %v10226 = vadd.f32 %v10185, %v10225
    %v10227 = vpop.f32.mrb[0].mxu0
    %v10228 = vpop.f32.mrb[0].mxu0
    %10229 = vdwg.mxu0
    %10230 = vmatprep.subr.bf16.mxu0 %v10121
    %10231 = vmatpush1.bf16.msra.mxu0 %v10120
    %10232 = vmatprep.subr.bf16.mxu0 %v10123
    %10233 = vmatpush1.bf16.msra.mxu0 %v10122
    %10234 = vmatprep.subr.bf16.mxu0 %v10125
    %10235 = vmatpush1.bf16.msra.mxu0 %v10124
    %10236 = vmatprep.subr.bf16.mxu0 %v10127
    %10237 = vmatpush1.bf16.msra.mxu0 %v10126
    %10238 = vmatprep.subr.bf16.mxu0 %v10129
    %10239 = vmatpush1.bf16.msra.mxu0 %v10128
    %10240 = vmatprep.subr.bf16.mxu0 %v10131
    %10241 = vmatpush1.bf16.msra.mxu0 %v10130
    %10242 = vmatprep.subr.bf16.mxu0 %v10133
    %10243 = vmatpush1.bf16.msra.mxu0 %v10132
    %10244 = vmatprep.subr.bf16.mxu0 %v10135
    %10245 = vmatpush1.bf16.msra.mxu0 %v10134
    %10246 = vmatprep.subr.bf16.mxu0 0
    %10247 = vmatpush1.bf16.msra.mxu0 0
    %10248 = vmatprep.subr.bf16.mxu0 0
    %10249 = vmatpush1.bf16.msra.mxu0 0
    %10250 = vmatprep.subr.bf16.mxu0 0
    %10251 = vmatpush1.bf16.msra.mxu0 0
    %10252 = vmatprep.subr.bf16.mxu0 0
    %10253 = vmatpush1.bf16.msra.mxu0 0
    %10254 = vmatprep.subr.bf16.mxu0 0
    %10255 = vmatpush1.bf16.msra.mxu0 0
    %10256 = vmatprep.subr.bf16.mxu0 0
    %10257 = vmatpush1.bf16.msra.mxu0 0
    %10258 = vmatprep.subr.bf16.mxu0 0
    %10259 = vmatpush1.bf16.msra.mxu0 0
    %10260 = vmatprep.subr.bf16.mxu0 0
    %10261 = vmatpush1.bf16.msra.mxu0 0
    %10262 = vmatprep.mubr.bf16.mxu0 0
    %10263 = vmatmul.mubr.bf16.gmra.mrb[0].mxu0 %v10055
    %v10264 = vpop.f32.mrb[0].mxu0
    %v10265 = vadd.f32 %v10224, %v10264
    %v10266 = vpop.f32.mrb[0].mxu0
    %v10267 = vadd.f32 %v10226, %v10266
    %v10268 = vpop.f32.mrb[0].mxu0
    %v10269 = vpop.f32.mrb[0].mxu0
    %10270 = vdwg.mxu0
    %10271 = vst [vmem:[%s14] sm:$0xff] %v10265
    %10272 = vst [vmem:[%s14 + $0x8] sm:$0xff] %v10267
    // Predicated region
    $region66: #{pure_lstm_forward.1} parent=1 // pred_check
      _
    $region67: #{pure_lstm_forward.1} parent=1 // pred_check_branch
      %10274 = sbr.rel (0) target = $region69
    $region68: #{pure_lstm_forward.1} parent=1 // pred_region
      _
    $region69: #{pure_lstm_forward.1} parent=1 // pred_fallthru
      _
    // Predicated region
    $region70: #{pure_lstm_forward.1} parent=1 // pred_check
      _
    $region71: #{pure_lstm_forward.1} parent=1 // pred_check_branch
      %10276 = sbr.rel (0) target = $region73
    $region72: #{pure_lstm_forward.1} parent=1 // pred_region
      _
    $region73: #{pure_lstm_forward.1} parent=1 // pred_fallthru
      _
    %10277 = vsyncpa [#allocation10], 1
    %10278 = vsyncpa [#allocation12], 1
    %10279 = vsyncpa [#allocation15], 1
    %10280 = vsyncpa [#allocation18], 1
  %10281 = vsyncmov [#allocation8]
  %s10282 = vpop.sfrf %10281
  %p10283 = scmp.eq.s32.totalorder %s10282, 0
  %p10284 = pneg %p10283
  %10286 = shalt.err (%p10284)
  %s10287 = scalar_lea.sflag [#allocation8], 1
  %10288 = vsyncmov %s10287
  %s10289 = vpop.sfrf %10288
  %p10290 = scmp.eq.s32.totalorder %s10289, 0
  %p10291 = pneg %p10290
  %10293 = shalt.err (%p10291)
  %s10294 = scalar_lea.sflag [#allocation8], 2
  %10295 = vsyncmov %s10294
  %s10296 = vpop.sfrf %10295
  %p10297 = scmp.eq.s32.totalorder %s10296, 0
  %p10298 = pneg %p10297
  %10300 = shalt.err (%p10298)
  %s10301 = scalar_lea.sflag [#allocation8], 3
  %10302 = vsyncmov %s10301
  %s10303 = vpop.sfrf %10302
  %p10304 = scmp.eq.s32.totalorder %s10303, 0
  %p10305 = pneg %p10304
  %10307 = shalt.err (%p10305)
  %s10308 = scalar_lea.sflag [#allocation8], 4
  %10309 = vsyncmov %s10308
  %s10310 = vpop.sfrf %10309
  %p10311 = scmp.eq.s32.totalorder %s10310, 0
  %p10312 = pneg %p10311
  %10314 = shalt.err (%p10312)
  %s10315 = scalar_lea.sflag [#allocation8], 5
  %10316 = vsyncmov %s10315
  %s10317 = vpop.sfrf %10316
  %p10318 = scmp.eq.s32.totalorder %s10317, 0
  %p10319 = pneg %p10318
  %10321 = shalt.err (%p10319)

</llo_original>
